<compile_context>
chip_gen: v5e
topology: v5e:2x2
jax: 0.10.0
libtpu: 0.0.40
codegen_flags: <defaults>
</compile_context>

<pallas_src>
import jax
import jax.numpy as jnp
from jax import lax
from jax.experimental import pallas as pl
from jax.experimental.pallas import tpu as pltpu

KSIZE = 5                      # conv kernel size
PAD = (KSIZE - 1) // 2         # 'same' padding = 2
CIN = 200                      # input channels
CIN_PAD = 256                  # input channels padded to a lane-friendly 256
CONV_CH = (512, 256, 128)      # conv output channels
HID = 128                      # LSTM hidden size
OUT_DIM = 93                   # final linear output
OUT_PAD = 128                  # lane-dense kernel output width (sliced to 93 outside)
CONV_MATMUL_DTYPE = jnp.bfloat16   # MXU input dtype for conv / x-projection matmuls


def _round_up(x, m):
    return (x + m - 1) // m * m


# ---------------------------------------------------------------------------
# Kernel 1: fused conv stack + (folded) BatchNorm + ReLU + LSTM input projection
# ---------------------------------------------------------------------------
def fused_cnn_kernel(xp_ref, mask_ref,
                     w1_ref, sh1_ref,
                     w2_ref, sh2_ref,
                     w3_ref, sh3_ref,
                     wih_ref, bih_ref, gx_ref):
    """One row-block of whole zero-padded sequences, flattened to M rows.

    Row space: each sequence occupies NP rows = [PAD zeros | T data | >=PAD zeros].  The
    zero pad rows turn every conv tap into a full-height matmul; taps are realized with
    pltpu.roll (jnp.roll semantics: result[i] = x[i - shift]).  Roll wrap-around only ever
    lands on pad rows, and pad rows are re-zeroed by `mask` after every layer so they act
    as the next layer's 'same' zero padding.  BN scale is pre-folded into the weights; only
    the per-channel shift is added here.
    """
    m_rows = xp_ref.shape[0]
    mask = mask_ref[...]                      # (M, 1): 1.0 on data rows, 0.0 on pad rows
    h = xp_ref[...].astype(jnp.float32)       # bf16 input DMA, upcast once in VMEM

    def conv_taps(h_in, w_ref):
        cout = w_ref.shape[-1]
        acc = jnp.zeros((m_rows, cout), jnp.float32)
        for k in range(KSIZE):                # static unroll: 5 full-height MXU matmuls
            if k == PAD:
                hk = h_in
            else:
                hk = pltpu.roll(h_in, shift=(PAD - k) % m_rows, axis=0)
            acc = acc + jnp.dot(hk.astype(CONV_MATMUL_DTYPE), w_ref[k],
                                preferred_element_type=jnp.float32)
        return acc

    for w_ref, sh_ref in ((w1_ref, sh1_ref), (w2_ref, sh2_ref), (w3_ref, sh3_ref)):
        y = conv_taps(h, w_ref) + sh_ref[...]          # conv + folded BN (scale in weights)
        h = jnp.maximum(y, 0.0) * mask                 # ReLU; re-zero pad rows

    # Hoisted LSTM input projection (removes X@W_ih from the serial recurrence).
    gx_ref[...] = (jnp.dot(h.astype(CONV_MATMUL_DTYPE), wih_ref[...],
                           preferred_element_type=jnp.float32) + bih_ref[...])


# ---------------------------------------------------------------------------
# Kernel 2: layer-0 LSTM recurrence (gates_x precomputed) + final Linear on c_T
# ---------------------------------------------------------------------------
def make_lstm_linear_kernel(tchunk, t_lo, t_hi):
    """tchunk: time steps per grid step; [t_lo, t_hi): valid (non-pad) time window."""

    def lstm_linear_kernel(gx_ref, whh_ref, wlin_ref, blin_ref, o_ref, h_ref, c_ref):
        t_blk = pl.program_id(1)

        @pl.when(t_blk == 0)
        def _init():
            h_ref[...] = jnp.zeros_like(h_ref)
            c_ref[...] = jnp.zeros_like(c_ref)

        whh = whh_ref[...]                    # hoisted out of the step loop (H, 4H)
        n = whh.shape[0]                      # = HID
        t0 = t_blk * tchunk

        def step(i, carry):
            h, c = carry
            g = gx_ref[i] + jnp.dot(h, whh, preferred_element_type=jnp.float32)
            i_g = jax.nn.sigmoid(g[:, 0:n])               # torch gate order i, f, g, o
            f_g = jax.nn.sigmoid(g[:, n:2 * n])
            g_g = jnp.tanh(g[:, 2 * n:3 * n])
            o_g = jax.nn.sigmoid(g[:, 3 * n:4 * n])
            c_new = f_g * c + i_g * g_g
            h_new = o_g * jnp.tanh(c_new)
            # Pad time rows must not update the state: blend with a {0,1} scalar so the
            # carry is exactly preserved on invalid steps (cheap VPU work, no divisors
            # constraint on T).
            vf = jnp.logical_and(t0 + i >= t_lo, t0 + i < t_hi).astype(jnp.float32)
            h = vf * h_new + (1.0 - vf) * h
            c = vf * c_new + (1.0 - vf) * c
            return h, c

        # TODO(synk): W_hh could additionally be pinned in the MXU weight registers across
        #             steps via pltpu.matmul_push_rhs / matmul_acc_lhs / matmul_pop.
        h_fin, c_fin = lax.fori_loop(0, tchunk, step,
                                     (h_ref[...], c_ref[...]), unroll=True)
        h_ref[...] = h_fin
        c_ref[...] = c_fin

        @pl.when(t_blk == pl.num_programs(1) - 1)
        def _finalize():
            o_ref[...] = (jnp.dot(c_fin, wlin_ref[...],
                                  preferred_element_type=jnp.float32) + blin_ref[...])

    return lstm_linear_kernel


# ---------------------------------------------------------------------------
# Tiling helpers
# ---------------------------------------------------------------------------
def _pick_row_block(batch, np_rows, target_rows=512):
    """Largest whole-sequence count per conv row block with <= ~target_rows rows."""
    best = 1
    for d in range(1, batch + 1):
        if batch % d == 0 and d * np_rows <= max(target_rows, np_rows):
            best = d
    return best


def _pick_time_chunk(np_rows):
    """np_rows is a multiple of 8; pick the biggest of 32/16/8 that divides it."""
    for c in (32, 16, 8):
        if np_rows % c == 0:
            return c
    return np_rows


def _pick_batch_block(batch, tchunk, bytes_cap=8 << 20):
    """Largest legal LSTM batch block (divisor of B, sublane-aligned or == B) whose
    per-buffer gates chunk fits the VMEM budget."""
    def fits(d):
        return tchunk * d * (4 * HID) * 4 <= bytes_cap
    legal = [d for d in range(8, batch + 1, 8) if batch % d == 0]
    if batch not in legal:
        legal.append(batch)
    ok = [d for d in legal if fits(d)]
    return max(ok) if ok else min(legal)


# ---------------------------------------------------------------------------
# Wrappers (padding, weight re-layout, pallas_call plumbing)
# ---------------------------------------------------------------------------
def fused_cnn_gates(x, conv_params, w_ih, bias_g):
    """x: (B, T, 200) channels-last.  Returns gates_x over the PADDED time axis:
    (B, NP, 4*HID) float32 (pad rows carry only the bias; kernel 2 skips them)."""
    B, T, _ = x.shape
    NP = _round_up(T + 2 * PAD, 8)      # rows per padded sequence (>= PAD zeros each end)
    M = B * NP

    # Padded row space (bf16 to halve the input DMA); pad rows/channels exactly zero.
    xp = jnp.zeros((B, NP, CIN_PAD), CONV_MATMUL_DTYPE)
    xp = xp.at[:, PAD:PAD + T, :CIN].set(x.astype(CONV_MATMUL_DTYPE))
    xp = xp.reshape(M, CIN_PAD)
    mask = jnp.zeros((B, NP, 1), jnp.float32).at[:, PAD:PAD + T, :].set(1.0).reshape(M, 1)

    # Weight re-layout: torch Conv1d (Cout, Cin, K) -> (K, Cin, Cout); BN folded into the
    # weights (scale) and a per-channel shift (inference-mode running stats).
    ins = []
    cin = CIN_PAD
    for (w, b, gamma, beta, mean, var) in conv_params:
        cout = w.shape[0]
        scale = (gamma / jnp.sqrt(var + 1e-5)).astype(jnp.float32)
        wk = jnp.transpose(w, (2, 1, 0)).astype(jnp.float32) * scale.reshape(1, 1, cout)
        wk = jnp.pad(wk, ((0, 0), (0, cin - wk.shape[1]), (0, 0)))  # pad Cin with zeros
        shift = ((b - mean) * scale + beta).astype(jnp.float32)
        ins += [wk.astype(CONV_MATMUL_DTYPE), shift.reshape(1, cout)]
        cin = cout
    wih_t = jnp.transpose(w_ih).astype(CONV_MATMUL_DTYPE)           # (HID, 4*HID)
    bias2 = bias_g.reshape(1, 4 * HID).astype(jnp.float32)          # b_ih + b_hh

    BBLK = _pick_row_block(B, NP)       # whole sequences per block (M rows ~512)
    BLK_M = BBLK * NP
    grid = (B // BBLK,)

    rows = lambda bi: (bi, 0)
    const2 = lambda bi: (0, 0)
    const3 = lambda bi: (0, 0, 0)

    in_specs = [
        pl.BlockSpec((BLK_M, CIN_PAD), rows),
        pl.BlockSpec((BLK_M, 1), rows),
        pl.BlockSpec((KSIZE, CIN_PAD, CONV_CH[0]), const3),
        pl.BlockSpec((1, CONV_CH[0]), const2),
        pl.BlockSpec((KSIZE, CONV_CH[0], CONV_CH[1]), const3),
        pl.BlockSpec((1, CONV_CH[1]), const2),
        pl.BlockSpec((KSIZE, CONV_CH[1], CONV_CH[2]), const3),
        pl.BlockSpec((1, CONV_CH[2]), const2),
        pl.BlockSpec((HID, 4 * HID), const2),
        pl.BlockSpec((1, 4 * HID), const2),
    ]

    gx = pl.pallas_call(
        fused_cnn_kernel,
        out_shape=jax.ShapeDtypeStruct((M, 4 * HID), jnp.float32),
        grid=grid,
        in_specs=in_specs,
        out_specs=pl.BlockSpec((BLK_M, 4 * HID), rows),
        compiler_params=pltpu.CompilerParams(dimension_semantics=("parallel",)),
    )(xp, mask, *ins, wih_t, bias2)

    return gx.reshape(B, NP, 4 * HID)


def lstm0_then_linear(gx_pad, seq_len, w_hh, w_lin, b_lin):
    """gx_pad: (B, NP, 4H) gates over the padded time axis (input projection + biases
    already applied).  Returns (B, OUT_DIM) = Linear(final cell state of LSTM layer 0)."""
    B, NP, _ = gx_pad.shape
    gx = jnp.transpose(gx_pad, (1, 0, 2))                           # (NP, B, 4H) time-major
    whh = jnp.transpose(w_hh).astype(jnp.float32)                   # (H, 4H)
    wl = jnp.pad(jnp.transpose(w_lin).astype(jnp.float32),
                 ((0, 0), (0, OUT_PAD - OUT_DIM)))                  # (H, 128) lane-dense
    bl = jnp.pad(b_lin.astype(jnp.float32),
                 (0, OUT_PAD - OUT_DIM)).reshape(1, OUT_PAD)

    TCHUNK = _pick_time_chunk(NP)
    B_BLK = _pick_batch_block(B, TCHUNK)
    grid = (B // B_BLK, NP // TCHUNK)

    kernel = make_lstm_linear_kernel(TCHUNK, PAD, PAD + seq_len)

    out = pl.pallas_call(
        kernel,
        out_shape=jax.ShapeDtypeStruct((B, OUT_PAD), jnp.float32),
        grid=grid,
        in_specs=[
            pl.BlockSpec((TCHUNK, B_BLK, 4 * HID), lambda b, c: (c, b, 0)),
            pl.BlockSpec((HID, 4 * HID), lambda b, c: (0, 0)),
            pl.BlockSpec((HID, OUT_PAD), lambda b, c: (0, 0)),
            pl.BlockSpec((1, OUT_PAD), lambda b, c: (0, 0)),
        ],
        out_specs=pl.BlockSpec((B_BLK, OUT_PAD), lambda b, c: (b, 0)),
        scratch_shapes=[pltpu.VMEM((B_BLK, HID), jnp.float32),       # h carry
                        pltpu.VMEM((B_BLK, HID), jnp.float32)],      # c carry
        compiler_params=pltpu.CompilerParams(
            dimension_semantics=("parallel", "arbitrary")),
    )(gx, whh, wl, bl)
    return out[:, :OUT_DIM]


# ---------------------------------------------------------------------------
# Network forward + deterministic parameter init
# ---------------------------------------------------------------------------
def init_params(key):
    ks = jax.random.split(key, 24)

    def nrm(k, shape, s=0.05):
        return (s * jax.random.normal(k, shape)).astype(jnp.float32)

    params = {"convs": []}
    i = 0
    cin = CIN
    for cout in CONV_CH:
        w = nrm(ks[i], (cout, cin, KSIZE)); i += 1
        b = nrm(ks[i], (cout,)); i += 1
        gamma = 1.0 + nrm(ks[i], (cout,), 0.01); i += 1
        beta = nrm(ks[i], (cout,), 0.01); i += 1
        mean = nrm(ks[i], (cout,), 0.01); i += 1
        var = 1.0 + jnp.abs(nrm(ks[i], (cout,), 0.01)); i += 1
        params["convs"].append((w, b, gamma, beta, mean, var))
        cin = cout
    # LSTM layer 0 (only layer whose state reaches the output).
    params["lstm0"] = (
        nrm(ks[i], (4 * HID, HID)),        # W_ih
        nrm(ks[i + 1], (4 * HID, HID)),    # W_hh
        nrm(ks[i + 2], (4 * HID,)),        # b_ih
        nrm(ks[i + 3], (4 * HID,)),        # b_hh
    )
    i += 4
    params["linear"] = (nrm(ks[i], (OUT_DIM, HID)), nrm(ks[i + 1], (OUT_DIM,)))
    return params


@jax.jit
def network_forward(params, x):
    # x: (B, 1, T, 200) -> torch.squeeze -> (B, T, 200).  The torch forward transposes to
    # NCL purely for nn.Conv1d; we compute directly in channels-last (same math).
    x = jnp.squeeze(x, axis=1).astype(jnp.float32)
    _, T, _ = x.shape
    w_ih, w_hh, b_ih, b_hh = params["lstm0"]
    w_lin, b_lin = params["linear"]
    gx_pad = fused_cnn_gates(x, params["convs"], w_ih, b_ih + b_hh)    # (B, NP, 4H)
    out = lstm0_then_linear(gx_pad, T, w_hh, w_lin, b_lin)             # (B, 93)
    # torch: ct[0] -> (1,B,128) -> transpose -> (B,1,128) -> Linear -> (B,1,93)
    return out[:, None, :]


if __name__ == "__main__":
    B, T = 2, 16
    root = jax.random.PRNGKey(0)
    k_params, k_x = jax.random.split(root)
    params = init_params(k_params)
    x = jax.random.normal(k_x, (B, 1, T, CIN), dtype=jnp.float32)
    y = network_forward(params, x)
    y = jax.block_until_ready(y)
    assert y.shape == (B, 1, OUT_DIM), y.shape
    assert bool(jnp.all(jnp.isfinite(y)))
    print("KERNEL_OK")
</pallas_src>

<mosaic_0001>
module attributes {stable_mosaic.version = 11 : i64} {
  func.func @fused_cnn_kernel(%arg0: i32, %arg1: memref<48x256xbf16, #tpu.memory_space<vmem>>, %arg2: memref<48x1xf32, #tpu.memory_space<vmem>>, %arg3: memref<5x256x512xbf16, #tpu.memory_space<vmem>>, %arg4: memref<1x512xf32, #tpu.memory_space<vmem>>, %arg5: memref<5x512x256xbf16, #tpu.memory_space<vmem>>, %arg6: memref<1x256xf32, #tpu.memory_space<vmem>>, %arg7: memref<5x256x128xbf16, #tpu.memory_space<vmem>>, %arg8: memref<1x128xf32, #tpu.memory_space<vmem>>, %arg9: memref<128x512xbf16, #tpu.memory_space<vmem>>, %arg10: memref<1x512xf32, #tpu.memory_space<vmem>>, %arg11: memref<48x512xf32, #tpu.memory_space<vmem>>) attributes {dimension_semantics = [#tpu.dimension_semantics<parallel>], iteration_bounds = array<i64: 1>, scalar_prefetch = 0 : i64, scratch_operands = 0 : i64, tpu.core_type = #tpu.core_type<tc>, window_params = [{transform_indices = @transform_0, window_bounds = array<i64: 48, 256>}, {transform_indices = @transform_1, window_bounds = array<i64: 48, 1>}, {pipeline_mode = #tpu.pipeline_mode<synchronous>, transform_indices = @transform_2, window_bounds = array<i64: 5, 256, 512>}, {pipeline_mode = #tpu.pipeline_mode<synchronous>, transform_indices = @transform_3, window_bounds = array<i64: 1, 512>}, {pipeline_mode = #tpu.pipeline_mode<synchronous>, transform_indices = @transform_4, window_bounds = array<i64: 5, 512, 256>}, {pipeline_mode = #tpu.pipeline_mode<synchronous>, transform_indices = @transform_5, window_bounds = array<i64: 1, 256>}, {pipeline_mode = #tpu.pipeline_mode<synchronous>, transform_indices = @transform_6, window_bounds = array<i64: 5, 256, 128>}, {pipeline_mode = #tpu.pipeline_mode<synchronous>, transform_indices = @transform_7, window_bounds = array<i64: 1, 128>}, {pipeline_mode = #tpu.pipeline_mode<synchronous>, transform_indices = @transform_8, window_bounds = array<i64: 128, 512>}, {pipeline_mode = #tpu.pipeline_mode<synchronous>, transform_indices = @transform_9, window_bounds = array<i64: 1, 512>}, {transform_indices = @transform_10, window_bounds = array<i64: 48, 512>}]} {
    %c0 = arith.constant 0 : index
    %c0_0 = arith.constant 0 : index
    %0 = vector.load %arg2[%c0, %c0_0] : memref<48x1xf32, #tpu.memory_space<vmem>>, vector<48x1xf32>
    %c0_1 = arith.constant 0 : index
    %c0_2 = arith.constant 0 : index
    %1 = vector.load %arg1[%c0_1, %c0_2] : memref<48x256xbf16, #tpu.memory_space<vmem>>, vector<48x256xbf16>
    %2 = arith.extf %1 : vector<48x256xbf16> to vector<48x256xf32>
    %cst = arith.constant 0.000000e+00 : f32
    %3 = vector.broadcast %cst : f32 to vector<48x512xf32>
    %c2_i32 = arith.constant 2 : i32
    %4 = tpu.dynamic_rotate %2 by %c2_i32 dim 0 : vector<48x256xf32>, i32 -> vector<48x256xf32>
    %5 = arith.truncf %4 : vector<48x256xf32> to vector<48x256xbf16>
    %c0_3 = arith.constant 0 : index
    %c0_4 = arith.constant 0 : index
    %c0_5 = arith.constant 0 : index
    %6 = vector.load %arg3[%c0_3, %c0_4, %c0_5] : memref<5x256x512xbf16, #tpu.memory_space<vmem>>, vector<1x256x512xbf16>
    %7 = vector.shape_cast %6 : vector<1x256x512xbf16> to vector<256x512xbf16>
    %cst_6 = arith.constant dense<0.000000e+00> : vector<48x512xf32>
    %8 = tpu.matmul %5, %7, %cst_6 {dimension_numbers = #tpu.dot_dimension_numbers<[1], [0], [0], [1], [0, 0, 1, 1], [], []>} : vector<48x256xbf16>, vector<256x512xbf16>, vector<48x512xf32> -> vector<48x512xf32>
    %9 = arith.addf %3, %8 : vector<48x512xf32>
    %c1_i32 = arith.constant 1 : i32
    %10 = tpu.dynamic_rotate %2 by %c1_i32 dim 0 : vector<48x256xf32>, i32 -> vector<48x256xf32>
    %11 = arith.truncf %10 : vector<48x256xf32> to vector<48x256xbf16>
    %c1 = arith.constant 1 : index
    %c0_7 = arith.constant 0 : index
    %c0_8 = arith.constant 0 : index
    %12 = vector.load %arg3[%c1, %c0_7, %c0_8] : memref<5x256x512xbf16, #tpu.memory_space<vmem>>, vector<1x256x512xbf16>
    %13 = vector.shape_cast %12 : vector<1x256x512xbf16> to vector<256x512xbf16>
    %cst_9 = arith.constant dense<0.000000e+00> : vector<48x512xf32>
    %14 = tpu.matmul %11, %13, %cst_9 {dimension_numbers = #tpu.dot_dimension_numbers<[1], [0], [0], [1], [0, 0, 1, 1], [], []>} : vector<48x256xbf16>, vector<256x512xbf16>, vector<48x512xf32> -> vector<48x512xf32>
    %15 = arith.addf %9, %14 : vector<48x512xf32>
    %16 = arith.truncf %2 : vector<48x256xf32> to vector<48x256xbf16>
    %c2 = arith.constant 2 : index
    %c0_10 = arith.constant 0 : index
    %c0_11 = arith.constant 0 : index
    %17 = vector.load %arg3[%c2, %c0_10, %c0_11] : memref<5x256x512xbf16, #tpu.memory_space<vmem>>, vector<1x256x512xbf16>
    %18 = vector.shape_cast %17 : vector<1x256x512xbf16> to vector<256x512xbf16>
    %cst_12 = arith.constant dense<0.000000e+00> : vector<48x512xf32>
    %19 = tpu.matmul %16, %18, %cst_12 {dimension_numbers = #tpu.dot_dimension_numbers<[1], [0], [0], [1], [0, 0, 1, 1], [], []>} : vector<48x256xbf16>, vector<256x512xbf16>, vector<48x512xf32> -> vector<48x512xf32>
    %20 = arith.addf %15, %19 : vector<48x512xf32>
    %c47_i32 = arith.constant 47 : i32
    %21 = tpu.dynamic_rotate %2 by %c47_i32 dim 0 : vector<48x256xf32>, i32 -> vector<48x256xf32>
    %22 = arith.truncf %21 : vector<48x256xf32> to vector<48x256xbf16>
    %c3 = arith.constant 3 : index
    %c0_13 = arith.constant 0 : index
    %c0_14 = arith.constant 0 : index
    %23 = vector.load %arg3[%c3, %c0_13, %c0_14] : memref<5x256x512xbf16, #tpu.memory_space<vmem>>, vector<1x256x512xbf16>
    %24 = vector.shape_cast %23 : vector<1x256x512xbf16> to vector<256x512xbf16>
    %cst_15 = arith.constant dense<0.000000e+00> : vector<48x512xf32>
    %25 = tpu.matmul %22, %24, %cst_15 {dimension_numbers = #tpu.dot_dimension_numbers<[1], [0], [0], [1], [0, 0, 1, 1], [], []>} : vector<48x256xbf16>, vector<256x512xbf16>, vector<48x512xf32> -> vector<48x512xf32>
    %26 = arith.addf %20, %25 : vector<48x512xf32>
    %c46_i32 = arith.constant 46 : i32
    %27 = tpu.dynamic_rotate %2 by %c46_i32 dim 0 : vector<48x256xf32>, i32 -> vector<48x256xf32>
    %28 = arith.truncf %27 : vector<48x256xf32> to vector<48x256xbf16>
    %c4 = arith.constant 4 : index
    %c0_16 = arith.constant 0 : index
    %c0_17 = arith.constant 0 : index
    %29 = vector.load %arg3[%c4, %c0_16, %c0_17] : memref<5x256x512xbf16, #tpu.memory_space<vmem>>, vector<1x256x512xbf16>
    %30 = vector.shape_cast %29 : vector<1x256x512xbf16> to vector<256x512xbf16>
    %cst_18 = arith.constant dense<0.000000e+00> : vector<48x512xf32>
    %31 = tpu.matmul %28, %30, %cst_18 {dimension_numbers = #tpu.dot_dimension_numbers<[1], [0], [0], [1], [0, 0, 1, 1], [], []>} : vector<48x256xbf16>, vector<256x512xbf16>, vector<48x512xf32> -> vector<48x512xf32>
    %32 = arith.addf %26, %31 : vector<48x512xf32>
    %c0_19 = arith.constant 0 : index
    %c0_20 = arith.constant 0 : index
    %33 = vector.load %arg4[%c0_19, %c0_20] : memref<1x512xf32, #tpu.memory_space<vmem>>, vector<1x512xf32>
    %34 = vector.broadcast %33 : vector<1x512xf32> to vector<48x512xf32>
    %35 = arith.addf %32, %34 : vector<48x512xf32>
    %cst_21 = arith.constant 0.000000e+00 : f32
    %36 = vector.broadcast %cst_21 : f32 to vector<48x512xf32>
    %37 = arith.maximumf %35, %36 : vector<48x512xf32>
    %38 = vector.broadcast %0 : vector<48x1xf32> to vector<48x512xf32>
    %39 = arith.mulf %37, %38 : vector<48x512xf32>
    %cst_22 = arith.constant 0.000000e+00 : f32
    %40 = vector.broadcast %cst_22 : f32 to vector<48x256xf32>
    %c2_i32_23 = arith.constant 2 : i32
    %41 = tpu.dynamic_rotate %39 by %c2_i32_23 dim 0 : vector<48x512xf32>, i32 -> vector<48x512xf32>
    %42 = arith.truncf %41 : vector<48x512xf32> to vector<48x512xbf16>
    %c0_24 = arith.constant 0 : index
    %c0_25 = arith.constant 0 : index
    %c0_26 = arith.constant 0 : index
    %43 = vector.load %arg5[%c0_24, %c0_25, %c0_26] : memref<5x512x256xbf16, #tpu.memory_space<vmem>>, vector<1x512x256xbf16>
    %44 = vector.shape_cast %43 : vector<1x512x256xbf16> to vector<512x256xbf16>
    %cst_27 = arith.constant dense<0.000000e+00> : vector<48x256xf32>
    %45 = tpu.matmul %42, %44, %cst_27 {dimension_numbers = #tpu.dot_dimension_numbers<[1], [0], [0], [1], [0, 0, 1, 1], [], []>} : vector<48x512xbf16>, vector<512x256xbf16>, vector<48x256xf32> -> vector<48x256xf32>
    %46 = arith.addf %40, %45 : vector<48x256xf32>
    %c1_i32_28 = arith.constant 1 : i32
    %47 = tpu.dynamic_rotate %39 by %c1_i32_28 dim 0 : vector<48x512xf32>, i32 -> vector<48x512xf32>
    %48 = arith.truncf %47 : vector<48x512xf32> to vector<48x512xbf16>
    %c1_29 = arith.constant 1 : index
    %c0_30 = arith.constant 0 : index
    %c0_31 = arith.constant 0 : index
    %49 = vector.load %arg5[%c1_29, %c0_30, %c0_31] : memref<5x512x256xbf16, #tpu.memory_space<vmem>>, vector<1x512x256xbf16>
    %50 = vector.shape_cast %49 : vector<1x512x256xbf16> to vector<512x256xbf16>
    %cst_32 = arith.constant dense<0.000000e+00> : vector<48x256xf32>
    %51 = tpu.matmul %48, %50, %cst_32 {dimension_numbers = #tpu.dot_dimension_numbers<[1], [0], [0], [1], [0, 0, 1, 1], [], []>} : vector<48x512xbf16>, vector<512x256xbf16>, vector<48x256xf32> -> vector<48x256xf32>
    %52 = arith.addf %46, %51 : vector<48x256xf32>
    %53 = arith.truncf %39 : vector<48x512xf32> to vector<48x512xbf16>
    %c2_33 = arith.constant 2 : index
    %c0_34 = arith.constant 0 : index
    %c0_35 = arith.constant 0 : index
    %54 = vector.load %arg5[%c2_33, %c0_34, %c0_35] : memref<5x512x256xbf16, #tpu.memory_space<vmem>>, vector<1x512x256xbf16>
    %55 = vector.shape_cast %54 : vector<1x512x256xbf16> to vector<512x256xbf16>
    %cst_36 = arith.constant dense<0.000000e+00> : vector<48x256xf32>
    %56 = tpu.matmul %53, %55, %cst_36 {dimension_numbers = #tpu.dot_dimension_numbers<[1], [0], [0], [1], [0, 0, 1, 1], [], []>} : vector<48x512xbf16>, vector<512x256xbf16>, vector<48x256xf32> -> vector<48x256xf32>
    %57 = arith.addf %52, %56 : vector<48x256xf32>
    %c47_i32_37 = arith.constant 47 : i32
    %58 = tpu.dynamic_rotate %39 by %c47_i32_37 dim 0 : vector<48x512xf32>, i32 -> vector<48x512xf32>
    %59 = arith.truncf %58 : vector<48x512xf32> to vector<48x512xbf16>
    %c3_38 = arith.constant 3 : index
    %c0_39 = arith.constant 0 : index
    %c0_40 = arith.constant 0 : index
    %60 = vector.load %arg5[%c3_38, %c0_39, %c0_40] : memref<5x512x256xbf16, #tpu.memory_space<vmem>>, vector<1x512x256xbf16>
    %61 = vector.shape_cast %60 : vector<1x512x256xbf16> to vector<512x256xbf16>
    %cst_41 = arith.constant dense<0.000000e+00> : vector<48x256xf32>
    %62 = tpu.matmul %59, %61, %cst_41 {dimension_numbers = #tpu.dot_dimension_numbers<[1], [0], [0], [1], [0, 0, 1, 1], [], []>} : vector<48x512xbf16>, vector<512x256xbf16>, vector<48x256xf32> -> vector<48x256xf32>
    %63 = arith.addf %57, %62 : vector<48x256xf32>
    %c46_i32_42 = arith.constant 46 : i32
    %64 = tpu.dynamic_rotate %39 by %c46_i32_42 dim 0 : vector<48x512xf32>, i32 -> vector<48x512xf32>
    %65 = arith.truncf %64 : vector<48x512xf32> to vector<48x512xbf16>
    %c4_43 = arith.constant 4 : index
    %c0_44 = arith.constant 0 : index
    %c0_45 = arith.constant 0 : index
    %66 = vector.load %arg5[%c4_43, %c0_44, %c0_45] : memref<5x512x256xbf16, #tpu.memory_space<vmem>>, vector<1x512x256xbf16>
    %67 = vector.shape_cast %66 : vector<1x512x256xbf16> to vector<512x256xbf16>
    %cst_46 = arith.constant dense<0.000000e+00> : vector<48x256xf32>
    %68 = tpu.matmul %65, %67, %cst_46 {dimension_numbers = #tpu.dot_dimension_numbers<[1], [0], [0], [1], [0, 0, 1, 1], [], []>} : vector<48x512xbf16>, vector<512x256xbf16>, vector<48x256xf32> -> vector<48x256xf32>
    %69 = arith.addf %63, %68 : vector<48x256xf32>
    %c0_47 = arith.constant 0 : index
    %c0_48 = arith.constant 0 : index
    %70 = vector.load %arg6[%c0_47, %c0_48] : memref<1x256xf32, #tpu.memory_space<vmem>>, vector<1x256xf32>
    %71 = vector.broadcast %70 : vector<1x256xf32> to vector<48x256xf32>
    %72 = arith.addf %69, %71 : vector<48x256xf32>
    %cst_49 = arith.constant 0.000000e+00 : f32
    %73 = vector.broadcast %cst_49 : f32 to vector<48x256xf32>
    %74 = arith.maximumf %72, %73 : vector<48x256xf32>
    %75 = vector.broadcast %0 : vector<48x1xf32> to vector<48x256xf32>
    %76 = arith.mulf %74, %75 : vector<48x256xf32>
    %cst_50 = arith.constant 0.000000e+00 : f32
    %77 = vector.broadcast %cst_50 : f32 to vector<48x128xf32>
    %c2_i32_51 = arith.constant 2 : i32
    %78 = tpu.dynamic_rotate %76 by %c2_i32_51 dim 0 : vector<48x256xf32>, i32 -> vector<48x256xf32>
    %79 = arith.truncf %78 : vector<48x256xf32> to vector<48x256xbf16>
    %c0_52 = arith.constant 0 : index
    %c0_53 = arith.constant 0 : index
    %c0_54 = arith.constant 0 : index
    %80 = vector.load %arg7[%c0_52, %c0_53, %c0_54] : memref<5x256x128xbf16, #tpu.memory_space<vmem>>, vector<1x256x128xbf16>
    %81 = vector.shape_cast %80 : vector<1x256x128xbf16> to vector<256x128xbf16>
    %cst_55 = arith.constant dense<0.000000e+00> : vector<48x128xf32>
    %82 = tpu.matmul %79, %81, %cst_55 {dimension_numbers = #tpu.dot_dimension_numbers<[1], [0], [0], [1], [0, 0, 1, 1], [], []>} : vector<48x256xbf16>, vector<256x128xbf16>, vector<48x128xf32> -> vector<48x128xf32>
    %83 = arith.addf %77, %82 : vector<48x128xf32>
    %c1_i32_56 = arith.constant 1 : i32
    %84 = tpu.dynamic_rotate %76 by %c1_i32_56 dim 0 : vector<48x256xf32>, i32 -> vector<48x256xf32>
    %85 = arith.truncf %84 : vector<48x256xf32> to vector<48x256xbf16>
    %c1_57 = arith.constant 1 : index
    %c0_58 = arith.constant 0 : index
    %c0_59 = arith.constant 0 : index
    %86 = vector.load %arg7[%c1_57, %c0_58, %c0_59] : memref<5x256x128xbf16, #tpu.memory_space<vmem>>, vector<1x256x128xbf16>
    %87 = vector.shape_cast %86 : vector<1x256x128xbf16> to vector<256x128xbf16>
    %cst_60 = arith.constant dense<0.000000e+00> : vector<48x128xf32>
    %88 = tpu.matmul %85, %87, %cst_60 {dimension_numbers = #tpu.dot_dimension_numbers<[1], [0], [0], [1], [0, 0, 1, 1], [], []>} : vector<48x256xbf16>, vector<256x128xbf16>, vector<48x128xf32> -> vector<48x128xf32>
    %89 = arith.addf %83, %88 : vector<48x128xf32>
    %90 = arith.truncf %76 : vector<48x256xf32> to vector<48x256xbf16>
    %c2_61 = arith.constant 2 : index
    %c0_62 = arith.constant 0 : index
    %c0_63 = arith.constant 0 : index
    %91 = vector.load %arg7[%c2_61, %c0_62, %c0_63] : memref<5x256x128xbf16, #tpu.memory_space<vmem>>, vector<1x256x128xbf16>
    %92 = vector.shape_cast %91 : vector<1x256x128xbf16> to vector<256x128xbf16>
    %cst_64 = arith.constant dense<0.000000e+00> : vector<48x128xf32>
    %93 = tpu.matmul %90, %92, %cst_64 {dimension_numbers = #tpu.dot_dimension_numbers<[1], [0], [0], [1], [0, 0, 1, 1], [], []>} : vector<48x256xbf16>, vector<256x128xbf16>, vector<48x128xf32> -> vector<48x128xf32>
    %94 = arith.addf %89, %93 : vector<48x128xf32>
    %c47_i32_65 = arith.constant 47 : i32
    %95 = tpu.dynamic_rotate %76 by %c47_i32_65 dim 0 : vector<48x256xf32>, i32 -> vector<48x256xf32>
    %96 = arith.truncf %95 : vector<48x256xf32> to vector<48x256xbf16>
    %c3_66 = arith.constant 3 : index
    %c0_67 = arith.constant 0 : index
    %c0_68 = arith.constant 0 : index
    %97 = vector.load %arg7[%c3_66, %c0_67, %c0_68] : memref<5x256x128xbf16, #tpu.memory_space<vmem>>, vector<1x256x128xbf16>
    %98 = vector.shape_cast %97 : vector<1x256x128xbf16> to vector<256x128xbf16>
    %cst_69 = arith.constant dense<0.000000e+00> : vector<48x128xf32>
    %99 = tpu.matmul %96, %98, %cst_69 {dimension_numbers = #tpu.dot_dimension_numbers<[1], [0], [0], [1], [0, 0, 1, 1], [], []>} : vector<48x256xbf16>, vector<256x128xbf16>, vector<48x128xf32> -> vector<48x128xf32>
    %100 = arith.addf %94, %99 : vector<48x128xf32>
    %c46_i32_70 = arith.constant 46 : i32
    %101 = tpu.dynamic_rotate %76 by %c46_i32_70 dim 0 : vector<48x256xf32>, i32 -> vector<48x256xf32>
    %102 = arith.truncf %101 : vector<48x256xf32> to vector<48x256xbf16>
    %c4_71 = arith.constant 4 : index
    %c0_72 = arith.constant 0 : index
    %c0_73 = arith.constant 0 : index
    %103 = vector.load %arg7[%c4_71, %c0_72, %c0_73] : memref<5x256x128xbf16, #tpu.memory_space<vmem>>, vector<1x256x128xbf16>
    %104 = vector.shape_cast %103 : vector<1x256x128xbf16> to vector<256x128xbf16>
    %cst_74 = arith.constant dense<0.000000e+00> : vector<48x128xf32>
    %105 = tpu.matmul %102, %104, %cst_74 {dimension_numbers = #tpu.dot_dimension_numbers<[1], [0], [0], [1], [0, 0, 1, 1], [], []>} : vector<48x256xbf16>, vector<256x128xbf16>, vector<48x128xf32> -> vector<48x128xf32>
    %106 = arith.addf %100, %105 : vector<48x128xf32>
    %c0_75 = arith.constant 0 : index
    %c0_76 = arith.constant 0 : index
    %107 = vector.load %arg8[%c0_75, %c0_76] : memref<1x128xf32, #tpu.memory_space<vmem>>, vector<1x128xf32>
    %108 = vector.broadcast %107 : vector<1x128xf32> to vector<48x128xf32>
    %109 = arith.addf %106, %108 : vector<48x128xf32>
    %cst_77 = arith.constant 0.000000e+00 : f32
    %110 = vector.broadcast %cst_77 : f32 to vector<48x128xf32>
    %111 = arith.maximumf %109, %110 : vector<48x128xf32>
    %112 = vector.broadcast %0 : vector<48x1xf32> to vector<48x128xf32>
    %113 = arith.mulf %111, %112 : vector<48x128xf32>
    %114 = arith.truncf %113 : vector<48x128xf32> to vector<48x128xbf16>
    %c0_78 = arith.constant 0 : index
    %c0_79 = arith.constant 0 : index
    %115 = vector.load %arg9[%c0_78, %c0_79] : memref<128x512xbf16, #tpu.memory_space<vmem>>, vector<128x512xbf16>
    %cst_80 = arith.constant dense<0.000000e+00> : vector<48x512xf32>
    %116 = tpu.matmul %114, %115, %cst_80 {dimension_numbers = #tpu.dot_dimension_numbers<[1], [0], [0], [1], [0, 0, 1, 1], [], []>} : vector<48x128xbf16>, vector<128x512xbf16>, vector<48x512xf32> -> vector<48x512xf32>
    %c0_81 = arith.constant 0 : index
    %c0_82 = arith.constant 0 : index
    %117 = vector.load %arg10[%c0_81, %c0_82] : memref<1x512xf32, #tpu.memory_space<vmem>>, vector<1x512xf32>
    %118 = vector.broadcast %117 : vector<1x512xf32> to vector<48x512xf32>
    %119 = arith.addf %116, %118 : vector<48x512xf32>
    %c0_83 = arith.constant 0 : index
    %c0_84 = arith.constant 0 : index
    %120 = vector.load %arg11[%c0_83, %c0_84] : memref<48x512xf32, #tpu.memory_space<vmem>>, vector<48x512xf32>
    tpu.vector_store %arg11[%c0_83, %c0_84], %119 {strides = array<i32>} : memref<48x512xf32, #tpu.memory_space<vmem>>, vector<48x512xf32>,
    return
  }
  func.func @transform_0(%arg0: i32) -> (i32, i32) {
    %c0_i32 = arith.constant 0 : i32
    %c0_i32_0 = arith.constant 0 : i32
    return %arg0, %c0_i32 : i32, i32
  }
  func.func @transform_1(%arg0: i32) -> (i32, i32) {
    %c0_i32 = arith.constant 0 : i32
    %c0_i32_0 = arith.constant 0 : i32
    return %arg0, %c0_i32 : i32, i32
  }
  func.func @transform_2(%arg0: i32) -> (i32, i32, i32) {
    %c0_i32 = arith.constant 0 : i32
    %c0_i32_0 = arith.constant 0 : i32
    %c0_i32_1 = arith.constant 0 : i32
    %c0_i32_2 = arith.constant 0 : i32
    return %c0_i32, %c0_i32_0, %c0_i32_1 : i32, i32, i32
  }
  func.func @transform_3(%arg0: i32) -> (i32, i32) {
    %c0_i32 = arith.constant 0 : i32
    %c0_i32_0 = arith.constant 0 : i32
    %c0_i32_1 = arith.constant 0 : i32
    return %c0_i32, %c0_i32_0 : i32, i32
  }
  func.func @transform_4(%arg0: i32) -> (i32, i32, i32) {
    %c0_i32 = arith.constant 0 : i32
    %c0_i32_0 = arith.constant 0 : i32
    %c0_i32_1 = arith.constant 0 : i32
    %c0_i32_2 = arith.constant 0 : i32
    return %c0_i32, %c0_i32_0, %c0_i32_1 : i32, i32, i32
  }
  func.func @transform_5(%arg0: i32) -> (i32, i32) {
    %c0_i32 = arith.constant 0 : i32
    %c0_i32_0 = arith.constant 0 : i32
    %c0_i32_1 = arith.constant 0 : i32
    return %c0_i32, %c0_i32_0 : i32, i32
  }
  func.func @transform_6(%arg0: i32) -> (i32, i32, i32) {
    %c0_i32 = arith.constant 0 : i32
    %c0_i32_0 = arith.constant 0 : i32
    %c0_i32_1 = arith.constant 0 : i32
    %c0_i32_2 = arith.constant 0 : i32
    return %c0_i32, %c0_i32_0, %c0_i32_1 : i32, i32, i32
  }
  func.func @transform_7(%arg0: i32) -> (i32, i32) {
    %c0_i32 = arith.constant 0 : i32
    %c0_i32_0 = arith.constant 0 : i32
    %c0_i32_1 = arith.constant 0 : i32
    return %c0_i32, %c0_i32_0 : i32, i32
  }
  func.func @transform_8(%arg0: i32) -> (i32, i32) {
    %c0_i32 = arith.constant 0 : i32
    %c0_i32_0 = arith.constant 0 : i32
    %c0_i32_1 = arith.constant 0 : i32
    return %c0_i32, %c0_i32_0 : i32, i32
  }
  func.func @transform_9(%arg0: i32) -> (i32, i32) {
    %c0_i32 = arith.constant 0 : i32
    %c0_i32_0 = arith.constant 0 : i32
    %c0_i32_1 = arith.constant 0 : i32
    return %c0_i32, %c0_i32_0 : i32, i32
  }
  func.func @transform_10(%arg0: i32) -> (i32, i32) {
    %c0_i32 = arith.constant 0 : i32
    %c0_i32_0 = arith.constant 0 : i32
    return %arg0, %c0_i32 : i32, i32
  }
}

module attributes {stable_mosaic.version = 11 : i64} {
  func.func @lstm_linear_kernel(%arg0: i32, %arg1: i32, %arg2: memref<8x2x512xf32, #tpu.memory_space<vmem>>, %arg3: memref<128x512xf32, #tpu.memory_space<vmem>>, %arg4: memref<128x128xf32, #tpu.memory_space<vmem>>, %arg5: memref<1x128xf32, #tpu.memory_space<vmem>>, %arg6: memref<2x128xf32, #tpu.memory_space<vmem>>, %arg7: memref<2x128xf32, #tpu.memory_space<vmem>>, %arg8: memref<2x128xf32, #tpu.memory_space<vmem>>) attributes {dimension_semantics = [#tpu.dimension_semantics<parallel>, #tpu.dimension_semantics<arbitrary>], iteration_bounds = array<i64: 1, 3>, scalar_prefetch = 0 : i64, scratch_operands = 2 : i64, tpu.core_type = #tpu.core_type<tc>, window_params = [{transform_indices = @transform_0, window_bounds = array<i64: 8, 2, 512>}, {pipeline_mode = #tpu.pipeline_mode<synchronous>, transform_indices = @transform_1, window_bounds = array<i64: 128, 512>}, {pipeline_mode = #tpu.pipeline_mode<synchronous>, transform_indices = @transform_2, window_bounds = array<i64: 128, 128>}, {pipeline_mode = #tpu.pipeline_mode<synchronous>, transform_indices = @transform_3, window_bounds = array<i64: 1, 128>}, {transform_indices = @transform_4, window_bounds = array<i64: 2, 128>}]} {
    %c0_i32 = arith.constant 0 : i32
    %0 = arith.cmpi eq, %arg1, %c0_i32 : i32
    %1 = arith.extui %0 : i1 to i32
    %c0_i32_0 = arith.constant 0 : i32
    %2 = arith.cmpi ne, %1, %c0_i32_0 : i32
    scf.if %2 {
      %cst_92 = arith.constant 0.000000e+00 : f32
      %404 = vector.broadcast %cst_92 : f32 to vector<2x128xf32>
      %c0_93 = arith.constant 0 : index
      %c0_94 = arith.constant 0 : index
      %405 = vector.load %arg7[%c0_93, %c0_94] : memref<2x128xf32, #tpu.memory_space<vmem>>, vector<2x128xf32>
      tpu.vector_store %arg7[%c0_93, %c0_94], %404 {strides = array<i32>} : memref<2x128xf32, #tpu.memory_space<vmem>>, vector<2x128xf32>,
      %cst_95 = arith.constant 0.000000e+00 : f32
      %406 = vector.broadcast %cst_95 : f32 to vector<2x128xf32>
      %c0_96 = arith.constant 0 : index
      %c0_97 = arith.constant 0 : index
      %407 = vector.load %arg8[%c0_96, %c0_97] : memref<2x128xf32, #tpu.memory_space<vmem>>, vector<2x128xf32>
      tpu.vector_store %arg8[%c0_96, %c0_97], %406 {strides = array<i32>} : memref<2x128xf32, #tpu.memory_space<vmem>>, vector<2x128xf32>,
    } else {
    }
    %c0 = arith.constant 0 : index
    %c0_1 = arith.constant 0 : index
    %3 = vector.load %arg3[%c0, %c0_1] : memref<128x512xf32, #tpu.memory_space<vmem>>, vector<128x512xf32>
    %c8_i32 = arith.constant 8 : i32
    %4 = arith.muli %arg1, %c8_i32 : i32
    %c0_2 = arith.constant 0 : index
    %c0_3 = arith.constant 0 : index
    %5 = vector.load %arg7[%c0_2, %c0_3] : memref<2x128xf32, #tpu.memory_space<vmem>>, vector<2x128xf32>
    %c0_4 = arith.constant 0 : index
    %c0_5 = arith.constant 0 : index
    %6 = vector.load %arg8[%c0_4, %c0_5] : memref<2x128xf32, #tpu.memory_space<vmem>>, vector<2x128xf32>
    %c0_i32_6 = arith.constant 0 : i32
    %7 = arith.index_cast %c0_i32_6 : i32 to index
    %c0_7 = arith.constant 0 : index
    %c0_8 = arith.constant 0 : index
    %8 = vector.load %arg2[%7, %c0_7, %c0_8] : memref<8x2x512xf32, #tpu.memory_space<vmem>>, vector<1x2x512xf32>
    %9 = vector.shape_cast %8 : vector<1x2x512xf32> to vector<2x512xf32>
    %cst = arith.constant dense<0.000000e+00> : vector<2x512xf32>
    %10 = tpu.matmul %5, %3, %cst {dimension_numbers = #tpu.dot_dimension_numbers<[1], [0], [0], [1], [0, 0, 1, 1], [], []>} : vector<2x128xf32>, vector<128x512xf32>, vector<2x512xf32> -> vector<2x512xf32>
    %11 = arith.addf %9, %10 : vector<2x512xf32>
    %12 = vector.extract_strided_slice %11 {offsets = [0, 0], sizes = [2, 128], strides = [1, 1]} : vector<2x512xf32> to vector<2x128xf32>
    %13 = arith.negf %12 : vector<2x128xf32>
    %14 = math.exp %13 : vector<2x128xf32>
    %cst_9 = arith.constant 1.000000e+00 : f32
    %15 = vector.broadcast %cst_9 : f32 to vector<2x128xf32>
    %16 = arith.addf %15, %14 : vector<2x128xf32>
    %17 = arith.divf %15, %16 : vector<2x128xf32>
    %18 = vector.extract_strided_slice %11 {offsets = [0, 128], sizes = [2, 128], strides = [1, 1]} : vector<2x512xf32> to vector<2x128xf32>
    %19 = arith.negf %18 : vector<2x128xf32>
    %20 = math.exp %19 : vector<2x128xf32>
    %cst_10 = arith.constant 1.000000e+00 : f32
    %21 = vector.broadcast %cst_10 : f32 to vector<2x128xf32>
    %22 = arith.addf %21, %20 : vector<2x128xf32>
    %23 = arith.divf %21, %22 : vector<2x128xf32>
    %24 = vector.extract_strided_slice %11 {offsets = [0, 256], sizes = [2, 128], strides = [1, 1]} : vector<2x512xf32> to vector<2x128xf32>
    %25 = math.tanh %24 : vector<2x128xf32>
    %26 = vector.extract_strided_slice %11 {offsets = [0, 384], sizes = [2, 128], strides = [1, 1]} : vector<2x512xf32> to vector<2x128xf32>
    %27 = arith.negf %26 : vector<2x128xf32>
    %28 = math.exp %27 : vector<2x128xf32>
    %cst_11 = arith.constant 1.000000e+00 : f32
    %29 = vector.broadcast %cst_11 : f32 to vector<2x128xf32>
    %30 = arith.addf %29, %28 : vector<2x128xf32>
    %31 = arith.divf %29, %30 : vector<2x128xf32>
    %32 = arith.mulf %23, %6 : vector<2x128xf32>
    %33 = arith.mulf %17, %25 : vector<2x128xf32>
    %34 = arith.addf %32, %33 : vector<2x128xf32>
    %35 = math.tanh %34 : vector<2x128xf32>
    %36 = arith.mulf %31, %35 : vector<2x128xf32>
    %37 = arith.addi %4, %c0_i32_6 : i32
    %c2_i32 = arith.constant 2 : i32
    %38 = arith.cmpi sge, %37, %c2_i32 : i32
    %39 = arith.addi %4, %c0_i32_6 : i32
    %c18_i32 = arith.constant 18 : i32
    %40 = arith.cmpi slt, %39, %c18_i32 : i32
    %41 = arith.andi %38, %40 : i1
    %42 = arith.extui %41 : i1 to i32
    %43 = arith.sitofp %42 : i32 to f32
    %44 = vector.broadcast %43 : f32 to vector<2x128xf32>
    %45 = arith.mulf %44, %36 : vector<2x128xf32>
    %cst_12 = arith.constant 1.000000e+00 : f32
    %46 = arith.subf %cst_12, %43 : f32
    %47 = vector.broadcast %46 : f32 to vector<2x128xf32>
    %48 = arith.mulf %47, %5 : vector<2x128xf32>
    %49 = arith.addf %45, %48 : vector<2x128xf32>
    %50 = vector.broadcast %43 : f32 to vector<2x128xf32>
    %51 = arith.mulf %50, %34 : vector<2x128xf32>
    %cst_13 = arith.constant 1.000000e+00 : f32
    %52 = arith.subf %cst_13, %43 : f32
    %53 = vector.broadcast %52 : f32 to vector<2x128xf32>
    %54 = arith.mulf %53, %6 : vector<2x128xf32>
    %55 = arith.addf %51, %54 : vector<2x128xf32>
    %c1_i32 = arith.constant 1 : i32
    %56 = arith.index_cast %c1_i32 : i32 to index
    %c0_14 = arith.constant 0 : index
    %c0_15 = arith.constant 0 : index
    %57 = vector.load %arg2[%56, %c0_14, %c0_15] : memref<8x2x512xf32, #tpu.memory_space<vmem>>, vector<1x2x512xf32>
    %58 = vector.shape_cast %57 : vector<1x2x512xf32> to vector<2x512xf32>
    %cst_16 = arith.constant dense<0.000000e+00> : vector<2x512xf32>
    %59 = tpu.matmul %49, %3, %cst_16 {dimension_numbers = #tpu.dot_dimension_numbers<[1], [0], [0], [1], [0, 0, 1, 1], [], []>} : vector<2x128xf32>, vector<128x512xf32>, vector<2x512xf32> -> vector<2x512xf32>
    %60 = arith.addf %58, %59 : vector<2x512xf32>
    %61 = vector.extract_strided_slice %60 {offsets = [0, 0], sizes = [2, 128], strides = [1, 1]} : vector<2x512xf32> to vector<2x128xf32>
    %62 = arith.negf %61 : vector<2x128xf32>
    %63 = math.exp %62 : vector<2x128xf32>
    %cst_17 = arith.constant 1.000000e+00 : f32
    %64 = vector.broadcast %cst_17 : f32 to vector<2x128xf32>
    %65 = arith.addf %64, %63 : vector<2x128xf32>
    %66 = arith.divf %64, %65 : vector<2x128xf32>
    %67 = vector.extract_strided_slice %60 {offsets = [0, 128], sizes = [2, 128], strides = [1, 1]} : vector<2x512xf32> to vector<2x128xf32>
    %68 = arith.negf %67 : vector<2x128xf32>
    %69 = math.exp %68 : vector<2x128xf32>
    %cst_18 = arith.constant 1.000000e+00 : f32
    %70 = vector.broadcast %cst_18 : f32 to vector<2x128xf32>
    %71 = arith.addf %70, %69 : vector<2x128xf32>
    %72 = arith.divf %70, %71 : vector<2x128xf32>
    %73 = vector.extract_strided_slice %60 {offsets = [0, 256], sizes = [2, 128], strides = [1, 1]} : vector<2x512xf32> to vector<2x128xf32>
    %74 = math.tanh %73 : vector<2x128xf32>
    %75 = vector.extract_strided_slice %60 {offsets = [0, 384], sizes = [2, 128], strides = [1, 1]} : vector<2x512xf32> to vector<2x128xf32>
    %76 = arith.negf %75 : vector<2x128xf32>
    %77 = math.exp %76 : vector<2x128xf32>
    %cst_19 = arith.constant 1.000000e+00 : f32
    %78 = vector.broadcast %cst_19 : f32 to vector<2x128xf32>
    %79 = arith.addf %78, %77 : vector<2x128xf32>
    %80 = arith.divf %78, %79 : vector<2x128xf32>
    %81 = arith.mulf %72, %55 : vector<2x128xf32>
    %82 = arith.mulf %66, %74 : vector<2x128xf32>
    %83 = arith.addf %81, %82 : vector<2x128xf32>
    %84 = math.tanh %83 : vector<2x128xf32>
    %85 = arith.mulf %80, %84 : vector<2x128xf32>
    %86 = arith.addi %4, %c1_i32 : i32
    %c2_i32_20 = arith.constant 2 : i32
    %87 = arith.cmpi sge, %86, %c2_i32_20 : i32
    %88 = arith.addi %4, %c1_i32 : i32
    %c18_i32_21 = arith.constant 18 : i32
    %89 = arith.cmpi slt, %88, %c18_i32_21 : i32
    %90 = arith.andi %87, %89 : i1
    %91 = arith.extui %90 : i1 to i32
    %92 = arith.sitofp %91 : i32 to f32
    %93 = vector.broadcast %92 : f32 to vector<2x128xf32>
    %94 = arith.mulf %93, %85 : vector<2x128xf32>
    %cst_22 = arith.constant 1.000000e+00 : f32
    %95 = arith.subf %cst_22, %92 : f32
    %96 = vector.broadcast %95 : f32 to vector<2x128xf32>
    %97 = arith.mulf %96, %49 : vector<2x128xf32>
    %98 = arith.addf %94, %97 : vector<2x128xf32>
    %99 = vector.broadcast %92 : f32 to vector<2x128xf32>
    %100 = arith.mulf %99, %83 : vector<2x128xf32>
    %cst_23 = arith.constant 1.000000e+00 : f32
    %101 = arith.subf %cst_23, %92 : f32
    %102 = vector.broadcast %101 : f32 to vector<2x128xf32>
    %103 = arith.mulf %102, %55 : vector<2x128xf32>
    %104 = arith.addf %100, %103 : vector<2x128xf32>
    %c2_i32_24 = arith.constant 2 : i32
    %105 = arith.index_cast %c2_i32_24 : i32 to index
    %c0_25 = arith.constant 0 : index
    %c0_26 = arith.constant 0 : index
    %106 = vector.load %arg2[%105, %c0_25, %c0_26] : memref<8x2x512xf32, #tpu.memory_space<vmem>>, vector<1x2x512xf32>
    %107 = vector.shape_cast %106 : vector<1x2x512xf32> to vector<2x512xf32>
    %cst_27 = arith.constant dense<0.000000e+00> : vector<2x512xf32>
    %108 = tpu.matmul %98, %3, %cst_27 {dimension_numbers = #tpu.dot_dimension_numbers<[1], [0], [0], [1], [0, 0, 1, 1], [], []>} : vector<2x128xf32>, vector<128x512xf32>, vector<2x512xf32> -> vector<2x512xf32>
    %109 = arith.addf %107, %108 : vector<2x512xf32>
    %110 = vector.extract_strided_slice %109 {offsets = [0, 0], sizes = [2, 128], strides = [1, 1]} : vector<2x512xf32> to vector<2x128xf32>
    %111 = arith.negf %110 : vector<2x128xf32>
    %112 = math.exp %111 : vector<2x128xf32>
    %cst_28 = arith.constant 1.000000e+00 : f32
    %113 = vector.broadcast %cst_28 : f32 to vector<2x128xf32>
    %114 = arith.addf %113, %112 : vector<2x128xf32>
    %115 = arith.divf %113, %114 : vector<2x128xf32>
    %116 = vector.extract_strided_slice %109 {offsets = [0, 128], sizes = [2, 128], strides = [1, 1]} : vector<2x512xf32> to vector<2x128xf32>
    %117 = arith.negf %116 : vector<2x128xf32>
    %118 = math.exp %117 : vector<2x128xf32>
    %cst_29 = arith.constant 1.000000e+00 : f32
    %119 = vector.broadcast %cst_29 : f32 to vector<2x128xf32>
    %120 = arith.addf %119, %118 : vector<2x128xf32>
    %121 = arith.divf %119, %120 : vector<2x128xf32>
    %122 = vector.extract_strided_slice %109 {offsets = [0, 256], sizes = [2, 128], strides = [1, 1]} : vector<2x512xf32> to vector<2x128xf32>
    %123 = math.tanh %122 : vector<2x128xf32>
    %124 = vector.extract_strided_slice %109 {offsets = [0, 384], sizes = [2, 128], strides = [1, 1]} : vector<2x512xf32> to vector<2x128xf32>
    %125 = arith.negf %124 : vector<2x128xf32>
    %126 = math.exp %125 : vector<2x128xf32>
    %cst_30 = arith.constant 1.000000e+00 : f32
    %127 = vector.broadcast %cst_30 : f32 to vector<2x128xf32>
    %128 = arith.addf %127, %126 : vector<2x128xf32>
    %129 = arith.divf %127, %128 : vector<2x128xf32>
    %130 = arith.mulf %121, %104 : vector<2x128xf32>
    %131 = arith.mulf %115, %123 : vector<2x128xf32>
    %132 = arith.addf %130, %131 : vector<2x128xf32>
    %133 = math.tanh %132 : vector<2x128xf32>
    %134 = arith.mulf %129, %133 : vector<2x128xf32>
    %135 = arith.addi %4, %c2_i32_24 : i32
    %c2_i32_31 = arith.constant 2 : i32
    %136 = arith.cmpi sge, %135, %c2_i32_31 : i32
    %137 = arith.addi %4, %c2_i32_24 : i32
    %c18_i32_32 = arith.constant 18 : i32
    %138 = arith.cmpi slt, %137, %c18_i32_32 : i32
    %139 = arith.andi %136, %138 : i1
    %140 = arith.extui %139 : i1 to i32
    %141 = arith.sitofp %140 : i32 to f32
    %142 = vector.broadcast %141 : f32 to vector<2x128xf32>
    %143 = arith.mulf %142, %134 : vector<2x128xf32>
    %cst_33 = arith.constant 1.000000e+00 : f32
    %144 = arith.subf %cst_33, %141 : f32
    %145 = vector.broadcast %144 : f32 to vector<2x128xf32>
    %146 = arith.mulf %145, %98 : vector<2x128xf32>
    %147 = arith.addf %143, %146 : vector<2x128xf32>
    %148 = vector.broadcast %141 : f32 to vector<2x128xf32>
    %149 = arith.mulf %148, %132 : vector<2x128xf32>
    %cst_34 = arith.constant 1.000000e+00 : f32
    %150 = arith.subf %cst_34, %141 : f32
    %151 = vector.broadcast %150 : f32 to vector<2x128xf32>
    %152 = arith.mulf %151, %104 : vector<2x128xf32>
    %153 = arith.addf %149, %152 : vector<2x128xf32>
    %c3_i32 = arith.constant 3 : i32
    %154 = arith.index_cast %c3_i32 : i32 to index
    %c0_35 = arith.constant 0 : index
    %c0_36 = arith.constant 0 : index
    %155 = vector.load %arg2[%154, %c0_35, %c0_36] : memref<8x2x512xf32, #tpu.memory_space<vmem>>, vector<1x2x512xf32>
    %156 = vector.shape_cast %155 : vector<1x2x512xf32> to vector<2x512xf32>
    %cst_37 = arith.constant dense<0.000000e+00> : vector<2x512xf32>
    %157 = tpu.matmul %147, %3, %cst_37 {dimension_numbers = #tpu.dot_dimension_numbers<[1], [0], [0], [1], [0, 0, 1, 1], [], []>} : vector<2x128xf32>, vector<128x512xf32>, vector<2x512xf32> -> vector<2x512xf32>
    %158 = arith.addf %156, %157 : vector<2x512xf32>
    %159 = vector.extract_strided_slice %158 {offsets = [0, 0], sizes = [2, 128], strides = [1, 1]} : vector<2x512xf32> to vector<2x128xf32>
    %160 = arith.negf %159 : vector<2x128xf32>
    %161 = math.exp %160 : vector<2x128xf32>
    %cst_38 = arith.constant 1.000000e+00 : f32
    %162 = vector.broadcast %cst_38 : f32 to vector<2x128xf32>
    %163 = arith.addf %162, %161 : vector<2x128xf32>
    %164 = arith.divf %162, %163 : vector<2x128xf32>
    %165 = vector.extract_strided_slice %158 {offsets = [0, 128], sizes = [2, 128], strides = [1, 1]} : vector<2x512xf32> to vector<2x128xf32>
    %166 = arith.negf %165 : vector<2x128xf32>
    %167 = math.exp %166 : vector<2x128xf32>
    %cst_39 = arith.constant 1.000000e+00 : f32
    %168 = vector.broadcast %cst_39 : f32 to vector<2x128xf32>
    %169 = arith.addf %168, %167 : vector<2x128xf32>
    %170 = arith.divf %168, %169 : vector<2x128xf32>
    %171 = vector.extract_strided_slice %158 {offsets = [0, 256], sizes = [2, 128], strides = [1, 1]} : vector<2x512xf32> to vector<2x128xf32>
    %172 = math.tanh %171 : vector<2x128xf32>
    %173 = vector.extract_strided_slice %158 {offsets = [0, 384], sizes = [2, 128], strides = [1, 1]} : vector<2x512xf32> to vector<2x128xf32>
    %174 = arith.negf %173 : vector<2x128xf32>
    %175 = math.exp %174 : vector<2x128xf32>
    %cst_40 = arith.constant 1.000000e+00 : f32
    %176 = vector.broadcast %cst_40 : f32 to vector<2x128xf32>
    %177 = arith.addf %176, %175 : vector<2x128xf32>
    %178 = arith.divf %176, %177 : vector<2x128xf32>
    %179 = arith.mulf %170, %153 : vector<2x128xf32>
    %180 = arith.mulf %164, %172 : vector<2x128xf32>
    %181 = arith.addf %179, %180 : vector<2x128xf32>
    %182 = math.tanh %181 : vector<2x128xf32>
    %183 = arith.mulf %178, %182 : vector<2x128xf32>
    %184 = arith.addi %4, %c3_i32 : i32
    %c2_i32_41 = arith.constant 2 : i32
    %185 = arith.cmpi sge, %184, %c2_i32_41 : i32
    %186 = arith.addi %4, %c3_i32 : i32
    %c18_i32_42 = arith.constant 18 : i32
    %187 = arith.cmpi slt, %186, %c18_i32_42 : i32
    %188 = arith.andi %185, %187 : i1
    %189 = arith.extui %188 : i1 to i32
    %190 = arith.sitofp %189 : i32 to f32
    %191 = vector.broadcast %190 : f32 to vector<2x128xf32>
    %192 = arith.mulf %191, %183 : vector<2x128xf32>
    %cst_43 = arith.constant 1.000000e+00 : f32
    %193 = arith.subf %cst_43, %190 : f32
    %194 = vector.broadcast %193 : f32 to vector<2x128xf32>
    %195 = arith.mulf %194, %147 : vector<2x128xf32>
    %196 = arith.addf %192, %195 : vector<2x128xf32>
    %197 = vector.broadcast %190 : f32 to vector<2x128xf32>
    %198 = arith.mulf %197, %181 : vector<2x128xf32>
    %cst_44 = arith.constant 1.000000e+00 : f32
    %199 = arith.subf %cst_44, %190 : f32
    %200 = vector.broadcast %199 : f32 to vector<2x128xf32>
    %201 = arith.mulf %200, %153 : vector<2x128xf32>
    %202 = arith.addf %198, %201 : vector<2x128xf32>
    %c4_i32 = arith.constant 4 : i32
    %203 = arith.index_cast %c4_i32 : i32 to index
    %c0_45 = arith.constant 0 : index
    %c0_46 = arith.constant 0 : index
    %204 = vector.load %arg2[%203, %c0_45, %c0_46] : memref<8x2x512xf32, #tpu.memory_space<vmem>>, vector<1x2x512xf32>
    %205 = vector.shape_cast %204 : vector<1x2x512xf32> to vector<2x512xf32>
    %cst_47 = arith.constant dense<0.000000e+00> : vector<2x512xf32>
    %206 = tpu.matmul %196, %3, %cst_47 {dimension_numbers = #tpu.dot_dimension_numbers<[1], [0], [0], [1], [0, 0, 1, 1], [], []>} : vector<2x128xf32>, vector<128x512xf32>, vector<2x512xf32> -> vector<2x512xf32>
    %207 = arith.addf %205, %206 : vector<2x512xf32>
    %208 = vector.extract_strided_slice %207 {offsets = [0, 0], sizes = [2, 128], strides = [1, 1]} : vector<2x512xf32> to vector<2x128xf32>
    %209 = arith.negf %208 : vector<2x128xf32>
    %210 = math.exp %209 : vector<2x128xf32>
    %cst_48 = arith.constant 1.000000e+00 : f32
    %211 = vector.broadcast %cst_48 : f32 to vector<2x128xf32>
    %212 = arith.addf %211, %210 : vector<2x128xf32>
    %213 = arith.divf %211, %212 : vector<2x128xf32>
    %214 = vector.extract_strided_slice %207 {offsets = [0, 128], sizes = [2, 128], strides = [1, 1]} : vector<2x512xf32> to vector<2x128xf32>
    %215 = arith.negf %214 : vector<2x128xf32>
    %216 = math.exp %215 : vector<2x128xf32>
    %cst_49 = arith.constant 1.000000e+00 : f32
    %217 = vector.broadcast %cst_49 : f32 to vector<2x128xf32>
    %218 = arith.addf %217, %216 : vector<2x128xf32>
    %219 = arith.divf %217, %218 : vector<2x128xf32>
    %220 = vector.extract_strided_slice %207 {offsets = [0, 256], sizes = [2, 128], strides = [1, 1]} : vector<2x512xf32> to vector<2x128xf32>
    %221 = math.tanh %220 : vector<2x128xf32>
    %222 = vector.extract_strided_slice %207 {offsets = [0, 384], sizes = [2, 128], strides = [1, 1]} : vector<2x512xf32> to vector<2x128xf32>
    %223 = arith.negf %222 : vector<2x128xf32>
    %224 = math.exp %223 : vector<2x128xf32>
    %cst_50 = arith.constant 1.000000e+00 : f32
    %225 = vector.broadcast %cst_50 : f32 to vector<2x128xf32>
    %226 = arith.addf %225, %224 : vector<2x128xf32>
    %227 = arith.divf %225, %226 : vector<2x128xf32>
    %228 = arith.mulf %219, %202 : vector<2x128xf32>
    %229 = arith.mulf %213, %221 : vector<2x128xf32>
    %230 = arith.addf %228, %229 : vector<2x128xf32>
    %231 = math.tanh %230 : vector<2x128xf32>
    %232 = arith.mulf %227, %231 : vector<2x128xf32>
    %233 = arith.addi %4, %c4_i32 : i32
    %c2_i32_51 = arith.constant 2 : i32
    %234 = arith.cmpi sge, %233, %c2_i32_51 : i32
    %235 = arith.addi %4, %c4_i32 : i32
    %c18_i32_52 = arith.constant 18 : i32
    %236 = arith.cmpi slt, %235, %c18_i32_52 : i32
    %237 = arith.andi %234, %236 : i1
    %238 = arith.extui %237 : i1 to i32
    %239 = arith.sitofp %238 : i32 to f32
    %240 = vector.broadcast %239 : f32 to vector<2x128xf32>
    %241 = arith.mulf %240, %232 : vector<2x128xf32>
    %cst_53 = arith.constant 1.000000e+00 : f32
    %242 = arith.subf %cst_53, %239 : f32
    %243 = vector.broadcast %242 : f32 to vector<2x128xf32>
    %244 = arith.mulf %243, %196 : vector<2x128xf32>
    %245 = arith.addf %241, %244 : vector<2x128xf32>
    %246 = vector.broadcast %239 : f32 to vector<2x128xf32>
    %247 = arith.mulf %246, %230 : vector<2x128xf32>
    %cst_54 = arith.constant 1.000000e+00 : f32
    %248 = arith.subf %cst_54, %239 : f32
    %249 = vector.broadcast %248 : f32 to vector<2x128xf32>
    %250 = arith.mulf %249, %202 : vector<2x128xf32>
    %251 = arith.addf %247, %250 : vector<2x128xf32>
    %c5_i32 = arith.constant 5 : i32
    %252 = arith.index_cast %c5_i32 : i32 to index
    %c0_55 = arith.constant 0 : index
    %c0_56 = arith.constant 0 : index
    %253 = vector.load %arg2[%252, %c0_55, %c0_56] : memref<8x2x512xf32, #tpu.memory_space<vmem>>, vector<1x2x512xf32>
    %254 = vector.shape_cast %253 : vector<1x2x512xf32> to vector<2x512xf32>
    %cst_57 = arith.constant dense<0.000000e+00> : vector<2x512xf32>
    %255 = tpu.matmul %245, %3, %cst_57 {dimension_numbers = #tpu.dot_dimension_numbers<[1], [0], [0], [1], [0, 0, 1, 1], [], []>} : vector<2x128xf32>, vector<128x512xf32>, vector<2x512xf32> -> vector<2x512xf32>
    %256 = arith.addf %254, %255 : vector<2x512xf32>
    %257 = vector.extract_strided_slice %256 {offsets = [0, 0], sizes = [2, 128], strides = [1, 1]} : vector<2x512xf32> to vector<2x128xf32>
    %258 = arith.negf %257 : vector<2x128xf32>
    %259 = math.exp %258 : vector<2x128xf32>
    %cst_58 = arith.constant 1.000000e+00 : f32
    %260 = vector.broadcast %cst_58 : f32 to vector<2x128xf32>
    %261 = arith.addf %260, %259 : vector<2x128xf32>
    %262 = arith.divf %260, %261 : vector<2x128xf32>
    %263 = vector.extract_strided_slice %256 {offsets = [0, 128], sizes = [2, 128], strides = [1, 1]} : vector<2x512xf32> to vector<2x128xf32>
    %264 = arith.negf %263 : vector<2x128xf32>
    %265 = math.exp %264 : vector<2x128xf32>
    %cst_59 = arith.constant 1.000000e+00 : f32
    %266 = vector.broadcast %cst_59 : f32 to vector<2x128xf32>
    %267 = arith.addf %266, %265 : vector<2x128xf32>
    %268 = arith.divf %266, %267 : vector<2x128xf32>
    %269 = vector.extract_strided_slice %256 {offsets = [0, 256], sizes = [2, 128], strides = [1, 1]} : vector<2x512xf32> to vector<2x128xf32>
    %270 = math.tanh %269 : vector<2x128xf32>
    %271 = vector.extract_strided_slice %256 {offsets = [0, 384], sizes = [2, 128], strides = [1, 1]} : vector<2x512xf32> to vector<2x128xf32>
    %272 = arith.negf %271 : vector<2x128xf32>
    %273 = math.exp %272 : vector<2x128xf32>
    %cst_60 = arith.constant 1.000000e+00 : f32
    %274 = vector.broadcast %cst_60 : f32 to vector<2x128xf32>
    %275 = arith.addf %274, %273 : vector<2x128xf32>
    %276 = arith.divf %274, %275 : vector<2x128xf32>
    %277 = arith.mulf %268, %251 : vector<2x128xf32>
    %278 = arith.mulf %262, %270 : vector<2x128xf32>
    %279 = arith.addf %277, %278 : vector<2x128xf32>
    %280 = math.tanh %279 : vector<2x128xf32>
    %281 = arith.mulf %276, %280 : vector<2x128xf32>
    %282 = arith.addi %4, %c5_i32 : i32
    %c2_i32_61 = arith.constant 2 : i32
    %283 = arith.cmpi sge, %282, %c2_i32_61 : i32
    %284 = arith.addi %4, %c5_i32 : i32
    %c18_i32_62 = arith.constant 18 : i32
    %285 = arith.cmpi slt, %284, %c18_i32_62 : i32
    %286 = arith.andi %283, %285 : i1
    %287 = arith.extui %286 : i1 to i32
    %288 = arith.sitofp %287 : i32 to f32
    %289 = vector.broadcast %288 : f32 to vector<2x128xf32>
    %290 = arith.mulf %289, %281 : vector<2x128xf32>
    %cst_63 = arith.constant 1.000000e+00 : f32
    %291 = arith.subf %cst_63, %288 : f32
    %292 = vector.broadcast %291 : f32 to vector<2x128xf32>
    %293 = arith.mulf %292, %245 : vector<2x128xf32>
    %294 = arith.addf %290, %293 : vector<2x128xf32>
    %295 = vector.broadcast %288 : f32 to vector<2x128xf32>
    %296 = arith.mulf %295, %279 : vector<2x128xf32>
    %cst_64 = arith.constant 1.000000e+00 : f32
    %297 = arith.subf %cst_64, %288 : f32
    %298 = vector.broadcast %297 : f32 to vector<2x128xf32>
    %299 = arith.mulf %298, %251 : vector<2x128xf32>
    %300 = arith.addf %296, %299 : vector<2x128xf32>
    %c6_i32 = arith.constant 6 : i32
    %301 = arith.index_cast %c6_i32 : i32 to index
    %c0_65 = arith.constant 0 : index
    %c0_66 = arith.constant 0 : index
    %302 = vector.load %arg2[%301, %c0_65, %c0_66] : memref<8x2x512xf32, #tpu.memory_space<vmem>>, vector<1x2x512xf32>
    %303 = vector.shape_cast %302 : vector<1x2x512xf32> to vector<2x512xf32>
    %cst_67 = arith.constant dense<0.000000e+00> : vector<2x512xf32>
    %304 = tpu.matmul %294, %3, %cst_67 {dimension_numbers = #tpu.dot_dimension_numbers<[1], [0], [0], [1], [0, 0, 1, 1], [], []>} : vector<2x128xf32>, vector<128x512xf32>, vector<2x512xf32> -> vector<2x512xf32>
    %305 = arith.addf %303, %304 : vector<2x512xf32>
    %306 = vector.extract_strided_slice %305 {offsets = [0, 0], sizes = [2, 128], strides = [1, 1]} : vector<2x512xf32> to vector<2x128xf32>
    %307 = arith.negf %306 : vector<2x128xf32>
    %308 = math.exp %307 : vector<2x128xf32>
    %cst_68 = arith.constant 1.000000e+00 : f32
    %309 = vector.broadcast %cst_68 : f32 to vector<2x128xf32>
    %310 = arith.addf %309, %308 : vector<2x128xf32>
    %311 = arith.divf %309, %310 : vector<2x128xf32>
    %312 = vector.extract_strided_slice %305 {offsets = [0, 128], sizes = [2, 128], strides = [1, 1]} : vector<2x512xf32> to vector<2x128xf32>
    %313 = arith.negf %312 : vector<2x128xf32>
    %314 = math.exp %313 : vector<2x128xf32>
    %cst_69 = arith.constant 1.000000e+00 : f32
    %315 = vector.broadcast %cst_69 : f32 to vector<2x128xf32>
    %316 = arith.addf %315, %314 : vector<2x128xf32>
    %317 = arith.divf %315, %316 : vector<2x128xf32>
    %318 = vector.extract_strided_slice %305 {offsets = [0, 256], sizes = [2, 128], strides = [1, 1]} : vector<2x512xf32> to vector<2x128xf32>
    %319 = math.tanh %318 : vector<2x128xf32>
    %320 = vector.extract_strided_slice %305 {offsets = [0, 384], sizes = [2, 128], strides = [1, 1]} : vector<2x512xf32> to vector<2x128xf32>
    %321 = arith.negf %320 : vector<2x128xf32>
    %322 = math.exp %321 : vector<2x128xf32>
    %cst_70 = arith.constant 1.000000e+00 : f32
    %323 = vector.broadcast %cst_70 : f32 to vector<2x128xf32>
    %324 = arith.addf %323, %322 : vector<2x128xf32>
    %325 = arith.divf %323, %324 : vector<2x128xf32>
    %326 = arith.mulf %317, %300 : vector<2x128xf32>
    %327 = arith.mulf %311, %319 : vector<2x128xf32>
    %328 = arith.addf %326, %327 : vector<2x128xf32>
    %329 = math.tanh %328 : vector<2x128xf32>
    %330 = arith.mulf %325, %329 : vector<2x128xf32>
    %331 = arith.addi %4, %c6_i32 : i32
    %c2_i32_71 = arith.constant 2 : i32
    %332 = arith.cmpi sge, %331, %c2_i32_71 : i32
    %333 = arith.addi %4, %c6_i32 : i32
    %c18_i32_72 = arith.constant 18 : i32
    %334 = arith.cmpi slt, %333, %c18_i32_72 : i32
    %335 = arith.andi %332, %334 : i1
    %336 = arith.extui %335 : i1 to i32
    %337 = arith.sitofp %336 : i32 to f32
    %338 = vector.broadcast %337 : f32 to vector<2x128xf32>
    %339 = arith.mulf %338, %330 : vector<2x128xf32>
    %cst_73 = arith.constant 1.000000e+00 : f32
    %340 = arith.subf %cst_73, %337 : f32
    %341 = vector.broadcast %340 : f32 to vector<2x128xf32>
    %342 = arith.mulf %341, %294 : vector<2x128xf32>
    %343 = arith.addf %339, %342 : vector<2x128xf32>
    %344 = vector.broadcast %337 : f32 to vector<2x128xf32>
    %345 = arith.mulf %344, %328 : vector<2x128xf32>
    %cst_74 = arith.constant 1.000000e+00 : f32
    %346 = arith.subf %cst_74, %337 : f32
    %347 = vector.broadcast %346 : f32 to vector<2x128xf32>
    %348 = arith.mulf %347, %300 : vector<2x128xf32>
    %349 = arith.addf %345, %348 : vector<2x128xf32>
    %c7_i32 = arith.constant 7 : i32
    %350 = arith.index_cast %c7_i32 : i32 to index
    %c0_75 = arith.constant 0 : index
    %c0_76 = arith.constant 0 : index
    %351 = vector.load %arg2[%350, %c0_75, %c0_76] : memref<8x2x512xf32, #tpu.memory_space<vmem>>, vector<1x2x512xf32>
    %352 = vector.shape_cast %351 : vector<1x2x512xf32> to vector<2x512xf32>
    %cst_77 = arith.constant dense<0.000000e+00> : vector<2x512xf32>
    %353 = tpu.matmul %343, %3, %cst_77 {dimension_numbers = #tpu.dot_dimension_numbers<[1], [0], [0], [1], [0, 0, 1, 1], [], []>} : vector<2x128xf32>, vector<128x512xf32>, vector<2x512xf32> -> vector<2x512xf32>
    %354 = arith.addf %352, %353 : vector<2x512xf32>
    %355 = vector.extract_strided_slice %354 {offsets = [0, 0], sizes = [2, 128], strides = [1, 1]} : vector<2x512xf32> to vector<2x128xf32>
    %356 = arith.negf %355 : vector<2x128xf32>
    %357 = math.exp %356 : vector<2x128xf32>
    %cst_78 = arith.constant 1.000000e+00 : f32
    %358 = vector.broadcast %cst_78 : f32 to vector<2x128xf32>
    %359 = arith.addf %358, %357 : vector<2x128xf32>
    %360 = arith.divf %358, %359 : vector<2x128xf32>
    %361 = vector.extract_strided_slice %354 {offsets = [0, 128], sizes = [2, 128], strides = [1, 1]} : vector<2x512xf32> to vector<2x128xf32>
    %362 = arith.negf %361 : vector<2x128xf32>
    %363 = math.exp %362 : vector<2x128xf32>
    %cst_79 = arith.constant 1.000000e+00 : f32
    %364 = vector.broadcast %cst_79 : f32 to vector<2x128xf32>
    %365 = arith.addf %364, %363 : vector<2x128xf32>
    %366 = arith.divf %364, %365 : vector<2x128xf32>
    %367 = vector.extract_strided_slice %354 {offsets = [0, 256], sizes = [2, 128], strides = [1, 1]} : vector<2x512xf32> to vector<2x128xf32>
    %368 = math.tanh %367 : vector<2x128xf32>
    %369 = vector.extract_strided_slice %354 {offsets = [0, 384], sizes = [2, 128], strides = [1, 1]} : vector<2x512xf32> to vector<2x128xf32>
    %370 = arith.negf %369 : vector<2x128xf32>
    %371 = math.exp %370 : vector<2x128xf32>
    %cst_80 = arith.constant 1.000000e+00 : f32
    %372 = vector.broadcast %cst_80 : f32 to vector<2x128xf32>
    %373 = arith.addf %372, %371 : vector<2x128xf32>
    %374 = arith.divf %372, %373 : vector<2x128xf32>
    %375 = arith.mulf %366, %349 : vector<2x128xf32>
    %376 = arith.mulf %360, %368 : vector<2x128xf32>
    %377 = arith.addf %375, %376 : vector<2x128xf32>
    %378 = math.tanh %377 : vector<2x128xf32>
    %379 = arith.mulf %374, %378 : vector<2x128xf32>
    %380 = arith.addi %4, %c7_i32 : i32
    %c2_i32_81 = arith.constant 2 : i32
    %381 = arith.cmpi sge, %380, %c2_i32_81 : i32
    %382 = arith.addi %4, %c7_i32 : i32
    %c18_i32_82 = arith.constant 18 : i32
    %383 = arith.cmpi slt, %382, %c18_i32_82 : i32
    %384 = arith.andi %381, %383 : i1
    %385 = arith.extui %384 : i1 to i32
    %386 = arith.sitofp %385 : i32 to f32
    %387 = vector.broadcast %386 : f32 to vector<2x128xf32>
    %388 = arith.mulf %387, %379 : vector<2x128xf32>
    %cst_83 = arith.constant 1.000000e+00 : f32
    %389 = arith.subf %cst_83, %386 : f32
    %390 = vector.broadcast %389 : f32 to vector<2x128xf32>
    %391 = arith.mulf %390, %343 : vector<2x128xf32>
    %392 = arith.addf %388, %391 : vector<2x128xf32>
    %393 = vector.broadcast %386 : f32 to vector<2x128xf32>
    %394 = arith.mulf %393, %377 : vector<2x128xf32>
    %cst_84 = arith.constant 1.000000e+00 : f32
    %395 = arith.subf %cst_84, %386 : f32
    %396 = vector.broadcast %395 : f32 to vector<2x128xf32>
    %397 = arith.mulf %396, %349 : vector<2x128xf32>
    %398 = arith.addf %394, %397 : vector<2x128xf32>
    %c8_i32_85 = arith.constant 8 : i32
    %c0_86 = arith.constant 0 : index
    %c0_87 = arith.constant 0 : index
    %399 = vector.load %arg7[%c0_86, %c0_87] : memref<2x128xf32, #tpu.memory_space<vmem>>, vector<2x128xf32>
    tpu.vector_store %arg7[%c0_86, %c0_87], %392 {strides = array<i32>} : memref<2x128xf32, #tpu.memory_space<vmem>>, vector<2x128xf32>,
    %c0_88 = arith.constant 0 : index
    %c0_89 = arith.constant 0 : index
    %400 = vector.load %arg8[%c0_88, %c0_89] : memref<2x128xf32, #tpu.memory_space<vmem>>, vector<2x128xf32>
    tpu.vector_store %arg8[%c0_88, %c0_89], %398 {strides = array<i32>} : memref<2x128xf32, #tpu.memory_space<vmem>>, vector<2x128xf32>,
    %c2_i32_90 = arith.constant 2 : i32
    %401 = arith.cmpi eq, %arg1, %c2_i32_90 : i32
    %402 = arith.extui %401 : i1 to i32
    %c0_i32_91 = arith.constant 0 : i32
    %403 = arith.cmpi ne, %402, %c0_i32_91 : i32
    scf.if %403 {
      %c0_92 = arith.constant 0 : index
      %c0_93 = arith.constant 0 : index
      %404 = vector.load %arg4[%c0_92, %c0_93] : memref<128x128xf32, #tpu.memory_space<vmem>>, vector<128x128xf32>
      %cst_94 = arith.constant dense<0.000000e+00> : vector<2x128xf32>
      %405 = tpu.matmul %398, %404, %cst_94 {dimension_numbers = #tpu.dot_dimension_numbers<[1], [0], [0], [1], [0, 0, 1, 1], [], []>} : vector<2x128xf32>, vector<128x128xf32>, vector<2x128xf32> -> vector<2x128xf32>
      %c0_95 = arith.constant 0 : index
      %c0_96 = arith.constant 0 : index
      %406 = vector.load %arg5[%c0_95, %c0_96] : memref<1x128xf32, #tpu.memory_space<vmem>>, vector<1x128xf32>
      %407 = vector.broadcast %406 : vector<1x128xf32> to vector<2x128xf32>
      %408 = arith.addf %405, %407 : vector<2x128xf32>
      %c0_97 = arith.constant 0 : index
      %c0_98 = arith.constant 0 : index
      %409 = vector.load %arg6[%c0_97, %c0_98] : memref<2x128xf32, #tpu.memory_space<vmem>>, vector<2x128xf32>
      tpu.vector_store %arg6[%c0_97, %c0_98], %408 {strides = array<i32>} : memref<2x128xf32, #tpu.memory_space<vmem>>, vector<2x128xf32>,
    } else {
    }
    return
  }
  func.func @transform_0(%arg0: i32, %arg1: i32) -> (i32, i32, i32) {
    %c0_i32 = arith.constant 0 : i32
    %c0_i32_0 = arith.constant 0 : i32
    return %arg1, %arg0, %c0_i32 : i32, i32, i32
  }
  func.func @transform_1(%arg0: i32, %arg1: i32) -> (i32, i32) {
    %c0_i32 = arith.constant 0 : i32
    %c0_i32_0 = arith.constant 0 : i32
    %c0_i32_1 = arith.constant 0 : i32
    return %c0_i32, %c0_i32_0 : i32, i32
  }
  func.func @transform_2(%arg0: i32, %arg1: i32) -> (i32, i32) {
    %c0_i32 = arith.constant 0 : i32
    %c0_i32_0 = arith.constant 0 : i32
    %c0_i32_1 = arith.constant 0 : i32
    return %c0_i32, %c0_i32_0 : i32, i32
  }
  func.func @transform_3(%arg0: i32, %arg1: i32) -> (i32, i32) {
    %c0_i32 = arith.constant 0 : i32
    %c0_i32_0 = arith.constant 0 : i32
    %c0_i32_1 = arith.constant 0 : i32
    return %c0_i32, %c0_i32_0 : i32, i32
  }
  func.func @transform_4(%arg0: i32, %arg1: i32) -> (i32, i32) {
    %c0_i32 = arith.constant 0 : i32
    %c0_i32_0 = arith.constant 0 : i32
    return %arg0, %c0_i32 : i32, i32
  }
}

</mosaic_0001>

<llo_original>
// kernel: network_forward.3
$region0: #{network_forward.3}
  #allocation0 [shape = 'u32[]', space=smem, size = 0x4, offset = 0x4, fixed_abs, tag = 'smem constant byte address 0x4 - core index']
  #allocation1 [shape = 'u32[72,128]{1,0:T(1,128)}', space=vmem, size = 0x9000, scoped, tag = 'internal scratch']
  #allocation2 [shape = 'f32[2,128]{1,0:T(2,128)}', space=vmem, size = 0x400, scoped, tag = 'scratch operand']
  #allocation3 [shape = 'f32[2,128]{1,0:T(2,128)}', space=vmem, size = 0x400, scoped, tag = 'scratch operand']
  %s0 = inlined_call_operand.vmem [shape: f32[24,2,512], index: 0, kind: input, shape index: {}]
  %s1 = inlined_call_operand.vmem [shape: f32[128,512], index: 1, kind: input, shape index: {}]
  %s2 = inlined_call_operand.vmem [shape: f32[128,128], index: 2, kind: input, shape index: {}]
  %s3 = inlined_call_operand.vmem [shape: f32[1,128], index: 3, kind: input, shape index: {}]
  %s4 = inlined_call_operand.hbm [shape: f32[2,128], index: 4, kind: output, shape index: {}]
  %s5 = sld [smem:[#allocation0]]
  $region57: #{network_forward.3} parent=0
    _
  %s7 = ssub.s32 1, %s5
  %s8 = scalar_select 0, %s7, %s5
  $region1: #{network_forward.3} parent=0
    #allocation4 [shape = 'u8[1024]{0}', space=vmem, size = 0x400, scoped, tag = 'output window, operand 0, single buffered']
    #allocation5 [shape = 's32[2]{0}', space=sflag, size = 0x8, scoped, tag = 'scoped memory for network_forward.3']
    %9 = vsyncpa [#allocation5], 0
    loop: start=0, step=1, limit=5
    $region2: #{network_forward.3} parent=1 // loop_pre_header
      _
    $region3: #{network_forward.3} parent=1 // loop_header
      %s11 = sphi 0, %s15
      %p12 = scmp.ge.s32.totalorder %s11, 5
      %s18 = sphi 0, %s30
      %s19 = sphi 0, %s26
      %s20 = sphi 0, %s18
      %s21 = sphi 0, %s19
      %s22 = sphi 0, %s20
      %s23 = sphi 0, %s21
      %s35 = sphi 0, %s37
      %s38 = sphi 0, %s35
      %s39 = sphi 0, %s38
      %s55 = sphi 0, %s39
      %s59 = sphi 0, %s59
      %s61 = sphi 0, %s59
      %s62 = sphi 0, %s61
      %s76 = sphi 0, %s62
      %s80 = sphi 0, %s80
      %s82 = sphi 0, %s80
      %s83 = sphi 0, %s82
      %s97 = sphi 0, %s83
      %s101 = sphi 0, %s101
      %s103 = sphi 0, %s101
      %s104 = sphi 0, %s103
      %s118 = sphi 0, %s104
      %s124 = sphi 0, %s126
      %s127 = sphi 0, %s124
      %s128 = sphi 0, %s127
      %s144 = sphi 0, %s128
    $region4: #{network_forward.3} parent=1 // loop_header_branch
      %14 = sbr.rel (%p12) target = $region8
    $region5: #{network_forward.3} parent=1 // loop_body
      %s16 = ssub.s32 %s11, 1
      %s17 = ssub.s32 %s11, 2
      %s24 = sadd.s32 1, %s19
      %p25 = scmp.ge.s32.totalorder %s24, 3
      %s26 = scalar_select %p25, 0, %s24
      %s27 = sadd.s32 1, %s18
      %s28 = scalar_select %p25, %s27, %s18
      %p29 = scmp.ge.s32.totalorder %s28, 1
      %s30 = scalar_select %p29, 0, %s28
      %s31 = ssub.s32 %s19, %s26
      %s32 = ssub.s32 %s18, %s30
      %s33 = sor.u32 %s31, %s32
      %p34 = scmp.eq.s32.totalorder %s33, 0
      %s36 = sadd.s32 %s35, 1
      %s37 = scalar_select %p34, %s35, %s36
      %p40 = pneg %p34
      %p41 = scmp.eq.s32.totalorder %s11, 2
      %p42 = por %p40, %p41
      %p43 = scmp.ne.s32.totalorder %s35, %s38
      %p44 = scmp.eq.s32.totalorder %s11, 0
      %p45 = por %p43, %p44
      %p46 = scmp.ne.s32.totalorder %s35, %s38
      %p47 = scmp.eq.s32.totalorder %s16, 2
      %p48 = por %p46, %p47
      %p49 = scmp.ne.s32.totalorder %s38, %s39
      %p50 = scmp.eq.s32.totalorder %s16, 0
      %p51 = por %p49, %p50
      %p52 = scmp.ne.s32.totalorder %s38, %s39
      %p53 = scmp.eq.s32.totalorder %s17, 2
      %p54 = por %p52, %p53
      %p56 = scmp.ne.s32.totalorder %s39, %s55
      %p57 = scmp.eq.s32.totalorder %s17, 0
      %p58 = por %p56, %p57
      %s60 = sadd.s32 %s59, 1
      %p63 = scmp.eq.s32.totalorder %s11, 2
      %p64 = scmp.ne.s32.totalorder %s59, %s61
      %p65 = scmp.eq.s32.totalorder %s11, 0
      %p66 = por %p64, %p65
      %p67 = scmp.ne.s32.totalorder %s59, %s61
      %p68 = scmp.eq.s32.totalorder %s16, 2
      %p69 = por %p67, %p68
      %p70 = scmp.ne.s32.totalorder %s61, %s62
      %p71 = scmp.eq.s32.totalorder %s16, 0
      %p72 = por %p70, %p71
      %p73 = scmp.ne.s32.totalorder %s61, %s62
      %p74 = scmp.eq.s32.totalorder %s17, 2
      %p75 = por %p73, %p74
      %p77 = scmp.ne.s32.totalorder %s62, %s76
      %p78 = scmp.eq.s32.totalorder %s17, 0
      %p79 = por %p77, %p78
      %s81 = sadd.s32 %s80, 1
      %p84 = scmp.eq.s32.totalorder %s11, 2
      %p85 = scmp.ne.s32.totalorder %s80, %s82
      %p86 = scmp.eq.s32.totalorder %s11, 0
      %p87 = por %p85, %p86
      %p88 = scmp.ne.s32.totalorder %s80, %s82
      %p89 = scmp.eq.s32.totalorder %s16, 2
      %p90 = por %p88, %p89
      %p91 = scmp.ne.s32.totalorder %s82, %s83
      %p92 = scmp.eq.s32.totalorder %s16, 0
      %p93 = por %p91, %p92
      %p94 = scmp.ne.s32.totalorder %s82, %s83
      %p95 = scmp.eq.s32.totalorder %s17, 2
      %p96 = por %p94, %p95
      %p98 = scmp.ne.s32.totalorder %s83, %s97
      %p99 = scmp.eq.s32.totalorder %s17, 0
      %p100 = por %p98, %p99
      %s102 = sadd.s32 %s101, 1
      %p105 = scmp.eq.s32.totalorder %s11, 2
      %p106 = scmp.ne.s32.totalorder %s101, %s103
      %p107 = scmp.eq.s32.totalorder %s11, 0
      %p108 = por %p106, %p107
      %p109 = scmp.ne.s32.totalorder %s101, %s103
      %p110 = scmp.eq.s32.totalorder %s16, 2
      %p111 = por %p109, %p110
      %p112 = scmp.ne.s32.totalorder %s103, %s104
      %p113 = scmp.eq.s32.totalorder %s16, 0
      %p114 = por %p112, %p113
      %p115 = scmp.ne.s32.totalorder %s103, %s104
      %p116 = scmp.eq.s32.totalorder %s17, 2
      %p117 = por %p115, %p116
      %p119 = scmp.ne.s32.totalorder %s104, %s118
      %p120 = scmp.eq.s32.totalorder %s17, 0
      %p121 = por %p119, %p120
      %s122 = ssub.s32 %s18, %s30
      %p123 = scmp.eq.s32.totalorder %s122, 0
      %s125 = sadd.s32 %s124, 1
      %s126 = scalar_select %p123, %s124, %s125
      %p129 = pneg %p123
      %p130 = scmp.eq.s32.totalorder %s11, 2
      %p131 = por %p129, %p130
      %p132 = scmp.ne.s32.totalorder %s124, %s127
      %p133 = scmp.eq.s32.totalorder %s11, 0
      %p134 = por %p132, %p133
      %p135 = scmp.ne.s32.totalorder %s124, %s127
      %p136 = scmp.eq.s32.totalorder %s16, 2
      %p137 = por %p135, %p136
      %p138 = scmp.ne.s32.totalorder %s127, %s128
      %p139 = scmp.eq.s32.totalorder %s16, 0
      %p140 = por %p138, %p139
      %p141 = scmp.ne.s32.totalorder %s127, %s128
      %p142 = scmp.eq.s32.totalorder %s17, 2
      %p143 = por %p141, %p142
      %p145 = scmp.ne.s32.totalorder %s128, %s144
      %p146 = scmp.eq.s32.totalorder %s17, 0
      %p147 = por %p145, %p146
      %p148 = scmp.le.s32.totalorder 1, %s11
      %p149 = scmp.lt.s32.totalorder %s11, 4
      %p150 = pnand %p148, %p149
      %p151 = pneg %p150
      // Predicated region
      $region9: #{network_forward.3} parent=5 // pred_check
        _
      $region10: #{network_forward.3} parent=5 // pred_check_branch
        %153 = sbr.rel (%p150) target = $region12
      $region11: #{network_forward.3} parent=5 // pred_region
        %s154 = ssub.s32 %s11, 1
        // Predicated region
        $region13: #{network_forward.3} parent=11 // pred_check
          %p155 = pneg %p72
        $region14: #{network_forward.3} parent=11 // pred_check_branch
          %157 = sbr.rel (%p155) target = $region16
        $region15: #{network_forward.3} parent=11 // pred_region
          _
        $region16: #{network_forward.3} parent=11 // pred_fallthru
          _
        // Predicated region
        $region17: #{network_forward.3} parent=11 // pred_check
          %p158 = pneg %p93
        $region18: #{network_forward.3} parent=11 // pred_check_branch
          %160 = sbr.rel (%p158) target = $region20
        $region19: #{network_forward.3} parent=11 // pred_region
          _
        $region20: #{network_forward.3} parent=11 // pred_fallthru
          _
        // Predicated region
        $region21: #{network_forward.3} parent=11 // pred_check
          %p161 = pneg %p114
        $region22: #{network_forward.3} parent=11 // pred_check_branch
          %163 = sbr.rel (%p161) target = $region24
        $region23: #{network_forward.3} parent=11 // pred_region
          _
        $region24: #{network_forward.3} parent=11 // pred_fallthru
          _
      $region12: #{network_forward.3} parent=5 // pred_fallthru
        _
      %p164 = scmp.lt.s32.totalorder %s11, 3
      // Predicated region
      $region25: #{network_forward.3} parent=5 // pred_check
        %p165 = pneg %p164
      $region26: #{network_forward.3} parent=5 // pred_check_branch
        %167 = sbr.rel (%p165) target = $region28
      $region27: #{network_forward.3} parent=5 // pred_region
        // Predicated region
        $region29: #{network_forward.3} parent=27 // pred_check
          %p168 = pneg %p45
        $region30: #{network_forward.3} parent=27 // pred_check_branch
          %170 = sbr.rel (%p168) target = $region32
        $region31: #{network_forward.3} parent=27 // pred_region
          %s171 = smul.u32 8, %s19
          %p172 = scmp.lt.s32.totalorder %s171, 23
          %s173 = scalar_select %p172, %s171, 23
          %p174 = scmp.lt.s32.totalorder %s18, 0
          %s175 = scalar_select %p174, %s18, 0
          %s176 = smul.addr %s175, 4
          %s177 = smul.addr %s173, 4
          %s178 = sadd.s32 %s176, %s177
          %s179 = smul.addr %s178, 2
          %s180 = scalar_lea.vmem %s0, %s179
          %s181 = smul.u32 8, %s19
        $region32: #{network_forward.3} parent=27 // pred_fallthru
          _
      $region28: #{network_forward.3} parent=5 // pred_fallthru
        _
      %p182 = scmp.le.s32.totalorder 1, %s11
      %p183 = scmp.lt.s32.totalorder %s11, 4
      %p184 = pnand %p182, %p183
      %p185 = pneg %p184
      // Predicated region
      $region33: #{network_forward.3} parent=5 // pred_check
        _
      $region34: #{network_forward.3} parent=5 // pred_check_branch
        %187 = sbr.rel (%p184) target = $region36
      $region35: #{network_forward.3} parent=5 // pred_region
        %s188 = ssub.s32 %s11, 1
        %s189 = smul.u32 8, %s21
        %p190 = scmp.lt.s32.totalorder %s189, 23
        %s191 = scalar_select %p190, %s189, 23
        %p192 = scmp.lt.s32.totalorder %s20, 0
        %s193 = scalar_select %p192, %s20, 0
        %s194 = smul.addr %s193, 4
        %s195 = smul.addr %s191, 4
        %s196 = sadd.s32 %s194, %s195
        %s197 = smul.addr %s196, 2
        %s198 = scalar_lea.vmem %s0, %s197
        %p199 = pneg %p51
        %p200 = pneg %p48
        %p201 = pneg %p72
        %p202 = pneg %p69
        %p203 = pneg %p93
        %p204 = pneg %p90
        %p205 = pneg %p114
        %p206 = pneg %p111
        %p207 = pneg %p140
        %p208 = pneg %p137
        %s209 = smul.u32 8, %s21
        %p210 = scmp.lt.s32.totalorder %s209, 23
        %s211 = scalar_select %p210, %s209, 23
        %p212 = scmp.lt.s32.totalorder %s20, 0
        %s213 = scalar_select %p212, %s20, 0
        %s214 = smul.addr %s213, 4
        %s215 = smul.addr %s211, 4
        %s216 = sadd.s32 %s214, %s215
        %s217 = smul.addr %s216, 2
        %s218 = scalar_lea.vmem %s0, %s217
        %s219 = smul.u32 8, %s21
        %p220 = scmp.eq.s32.totalorder %s21, 0
        // Predicated region
        $region37: #{network_forward.3} parent=35 // pred_check
          %p221 = pneg %p220
        $region38: #{network_forward.3} parent=35 // pred_check_branch
          %223 = sbr.rel (%p221) target = $region40
        $region39: #{network_forward.3} parent=35 // pred_region
          %224 = vst [vmem:[#allocation2] sm:$0x3] 0.0
          %225 = vst [vmem:[#allocation3] sm:$0x3] 0.0
        $region40: #{network_forward.3} parent=35 // pred_fallthru
          _
        %v226 = vld [vmem:[%s1] sm:$0xff]
        %v227 = vld [vmem:[%s1 + $0x8] sm:$0xff]
        %v228 = vld [vmem:[%s1 + $0x10] sm:$0xff]
        %v229 = vld [vmem:[%s1 + $0x18] sm:$0xff]
        %v230 = vld [vmem:[%s1 + $0x20] sm:$0xff]
        %v231 = vld [vmem:[%s1 + $0x28] sm:$0xff]
        %v232 = vld [vmem:[%s1 + $0x30] sm:$0xff]
        %v233 = vld [vmem:[%s1 + $0x38] sm:$0xff]
        %v234 = vld [vmem:[%s1 + $0x40] sm:$0xff]
        %v235 = vld [vmem:[%s1 + $0x48] sm:$0xff]
        %v236 = vld [vmem:[%s1 + $0x50] sm:$0xff]
        %v237 = vld [vmem:[%s1 + $0x58] sm:$0xff]
        %v238 = vld [vmem:[%s1 + $0x60] sm:$0xff]
        %v239 = vld [vmem:[%s1 + $0x68] sm:$0xff]
        %v240 = vld [vmem:[%s1 + $0x70] sm:$0xff]
        %v241 = vld [vmem:[%s1 + $0x78] sm:$0xff]
        %v242 = vld [vmem:[%s1 + $0x80] sm:$0xff]
        %v243 = vld [vmem:[%s1 + $0x88] sm:$0xff]
        %v244 = vld [vmem:[%s1 + $0x90] sm:$0xff]
        %v245 = vld [vmem:[%s1 + $0x98] sm:$0xff]
        %v246 = vld [vmem:[%s1 + $0xa0] sm:$0xff]
        %v247 = vld [vmem:[%s1 + $0xa8] sm:$0xff]
        %v248 = vld [vmem:[%s1 + $0xb0] sm:$0xff]
        %v249 = vld [vmem:[%s1 + $0xb8] sm:$0xff]
        %v250 = vld [vmem:[%s1 + $0xc0] sm:$0xff]
        %v251 = vld [vmem:[%s1 + $0xc8] sm:$0xff]
        %v252 = vld [vmem:[%s1 + $0xd0] sm:$0xff]
        %v253 = vld [vmem:[%s1 + $0xd8] sm:$0xff]
        %v254 = vld [vmem:[%s1 + $0xe0] sm:$0xff]
        %v255 = vld [vmem:[%s1 + $0xe8] sm:$0xff]
        %v256 = vld [vmem:[%s1 + $0xf0] sm:$0xff]
        %v257 = vld [vmem:[%s1 + $0xf8] sm:$0xff]
        %v258 = vld [vmem:[%s1 + $0x100] sm:$0xff]
        %v259 = vld [vmem:[%s1 + $0x108] sm:$0xff]
        %v260 = vld [vmem:[%s1 + $0x110] sm:$0xff]
        %v261 = vld [vmem:[%s1 + $0x118] sm:$0xff]
        %v262 = vld [vmem:[%s1 + $0x120] sm:$0xff]
        %v263 = vld [vmem:[%s1 + $0x128] sm:$0xff]
        %v264 = vld [vmem:[%s1 + $0x130] sm:$0xff]
        %v265 = vld [vmem:[%s1 + $0x138] sm:$0xff]
        %v266 = vld [vmem:[%s1 + $0x140] sm:$0xff]
        %v267 = vld [vmem:[%s1 + $0x148] sm:$0xff]
        %v268 = vld [vmem:[%s1 + $0x150] sm:$0xff]
        %v269 = vld [vmem:[%s1 + $0x158] sm:$0xff]
        %v270 = vld [vmem:[%s1 + $0x160] sm:$0xff]
        %v271 = vld [vmem:[%s1 + $0x168] sm:$0xff]
        %v272 = vld [vmem:[%s1 + $0x170] sm:$0xff]
        %v273 = vld [vmem:[%s1 + $0x178] sm:$0xff]
        %v274 = vld [vmem:[%s1 + $0x180] sm:$0xff]
        %v275 = vld [vmem:[%s1 + $0x188] sm:$0xff]
        %v276 = vld [vmem:[%s1 + $0x190] sm:$0xff]
        %v277 = vld [vmem:[%s1 + $0x198] sm:$0xff]
        %v278 = vld [vmem:[%s1 + $0x1a0] sm:$0xff]
        %v279 = vld [vmem:[%s1 + $0x1a8] sm:$0xff]
        %v280 = vld [vmem:[%s1 + $0x1b0] sm:$0xff]
        %v281 = vld [vmem:[%s1 + $0x1b8] sm:$0xff]
        %v282 = vld [vmem:[%s1 + $0x1c0] sm:$0xff]
        %v283 = vld [vmem:[%s1 + $0x1c8] sm:$0xff]
        %v284 = vld [vmem:[%s1 + $0x1d0] sm:$0xff]
        %v285 = vld [vmem:[%s1 + $0x1d8] sm:$0xff]
        %v286 = vld [vmem:[%s1 + $0x1e0] sm:$0xff]
        %v287 = vld [vmem:[%s1 + $0x1e8] sm:$0xff]
        %v288 = vld [vmem:[%s1 + $0x1f0] sm:$0xff]
        %v289 = vld [vmem:[%s1 + $0x1f8] sm:$0xff]
        %s290 = smul.u32 %s21, 8
        %v291 = vld [vmem:[#allocation2] sm:$0x3]
        %v292 = vld [vmem:[#allocation3] sm:$0x3]
        %v293 = vld [vmem:[%s218] sm:$0xff]
        %294 = vmatpush.msra.mxu0 %v286
        %295 = vmatpush.msra.mxu0 %v282
        %296 = vmatpush.msra.mxu0 %v278
        %297 = vmatpush.msra.mxu0 %v274
        %298 = vmatpush.msra.mxu0 %v270
        %299 = vmatpush.msra.mxu0 %v266
        %300 = vmatpush.msra.mxu0 %v262
        %301 = vmatpush.msra.mxu0 %v258
        %302 = vmatpush.msra.mxu0 %v254
        %303 = vmatpush.msra.mxu0 %v250
        %304 = vmatpush.msra.mxu0 %v246
        %305 = vmatpush.msra.mxu0 %v242
        %306 = vmatpush.msra.mxu0 %v238
        %307 = vmatpush.msra.mxu0 %v234
        %308 = vmatpush.msra.mxu0 %v230
        %309 = vmatpush.msra.mxu0 %v226
        %310 = vmatmul.f32.gmra.mxu0 %v291
        %v311 = vpop.f32.mrf.mxu0
        %v312 = vadd.f32 0.0, %v311
        %313 = vdwg.mxu0
        %314 = vmatpush.msra.mxu0 %v287
        %315 = vmatpush.msra.mxu0 %v283
        %316 = vmatpush.msra.mxu0 %v279
        %317 = vmatpush.msra.mxu0 %v275
        %318 = vmatpush.msra.mxu0 %v271
        %319 = vmatpush.msra.mxu0 %v267
        %320 = vmatpush.msra.mxu0 %v263
        %321 = vmatpush.msra.mxu0 %v259
        %322 = vmatpush.msra.mxu0 %v255
        %323 = vmatpush.msra.mxu0 %v251
        %324 = vmatpush.msra.mxu0 %v247
        %325 = vmatpush.msra.mxu0 %v243
        %326 = vmatpush.msra.mxu0 %v239
        %327 = vmatpush.msra.mxu0 %v235
        %328 = vmatpush.msra.mxu0 %v231
        %329 = vmatpush.msra.mxu0 %v227
        %330 = vmatmul.f32.gmra.mxu0 %v291
        %v331 = vpop.f32.mrf.mxu0
        %v332 = vadd.f32 0.0, %v331
        %333 = vdwg.mxu0
        %334 = vmatpush.msra.mxu0 %v288
        %335 = vmatpush.msra.mxu0 %v284
        %336 = vmatpush.msra.mxu0 %v280
        %337 = vmatpush.msra.mxu0 %v276
        %338 = vmatpush.msra.mxu0 %v272
        %339 = vmatpush.msra.mxu0 %v268
        %340 = vmatpush.msra.mxu0 %v264
        %341 = vmatpush.msra.mxu0 %v260
        %342 = vmatpush.msra.mxu0 %v256
        %343 = vmatpush.msra.mxu0 %v252
        %344 = vmatpush.msra.mxu0 %v248
        %345 = vmatpush.msra.mxu0 %v244
        %346 = vmatpush.msra.mxu0 %v240
        %347 = vmatpush.msra.mxu0 %v236
        %348 = vmatpush.msra.mxu0 %v232
        %349 = vmatpush.msra.mxu0 %v228
        %350 = vmatmul.f32.gmra.mxu0 %v291
        %v351 = vpop.f32.mrf.mxu0
        %v352 = vadd.f32 0.0, %v351
        %353 = vdwg.mxu0
        %354 = vmatpush.msra.mxu0 %v289
        %355 = vmatpush.msra.mxu0 %v285
        %356 = vmatpush.msra.mxu0 %v281
        %357 = vmatpush.msra.mxu0 %v277
        %358 = vmatpush.msra.mxu0 %v273
        %359 = vmatpush.msra.mxu0 %v269
        %360 = vmatpush.msra.mxu0 %v265
        %361 = vmatpush.msra.mxu0 %v261
        %362 = vmatpush.msra.mxu0 %v257
        %363 = vmatpush.msra.mxu0 %v253
        %364 = vmatpush.msra.mxu0 %v249
        %365 = vmatpush.msra.mxu0 %v245
        %366 = vmatpush.msra.mxu0 %v241
        %367 = vmatpush.msra.mxu0 %v237
        %368 = vmatpush.msra.mxu0 %v233
        %369 = vmatpush.msra.mxu0 %v229
        %370 = vmatmul.f32.gmra.mxu0 %v291
        %v371 = vpop.f32.mrf.mxu0
        %v372 = vadd.f32 0.0, %v371
        %373 = vdwg.mxu0
        %v378 = vrot.slane %v332, 6
        %v379 = vrot.slane %v352, 4
        %v380 = vrot.slane %v372, 2
        %vm381 = vcmask 1041408
        %v382 = vsel %vm381, %v312, %v378
        %vm383 = vcmask 1045508
        %v384 = vsel %vm383, %v379, %v380
        %vm385 = vcmask 1043456
        %v386 = vsel %vm385, %v382, %v384
        %v388 = vadd.f32 %v293, %v386
        %v389 = vxor.u32 %v388, 2147483648
        %v390 = vmul.f32 %v389, 1.442695
        %v391 = vpow.pop %v390
        %v392 = vadd.f32 %v391, 1.0
        %v393 = vrcp.pop %v392
        %v394 = vmul.f32 %v392, %v393
        %v395 = vsub.f32 1.0, %v394
        %v396 = vmul.f32 %v393, %v395
        %v397 = vadd.f32 %v393, %v396
        %vm398 = vweird.f32 %v392
        %vm399 = vweird.f32 %v393
        %vm400 = vmor %vm398, %vm399
        %v401 = vsel %vm400, %v393, %v397
        %v402 = vand.u32 2147483647, %v392
        %vm403 = vcmp.eq.f32.partialorder %v402, 8.507059e+37
        %v404 = vand.u32 %v392, 2147483648
        %v405 = vor.u32 1.1754944e-38, %v404
        %v406 = vsel %vm403, %v405, %v401
        %v407 = vmul.f32 1.0, %v406
        %v409 = vrot.slane %v388, 2
        %v411 = vxor.u32 %v409, 2147483648
        %v412 = vmul.f32 %v411, 1.442695
        %v413 = vpow.pop %v412
        %v414 = vadd.f32 %v413, 1.0
        %v415 = vrcp.pop %v414
        %v416 = vmul.f32 %v414, %v415
        %v417 = vsub.f32 1.0, %v416
        %v418 = vmul.f32 %v415, %v417
        %v419 = vadd.f32 %v415, %v418
        %vm420 = vweird.f32 %v414
        %vm421 = vweird.f32 %v415
        %vm422 = vmor %vm420, %vm421
        %v423 = vsel %vm422, %v415, %v419
        %v424 = vand.u32 2147483647, %v414
        %vm425 = vcmp.eq.f32.partialorder %v424, 8.507059e+37
        %v426 = vand.u32 %v414, 2147483648
        %v427 = vor.u32 1.1754944e-38, %v426
        %v428 = vsel %vm425, %v427, %v423
        %v429 = vmul.f32 1.0, %v428
        %v430 = vrot.slane %v388, 4
        %v432 = vtanh.pop %v430
        %v433 = vrot.slane %v388, 6
        %v435 = vxor.u32 %v433, 2147483648
        %v436 = vmul.f32 %v435, 1.442695
        %v437 = vpow.pop %v436
        %v438 = vadd.f32 %v437, 1.0
        %v439 = vrcp.pop %v438
        %v440 = vmul.f32 %v438, %v439
        %v441 = vsub.f32 1.0, %v440
        %v442 = vmul.f32 %v439, %v441
        %v443 = vadd.f32 %v439, %v442
        %vm444 = vweird.f32 %v438
        %vm445 = vweird.f32 %v439
        %vm446 = vmor %vm444, %vm445
        %v447 = vsel %vm446, %v439, %v443
        %v448 = vand.u32 2147483647, %v438
        %vm449 = vcmp.eq.f32.partialorder %v448, 8.507059e+37
        %v450 = vand.u32 %v438, 2147483648
        %v451 = vor.u32 1.1754944e-38, %v450
        %v452 = vsel %vm449, %v451, %v447
        %v453 = vmul.f32 1.0, %v452
        %v454 = vmul.f32 %v429, %v292
        %v455 = vmul.f32 %v407, %v432
        %v456 = vadd.f32 %v454, %v455
        %v457 = vtanh.pop %v456
        %v458 = vmul.f32 %v453, %v457
        %p459 = scmp.ge.s32.totalorder %s290, 2
        %p460 = scmp.lt.s32.totalorder %s290, 18
        %p461 = pnand %p459, %p460
        %p462 = pneg %p461
        %s463 = scalar_select %p462, 1, 0
        %s464 = scvt.s32.f32 %s463
        %v465 = vstv %s464
        %v466 = vmul.f32 %v465, %v458
        %s467 = ssub.f32 1.0, %s464
        %v468 = vstv %s467
        %v469 = vmul.f32 %v468, %v291
        %v470 = vadd.f32 %v466, %v469
        %v471 = vmul.f32 %v465, %v456
        %v472 = vmul.f32 %v468, %v292
        %v473 = vadd.f32 %v471, %v472
        %s474 = scalar_lea.vmem %s218, 8
        %v475 = vld [vmem:[%s474] sm:$0xff]
        %476 = vmatpush.msra.mxu0 %v286
        %477 = vmatpush.msra.mxu0 %v282
        %478 = vmatpush.msra.mxu0 %v278
        %479 = vmatpush.msra.mxu0 %v274
        %480 = vmatpush.msra.mxu0 %v270
        %481 = vmatpush.msra.mxu0 %v266
        %482 = vmatpush.msra.mxu0 %v262
        %483 = vmatpush.msra.mxu0 %v258
        %484 = vmatpush.msra.mxu0 %v254
        %485 = vmatpush.msra.mxu0 %v250
        %486 = vmatpush.msra.mxu0 %v246
        %487 = vmatpush.msra.mxu0 %v242
        %488 = vmatpush.msra.mxu0 %v238
        %489 = vmatpush.msra.mxu0 %v234
        %490 = vmatpush.msra.mxu0 %v230
        %491 = vmatpush.msra.mxu0 %v226
        %492 = vmatmul.f32.gmra.mxu0 %v470
        %v493 = vpop.f32.mrf.mxu0
        %v494 = vadd.f32 0.0, %v493
        %495 = vdwg.mxu0
        %496 = vmatpush.msra.mxu0 %v287
        %497 = vmatpush.msra.mxu0 %v283
        %498 = vmatpush.msra.mxu0 %v279
        %499 = vmatpush.msra.mxu0 %v275
        %500 = vmatpush.msra.mxu0 %v271
        %501 = vmatpush.msra.mxu0 %v267
        %502 = vmatpush.msra.mxu0 %v263
        %503 = vmatpush.msra.mxu0 %v259
        %504 = vmatpush.msra.mxu0 %v255
        %505 = vmatpush.msra.mxu0 %v251
        %506 = vmatpush.msra.mxu0 %v247
        %507 = vmatpush.msra.mxu0 %v243
        %508 = vmatpush.msra.mxu0 %v239
        %509 = vmatpush.msra.mxu0 %v235
        %510 = vmatpush.msra.mxu0 %v231
        %511 = vmatpush.msra.mxu0 %v227
        %512 = vmatmul.f32.gmra.mxu0 %v470
        %v513 = vpop.f32.mrf.mxu0
        %v514 = vadd.f32 0.0, %v513
        %515 = vdwg.mxu0
        %516 = vmatpush.msra.mxu0 %v288
        %517 = vmatpush.msra.mxu0 %v284
        %518 = vmatpush.msra.mxu0 %v280
        %519 = vmatpush.msra.mxu0 %v276
        %520 = vmatpush.msra.mxu0 %v272
        %521 = vmatpush.msra.mxu0 %v268
        %522 = vmatpush.msra.mxu0 %v264
        %523 = vmatpush.msra.mxu0 %v260
        %524 = vmatpush.msra.mxu0 %v256
        %525 = vmatpush.msra.mxu0 %v252
        %526 = vmatpush.msra.mxu0 %v248
        %527 = vmatpush.msra.mxu0 %v244
        %528 = vmatpush.msra.mxu0 %v240
        %529 = vmatpush.msra.mxu0 %v236
        %530 = vmatpush.msra.mxu0 %v232
        %531 = vmatpush.msra.mxu0 %v228
        %532 = vmatmul.f32.gmra.mxu0 %v470
        %v533 = vpop.f32.mrf.mxu0
        %v534 = vadd.f32 0.0, %v533
        %535 = vdwg.mxu0
        %536 = vmatpush.msra.mxu0 %v289
        %537 = vmatpush.msra.mxu0 %v285
        %538 = vmatpush.msra.mxu0 %v281
        %539 = vmatpush.msra.mxu0 %v277
        %540 = vmatpush.msra.mxu0 %v273
        %541 = vmatpush.msra.mxu0 %v269
        %542 = vmatpush.msra.mxu0 %v265
        %543 = vmatpush.msra.mxu0 %v261
        %544 = vmatpush.msra.mxu0 %v257
        %545 = vmatpush.msra.mxu0 %v253
        %546 = vmatpush.msra.mxu0 %v249
        %547 = vmatpush.msra.mxu0 %v245
        %548 = vmatpush.msra.mxu0 %v241
        %549 = vmatpush.msra.mxu0 %v237
        %550 = vmatpush.msra.mxu0 %v233
        %551 = vmatpush.msra.mxu0 %v229
        %552 = vmatmul.f32.gmra.mxu0 %v470
        %v553 = vpop.f32.mrf.mxu0
        %v554 = vadd.f32 0.0, %v553
        %555 = vdwg.mxu0
        %v560 = vrot.slane %v514, 6
        %v561 = vrot.slane %v534, 4
        %v562 = vrot.slane %v554, 2
        %v563 = vsel %vm381, %v494, %v560
        %v564 = vsel %vm383, %v561, %v562
        %v565 = vsel %vm385, %v563, %v564
        %v567 = vadd.f32 %v475, %v565
        %v568 = vxor.u32 %v567, 2147483648
        %v569 = vmul.f32 %v568, 1.442695
        %v570 = vpow.pop %v569
        %v571 = vadd.f32 %v570, 1.0
        %v572 = vrcp.pop %v571
        %v573 = vmul.f32 %v571, %v572
        %v574 = vsub.f32 1.0, %v573
        %v575 = vmul.f32 %v572, %v574
        %v576 = vadd.f32 %v572, %v575
        %vm577 = vweird.f32 %v571
        %vm578 = vweird.f32 %v572
        %vm579 = vmor %vm577, %vm578
        %v580 = vsel %vm579, %v572, %v576
        %v581 = vand.u32 2147483647, %v571
        %vm582 = vcmp.eq.f32.partialorder %v581, 8.507059e+37
        %v583 = vand.u32 %v571, 2147483648
        %v584 = vor.u32 1.1754944e-38, %v583
        %v585 = vsel %vm582, %v584, %v580
        %v586 = vmul.f32 1.0, %v585
        %v588 = vrot.slane %v567, 2
        %v590 = vxor.u32 %v588, 2147483648
        %v591 = vmul.f32 %v590, 1.442695
        %v592 = vpow.pop %v591
        %v593 = vadd.f32 %v592, 1.0
        %v594 = vrcp.pop %v593
        %v595 = vmul.f32 %v593, %v594
        %v596 = vsub.f32 1.0, %v595
        %v597 = vmul.f32 %v594, %v596
        %v598 = vadd.f32 %v594, %v597
        %vm599 = vweird.f32 %v593
        %vm600 = vweird.f32 %v594
        %vm601 = vmor %vm599, %vm600
        %v602 = vsel %vm601, %v594, %v598
        %v603 = vand.u32 2147483647, %v593
        %vm604 = vcmp.eq.f32.partialorder %v603, 8.507059e+37
        %v605 = vand.u32 %v593, 2147483648
        %v606 = vor.u32 1.1754944e-38, %v605
        %v607 = vsel %vm604, %v606, %v602
        %v608 = vmul.f32 1.0, %v607
        %v609 = vrot.slane %v567, 4
        %v611 = vtanh.pop %v609
        %v612 = vrot.slane %v567, 6
        %v614 = vxor.u32 %v612, 2147483648
        %v615 = vmul.f32 %v614, 1.442695
        %v616 = vpow.pop %v615
        %v617 = vadd.f32 %v616, 1.0
        %v618 = vrcp.pop %v617
        %v619 = vmul.f32 %v617, %v618
        %v620 = vsub.f32 1.0, %v619
        %v621 = vmul.f32 %v618, %v620
        %v622 = vadd.f32 %v618, %v621
        %vm623 = vweird.f32 %v617
        %vm624 = vweird.f32 %v618
        %vm625 = vmor %vm623, %vm624
        %v626 = vsel %vm625, %v618, %v622
        %v627 = vand.u32 2147483647, %v617
        %vm628 = vcmp.eq.f32.partialorder %v627, 8.507059e+37
        %v629 = vand.u32 %v617, 2147483648
        %v630 = vor.u32 1.1754944e-38, %v629
        %v631 = vsel %vm628, %v630, %v626
        %v632 = vmul.f32 1.0, %v631
        %v633 = vmul.f32 %v608, %v473
        %v634 = vmul.f32 %v586, %v611
        %v635 = vadd.f32 %v633, %v634
        %v636 = vtanh.pop %v635
        %v637 = vmul.f32 %v632, %v636
        %s638 = sadd.s32 %s290, 1
        %p639 = scmp.ge.s32.totalorder %s638, 2
        %p640 = scmp.lt.s32.totalorder %s638, 18
        %p641 = pnand %p639, %p640
        %p642 = pneg %p641
        %s643 = scalar_select %p642, 1, 0
        %s644 = scvt.s32.f32 %s643
        %v645 = vstv %s644
        %v646 = vmul.f32 %v645, %v637
        %s647 = ssub.f32 1.0, %s644
        %v648 = vstv %s647
        %v649 = vmul.f32 %v648, %v470
        %v650 = vadd.f32 %v646, %v649
        %v651 = vmul.f32 %v645, %v635
        %v652 = vmul.f32 %v648, %v473
        %v653 = vadd.f32 %v651, %v652
        %s654 = scalar_lea.vmem %s218, 16
        %v655 = vld [vmem:[%s654] sm:$0xff]
        %656 = vmatpush.msra.mxu0 %v286
        %657 = vmatpush.msra.mxu0 %v282
        %658 = vmatpush.msra.mxu0 %v278
        %659 = vmatpush.msra.mxu0 %v274
        %660 = vmatpush.msra.mxu0 %v270
        %661 = vmatpush.msra.mxu0 %v266
        %662 = vmatpush.msra.mxu0 %v262
        %663 = vmatpush.msra.mxu0 %v258
        %664 = vmatpush.msra.mxu0 %v254
        %665 = vmatpush.msra.mxu0 %v250
        %666 = vmatpush.msra.mxu0 %v246
        %667 = vmatpush.msra.mxu0 %v242
        %668 = vmatpush.msra.mxu0 %v238
        %669 = vmatpush.msra.mxu0 %v234
        %670 = vmatpush.msra.mxu0 %v230
        %671 = vmatpush.msra.mxu0 %v226
        %672 = vmatmul.f32.gmra.mxu0 %v650
        %v673 = vpop.f32.mrf.mxu0
        %v674 = vadd.f32 0.0, %v673
        %675 = vdwg.mxu0
        %676 = vmatpush.msra.mxu0 %v287
        %677 = vmatpush.msra.mxu0 %v283
        %678 = vmatpush.msra.mxu0 %v279
        %679 = vmatpush.msra.mxu0 %v275
        %680 = vmatpush.msra.mxu0 %v271
        %681 = vmatpush.msra.mxu0 %v267
        %682 = vmatpush.msra.mxu0 %v263
        %683 = vmatpush.msra.mxu0 %v259
        %684 = vmatpush.msra.mxu0 %v255
        %685 = vmatpush.msra.mxu0 %v251
        %686 = vmatpush.msra.mxu0 %v247
        %687 = vmatpush.msra.mxu0 %v243
        %688 = vmatpush.msra.mxu0 %v239
        %689 = vmatpush.msra.mxu0 %v235
        %690 = vmatpush.msra.mxu0 %v231
        %691 = vmatpush.msra.mxu0 %v227
        %692 = vmatmul.f32.gmra.mxu0 %v650
        %v693 = vpop.f32.mrf.mxu0
        %v694 = vadd.f32 0.0, %v693
        %695 = vdwg.mxu0
        %696 = vmatpush.msra.mxu0 %v288
        %697 = vmatpush.msra.mxu0 %v284
        %698 = vmatpush.msra.mxu0 %v280
        %699 = vmatpush.msra.mxu0 %v276
        %700 = vmatpush.msra.mxu0 %v272
        %701 = vmatpush.msra.mxu0 %v268
        %702 = vmatpush.msra.mxu0 %v264
        %703 = vmatpush.msra.mxu0 %v260
        %704 = vmatpush.msra.mxu0 %v256
        %705 = vmatpush.msra.mxu0 %v252
        %706 = vmatpush.msra.mxu0 %v248
        %707 = vmatpush.msra.mxu0 %v244
        %708 = vmatpush.msra.mxu0 %v240
        %709 = vmatpush.msra.mxu0 %v236
        %710 = vmatpush.msra.mxu0 %v232
        %711 = vmatpush.msra.mxu0 %v228
        %712 = vmatmul.f32.gmra.mxu0 %v650
        %v713 = vpop.f32.mrf.mxu0
        %v714 = vadd.f32 0.0, %v713
        %715 = vdwg.mxu0
        %716 = vmatpush.msra.mxu0 %v289
        %717 = vmatpush.msra.mxu0 %v285
        %718 = vmatpush.msra.mxu0 %v281
        %719 = vmatpush.msra.mxu0 %v277
        %720 = vmatpush.msra.mxu0 %v273
        %721 = vmatpush.msra.mxu0 %v269
        %722 = vmatpush.msra.mxu0 %v265
        %723 = vmatpush.msra.mxu0 %v261
        %724 = vmatpush.msra.mxu0 %v257
        %725 = vmatpush.msra.mxu0 %v253
        %726 = vmatpush.msra.mxu0 %v249
        %727 = vmatpush.msra.mxu0 %v245
        %728 = vmatpush.msra.mxu0 %v241
        %729 = vmatpush.msra.mxu0 %v237
        %730 = vmatpush.msra.mxu0 %v233
        %731 = vmatpush.msra.mxu0 %v229
        %732 = vmatmul.f32.gmra.mxu0 %v650
        %v733 = vpop.f32.mrf.mxu0
        %v734 = vadd.f32 0.0, %v733
        %735 = vdwg.mxu0
        %v740 = vrot.slane %v694, 6
        %v741 = vrot.slane %v714, 4
        %v742 = vrot.slane %v734, 2
        %v743 = vsel %vm381, %v674, %v740
        %v744 = vsel %vm383, %v741, %v742
        %v745 = vsel %vm385, %v743, %v744
        %v747 = vadd.f32 %v655, %v745
        %v748 = vxor.u32 %v747, 2147483648
        %v749 = vmul.f32 %v748, 1.442695
        %v750 = vpow.pop %v749
        %v751 = vadd.f32 %v750, 1.0
        %v752 = vrcp.pop %v751
        %v753 = vmul.f32 %v751, %v752
        %v754 = vsub.f32 1.0, %v753
        %v755 = vmul.f32 %v752, %v754
        %v756 = vadd.f32 %v752, %v755
        %vm757 = vweird.f32 %v751
        %vm758 = vweird.f32 %v752
        %vm759 = vmor %vm757, %vm758
        %v760 = vsel %vm759, %v752, %v756
        %v761 = vand.u32 2147483647, %v751
        %vm762 = vcmp.eq.f32.partialorder %v761, 8.507059e+37
        %v763 = vand.u32 %v751, 2147483648
        %v764 = vor.u32 1.1754944e-38, %v763
        %v765 = vsel %vm762, %v764, %v760
        %v766 = vmul.f32 1.0, %v765
        %v768 = vrot.slane %v747, 2
        %v770 = vxor.u32 %v768, 2147483648
        %v771 = vmul.f32 %v770, 1.442695
        %v772 = vpow.pop %v771
        %v773 = vadd.f32 %v772, 1.0
        %v774 = vrcp.pop %v773
        %v775 = vmul.f32 %v773, %v774
        %v776 = vsub.f32 1.0, %v775
        %v777 = vmul.f32 %v774, %v776
        %v778 = vadd.f32 %v774, %v777
        %vm779 = vweird.f32 %v773
        %vm780 = vweird.f32 %v774
        %vm781 = vmor %vm779, %vm780
        %v782 = vsel %vm781, %v774, %v778
        %v783 = vand.u32 2147483647, %v773
        %vm784 = vcmp.eq.f32.partialorder %v783, 8.507059e+37
        %v785 = vand.u32 %v773, 2147483648
        %v786 = vor.u32 1.1754944e-38, %v785
        %v787 = vsel %vm784, %v786, %v782
        %v788 = vmul.f32 1.0, %v787
        %v789 = vrot.slane %v747, 4
        %v791 = vtanh.pop %v789
        %v792 = vrot.slane %v747, 6
        %v794 = vxor.u32 %v792, 2147483648
        %v795 = vmul.f32 %v794, 1.442695
        %v796 = vpow.pop %v795
        %v797 = vadd.f32 %v796, 1.0
        %v798 = vrcp.pop %v797
        %v799 = vmul.f32 %v797, %v798
        %v800 = vsub.f32 1.0, %v799
        %v801 = vmul.f32 %v798, %v800
        %v802 = vadd.f32 %v798, %v801
        %vm803 = vweird.f32 %v797
        %vm804 = vweird.f32 %v798
        %vm805 = vmor %vm803, %vm804
        %v806 = vsel %vm805, %v798, %v802
        %v807 = vand.u32 2147483647, %v797
        %vm808 = vcmp.eq.f32.partialorder %v807, 8.507059e+37
        %v809 = vand.u32 %v797, 2147483648
        %v810 = vor.u32 1.1754944e-38, %v809
        %v811 = vsel %vm808, %v810, %v806
        %v812 = vmul.f32 1.0, %v811
        %v813 = vmul.f32 %v788, %v653
        %v814 = vmul.f32 %v766, %v791
        %v815 = vadd.f32 %v813, %v814
        %v816 = vtanh.pop %v815
        %v817 = vmul.f32 %v812, %v816
        %s818 = sadd.s32 %s290, 2
        %p819 = scmp.ge.s32.totalorder %s818, 2
        %p820 = scmp.lt.s32.totalorder %s818, 18
        %p821 = pnand %p819, %p820
        %p822 = pneg %p821
        %s823 = scalar_select %p822, 1, 0
        %s824 = scvt.s32.f32 %s823
        %v825 = vstv %s824
        %v826 = vmul.f32 %v825, %v817
        %s827 = ssub.f32 1.0, %s824
        %v828 = vstv %s827
        %v829 = vmul.f32 %v828, %v650
        %v830 = vadd.f32 %v826, %v829
        %v831 = vmul.f32 %v825, %v815
        %v832 = vmul.f32 %v828, %v653
        %v833 = vadd.f32 %v831, %v832
        %s834 = scalar_lea.vmem %s218, 24
        %v835 = vld [vmem:[%s834] sm:$0xff]
        %836 = vmatpush.msra.mxu0 %v286
        %837 = vmatpush.msra.mxu0 %v282
        %838 = vmatpush.msra.mxu0 %v278
        %839 = vmatpush.msra.mxu0 %v274
        %840 = vmatpush.msra.mxu0 %v270
        %841 = vmatpush.msra.mxu0 %v266
        %842 = vmatpush.msra.mxu0 %v262
        %843 = vmatpush.msra.mxu0 %v258
        %844 = vmatpush.msra.mxu0 %v254
        %845 = vmatpush.msra.mxu0 %v250
        %846 = vmatpush.msra.mxu0 %v246
        %847 = vmatpush.msra.mxu0 %v242
        %848 = vmatpush.msra.mxu0 %v238
        %849 = vmatpush.msra.mxu0 %v234
        %850 = vmatpush.msra.mxu0 %v230
        %851 = vmatpush.msra.mxu0 %v226
        %852 = vmatmul.f32.gmra.mxu0 %v830
        %v853 = vpop.f32.mrf.mxu0
        %v854 = vadd.f32 0.0, %v853
        %855 = vdwg.mxu0
        %856 = vmatpush.msra.mxu0 %v287
        %857 = vmatpush.msra.mxu0 %v283
        %858 = vmatpush.msra.mxu0 %v279
        %859 = vmatpush.msra.mxu0 %v275
        %860 = vmatpush.msra.mxu0 %v271
        %861 = vmatpush.msra.mxu0 %v267
        %862 = vmatpush.msra.mxu0 %v263
        %863 = vmatpush.msra.mxu0 %v259
        %864 = vmatpush.msra.mxu0 %v255
        %865 = vmatpush.msra.mxu0 %v251
        %866 = vmatpush.msra.mxu0 %v247
        %867 = vmatpush.msra.mxu0 %v243
        %868 = vmatpush.msra.mxu0 %v239
        %869 = vmatpush.msra.mxu0 %v235
        %870 = vmatpush.msra.mxu0 %v231
        %871 = vmatpush.msra.mxu0 %v227
        %872 = vmatmul.f32.gmra.mxu0 %v830
        %v873 = vpop.f32.mrf.mxu0
        %v874 = vadd.f32 0.0, %v873
        %875 = vdwg.mxu0
        %876 = vmatpush.msra.mxu0 %v288
        %877 = vmatpush.msra.mxu0 %v284
        %878 = vmatpush.msra.mxu0 %v280
        %879 = vmatpush.msra.mxu0 %v276
        %880 = vmatpush.msra.mxu0 %v272
        %881 = vmatpush.msra.mxu0 %v268
        %882 = vmatpush.msra.mxu0 %v264
        %883 = vmatpush.msra.mxu0 %v260
        %884 = vmatpush.msra.mxu0 %v256
        %885 = vmatpush.msra.mxu0 %v252
        %886 = vmatpush.msra.mxu0 %v248
        %887 = vmatpush.msra.mxu0 %v244
        %888 = vmatpush.msra.mxu0 %v240
        %889 = vmatpush.msra.mxu0 %v236
        %890 = vmatpush.msra.mxu0 %v232
        %891 = vmatpush.msra.mxu0 %v228
        %892 = vmatmul.f32.gmra.mxu0 %v830
        %v893 = vpop.f32.mrf.mxu0
        %v894 = vadd.f32 0.0, %v893
        %895 = vdwg.mxu0
        %896 = vmatpush.msra.mxu0 %v289
        %897 = vmatpush.msra.mxu0 %v285
        %898 = vmatpush.msra.mxu0 %v281
        %899 = vmatpush.msra.mxu0 %v277
        %900 = vmatpush.msra.mxu0 %v273
        %901 = vmatpush.msra.mxu0 %v269
        %902 = vmatpush.msra.mxu0 %v265
        %903 = vmatpush.msra.mxu0 %v261
        %904 = vmatpush.msra.mxu0 %v257
        %905 = vmatpush.msra.mxu0 %v253
        %906 = vmatpush.msra.mxu0 %v249
        %907 = vmatpush.msra.mxu0 %v245
        %908 = vmatpush.msra.mxu0 %v241
        %909 = vmatpush.msra.mxu0 %v237
        %910 = vmatpush.msra.mxu0 %v233
        %911 = vmatpush.msra.mxu0 %v229
        %912 = vmatmul.f32.gmra.mxu0 %v830
        %v913 = vpop.f32.mrf.mxu0
        %v914 = vadd.f32 0.0, %v913
        %915 = vdwg.mxu0
        %v920 = vrot.slane %v874, 6
        %v921 = vrot.slane %v894, 4
        %v922 = vrot.slane %v914, 2
        %v923 = vsel %vm381, %v854, %v920
        %v924 = vsel %vm383, %v921, %v922
        %v925 = vsel %vm385, %v923, %v924
        %v927 = vadd.f32 %v835, %v925
        %v928 = vxor.u32 %v927, 2147483648
        %v929 = vmul.f32 %v928, 1.442695
        %v930 = vpow.pop %v929
        %v931 = vadd.f32 %v930, 1.0
        %v932 = vrcp.pop %v931
        %v933 = vmul.f32 %v931, %v932
        %v934 = vsub.f32 1.0, %v933
        %v935 = vmul.f32 %v932, %v934
        %v936 = vadd.f32 %v932, %v935
        %vm937 = vweird.f32 %v931
        %vm938 = vweird.f32 %v932
        %vm939 = vmor %vm937, %vm938
        %v940 = vsel %vm939, %v932, %v936
        %v941 = vand.u32 2147483647, %v931
        %vm942 = vcmp.eq.f32.partialorder %v941, 8.507059e+37
        %v943 = vand.u32 %v931, 2147483648
        %v944 = vor.u32 1.1754944e-38, %v943
        %v945 = vsel %vm942, %v944, %v940
        %v946 = vmul.f32 1.0, %v945
        %v948 = vrot.slane %v927, 2
        %v950 = vxor.u32 %v948, 2147483648
        %v951 = vmul.f32 %v950, 1.442695
        %v952 = vpow.pop %v951
        %v953 = vadd.f32 %v952, 1.0
        %v954 = vrcp.pop %v953
        %v955 = vmul.f32 %v953, %v954
        %v956 = vsub.f32 1.0, %v955
        %v957 = vmul.f32 %v954, %v956
        %v958 = vadd.f32 %v954, %v957
        %vm959 = vweird.f32 %v953
        %vm960 = vweird.f32 %v954
        %vm961 = vmor %vm959, %vm960
        %v962 = vsel %vm961, %v954, %v958
        %v963 = vand.u32 2147483647, %v953
        %vm964 = vcmp.eq.f32.partialorder %v963, 8.507059e+37
        %v965 = vand.u32 %v953, 2147483648
        %v966 = vor.u32 1.1754944e-38, %v965
        %v967 = vsel %vm964, %v966, %v962
        %v968 = vmul.f32 1.0, %v967
        %v969 = vrot.slane %v927, 4
        %v971 = vtanh.pop %v969
        %v972 = vrot.slane %v927, 6
        %v974 = vxor.u32 %v972, 2147483648
        %v975 = vmul.f32 %v974, 1.442695
        %v976 = vpow.pop %v975
        %v977 = vadd.f32 %v976, 1.0
        %v978 = vrcp.pop %v977
        %v979 = vmul.f32 %v977, %v978
        %v980 = vsub.f32 1.0, %v979
        %v981 = vmul.f32 %v978, %v980
        %v982 = vadd.f32 %v978, %v981
        %vm983 = vweird.f32 %v977
        %vm984 = vweird.f32 %v978
        %vm985 = vmor %vm983, %vm984
        %v986 = vsel %vm985, %v978, %v982
        %v987 = vand.u32 2147483647, %v977
        %vm988 = vcmp.eq.f32.partialorder %v987, 8.507059e+37
        %v989 = vand.u32 %v977, 2147483648
        %v990 = vor.u32 1.1754944e-38, %v989
        %v991 = vsel %vm988, %v990, %v986
        %v992 = vmul.f32 1.0, %v991
        %v993 = vmul.f32 %v968, %v833
        %v994 = vmul.f32 %v946, %v971
        %v995 = vadd.f32 %v993, %v994
        %v996 = vtanh.pop %v995
        %v997 = vmul.f32 %v992, %v996
        %s998 = sadd.s32 %s290, 3
        %p999 = scmp.ge.s32.totalorder %s998, 2
        %p1000 = scmp.lt.s32.totalorder %s998, 18
        %p1001 = pnand %p999, %p1000
        %p1002 = pneg %p1001
        %s1003 = scalar_select %p1002, 1, 0
        %s1004 = scvt.s32.f32 %s1003
        %v1005 = vstv %s1004
        %v1006 = vmul.f32 %v1005, %v997
        %s1007 = ssub.f32 1.0, %s1004
        %v1008 = vstv %s1007
        %v1009 = vmul.f32 %v1008, %v830
        %v1010 = vadd.f32 %v1006, %v1009
        %v1011 = vmul.f32 %v1005, %v995
        %v1012 = vmul.f32 %v1008, %v833
        %v1013 = vadd.f32 %v1011, %v1012
        %s1014 = scalar_lea.vmem %s218, 32
        %v1015 = vld [vmem:[%s1014] sm:$0xff]
        %1016 = vmatpush.msra.mxu0 %v286
        %1017 = vmatpush.msra.mxu0 %v282
        %1018 = vmatpush.msra.mxu0 %v278
        %1019 = vmatpush.msra.mxu0 %v274
        %1020 = vmatpush.msra.mxu0 %v270
        %1021 = vmatpush.msra.mxu0 %v266
        %1022 = vmatpush.msra.mxu0 %v262
        %1023 = vmatpush.msra.mxu0 %v258
        %1024 = vmatpush.msra.mxu0 %v254
        %1025 = vmatpush.msra.mxu0 %v250
        %1026 = vmatpush.msra.mxu0 %v246
        %1027 = vmatpush.msra.mxu0 %v242
        %1028 = vmatpush.msra.mxu0 %v238
        %1029 = vmatpush.msra.mxu0 %v234
        %1030 = vmatpush.msra.mxu0 %v230
        %1031 = vmatpush.msra.mxu0 %v226
        %1032 = vmatmul.f32.gmra.mxu0 %v1010
        %v1033 = vpop.f32.mrf.mxu0
        %v1034 = vadd.f32 0.0, %v1033
        %1035 = vdwg.mxu0
        %1036 = vmatpush.msra.mxu0 %v287
        %1037 = vmatpush.msra.mxu0 %v283
        %1038 = vmatpush.msra.mxu0 %v279
        %1039 = vmatpush.msra.mxu0 %v275
        %1040 = vmatpush.msra.mxu0 %v271
        %1041 = vmatpush.msra.mxu0 %v267
        %1042 = vmatpush.msra.mxu0 %v263
        %1043 = vmatpush.msra.mxu0 %v259
        %1044 = vmatpush.msra.mxu0 %v255
        %1045 = vmatpush.msra.mxu0 %v251
        %1046 = vmatpush.msra.mxu0 %v247
        %1047 = vmatpush.msra.mxu0 %v243
        %1048 = vmatpush.msra.mxu0 %v239
        %1049 = vmatpush.msra.mxu0 %v235
        %1050 = vmatpush.msra.mxu0 %v231
        %1051 = vmatpush.msra.mxu0 %v227
        %1052 = vmatmul.f32.gmra.mxu0 %v1010
        %v1053 = vpop.f32.mrf.mxu0
        %v1054 = vadd.f32 0.0, %v1053
        %1055 = vdwg.mxu0
        %1056 = vmatpush.msra.mxu0 %v288
        %1057 = vmatpush.msra.mxu0 %v284
        %1058 = vmatpush.msra.mxu0 %v280
        %1059 = vmatpush.msra.mxu0 %v276
        %1060 = vmatpush.msra.mxu0 %v272
        %1061 = vmatpush.msra.mxu0 %v268
        %1062 = vmatpush.msra.mxu0 %v264
        %1063 = vmatpush.msra.mxu0 %v260
        %1064 = vmatpush.msra.mxu0 %v256
        %1065 = vmatpush.msra.mxu0 %v252
        %1066 = vmatpush.msra.mxu0 %v248
        %1067 = vmatpush.msra.mxu0 %v244
        %1068 = vmatpush.msra.mxu0 %v240
        %1069 = vmatpush.msra.mxu0 %v236
        %1070 = vmatpush.msra.mxu0 %v232
        %1071 = vmatpush.msra.mxu0 %v228
        %1072 = vmatmul.f32.gmra.mxu0 %v1010
        %v1073 = vpop.f32.mrf.mxu0
        %v1074 = vadd.f32 0.0, %v1073
        %1075 = vdwg.mxu0
        %1076 = vmatpush.msra.mxu0 %v289
        %1077 = vmatpush.msra.mxu0 %v285
        %1078 = vmatpush.msra.mxu0 %v281
        %1079 = vmatpush.msra.mxu0 %v277
        %1080 = vmatpush.msra.mxu0 %v273
        %1081 = vmatpush.msra.mxu0 %v269
        %1082 = vmatpush.msra.mxu0 %v265
        %1083 = vmatpush.msra.mxu0 %v261
        %1084 = vmatpush.msra.mxu0 %v257
        %1085 = vmatpush.msra.mxu0 %v253
        %1086 = vmatpush.msra.mxu0 %v249
        %1087 = vmatpush.msra.mxu0 %v245
        %1088 = vmatpush.msra.mxu0 %v241
        %1089 = vmatpush.msra.mxu0 %v237
        %1090 = vmatpush.msra.mxu0 %v233
        %1091 = vmatpush.msra.mxu0 %v229
        %1092 = vmatmul.f32.gmra.mxu0 %v1010
        %v1093 = vpop.f32.mrf.mxu0
        %v1094 = vadd.f32 0.0, %v1093
        %1095 = vdwg.mxu0
        %v1100 = vrot.slane %v1054, 6
        %v1101 = vrot.slane %v1074, 4
        %v1102 = vrot.slane %v1094, 2
        %v1103 = vsel %vm381, %v1034, %v1100
        %v1104 = vsel %vm383, %v1101, %v1102
        %v1105 = vsel %vm385, %v1103, %v1104
        %v1107 = vadd.f32 %v1015, %v1105
        %v1108 = vxor.u32 %v1107, 2147483648
        %v1109 = vmul.f32 %v1108, 1.442695
        %v1110 = vpow.pop %v1109
        %v1111 = vadd.f32 %v1110, 1.0
        %v1112 = vrcp.pop %v1111
        %v1113 = vmul.f32 %v1111, %v1112
        %v1114 = vsub.f32 1.0, %v1113
        %v1115 = vmul.f32 %v1112, %v1114
        %v1116 = vadd.f32 %v1112, %v1115
        %vm1117 = vweird.f32 %v1111
        %vm1118 = vweird.f32 %v1112
        %vm1119 = vmor %vm1117, %vm1118
        %v1120 = vsel %vm1119, %v1112, %v1116
        %v1121 = vand.u32 2147483647, %v1111
        %vm1122 = vcmp.eq.f32.partialorder %v1121, 8.507059e+37
        %v1123 = vand.u32 %v1111, 2147483648
        %v1124 = vor.u32 1.1754944e-38, %v1123
        %v1125 = vsel %vm1122, %v1124, %v1120
        %v1126 = vmul.f32 1.0, %v1125
        %v1128 = vrot.slane %v1107, 2
        %v1130 = vxor.u32 %v1128, 2147483648
        %v1131 = vmul.f32 %v1130, 1.442695
        %v1132 = vpow.pop %v1131
        %v1133 = vadd.f32 %v1132, 1.0
        %v1134 = vrcp.pop %v1133
        %v1135 = vmul.f32 %v1133, %v1134
        %v1136 = vsub.f32 1.0, %v1135
        %v1137 = vmul.f32 %v1134, %v1136
        %v1138 = vadd.f32 %v1134, %v1137
        %vm1139 = vweird.f32 %v1133
        %vm1140 = vweird.f32 %v1134
        %vm1141 = vmor %vm1139, %vm1140
        %v1142 = vsel %vm1141, %v1134, %v1138
        %v1143 = vand.u32 2147483647, %v1133
        %vm1144 = vcmp.eq.f32.partialorder %v1143, 8.507059e+37
        %v1145 = vand.u32 %v1133, 2147483648
        %v1146 = vor.u32 1.1754944e-38, %v1145
        %v1147 = vsel %vm1144, %v1146, %v1142
        %v1148 = vmul.f32 1.0, %v1147
        %v1149 = vrot.slane %v1107, 4
        %v1151 = vtanh.pop %v1149
        %v1152 = vrot.slane %v1107, 6
        %v1154 = vxor.u32 %v1152, 2147483648
        %v1155 = vmul.f32 %v1154, 1.442695
        %v1156 = vpow.pop %v1155
        %v1157 = vadd.f32 %v1156, 1.0
        %v1158 = vrcp.pop %v1157
        %v1159 = vmul.f32 %v1157, %v1158
        %v1160 = vsub.f32 1.0, %v1159
        %v1161 = vmul.f32 %v1158, %v1160
        %v1162 = vadd.f32 %v1158, %v1161
        %vm1163 = vweird.f32 %v1157
        %vm1164 = vweird.f32 %v1158
        %vm1165 = vmor %vm1163, %vm1164
        %v1166 = vsel %vm1165, %v1158, %v1162
        %v1167 = vand.u32 2147483647, %v1157
        %vm1168 = vcmp.eq.f32.partialorder %v1167, 8.507059e+37
        %v1169 = vand.u32 %v1157, 2147483648
        %v1170 = vor.u32 1.1754944e-38, %v1169
        %v1171 = vsel %vm1168, %v1170, %v1166
        %v1172 = vmul.f32 1.0, %v1171
        %v1173 = vmul.f32 %v1148, %v1013
        %v1174 = vmul.f32 %v1126, %v1151
        %v1175 = vadd.f32 %v1173, %v1174
        %v1176 = vtanh.pop %v1175
        %v1177 = vmul.f32 %v1172, %v1176
        %s1178 = sadd.s32 %s290, 4
        %p1179 = scmp.ge.s32.totalorder %s1178, 2
        %p1180 = scmp.lt.s32.totalorder %s1178, 18
        %p1181 = pnand %p1179, %p1180
        %p1182 = pneg %p1181
        %s1183 = scalar_select %p1182, 1, 0
        %s1184 = scvt.s32.f32 %s1183
        %v1185 = vstv %s1184
        %v1186 = vmul.f32 %v1185, %v1177
        %s1187 = ssub.f32 1.0, %s1184
        %v1188 = vstv %s1187
        %v1189 = vmul.f32 %v1188, %v1010
        %v1190 = vadd.f32 %v1186, %v1189
        %v1191 = vmul.f32 %v1185, %v1175
        %v1192 = vmul.f32 %v1188, %v1013
        %v1193 = vadd.f32 %v1191, %v1192
        %s1194 = scalar_lea.vmem %s218, 40
        %v1195 = vld [vmem:[%s1194] sm:$0xff]
        %1196 = vmatpush.msra.mxu0 %v286
        %1197 = vmatpush.msra.mxu0 %v282
        %1198 = vmatpush.msra.mxu0 %v278
        %1199 = vmatpush.msra.mxu0 %v274
        %1200 = vmatpush.msra.mxu0 %v270
        %1201 = vmatpush.msra.mxu0 %v266
        %1202 = vmatpush.msra.mxu0 %v262
        %1203 = vmatpush.msra.mxu0 %v258
        %1204 = vmatpush.msra.mxu0 %v254
        %1205 = vmatpush.msra.mxu0 %v250
        %1206 = vmatpush.msra.mxu0 %v246
        %1207 = vmatpush.msra.mxu0 %v242
        %1208 = vmatpush.msra.mxu0 %v238
        %1209 = vmatpush.msra.mxu0 %v234
        %1210 = vmatpush.msra.mxu0 %v230
        %1211 = vmatpush.msra.mxu0 %v226
        %1212 = vmatmul.f32.gmra.mxu0 %v1190
        %v1213 = vpop.f32.mrf.mxu0
        %v1214 = vadd.f32 0.0, %v1213
        %1215 = vdwg.mxu0
        %1216 = vmatpush.msra.mxu0 %v287
        %1217 = vmatpush.msra.mxu0 %v283
        %1218 = vmatpush.msra.mxu0 %v279
        %1219 = vmatpush.msra.mxu0 %v275
        %1220 = vmatpush.msra.mxu0 %v271
        %1221 = vmatpush.msra.mxu0 %v267
        %1222 = vmatpush.msra.mxu0 %v263
        %1223 = vmatpush.msra.mxu0 %v259
        %1224 = vmatpush.msra.mxu0 %v255
        %1225 = vmatpush.msra.mxu0 %v251
        %1226 = vmatpush.msra.mxu0 %v247
        %1227 = vmatpush.msra.mxu0 %v243
        %1228 = vmatpush.msra.mxu0 %v239
        %1229 = vmatpush.msra.mxu0 %v235
        %1230 = vmatpush.msra.mxu0 %v231
        %1231 = vmatpush.msra.mxu0 %v227
        %1232 = vmatmul.f32.gmra.mxu0 %v1190
        %v1233 = vpop.f32.mrf.mxu0
        %v1234 = vadd.f32 0.0, %v1233
        %1235 = vdwg.mxu0
        %1236 = vmatpush.msra.mxu0 %v288
        %1237 = vmatpush.msra.mxu0 %v284
        %1238 = vmatpush.msra.mxu0 %v280
        %1239 = vmatpush.msra.mxu0 %v276
        %1240 = vmatpush.msra.mxu0 %v272
        %1241 = vmatpush.msra.mxu0 %v268
        %1242 = vmatpush.msra.mxu0 %v264
        %1243 = vmatpush.msra.mxu0 %v260
        %1244 = vmatpush.msra.mxu0 %v256
        %1245 = vmatpush.msra.mxu0 %v252
        %1246 = vmatpush.msra.mxu0 %v248
        %1247 = vmatpush.msra.mxu0 %v244
        %1248 = vmatpush.msra.mxu0 %v240
        %1249 = vmatpush.msra.mxu0 %v236
        %1250 = vmatpush.msra.mxu0 %v232
        %1251 = vmatpush.msra.mxu0 %v228
        %1252 = vmatmul.f32.gmra.mxu0 %v1190
        %v1253 = vpop.f32.mrf.mxu0
        %v1254 = vadd.f32 0.0, %v1253
        %1255 = vdwg.mxu0
        %1256 = vmatpush.msra.mxu0 %v289
        %1257 = vmatpush.msra.mxu0 %v285
        %1258 = vmatpush.msra.mxu0 %v281
        %1259 = vmatpush.msra.mxu0 %v277
        %1260 = vmatpush.msra.mxu0 %v273
        %1261 = vmatpush.msra.mxu0 %v269
        %1262 = vmatpush.msra.mxu0 %v265
        %1263 = vmatpush.msra.mxu0 %v261
        %1264 = vmatpush.msra.mxu0 %v257
        %1265 = vmatpush.msra.mxu0 %v253
        %1266 = vmatpush.msra.mxu0 %v249
        %1267 = vmatpush.msra.mxu0 %v245
        %1268 = vmatpush.msra.mxu0 %v241
        %1269 = vmatpush.msra.mxu0 %v237
        %1270 = vmatpush.msra.mxu0 %v233
        %1271 = vmatpush.msra.mxu0 %v229
        %1272 = vmatmul.f32.gmra.mxu0 %v1190
        %v1273 = vpop.f32.mrf.mxu0
        %v1274 = vadd.f32 0.0, %v1273
        %1275 = vdwg.mxu0
        %v1280 = vrot.slane %v1234, 6
        %v1281 = vrot.slane %v1254, 4
        %v1282 = vrot.slane %v1274, 2
        %v1283 = vsel %vm381, %v1214, %v1280
        %v1284 = vsel %vm383, %v1281, %v1282
        %v1285 = vsel %vm385, %v1283, %v1284
        %v1287 = vadd.f32 %v1195, %v1285
        %v1288 = vxor.u32 %v1287, 2147483648
        %v1289 = vmul.f32 %v1288, 1.442695
        %v1290 = vpow.pop %v1289
        %v1291 = vadd.f32 %v1290, 1.0
        %v1292 = vrcp.pop %v1291
        %v1293 = vmul.f32 %v1291, %v1292
        %v1294 = vsub.f32 1.0, %v1293
        %v1295 = vmul.f32 %v1292, %v1294
        %v1296 = vadd.f32 %v1292, %v1295
        %vm1297 = vweird.f32 %v1291
        %vm1298 = vweird.f32 %v1292
        %vm1299 = vmor %vm1297, %vm1298
        %v1300 = vsel %vm1299, %v1292, %v1296
        %v1301 = vand.u32 2147483647, %v1291
        %vm1302 = vcmp.eq.f32.partialorder %v1301, 8.507059e+37
        %v1303 = vand.u32 %v1291, 2147483648
        %v1304 = vor.u32 1.1754944e-38, %v1303
        %v1305 = vsel %vm1302, %v1304, %v1300
        %v1306 = vmul.f32 1.0, %v1305
        %v1308 = vrot.slane %v1287, 2
        %v1310 = vxor.u32 %v1308, 2147483648
        %v1311 = vmul.f32 %v1310, 1.442695
        %v1312 = vpow.pop %v1311
        %v1313 = vadd.f32 %v1312, 1.0
        %v1314 = vrcp.pop %v1313
        %v1315 = vmul.f32 %v1313, %v1314
        %v1316 = vsub.f32 1.0, %v1315
        %v1317 = vmul.f32 %v1314, %v1316
        %v1318 = vadd.f32 %v1314, %v1317
        %vm1319 = vweird.f32 %v1313
        %vm1320 = vweird.f32 %v1314
        %vm1321 = vmor %vm1319, %vm1320
        %v1322 = vsel %vm1321, %v1314, %v1318
        %v1323 = vand.u32 2147483647, %v1313
        %vm1324 = vcmp.eq.f32.partialorder %v1323, 8.507059e+37
        %v1325 = vand.u32 %v1313, 2147483648
        %v1326 = vor.u32 1.1754944e-38, %v1325
        %v1327 = vsel %vm1324, %v1326, %v1322
        %v1328 = vmul.f32 1.0, %v1327
        %v1329 = vrot.slane %v1287, 4
        %v1331 = vtanh.pop %v1329
        %v1332 = vrot.slane %v1287, 6
        %v1334 = vxor.u32 %v1332, 2147483648
        %v1335 = vmul.f32 %v1334, 1.442695
        %v1336 = vpow.pop %v1335
        %v1337 = vadd.f32 %v1336, 1.0
        %v1338 = vrcp.pop %v1337
        %v1339 = vmul.f32 %v1337, %v1338
        %v1340 = vsub.f32 1.0, %v1339
        %v1341 = vmul.f32 %v1338, %v1340
        %v1342 = vadd.f32 %v1338, %v1341
        %vm1343 = vweird.f32 %v1337
        %vm1344 = vweird.f32 %v1338
        %vm1345 = vmor %vm1343, %vm1344
        %v1346 = vsel %vm1345, %v1338, %v1342
        %v1347 = vand.u32 2147483647, %v1337
        %vm1348 = vcmp.eq.f32.partialorder %v1347, 8.507059e+37
        %v1349 = vand.u32 %v1337, 2147483648
        %v1350 = vor.u32 1.1754944e-38, %v1349
        %v1351 = vsel %vm1348, %v1350, %v1346
        %v1352 = vmul.f32 1.0, %v1351
        %v1353 = vmul.f32 %v1328, %v1193
        %v1354 = vmul.f32 %v1306, %v1331
        %v1355 = vadd.f32 %v1353, %v1354
        %v1356 = vtanh.pop %v1355
        %v1357 = vmul.f32 %v1352, %v1356
        %s1358 = sadd.s32 %s290, 5
        %p1359 = scmp.ge.s32.totalorder %s1358, 2
        %p1360 = scmp.lt.s32.totalorder %s1358, 18
        %p1361 = pnand %p1359, %p1360
        %p1362 = pneg %p1361
        %s1363 = scalar_select %p1362, 1, 0
        %s1364 = scvt.s32.f32 %s1363
        %v1365 = vstv %s1364
        %v1366 = vmul.f32 %v1365, %v1357
        %s1367 = ssub.f32 1.0, %s1364
        %v1368 = vstv %s1367
        %v1369 = vmul.f32 %v1368, %v1190
        %v1370 = vadd.f32 %v1366, %v1369
        %v1371 = vmul.f32 %v1365, %v1355
        %v1372 = vmul.f32 %v1368, %v1193
        %v1373 = vadd.f32 %v1371, %v1372
        %s1374 = scalar_lea.vmem %s218, 48
        %v1375 = vld [vmem:[%s1374] sm:$0xff]
        %1376 = vmatpush.msra.mxu0 %v286
        %1377 = vmatpush.msra.mxu0 %v282
        %1378 = vmatpush.msra.mxu0 %v278
        %1379 = vmatpush.msra.mxu0 %v274
        %1380 = vmatpush.msra.mxu0 %v270
        %1381 = vmatpush.msra.mxu0 %v266
        %1382 = vmatpush.msra.mxu0 %v262
        %1383 = vmatpush.msra.mxu0 %v258
        %1384 = vmatpush.msra.mxu0 %v254
        %1385 = vmatpush.msra.mxu0 %v250
        %1386 = vmatpush.msra.mxu0 %v246
        %1387 = vmatpush.msra.mxu0 %v242
        %1388 = vmatpush.msra.mxu0 %v238
        %1389 = vmatpush.msra.mxu0 %v234
        %1390 = vmatpush.msra.mxu0 %v230
        %1391 = vmatpush.msra.mxu0 %v226
        %1392 = vmatmul.f32.gmra.mxu0 %v1370
        %v1393 = vpop.f32.mrf.mxu0
        %v1394 = vadd.f32 0.0, %v1393
        %1395 = vdwg.mxu0
        %1396 = vmatpush.msra.mxu0 %v287
        %1397 = vmatpush.msra.mxu0 %v283
        %1398 = vmatpush.msra.mxu0 %v279
        %1399 = vmatpush.msra.mxu0 %v275
        %1400 = vmatpush.msra.mxu0 %v271
        %1401 = vmatpush.msra.mxu0 %v267
        %1402 = vmatpush.msra.mxu0 %v263
        %1403 = vmatpush.msra.mxu0 %v259
        %1404 = vmatpush.msra.mxu0 %v255
        %1405 = vmatpush.msra.mxu0 %v251
        %1406 = vmatpush.msra.mxu0 %v247
        %1407 = vmatpush.msra.mxu0 %v243
        %1408 = vmatpush.msra.mxu0 %v239
        %1409 = vmatpush.msra.mxu0 %v235
        %1410 = vmatpush.msra.mxu0 %v231
        %1411 = vmatpush.msra.mxu0 %v227
        %1412 = vmatmul.f32.gmra.mxu0 %v1370
        %v1413 = vpop.f32.mrf.mxu0
        %v1414 = vadd.f32 0.0, %v1413
        %1415 = vdwg.mxu0
        %1416 = vmatpush.msra.mxu0 %v288
        %1417 = vmatpush.msra.mxu0 %v284
        %1418 = vmatpush.msra.mxu0 %v280
        %1419 = vmatpush.msra.mxu0 %v276
        %1420 = vmatpush.msra.mxu0 %v272
        %1421 = vmatpush.msra.mxu0 %v268
        %1422 = vmatpush.msra.mxu0 %v264
        %1423 = vmatpush.msra.mxu0 %v260
        %1424 = vmatpush.msra.mxu0 %v256
        %1425 = vmatpush.msra.mxu0 %v252
        %1426 = vmatpush.msra.mxu0 %v248
        %1427 = vmatpush.msra.mxu0 %v244
        %1428 = vmatpush.msra.mxu0 %v240
        %1429 = vmatpush.msra.mxu0 %v236
        %1430 = vmatpush.msra.mxu0 %v232
        %1431 = vmatpush.msra.mxu0 %v228
        %1432 = vmatmul.f32.gmra.mxu0 %v1370
        %v1433 = vpop.f32.mrf.mxu0
        %v1434 = vadd.f32 0.0, %v1433
        %1435 = vdwg.mxu0
        %1436 = vmatpush.msra.mxu0 %v289
        %1437 = vmatpush.msra.mxu0 %v285
        %1438 = vmatpush.msra.mxu0 %v281
        %1439 = vmatpush.msra.mxu0 %v277
        %1440 = vmatpush.msra.mxu0 %v273
        %1441 = vmatpush.msra.mxu0 %v269
        %1442 = vmatpush.msra.mxu0 %v265
        %1443 = vmatpush.msra.mxu0 %v261
        %1444 = vmatpush.msra.mxu0 %v257
        %1445 = vmatpush.msra.mxu0 %v253
        %1446 = vmatpush.msra.mxu0 %v249
        %1447 = vmatpush.msra.mxu0 %v245
        %1448 = vmatpush.msra.mxu0 %v241
        %1449 = vmatpush.msra.mxu0 %v237
        %1450 = vmatpush.msra.mxu0 %v233
        %1451 = vmatpush.msra.mxu0 %v229
        %1452 = vmatmul.f32.gmra.mxu0 %v1370
        %v1453 = vpop.f32.mrf.mxu0
        %v1454 = vadd.f32 0.0, %v1453
        %1455 = vdwg.mxu0
        %v1460 = vrot.slane %v1414, 6
        %v1461 = vrot.slane %v1434, 4
        %v1462 = vrot.slane %v1454, 2
        %v1463 = vsel %vm381, %v1394, %v1460
        %v1464 = vsel %vm383, %v1461, %v1462
        %v1465 = vsel %vm385, %v1463, %v1464
        %v1467 = vadd.f32 %v1375, %v1465
        %v1468 = vxor.u32 %v1467, 2147483648
        %v1469 = vmul.f32 %v1468, 1.442695
        %v1470 = vpow.pop %v1469
        %v1471 = vadd.f32 %v1470, 1.0
        %v1472 = vrcp.pop %v1471
        %v1473 = vmul.f32 %v1471, %v1472
        %v1474 = vsub.f32 1.0, %v1473
        %v1475 = vmul.f32 %v1472, %v1474
        %v1476 = vadd.f32 %v1472, %v1475
        %vm1477 = vweird.f32 %v1471
        %vm1478 = vweird.f32 %v1472
        %vm1479 = vmor %vm1477, %vm1478
        %v1480 = vsel %vm1479, %v1472, %v1476
        %v1481 = vand.u32 2147483647, %v1471
        %vm1482 = vcmp.eq.f32.partialorder %v1481, 8.507059e+37
        %v1483 = vand.u32 %v1471, 2147483648
        %v1484 = vor.u32 1.1754944e-38, %v1483
        %v1485 = vsel %vm1482, %v1484, %v1480
        %v1486 = vmul.f32 1.0, %v1485
        %v1488 = vrot.slane %v1467, 2
        %v1490 = vxor.u32 %v1488, 2147483648
        %v1491 = vmul.f32 %v1490, 1.442695
        %v1492 = vpow.pop %v1491
        %v1493 = vadd.f32 %v1492, 1.0
        %v1494 = vrcp.pop %v1493
        %v1495 = vmul.f32 %v1493, %v1494
        %v1496 = vsub.f32 1.0, %v1495
        %v1497 = vmul.f32 %v1494, %v1496
        %v1498 = vadd.f32 %v1494, %v1497
        %vm1499 = vweird.f32 %v1493
        %vm1500 = vweird.f32 %v1494
        %vm1501 = vmor %vm1499, %vm1500
        %v1502 = vsel %vm1501, %v1494, %v1498
        %v1503 = vand.u32 2147483647, %v1493
        %vm1504 = vcmp.eq.f32.partialorder %v1503, 8.507059e+37
        %v1505 = vand.u32 %v1493, 2147483648
        %v1506 = vor.u32 1.1754944e-38, %v1505
        %v1507 = vsel %vm1504, %v1506, %v1502
        %v1508 = vmul.f32 1.0, %v1507
        %v1509 = vrot.slane %v1467, 4
        %v1511 = vtanh.pop %v1509
        %v1512 = vrot.slane %v1467, 6
        %v1514 = vxor.u32 %v1512, 2147483648
        %v1515 = vmul.f32 %v1514, 1.442695
        %v1516 = vpow.pop %v1515
        %v1517 = vadd.f32 %v1516, 1.0
        %v1518 = vrcp.pop %v1517
        %v1519 = vmul.f32 %v1517, %v1518
        %v1520 = vsub.f32 1.0, %v1519
        %v1521 = vmul.f32 %v1518, %v1520
        %v1522 = vadd.f32 %v1518, %v1521
        %vm1523 = vweird.f32 %v1517
        %vm1524 = vweird.f32 %v1518
        %vm1525 = vmor %vm1523, %vm1524
        %v1526 = vsel %vm1525, %v1518, %v1522
        %v1527 = vand.u32 2147483647, %v1517
        %vm1528 = vcmp.eq.f32.partialorder %v1527, 8.507059e+37
        %v1529 = vand.u32 %v1517, 2147483648
        %v1530 = vor.u32 1.1754944e-38, %v1529
        %v1531 = vsel %vm1528, %v1530, %v1526
        %v1532 = vmul.f32 1.0, %v1531
        %v1533 = vmul.f32 %v1508, %v1373
        %v1534 = vmul.f32 %v1486, %v1511
        %v1535 = vadd.f32 %v1533, %v1534
        %v1536 = vtanh.pop %v1535
        %v1537 = vmul.f32 %v1532, %v1536
        %s1538 = sadd.s32 %s290, 6
        %p1539 = scmp.ge.s32.totalorder %s1538, 2
        %p1540 = scmp.lt.s32.totalorder %s1538, 18
        %p1541 = pnand %p1539, %p1540
        %p1542 = pneg %p1541
        %s1543 = scalar_select %p1542, 1, 0
        %s1544 = scvt.s32.f32 %s1543
        %v1545 = vstv %s1544
        %v1546 = vmul.f32 %v1545, %v1537
        %s1547 = ssub.f32 1.0, %s1544
        %v1548 = vstv %s1547
        %v1549 = vmul.f32 %v1548, %v1370
        %v1550 = vadd.f32 %v1546, %v1549
        %v1551 = vmul.f32 %v1545, %v1535
        %v1552 = vmul.f32 %v1548, %v1373
        %v1553 = vadd.f32 %v1551, %v1552
        %s1554 = scalar_lea.vmem %s218, 56
        %v1555 = vld [vmem:[%s1554] sm:$0xff]
        %1556 = vmatpush.msra.mxu0 %v286
        %1557 = vmatpush.msra.mxu0 %v282
        %1558 = vmatpush.msra.mxu0 %v278
        %1559 = vmatpush.msra.mxu0 %v274
        %1560 = vmatpush.msra.mxu0 %v270
        %1561 = vmatpush.msra.mxu0 %v266
        %1562 = vmatpush.msra.mxu0 %v262
        %1563 = vmatpush.msra.mxu0 %v258
        %1564 = vmatpush.msra.mxu0 %v254
        %1565 = vmatpush.msra.mxu0 %v250
        %1566 = vmatpush.msra.mxu0 %v246
        %1567 = vmatpush.msra.mxu0 %v242
        %1568 = vmatpush.msra.mxu0 %v238
        %1569 = vmatpush.msra.mxu0 %v234
        %1570 = vmatpush.msra.mxu0 %v230
        %1571 = vmatpush.msra.mxu0 %v226
        %1572 = vmatmul.f32.gmra.mxu0 %v1550
        %v1573 = vpop.f32.mrf.mxu0
        %v1574 = vadd.f32 0.0, %v1573
        %1575 = vdwg.mxu0
        %1576 = vmatpush.msra.mxu0 %v287
        %1577 = vmatpush.msra.mxu0 %v283
        %1578 = vmatpush.msra.mxu0 %v279
        %1579 = vmatpush.msra.mxu0 %v275
        %1580 = vmatpush.msra.mxu0 %v271
        %1581 = vmatpush.msra.mxu0 %v267
        %1582 = vmatpush.msra.mxu0 %v263
        %1583 = vmatpush.msra.mxu0 %v259
        %1584 = vmatpush.msra.mxu0 %v255
        %1585 = vmatpush.msra.mxu0 %v251
        %1586 = vmatpush.msra.mxu0 %v247
        %1587 = vmatpush.msra.mxu0 %v243
        %1588 = vmatpush.msra.mxu0 %v239
        %1589 = vmatpush.msra.mxu0 %v235
        %1590 = vmatpush.msra.mxu0 %v231
        %1591 = vmatpush.msra.mxu0 %v227
        %1592 = vmatmul.f32.gmra.mxu0 %v1550
        %v1593 = vpop.f32.mrf.mxu0
        %v1594 = vadd.f32 0.0, %v1593
        %1595 = vdwg.mxu0
        %1596 = vmatpush.msra.mxu0 %v288
        %1597 = vmatpush.msra.mxu0 %v284
        %1598 = vmatpush.msra.mxu0 %v280
        %1599 = vmatpush.msra.mxu0 %v276
        %1600 = vmatpush.msra.mxu0 %v272
        %1601 = vmatpush.msra.mxu0 %v268
        %1602 = vmatpush.msra.mxu0 %v264
        %1603 = vmatpush.msra.mxu0 %v260
        %1604 = vmatpush.msra.mxu0 %v256
        %1605 = vmatpush.msra.mxu0 %v252
        %1606 = vmatpush.msra.mxu0 %v248
        %1607 = vmatpush.msra.mxu0 %v244
        %1608 = vmatpush.msra.mxu0 %v240
        %1609 = vmatpush.msra.mxu0 %v236
        %1610 = vmatpush.msra.mxu0 %v232
        %1611 = vmatpush.msra.mxu0 %v228
        %1612 = vmatmul.f32.gmra.mxu0 %v1550
        %v1613 = vpop.f32.mrf.mxu0
        %v1614 = vadd.f32 0.0, %v1613
        %1615 = vdwg.mxu0
        %1616 = vmatpush.msra.mxu0 %v289
        %1617 = vmatpush.msra.mxu0 %v285
        %1618 = vmatpush.msra.mxu0 %v281
        %1619 = vmatpush.msra.mxu0 %v277
        %1620 = vmatpush.msra.mxu0 %v273
        %1621 = vmatpush.msra.mxu0 %v269
        %1622 = vmatpush.msra.mxu0 %v265
        %1623 = vmatpush.msra.mxu0 %v261
        %1624 = vmatpush.msra.mxu0 %v257
        %1625 = vmatpush.msra.mxu0 %v253
        %1626 = vmatpush.msra.mxu0 %v249
        %1627 = vmatpush.msra.mxu0 %v245
        %1628 = vmatpush.msra.mxu0 %v241
        %1629 = vmatpush.msra.mxu0 %v237
        %1630 = vmatpush.msra.mxu0 %v233
        %1631 = vmatpush.msra.mxu0 %v229
        %1632 = vmatmul.f32.gmra.mxu0 %v1550
        %v1633 = vpop.f32.mrf.mxu0
        %v1634 = vadd.f32 0.0, %v1633
        %1635 = vdwg.mxu0
        %v1640 = vrot.slane %v1594, 6
        %v1641 = vrot.slane %v1614, 4
        %v1642 = vrot.slane %v1634, 2
        %v1643 = vsel %vm381, %v1574, %v1640
        %v1644 = vsel %vm383, %v1641, %v1642
        %v1645 = vsel %vm385, %v1643, %v1644
        %v1647 = vadd.f32 %v1555, %v1645
        %v1648 = vxor.u32 %v1647, 2147483648
        %v1649 = vmul.f32 %v1648, 1.442695
        %v1650 = vpow.pop %v1649
        %v1651 = vadd.f32 %v1650, 1.0
        %v1652 = vrcp.pop %v1651
        %v1653 = vmul.f32 %v1651, %v1652
        %v1654 = vsub.f32 1.0, %v1653
        %v1655 = vmul.f32 %v1652, %v1654
        %v1656 = vadd.f32 %v1652, %v1655
        %vm1657 = vweird.f32 %v1651
        %vm1658 = vweird.f32 %v1652
        %vm1659 = vmor %vm1657, %vm1658
        %v1660 = vsel %vm1659, %v1652, %v1656
        %v1661 = vand.u32 2147483647, %v1651
        %vm1662 = vcmp.eq.f32.partialorder %v1661, 8.507059e+37
        %v1663 = vand.u32 %v1651, 2147483648
        %v1664 = vor.u32 1.1754944e-38, %v1663
        %v1665 = vsel %vm1662, %v1664, %v1660
        %v1666 = vmul.f32 1.0, %v1665
        %v1668 = vrot.slane %v1647, 2
        %v1670 = vxor.u32 %v1668, 2147483648
        %v1671 = vmul.f32 %v1670, 1.442695
        %v1672 = vpow.pop %v1671
        %v1673 = vadd.f32 %v1672, 1.0
        %v1674 = vrcp.pop %v1673
        %v1675 = vmul.f32 %v1673, %v1674
        %v1676 = vsub.f32 1.0, %v1675
        %v1677 = vmul.f32 %v1674, %v1676
        %v1678 = vadd.f32 %v1674, %v1677
        %vm1679 = vweird.f32 %v1673
        %vm1680 = vweird.f32 %v1674
        %vm1681 = vmor %vm1679, %vm1680
        %v1682 = vsel %vm1681, %v1674, %v1678
        %v1683 = vand.u32 2147483647, %v1673
        %vm1684 = vcmp.eq.f32.partialorder %v1683, 8.507059e+37
        %v1685 = vand.u32 %v1673, 2147483648
        %v1686 = vor.u32 1.1754944e-38, %v1685
        %v1687 = vsel %vm1684, %v1686, %v1682
        %v1688 = vmul.f32 1.0, %v1687
        %v1689 = vrot.slane %v1647, 4
        %v1691 = vtanh.pop %v1689
        %v1692 = vrot.slane %v1647, 6
        %v1694 = vxor.u32 %v1692, 2147483648
        %v1695 = vmul.f32 %v1694, 1.442695
        %v1696 = vpow.pop %v1695
        %v1697 = vadd.f32 %v1696, 1.0
        %v1698 = vrcp.pop %v1697
        %v1699 = vmul.f32 %v1697, %v1698
        %v1700 = vsub.f32 1.0, %v1699
        %v1701 = vmul.f32 %v1698, %v1700
        %v1702 = vadd.f32 %v1698, %v1701
        %vm1703 = vweird.f32 %v1697
        %vm1704 = vweird.f32 %v1698
        %vm1705 = vmor %vm1703, %vm1704
        %v1706 = vsel %vm1705, %v1698, %v1702
        %v1707 = vand.u32 2147483647, %v1697
        %vm1708 = vcmp.eq.f32.partialorder %v1707, 8.507059e+37
        %v1709 = vand.u32 %v1697, 2147483648
        %v1710 = vor.u32 1.1754944e-38, %v1709
        %v1711 = vsel %vm1708, %v1710, %v1706
        %v1712 = vmul.f32 1.0, %v1711
        %v1713 = vmul.f32 %v1688, %v1553
        %v1714 = vmul.f32 %v1666, %v1691
        %v1715 = vadd.f32 %v1713, %v1714
        %v1716 = vtanh.pop %v1715
        %v1717 = vmul.f32 %v1712, %v1716
        %s1718 = sadd.s32 %s290, 7
        %p1719 = scmp.ge.s32.totalorder %s1718, 2
        %p1720 = scmp.lt.s32.totalorder %s1718, 18
        %p1721 = pnand %p1719, %p1720
        %p1722 = pneg %p1721
        %s1723 = scalar_select %p1722, 1, 0
        %s1724 = scvt.s32.f32 %s1723
        %v1725 = vstv %s1724
        %v1726 = vmul.f32 %v1725, %v1717
        %s1727 = ssub.f32 1.0, %s1724
        %v1728 = vstv %s1727
        %v1729 = vmul.f32 %v1728, %v1550
        %v1730 = vadd.f32 %v1726, %v1729
        %v1731 = vmul.f32 %v1725, %v1715
        %v1732 = vmul.f32 %v1728, %v1553
        %v1733 = vadd.f32 %v1731, %v1732
        %1734 = vst [vmem:[#allocation2] sm:$0x3] %v1730
        %1735 = vst [vmem:[#allocation3] sm:$0x3] %v1733
        %p1736 = scmp.eq.s32.totalorder %s21, 2
        // Predicated region
        $region41: #{network_forward.3} parent=35 // pred_check
          %p1737 = pneg %p1736
        $region42: #{network_forward.3} parent=35 // pred_check_branch
          %1739 = sbr.rel (%p1737) target = $region44
        $region43: #{network_forward.3} parent=35 // pred_region
          %v1740 = vld [vmem:[%s2] sm:$0xff]
          %v1741 = vld [vmem:[%s2 + $0x8] sm:$0xff]
          %v1742 = vld [vmem:[%s2 + $0x10] sm:$0xff]
          %v1743 = vld [vmem:[%s2 + $0x18] sm:$0xff]
          %v1744 = vld [vmem:[%s2 + $0x20] sm:$0xff]
          %v1745 = vld [vmem:[%s2 + $0x28] sm:$0xff]
          %v1746 = vld [vmem:[%s2 + $0x30] sm:$0xff]
          %v1747 = vld [vmem:[%s2 + $0x38] sm:$0xff]
          %v1748 = vld [vmem:[%s2 + $0x40] sm:$0xff]
          %v1749 = vld [vmem:[%s2 + $0x48] sm:$0xff]
          %v1750 = vld [vmem:[%s2 + $0x50] sm:$0xff]
          %v1751 = vld [vmem:[%s2 + $0x58] sm:$0xff]
          %v1752 = vld [vmem:[%s2 + $0x60] sm:$0xff]
          %v1753 = vld [vmem:[%s2 + $0x68] sm:$0xff]
          %v1754 = vld [vmem:[%s2 + $0x70] sm:$0xff]
          %v1755 = vld [vmem:[%s2 + $0x78] sm:$0xff]
          %v1756 = vld [vmem:[%s3] sm:$0x1]
          %v1758 = vperm.slane %v1756, 0
          %1760 = vmatpush.msra.mxu0 %v1755
          %1761 = vmatpush.msra.mxu0 %v1754
          %1762 = vmatpush.msra.mxu0 %v1753
          %1763 = vmatpush.msra.mxu0 %v1752
          %1764 = vmatpush.msra.mxu0 %v1751
          %1765 = vmatpush.msra.mxu0 %v1750
          %1766 = vmatpush.msra.mxu0 %v1749
          %1767 = vmatpush.msra.mxu0 %v1748
          %1768 = vmatpush.msra.mxu0 %v1747
          %1769 = vmatpush.msra.mxu0 %v1746
          %1770 = vmatpush.msra.mxu0 %v1745
          %1771 = vmatpush.msra.mxu0 %v1744
          %1772 = vmatpush.msra.mxu0 %v1743
          %1773 = vmatpush.msra.mxu0 %v1742
          %1774 = vmatpush.msra.mxu0 %v1741
          %1775 = vmatpush.msra.mxu0 %v1740
          %1776 = vmatmul.f32.gmra.mxu0 %v1733
          %v1777 = vpop.f32.mrf.mxu0
          %v1778 = vadd.f32 %v1758, %v1777
          %1779 = vdwg.mxu0
          %1780 = vst [vmem:[#allocation4] sm:$0x3] %v1778
        $region44: #{network_forward.3} parent=35 // pred_fallthru
          _
        // Predicated region
        $region45: #{network_forward.3} parent=35 // pred_check
          %p1781 = pneg %p137
        $region46: #{network_forward.3} parent=35 // pred_check_branch
          %1783 = sbr.rel (%p1781) target = $region48
        $region47: #{network_forward.3} parent=35 // pred_region
          %1785 = vsyncadd [#allocation5], 0
          %s1786 = smul.addr %s20, 2
          %s1787 = scalar_lea.hbm %s4, %s1786
          %s1789 = sshll.u32 [#allocation4], 4
          %s1790 = int_to_ptr.vmem [resolvable:$true] %s1789
          %s1791 = sshll.u32 %s1787, 4
          %s1792 = int_to_ptr.hbm [resolvable:$true] %s1791
          %1794 = dma.vmem_to_hbm [thread:$0]  %s1790, 32, %s1792, [#allocation5]
        $region48: #{network_forward.3} parent=35 // pred_fallthru
          _
        // Predicated region
        $region49: #{network_forward.3} parent=35 // pred_check
          %p1795 = pneg %p137
        $region50: #{network_forward.3} parent=35 // pred_check_branch
          %1797 = sbr.rel (%p1795) target = $region52
        $region51: #{network_forward.3} parent=35 // pred_region
          %1799 = dma.done [#allocation5], 32
        $region52: #{network_forward.3} parent=35 // pred_fallthru
          _
      $region36: #{network_forward.3} parent=5 // pred_fallthru
        _
      %p1800 = scmp.le.s32.totalorder 2, %s11
      // Predicated region
      $region53: #{network_forward.3} parent=5 // pred_check
        %p1801 = pneg %p1800
      $region54: #{network_forward.3} parent=5 // pred_check_branch
        %1803 = sbr.rel (%p1801) target = $region56
      $region55: #{network_forward.3} parent=5 // pred_region
        %s1804 = ssub.s32 %s11, 2
      $region56: #{network_forward.3} parent=5 // pred_fallthru
        _
    $region6: #{network_forward.3} parent=1 // loop_footer
      %s15 = sadd.s32 1, %s11
    $region7: #{network_forward.3} parent=1 // loop_footer_branch
      %10 = sbr.rel target = $region3
    $region8: #{network_forward.3} parent=1 // loop_exit
      _
    %1805 = vsyncpa [#allocation5], 1
    %s1806 = scalar_lea.sflag [#allocation5], 1
    %1807 = vsyncpa %s1806, 1

// kernel: network_forward.2
$region0: #{network_forward.2}
  #allocation0 [shape = 'u32[]', space=smem, size = 0x4, offset = 0x4, fixed_abs, tag = 'smem constant byte address 0x4 - core index']
  #allocation1 [shape = 'u32[72,128]{1,0:T(1,128)}', space=vmem, size = 0x9000, scoped, tag = 'internal scratch']
  %s0 = inlined_call_operand.vmem [shape: bf16[48,256], index: 0, kind: input, shape index: {}]
  %s1 = inlined_call_operand.vmem [shape: f32[48,1], index: 1, kind: input, shape index: {}]
  %s2 = inlined_call_operand.vmem [shape: bf16[5,256,512], index: 2, kind: input, shape index: {}]
  %s3 = inlined_call_operand.vmem [shape: f32[1,512], index: 3, kind: input, shape index: {}]
  %s4 = inlined_call_operand.vmem [shape: bf16[5,512,256], index: 4, kind: input, shape index: {}]
  %s5 = inlined_call_operand.vmem [shape: f32[1,256], index: 5, kind: input, shape index: {}]
  %s6 = inlined_call_operand.vmem [shape: bf16[5,256,128], index: 6, kind: input, shape index: {}]
  %s7 = inlined_call_operand.vmem [shape: f32[1,128], index: 7, kind: input, shape index: {}]
  %s8 = inlined_call_operand.vmem [shape: bf16[128,512], index: 8, kind: input, shape index: {}]
  %s9 = inlined_call_operand.vmem [shape: f32[1,512], index: 9, kind: input, shape index: {}]
  %s10 = inlined_call_operand.vmem [shape: f32[48,512], index: 10, kind: output, shape index: {}]
  %s11 = sld [smem:[#allocation0]]
  $region50: #{network_forward.2} parent=0
    _
  %s13 = ssub.s32 1, %s11
  %s14 = scalar_select 0, %s13, %s11
  // Predicated region
  $region2: #{network_forward.2} parent=0 // pred_check
    _
  $region3: #{network_forward.2} parent=0 // pred_check_branch
    %16 = sbr.rel (0) target = $region5
  $region4: #{network_forward.2} parent=0 // pred_region
    _
  $region5: #{network_forward.2} parent=0 // pred_fallthru
    _
  // Predicated region
  $region6: #{network_forward.2} parent=0 // pred_check
    _
  $region7: #{network_forward.2} parent=0 // pred_check_branch
    %18 = sbr.rel (0) target = $region9
  $region8: #{network_forward.2} parent=0 // pred_region
    _
  $region9: #{network_forward.2} parent=0 // pred_fallthru
    _
  // Predicated region
  $region10: #{network_forward.2} parent=0 // pred_check
    _
  $region11: #{network_forward.2} parent=0 // pred_check_branch
    %20 = sbr.rel (0) target = $region13
  $region12: #{network_forward.2} parent=0 // pred_region
    _
  $region13: #{network_forward.2} parent=0 // pred_fallthru
    _
  // Predicated region
  $region14: #{network_forward.2} parent=0 // pred_check
    _
  $region15: #{network_forward.2} parent=0 // pred_check_branch
    %22 = sbr.rel (0) target = $region17
  $region16: #{network_forward.2} parent=0 // pred_region
    _
  $region17: #{network_forward.2} parent=0 // pred_fallthru
    _
  // Predicated region
  $region18: #{network_forward.2} parent=0 // pred_check
    _
  $region19: #{network_forward.2} parent=0 // pred_check_branch
    %24 = sbr.rel (0) target = $region21
  $region20: #{network_forward.2} parent=0 // pred_region
    _
  $region21: #{network_forward.2} parent=0 // pred_fallthru
    _
  // Predicated region
  $region22: #{network_forward.2} parent=0 // pred_check
    _
  $region23: #{network_forward.2} parent=0 // pred_check_branch
    %26 = sbr.rel (0) target = $region25
  $region24: #{network_forward.2} parent=0 // pred_region
    _
  $region25: #{network_forward.2} parent=0 // pred_fallthru
    _
  // Predicated region
  $region26: #{network_forward.2} parent=0 // pred_check
    _
  $region27: #{network_forward.2} parent=0 // pred_check_branch
    %28 = sbr.rel (0) target = $region29
  $region28: #{network_forward.2} parent=0 // pred_region
    _
  $region29: #{network_forward.2} parent=0 // pred_fallthru
    _
  // Predicated region
  $region30: #{network_forward.2} parent=0 // pred_check
    _
  $region31: #{network_forward.2} parent=0 // pred_check_branch
    %30 = sbr.rel (0) target = $region33
  $region32: #{network_forward.2} parent=0 // pred_region
    _
  $region33: #{network_forward.2} parent=0 // pred_fallthru
    _
  // Predicated region
  $region34: #{network_forward.2} parent=0 // pred_check
    _
  $region35: #{network_forward.2} parent=0 // pred_check_branch
    %32 = sbr.rel (0) target = $region37
  $region36: #{network_forward.2} parent=0 // pred_region
    _
  $region37: #{network_forward.2} parent=0 // pred_fallthru
    _
  // Predicated region
  $region38: #{network_forward.2} parent=0 // pred_check
    _
  $region39: #{network_forward.2} parent=0 // pred_check_branch
    %34 = sbr.rel (0) target = $region41
  $region40: #{network_forward.2} parent=0 // pred_region
    _
  $region41: #{network_forward.2} parent=0 // pred_fallthru
    _
  %v35 = vld [vmem:[%s1] sm:$0xff]
  %v36 = vld [vmem:[%s1 + $0x8] sm:$0xff]
  %v37 = vld [vmem:[%s1 + $0x10] sm:$0xff]
  %v38 = vld [vmem:[%s1 + $0x18] sm:$0xff]
  %v39 = vld [vmem:[%s1 + $0x20] sm:$0xff]
  %v40 = vld [vmem:[%s1 + $0x28] sm:$0xff]
  %v41 = vld [vmem:[%s0] sm:$0xff]
  %v42 = vld [vmem:[%s0 + $0x8] sm:$0xff]
  %v43 = vld [vmem:[%s0 + $0x10] sm:$0xff]
  %v44 = vld [vmem:[%s0 + $0x18] sm:$0xff]
  %v45 = vld [vmem:[%s0 + $0x20] sm:$0xff]
  %v46 = vld [vmem:[%s0 + $0x28] sm:$0xff]
  %v47 = vunpack.c.l.bf16 %v41
  %v48 = vunpack.c.h.bf16 %v41
  %v49 = vunpack.c.l.bf16 %v42
  %v50 = vunpack.c.h.bf16 %v42
  %v51 = vunpack.c.l.bf16 %v43
  %v52 = vunpack.c.h.bf16 %v43
  %v53 = vunpack.c.l.bf16 %v44
  %v54 = vunpack.c.h.bf16 %v44
  %v55 = vunpack.c.l.bf16 %v45
  %v56 = vunpack.c.h.bf16 %v45
  %v57 = vunpack.c.l.bf16 %v46
  %v58 = vunpack.c.h.bf16 %v46
  %v59 = vrot.slane %v47, 6
  %v60 = vrot.slane %v48, 6
  %v61 = vrot.slane %v49, 6
  %v62 = vrot.slane %v50, 6
  %v63 = vrot.slane %v51, 6
  %v64 = vrot.slane %v52, 6
  %v65 = vrot.slane %v53, 6
  %v66 = vrot.slane %v54, 6
  %v67 = vrot.slane %v55, 6
  %v68 = vrot.slane %v56, 6
  %v69 = vrot.slane %v57, 6
  %v70 = vrot.slane %v58, 6
  %v71 = vlaneseq
  %v72 = vshrl.u32 %v71, 7
  %vm73 = vcmp.lt.s32.totalorder %v72, 2
  %v74 = vsel %vm73, %v67, %v69
  %v75 = vsel %vm73, %v68, %v70
  %v76 = vsel %vm73, %v65, %v67
  %v77 = vsel %vm73, %v66, %v68
  %v78 = vsel %vm73, %v63, %v65
  %v79 = vsel %vm73, %v64, %v66
  %v80 = vsel %vm73, %v61, %v63
  %v81 = vsel %vm73, %v62, %v64
  %v82 = vsel %vm73, %v59, %v61
  %v83 = vsel %vm73, %v60, %v62
  %v84 = vsel %vm73, %v69, %v59
  %v85 = vsel %vm73, %v70, %v60
  %v86 = vpack.c.bf16 %v82, %v84
  %v87 = vpack.c.bf16 %v83, %v85
  %v88 = vpack.c.bf16 %v78, %v80
  %v89 = vpack.c.bf16 %v79, %v81
  %v90 = vpack.c.bf16 %v74, %v76
  %v91 = vpack.c.bf16 %v75, %v77
  %v92 = vld [vmem:[%s2] sm:$0xff]
  %v93 = vld [vmem:[%s2 + $0x8] sm:$0xff]
  %v94 = vld [vmem:[%s2 + $0x10] sm:$0xff]
  %v95 = vld [vmem:[%s2 + $0x18] sm:$0xff]
  %v96 = vld [vmem:[%s2 + $0x20] sm:$0xff]
  %v97 = vld [vmem:[%s2 + $0x28] sm:$0xff]
  %v98 = vld [vmem:[%s2 + $0x30] sm:$0xff]
  %v99 = vld [vmem:[%s2 + $0x38] sm:$0xff]
  %v100 = vld [vmem:[%s2 + $0x40] sm:$0xff]
  %v101 = vld [vmem:[%s2 + $0x48] sm:$0xff]
  %v102 = vld [vmem:[%s2 + $0x50] sm:$0xff]
  %v103 = vld [vmem:[%s2 + $0x58] sm:$0xff]
  %v104 = vld [vmem:[%s2 + $0x60] sm:$0xff]
  %v105 = vld [vmem:[%s2 + $0x68] sm:$0xff]
  %v106 = vld [vmem:[%s2 + $0x70] sm:$0xff]
  %v107 = vld [vmem:[%s2 + $0x78] sm:$0xff]
  %v108 = vld [vmem:[%s2 + $0x80] sm:$0xff]
  %v109 = vld [vmem:[%s2 + $0x88] sm:$0xff]
  %v110 = vld [vmem:[%s2 + $0x90] sm:$0xff]
  %v111 = vld [vmem:[%s2 + $0x98] sm:$0xff]
  %v112 = vld [vmem:[%s2 + $0xa0] sm:$0xff]
  %v113 = vld [vmem:[%s2 + $0xa8] sm:$0xff]
  %v114 = vld [vmem:[%s2 + $0xb0] sm:$0xff]
  %v115 = vld [vmem:[%s2 + $0xb8] sm:$0xff]
  %v116 = vld [vmem:[%s2 + $0xc0] sm:$0xff]
  %v117 = vld [vmem:[%s2 + $0xc8] sm:$0xff]
  %v118 = vld [vmem:[%s2 + $0xd0] sm:$0xff]
  %v119 = vld [vmem:[%s2 + $0xd8] sm:$0xff]
  %v120 = vld [vmem:[%s2 + $0xe0] sm:$0xff]
  %v121 = vld [vmem:[%s2 + $0xe8] sm:$0xff]
  %v122 = vld [vmem:[%s2 + $0xf0] sm:$0xff]
  %v123 = vld [vmem:[%s2 + $0xf8] sm:$0xff]
  %v124 = vld [vmem:[%s2 + $0x100] sm:$0xff]
  %v125 = vld [vmem:[%s2 + $0x108] sm:$0xff]
  %v126 = vld [vmem:[%s2 + $0x110] sm:$0xff]
  %v127 = vld [vmem:[%s2 + $0x118] sm:$0xff]
  %v128 = vld [vmem:[%s2 + $0x120] sm:$0xff]
  %v129 = vld [vmem:[%s2 + $0x128] sm:$0xff]
  %v130 = vld [vmem:[%s2 + $0x130] sm:$0xff]
  %v131 = vld [vmem:[%s2 + $0x138] sm:$0xff]
  %v132 = vld [vmem:[%s2 + $0x140] sm:$0xff]
  %v133 = vld [vmem:[%s2 + $0x148] sm:$0xff]
  %v134 = vld [vmem:[%s2 + $0x150] sm:$0xff]
  %v135 = vld [vmem:[%s2 + $0x158] sm:$0xff]
  %v136 = vld [vmem:[%s2 + $0x160] sm:$0xff]
  %v137 = vld [vmem:[%s2 + $0x168] sm:$0xff]
  %v138 = vld [vmem:[%s2 + $0x170] sm:$0xff]
  %v139 = vld [vmem:[%s2 + $0x178] sm:$0xff]
  %v140 = vld [vmem:[%s2 + $0x180] sm:$0xff]
  %v141 = vld [vmem:[%s2 + $0x188] sm:$0xff]
  %v142 = vld [vmem:[%s2 + $0x190] sm:$0xff]
  %v143 = vld [vmem:[%s2 + $0x198] sm:$0xff]
  %v144 = vld [vmem:[%s2 + $0x1a0] sm:$0xff]
  %v145 = vld [vmem:[%s2 + $0x1a8] sm:$0xff]
  %v146 = vld [vmem:[%s2 + $0x1b0] sm:$0xff]
  %v147 = vld [vmem:[%s2 + $0x1b8] sm:$0xff]
  %v148 = vld [vmem:[%s2 + $0x1c0] sm:$0xff]
  %v149 = vld [vmem:[%s2 + $0x1c8] sm:$0xff]
  %v150 = vld [vmem:[%s2 + $0x1d0] sm:$0xff]
  %v151 = vld [vmem:[%s2 + $0x1d8] sm:$0xff]
  %v152 = vld [vmem:[%s2 + $0x1e0] sm:$0xff]
  %v153 = vld [vmem:[%s2 + $0x1e8] sm:$0xff]
  %v154 = vld [vmem:[%s2 + $0x1f0] sm:$0xff]
  %v155 = vld [vmem:[%s2 + $0x1f8] sm:$0xff]
  %v156 = vrot.slane %v47, 7
  %v157 = vrot.slane %v48, 7
  %v158 = vrot.slane %v49, 7
  %v159 = vrot.slane %v50, 7
  %v160 = vrot.slane %v51, 7
  %v161 = vrot.slane %v52, 7
  %v162 = vrot.slane %v53, 7
  %v163 = vrot.slane %v54, 7
  %v164 = vrot.slane %v55, 7
  %v165 = vrot.slane %v56, 7
  %v166 = vrot.slane %v57, 7
  %v167 = vrot.slane %v58, 7
  %vm168 = vcmp.lt.s32.totalorder %v72, 1
  %v169 = vsel %vm168, %v164, %v166
  %v170 = vsel %vm168, %v165, %v167
  %v171 = vsel %vm168, %v162, %v164
  %v172 = vsel %vm168, %v163, %v165
  %v173 = vsel %vm168, %v160, %v162
  %v174 = vsel %vm168, %v161, %v163
  %v175 = vsel %vm168, %v158, %v160
  %v176 = vsel %vm168, %v159, %v161
  %v177 = vsel %vm168, %v156, %v158
  %v178 = vsel %vm168, %v157, %v159
  %v179 = vsel %vm168, %v166, %v156
  %v180 = vsel %vm168, %v167, %v157
  %v181 = vpack.c.bf16 %v177, %v179
  %v182 = vpack.c.bf16 %v178, %v180
  %v183 = vpack.c.bf16 %v173, %v175
  %v184 = vpack.c.bf16 %v174, %v176
  %v185 = vpack.c.bf16 %v169, %v171
  %v186 = vpack.c.bf16 %v170, %v172
  %s187 = scalar_lea.vmem %s2, 512
  %v188 = vld [vmem:[%s187] sm:$0xff]
  %v189 = vld [vmem:[%s187 + $0x8] sm:$0xff]
  %v190 = vld [vmem:[%s187 + $0x10] sm:$0xff]
  %v191 = vld [vmem:[%s187 + $0x18] sm:$0xff]
  %v192 = vld [vmem:[%s187 + $0x20] sm:$0xff]
  %v193 = vld [vmem:[%s187 + $0x28] sm:$0xff]
  %v194 = vld [vmem:[%s187 + $0x30] sm:$0xff]
  %v195 = vld [vmem:[%s187 + $0x38] sm:$0xff]
  %v196 = vld [vmem:[%s187 + $0x40] sm:$0xff]
  %v197 = vld [vmem:[%s187 + $0x48] sm:$0xff]
  %v198 = vld [vmem:[%s187 + $0x50] sm:$0xff]
  %v199 = vld [vmem:[%s187 + $0x58] sm:$0xff]
  %v200 = vld [vmem:[%s187 + $0x60] sm:$0xff]
  %v201 = vld [vmem:[%s187 + $0x68] sm:$0xff]
  %v202 = vld [vmem:[%s187 + $0x70] sm:$0xff]
  %v203 = vld [vmem:[%s187 + $0x78] sm:$0xff]
  %v204 = vld [vmem:[%s187 + $0x80] sm:$0xff]
  %v205 = vld [vmem:[%s187 + $0x88] sm:$0xff]
  %v206 = vld [vmem:[%s187 + $0x90] sm:$0xff]
  %v207 = vld [vmem:[%s187 + $0x98] sm:$0xff]
  %v208 = vld [vmem:[%s187 + $0xa0] sm:$0xff]
  %v209 = vld [vmem:[%s187 + $0xa8] sm:$0xff]
  %v210 = vld [vmem:[%s187 + $0xb0] sm:$0xff]
  %v211 = vld [vmem:[%s187 + $0xb8] sm:$0xff]
  %v212 = vld [vmem:[%s187 + $0xc0] sm:$0xff]
  %v213 = vld [vmem:[%s187 + $0xc8] sm:$0xff]
  %v214 = vld [vmem:[%s187 + $0xd0] sm:$0xff]
  %v215 = vld [vmem:[%s187 + $0xd8] sm:$0xff]
  %v216 = vld [vmem:[%s187 + $0xe0] sm:$0xff]
  %v217 = vld [vmem:[%s187 + $0xe8] sm:$0xff]
  %v218 = vld [vmem:[%s187 + $0xf0] sm:$0xff]
  %v219 = vld [vmem:[%s187 + $0xf8] sm:$0xff]
  %v220 = vld [vmem:[%s187 + $0x100] sm:$0xff]
  %v221 = vld [vmem:[%s187 + $0x108] sm:$0xff]
  %v222 = vld [vmem:[%s187 + $0x110] sm:$0xff]
  %v223 = vld [vmem:[%s187 + $0x118] sm:$0xff]
  %v224 = vld [vmem:[%s187 + $0x120] sm:$0xff]
  %v225 = vld [vmem:[%s187 + $0x128] sm:$0xff]
  %v226 = vld [vmem:[%s187 + $0x130] sm:$0xff]
  %v227 = vld [vmem:[%s187 + $0x138] sm:$0xff]
  %v228 = vld [vmem:[%s187 + $0x140] sm:$0xff]
  %v229 = vld [vmem:[%s187 + $0x148] sm:$0xff]
  %v230 = vld [vmem:[%s187 + $0x150] sm:$0xff]
  %v231 = vld [vmem:[%s187 + $0x158] sm:$0xff]
  %v232 = vld [vmem:[%s187 + $0x160] sm:$0xff]
  %v233 = vld [vmem:[%s187 + $0x168] sm:$0xff]
  %v234 = vld [vmem:[%s187 + $0x170] sm:$0xff]
  %v235 = vld [vmem:[%s187 + $0x178] sm:$0xff]
  %v236 = vld [vmem:[%s187 + $0x180] sm:$0xff]
  %v237 = vld [vmem:[%s187 + $0x188] sm:$0xff]
  %v238 = vld [vmem:[%s187 + $0x190] sm:$0xff]
  %v239 = vld [vmem:[%s187 + $0x198] sm:$0xff]
  %v240 = vld [vmem:[%s187 + $0x1a0] sm:$0xff]
  %v241 = vld [vmem:[%s187 + $0x1a8] sm:$0xff]
  %v242 = vld [vmem:[%s187 + $0x1b0] sm:$0xff]
  %v243 = vld [vmem:[%s187 + $0x1b8] sm:$0xff]
  %v244 = vld [vmem:[%s187 + $0x1c0] sm:$0xff]
  %v245 = vld [vmem:[%s187 + $0x1c8] sm:$0xff]
  %v246 = vld [vmem:[%s187 + $0x1d0] sm:$0xff]
  %v247 = vld [vmem:[%s187 + $0x1d8] sm:$0xff]
  %v248 = vld [vmem:[%s187 + $0x1e0] sm:$0xff]
  %v249 = vld [vmem:[%s187 + $0x1e8] sm:$0xff]
  %v250 = vld [vmem:[%s187 + $0x1f0] sm:$0xff]
  %v251 = vld [vmem:[%s187 + $0x1f8] sm:$0xff]
  %v316 = vunpack.c.l.b16 %v188
  %v317 = vunpack.c.h.b16 %v188
  %v318 = vunpack.c.l.b16 %v189
  %v319 = vunpack.c.h.b16 %v189
  %v320 = vunpack.c.l.b16 %v190
  %v321 = vunpack.c.h.b16 %v190
  %v322 = vunpack.c.l.b16 %v191
  %v323 = vunpack.c.h.b16 %v191
  %v324 = vunpack.c.l.b16 %v192
  %v325 = vunpack.c.h.b16 %v192
  %v326 = vunpack.c.l.b16 %v193
  %v327 = vunpack.c.h.b16 %v193
  %v328 = vunpack.c.l.b16 %v194
  %v329 = vunpack.c.h.b16 %v194
  %v330 = vunpack.c.l.b16 %v195
  %v331 = vunpack.c.h.b16 %v195
  %v332 = vunpack.c.l.b16 %v196
  %v333 = vunpack.c.h.b16 %v196
  %v334 = vunpack.c.l.b16 %v197
  %v335 = vunpack.c.h.b16 %v197
  %v336 = vunpack.c.l.b16 %v198
  %v337 = vunpack.c.h.b16 %v198
  %v338 = vunpack.c.l.b16 %v199
  %v339 = vunpack.c.h.b16 %v199
  %v340 = vunpack.c.l.b16 %v200
  %v341 = vunpack.c.h.b16 %v200
  %v342 = vunpack.c.l.b16 %v201
  %v343 = vunpack.c.h.b16 %v201
  %v344 = vunpack.c.l.b16 %v202
  %v345 = vunpack.c.h.b16 %v202
  %v346 = vunpack.c.l.b16 %v203
  %v347 = vunpack.c.h.b16 %v203
  %v348 = vunpack.c.l.b16 %v204
  %v349 = vunpack.c.h.b16 %v204
  %v350 = vunpack.c.l.b16 %v205
  %v351 = vunpack.c.h.b16 %v205
  %v352 = vunpack.c.l.b16 %v206
  %v353 = vunpack.c.h.b16 %v206
  %v354 = vunpack.c.l.b16 %v207
  %v355 = vunpack.c.h.b16 %v207
  %v356 = vunpack.c.l.b16 %v208
  %v357 = vunpack.c.h.b16 %v208
  %v358 = vunpack.c.l.b16 %v209
  %v359 = vunpack.c.h.b16 %v209
  %v360 = vunpack.c.l.b16 %v210
  %v361 = vunpack.c.h.b16 %v210
  %v362 = vunpack.c.l.b16 %v211
  %v363 = vunpack.c.h.b16 %v211
  %v364 = vunpack.c.l.b16 %v212
  %v365 = vunpack.c.h.b16 %v212
  %v366 = vunpack.c.l.b16 %v213
  %v367 = vunpack.c.h.b16 %v213
  %v368 = vunpack.c.l.b16 %v214
  %v369 = vunpack.c.h.b16 %v214
  %v370 = vunpack.c.l.b16 %v215
  %v371 = vunpack.c.h.b16 %v215
  %v372 = vunpack.c.l.b16 %v216
  %v373 = vunpack.c.h.b16 %v216
  %v374 = vunpack.c.l.b16 %v217
  %v375 = vunpack.c.h.b16 %v217
  %v376 = vunpack.c.l.b16 %v218
  %v377 = vunpack.c.h.b16 %v218
  %v378 = vunpack.c.l.b16 %v219
  %v379 = vunpack.c.h.b16 %v219
  %v380 = vunpack.c.l.b16 %v220
  %v381 = vunpack.c.h.b16 %v220
  %v382 = vunpack.c.l.b16 %v221
  %v383 = vunpack.c.h.b16 %v221
  %v384 = vunpack.c.l.b16 %v222
  %v385 = vunpack.c.h.b16 %v222
  %v386 = vunpack.c.l.b16 %v223
  %v387 = vunpack.c.h.b16 %v223
  %v388 = vunpack.c.l.b16 %v224
  %v389 = vunpack.c.h.b16 %v224
  %v390 = vunpack.c.l.b16 %v225
  %v391 = vunpack.c.h.b16 %v225
  %v392 = vunpack.c.l.b16 %v226
  %v393 = vunpack.c.h.b16 %v226
  %v394 = vunpack.c.l.b16 %v227
  %v395 = vunpack.c.h.b16 %v227
  %v396 = vunpack.c.l.b16 %v228
  %v397 = vunpack.c.h.b16 %v228
  %v398 = vunpack.c.l.b16 %v229
  %v399 = vunpack.c.h.b16 %v229
  %v400 = vunpack.c.l.b16 %v230
  %v401 = vunpack.c.h.b16 %v230
  %v402 = vunpack.c.l.b16 %v231
  %v403 = vunpack.c.h.b16 %v231
  %v404 = vunpack.c.l.b16 %v232
  %v405 = vunpack.c.h.b16 %v232
  %v406 = vunpack.c.l.b16 %v233
  %v407 = vunpack.c.h.b16 %v233
  %v408 = vunpack.c.l.b16 %v234
  %v409 = vunpack.c.h.b16 %v234
  %v410 = vunpack.c.l.b16 %v235
  %v411 = vunpack.c.h.b16 %v235
  %v412 = vunpack.c.l.b16 %v236
  %v413 = vunpack.c.h.b16 %v236
  %v414 = vunpack.c.l.b16 %v237
  %v415 = vunpack.c.h.b16 %v237
  %v416 = vunpack.c.l.b16 %v238
  %v417 = vunpack.c.h.b16 %v238
  %v418 = vunpack.c.l.b16 %v239
  %v419 = vunpack.c.h.b16 %v239
  %v420 = vunpack.c.l.b16 %v240
  %v421 = vunpack.c.h.b16 %v240
  %v422 = vunpack.c.l.b16 %v241
  %v423 = vunpack.c.h.b16 %v241
  %v424 = vunpack.c.l.b16 %v242
  %v425 = vunpack.c.h.b16 %v242
  %v426 = vunpack.c.l.b16 %v243
  %v427 = vunpack.c.h.b16 %v243
  %v428 = vunpack.c.l.b16 %v244
  %v429 = vunpack.c.h.b16 %v244
  %v430 = vunpack.c.l.b16 %v245
  %v431 = vunpack.c.h.b16 %v245
  %v432 = vunpack.c.l.b16 %v246
  %v433 = vunpack.c.h.b16 %v246
  %v434 = vunpack.c.l.b16 %v247
  %v435 = vunpack.c.h.b16 %v247
  %v436 = vunpack.c.l.b16 %v248
  %v437 = vunpack.c.h.b16 %v248
  %v438 = vunpack.c.l.b16 %v249
  %v439 = vunpack.c.h.b16 %v249
  %v440 = vunpack.c.l.b16 %v250
  %v441 = vunpack.c.h.b16 %v250
  %v442 = vunpack.c.l.b16 %v251
  %v443 = vunpack.c.h.b16 %v251
  %v444 = vpack.c.b16 %v320, %v316
  %v445 = vpack.c.b16 %v321, %v317
  %v446 = vpack.c.b16 %v322, %v318
  %v447 = vpack.c.b16 %v323, %v319
  %v448 = vpack.c.b16 %v328, %v324
  %v449 = vpack.c.b16 %v329, %v325
  %v450 = vpack.c.b16 %v330, %v326
  %v451 = vpack.c.b16 %v331, %v327
  %v452 = vpack.c.b16 %v336, %v332
  %v453 = vpack.c.b16 %v337, %v333
  %v454 = vpack.c.b16 %v338, %v334
  %v455 = vpack.c.b16 %v339, %v335
  %v456 = vpack.c.b16 %v344, %v340
  %v457 = vpack.c.b16 %v345, %v341
  %v458 = vpack.c.b16 %v346, %v342
  %v459 = vpack.c.b16 %v347, %v343
  %v460 = vpack.c.b16 %v352, %v348
  %v461 = vpack.c.b16 %v353, %v349
  %v462 = vpack.c.b16 %v354, %v350
  %v463 = vpack.c.b16 %v355, %v351
  %v464 = vpack.c.b16 %v360, %v356
  %v465 = vpack.c.b16 %v361, %v357
  %v466 = vpack.c.b16 %v362, %v358
  %v467 = vpack.c.b16 %v363, %v359
  %v468 = vpack.c.b16 %v368, %v364
  %v469 = vpack.c.b16 %v369, %v365
  %v470 = vpack.c.b16 %v370, %v366
  %v471 = vpack.c.b16 %v371, %v367
  %v472 = vpack.c.b16 %v376, %v372
  %v473 = vpack.c.b16 %v377, %v373
  %v474 = vpack.c.b16 %v378, %v374
  %v475 = vpack.c.b16 %v379, %v375
  %v476 = vpack.c.b16 %v384, %v380
  %v477 = vpack.c.b16 %v385, %v381
  %v478 = vpack.c.b16 %v386, %v382
  %v479 = vpack.c.b16 %v387, %v383
  %v480 = vpack.c.b16 %v392, %v388
  %v481 = vpack.c.b16 %v393, %v389
  %v482 = vpack.c.b16 %v394, %v390
  %v483 = vpack.c.b16 %v395, %v391
  %v484 = vpack.c.b16 %v400, %v396
  %v485 = vpack.c.b16 %v401, %v397
  %v486 = vpack.c.b16 %v402, %v398
  %v487 = vpack.c.b16 %v403, %v399
  %v488 = vpack.c.b16 %v408, %v404
  %v489 = vpack.c.b16 %v409, %v405
  %v490 = vpack.c.b16 %v410, %v406
  %v491 = vpack.c.b16 %v411, %v407
  %v492 = vpack.c.b16 %v416, %v412
  %v493 = vpack.c.b16 %v417, %v413
  %v494 = vpack.c.b16 %v418, %v414
  %v495 = vpack.c.b16 %v419, %v415
  %v496 = vpack.c.b16 %v424, %v420
  %v497 = vpack.c.b16 %v425, %v421
  %v498 = vpack.c.b16 %v426, %v422
  %v499 = vpack.c.b16 %v427, %v423
  %v500 = vpack.c.b16 %v432, %v428
  %v501 = vpack.c.b16 %v433, %v429
  %v502 = vpack.c.b16 %v434, %v430
  %v503 = vpack.c.b16 %v435, %v431
  %v504 = vpack.c.b16 %v440, %v436
  %v505 = vpack.c.b16 %v441, %v437
  %v506 = vpack.c.b16 %v442, %v438
  %v507 = vpack.c.b16 %v443, %v439
  %572 = vmatpush.bf16.msra.mxu0 %v472
  %573 = vmatpush.bf16.msra.mxu0 %v468
  %574 = vmatpush.bf16.msra.mxu0 %v464
  %575 = vmatpush.bf16.msra.mxu0 %v460
  %576 = vmatpush.bf16.msra.mxu0 %v456
  %577 = vmatpush.bf16.msra.mxu0 %v452
  %578 = vmatpush.bf16.msra.mxu0 %v448
  %579 = vmatpush.bf16.msra.mxu0 %v444
  %580 = vmatmul.bf16.gmra.mxu0 %v181
  %v581 = vpop.f32.mrf.mxu0
  %v582 = vadd.f32 0.0, %v581
  %v583 = vpop.f32.mrf.mxu0
  %v584 = vadd.f32 0.0, %v583
  %585 = vmatmul.bf16.gmra.mxu0 %v183
  %v586 = vpop.f32.mrf.mxu0
  %v587 = vadd.f32 0.0, %v586
  %v588 = vpop.f32.mrf.mxu0
  %v589 = vadd.f32 0.0, %v588
  %590 = vmatmul.bf16.gmra.mxu0 %v185
  %v591 = vpop.f32.mrf.mxu0
  %v592 = vadd.f32 0.0, %v591
  %v593 = vpop.f32.mrf.mxu0
  %v594 = vadd.f32 0.0, %v593
  %595 = vdwg.mxu0
  %596 = vmatpush.bf16.msra.mxu0 %v504
  %597 = vmatpush.bf16.msra.mxu0 %v500
  %598 = vmatpush.bf16.msra.mxu0 %v496
  %599 = vmatpush.bf16.msra.mxu0 %v492
  %600 = vmatpush.bf16.msra.mxu0 %v488
  %601 = vmatpush.bf16.msra.mxu0 %v484
  %602 = vmatpush.bf16.msra.mxu0 %v480
  %603 = vmatpush.bf16.msra.mxu0 %v476
  %604 = vmatmul.bf16.gmra.mxu0 %v182
  %v605 = vpop.f32.mrf.mxu0
  %v606 = vadd.f32 %v582, %v605
  %v607 = vpop.f32.mrf.mxu0
  %v608 = vadd.f32 %v584, %v607
  %609 = vmatmul.bf16.gmra.mxu0 %v184
  %v610 = vpop.f32.mrf.mxu0
  %v611 = vadd.f32 %v587, %v610
  %v612 = vpop.f32.mrf.mxu0
  %v613 = vadd.f32 %v589, %v612
  %614 = vmatmul.bf16.gmra.mxu0 %v186
  %v615 = vpop.f32.mrf.mxu0
  %v616 = vadd.f32 %v592, %v615
  %v617 = vpop.f32.mrf.mxu0
  %v618 = vadd.f32 %v594, %v617
  %619 = vdwg.mxu0
  %620 = vmatpush.bf16.msra.mxu0 %v473
  %621 = vmatpush.bf16.msra.mxu0 %v469
  %622 = vmatpush.bf16.msra.mxu0 %v465
  %623 = vmatpush.bf16.msra.mxu0 %v461
  %624 = vmatpush.bf16.msra.mxu0 %v457
  %625 = vmatpush.bf16.msra.mxu0 %v453
  %626 = vmatpush.bf16.msra.mxu0 %v449
  %627 = vmatpush.bf16.msra.mxu0 %v445
  %628 = vmatmul.bf16.gmra.mxu0 %v181
  %v629 = vpop.f32.mrf.mxu0
  %v630 = vadd.f32 0.0, %v629
  %v631 = vpop.f32.mrf.mxu0
  %v632 = vadd.f32 0.0, %v631
  %633 = vmatmul.bf16.gmra.mxu0 %v183
  %v634 = vpop.f32.mrf.mxu0
  %v635 = vadd.f32 0.0, %v634
  %v636 = vpop.f32.mrf.mxu0
  %v637 = vadd.f32 0.0, %v636
  %638 = vmatmul.bf16.gmra.mxu0 %v185
  %v639 = vpop.f32.mrf.mxu0
  %v640 = vadd.f32 0.0, %v639
  %v641 = vpop.f32.mrf.mxu0
  %v642 = vadd.f32 0.0, %v641
  %643 = vdwg.mxu0
  %644 = vmatpush.bf16.msra.mxu0 %v505
  %645 = vmatpush.bf16.msra.mxu0 %v501
  %646 = vmatpush.bf16.msra.mxu0 %v497
  %647 = vmatpush.bf16.msra.mxu0 %v493
  %648 = vmatpush.bf16.msra.mxu0 %v489
  %649 = vmatpush.bf16.msra.mxu0 %v485
  %650 = vmatpush.bf16.msra.mxu0 %v481
  %651 = vmatpush.bf16.msra.mxu0 %v477
  %652 = vmatmul.bf16.gmra.mxu0 %v182
  %v653 = vpop.f32.mrf.mxu0
  %v654 = vadd.f32 %v630, %v653
  %v655 = vpop.f32.mrf.mxu0
  %v656 = vadd.f32 %v632, %v655
  %657 = vmatmul.bf16.gmra.mxu0 %v184
  %v658 = vpop.f32.mrf.mxu0
  %v659 = vadd.f32 %v635, %v658
  %v660 = vpop.f32.mrf.mxu0
  %v661 = vadd.f32 %v637, %v660
  %662 = vmatmul.bf16.gmra.mxu0 %v186
  %v663 = vpop.f32.mrf.mxu0
  %v664 = vadd.f32 %v640, %v663
  %v665 = vpop.f32.mrf.mxu0
  %v666 = vadd.f32 %v642, %v665
  %667 = vdwg.mxu0
  %668 = vmatpush.bf16.msra.mxu0 %v474
  %669 = vmatpush.bf16.msra.mxu0 %v470
  %670 = vmatpush.bf16.msra.mxu0 %v466
  %671 = vmatpush.bf16.msra.mxu0 %v462
  %672 = vmatpush.bf16.msra.mxu0 %v458
  %673 = vmatpush.bf16.msra.mxu0 %v454
  %674 = vmatpush.bf16.msra.mxu0 %v450
  %675 = vmatpush.bf16.msra.mxu0 %v446
  %676 = vmatmul.bf16.gmra.mxu0 %v181
  %v677 = vpop.f32.mrf.mxu0
  %v678 = vadd.f32 0.0, %v677
  %v679 = vpop.f32.mrf.mxu0
  %v680 = vadd.f32 0.0, %v679
  %681 = vmatmul.bf16.gmra.mxu0 %v183
  %v682 = vpop.f32.mrf.mxu0
  %v683 = vadd.f32 0.0, %v682
  %v684 = vpop.f32.mrf.mxu0
  %v685 = vadd.f32 0.0, %v684
  %686 = vmatmul.bf16.gmra.mxu0 %v185
  %v687 = vpop.f32.mrf.mxu0
  %v688 = vadd.f32 0.0, %v687
  %v689 = vpop.f32.mrf.mxu0
  %v690 = vadd.f32 0.0, %v689
  %691 = vdwg.mxu0
  %692 = vmatpush.bf16.msra.mxu0 %v506
  %693 = vmatpush.bf16.msra.mxu0 %v502
  %694 = vmatpush.bf16.msra.mxu0 %v498
  %695 = vmatpush.bf16.msra.mxu0 %v494
  %696 = vmatpush.bf16.msra.mxu0 %v490
  %697 = vmatpush.bf16.msra.mxu0 %v486
  %698 = vmatpush.bf16.msra.mxu0 %v482
  %699 = vmatpush.bf16.msra.mxu0 %v478
  %700 = vmatmul.bf16.gmra.mxu0 %v182
  %v701 = vpop.f32.mrf.mxu0
  %v702 = vadd.f32 %v678, %v701
  %v703 = vpop.f32.mrf.mxu0
  %v704 = vadd.f32 %v680, %v703
  %705 = vmatmul.bf16.gmra.mxu0 %v184
  %v706 = vpop.f32.mrf.mxu0
  %v707 = vadd.f32 %v683, %v706
  %v708 = vpop.f32.mrf.mxu0
  %v709 = vadd.f32 %v685, %v708
  %710 = vmatmul.bf16.gmra.mxu0 %v186
  %v711 = vpop.f32.mrf.mxu0
  %v712 = vadd.f32 %v688, %v711
  %v713 = vpop.f32.mrf.mxu0
  %v714 = vadd.f32 %v690, %v713
  %715 = vdwg.mxu0
  %716 = vmatpush.bf16.msra.mxu0 %v475
  %717 = vmatpush.bf16.msra.mxu0 %v471
  %718 = vmatpush.bf16.msra.mxu0 %v467
  %719 = vmatpush.bf16.msra.mxu0 %v463
  %720 = vmatpush.bf16.msra.mxu0 %v459
  %721 = vmatpush.bf16.msra.mxu0 %v455
  %722 = vmatpush.bf16.msra.mxu0 %v451
  %723 = vmatpush.bf16.msra.mxu0 %v447
  %724 = vmatmul.bf16.gmra.mxu0 %v181
  %v725 = vpop.f32.mrf.mxu0
  %v726 = vadd.f32 0.0, %v725
  %v727 = vpop.f32.mrf.mxu0
  %v728 = vadd.f32 0.0, %v727
  %729 = vmatmul.bf16.gmra.mxu0 %v183
  %v730 = vpop.f32.mrf.mxu0
  %v731 = vadd.f32 0.0, %v730
  %v732 = vpop.f32.mrf.mxu0
  %v733 = vadd.f32 0.0, %v732
  %734 = vmatmul.bf16.gmra.mxu0 %v185
  %v735 = vpop.f32.mrf.mxu0
  %v736 = vadd.f32 0.0, %v735
  %v737 = vpop.f32.mrf.mxu0
  %v738 = vadd.f32 0.0, %v737
  %739 = vdwg.mxu0
  %740 = vmatpush.bf16.msra.mxu0 %v507
  %741 = vmatpush.bf16.msra.mxu0 %v503
  %742 = vmatpush.bf16.msra.mxu0 %v499
  %743 = vmatpush.bf16.msra.mxu0 %v495
  %744 = vmatpush.bf16.msra.mxu0 %v491
  %745 = vmatpush.bf16.msra.mxu0 %v487
  %746 = vmatpush.bf16.msra.mxu0 %v483
  %747 = vmatpush.bf16.msra.mxu0 %v479
  %748 = vmatmul.bf16.gmra.mxu0 %v182
  %v749 = vpop.f32.mrf.mxu0
  %v750 = vadd.f32 %v726, %v749
  %v751 = vpop.f32.mrf.mxu0
  %v752 = vadd.f32 %v728, %v751
  %753 = vmatmul.bf16.gmra.mxu0 %v184
  %v754 = vpop.f32.mrf.mxu0
  %v755 = vadd.f32 %v731, %v754
  %v756 = vpop.f32.mrf.mxu0
  %v757 = vadd.f32 %v733, %v756
  %758 = vmatmul.bf16.gmra.mxu0 %v186
  %v759 = vpop.f32.mrf.mxu0
  %v760 = vadd.f32 %v736, %v759
  %v761 = vpop.f32.mrf.mxu0
  %v762 = vadd.f32 %v738, %v761
  %763 = vdwg.mxu0
  %v828 = vunpack.c.l.b16 %v92
  %v829 = vunpack.c.h.b16 %v92
  %v830 = vunpack.c.l.b16 %v93
  %v831 = vunpack.c.h.b16 %v93
  %v832 = vunpack.c.l.b16 %v94
  %v833 = vunpack.c.h.b16 %v94
  %v834 = vunpack.c.l.b16 %v95
  %v835 = vunpack.c.h.b16 %v95
  %v836 = vunpack.c.l.b16 %v96
  %v837 = vunpack.c.h.b16 %v96
  %v838 = vunpack.c.l.b16 %v97
  %v839 = vunpack.c.h.b16 %v97
  %v840 = vunpack.c.l.b16 %v98
  %v841 = vunpack.c.h.b16 %v98
  %v842 = vunpack.c.l.b16 %v99
  %v843 = vunpack.c.h.b16 %v99
  %v844 = vunpack.c.l.b16 %v100
  %v845 = vunpack.c.h.b16 %v100
  %v846 = vunpack.c.l.b16 %v101
  %v847 = vunpack.c.h.b16 %v101
  %v848 = vunpack.c.l.b16 %v102
  %v849 = vunpack.c.h.b16 %v102
  %v850 = vunpack.c.l.b16 %v103
  %v851 = vunpack.c.h.b16 %v103
  %v852 = vunpack.c.l.b16 %v104
  %v853 = vunpack.c.h.b16 %v104
  %v854 = vunpack.c.l.b16 %v105
  %v855 = vunpack.c.h.b16 %v105
  %v856 = vunpack.c.l.b16 %v106
  %v857 = vunpack.c.h.b16 %v106
  %v858 = vunpack.c.l.b16 %v107
  %v859 = vunpack.c.h.b16 %v107
  %v860 = vunpack.c.l.b16 %v108
  %v861 = vunpack.c.h.b16 %v108
  %v862 = vunpack.c.l.b16 %v109
  %v863 = vunpack.c.h.b16 %v109
  %v864 = vunpack.c.l.b16 %v110
  %v865 = vunpack.c.h.b16 %v110
  %v866 = vunpack.c.l.b16 %v111
  %v867 = vunpack.c.h.b16 %v111
  %v868 = vunpack.c.l.b16 %v112
  %v869 = vunpack.c.h.b16 %v112
  %v870 = vunpack.c.l.b16 %v113
  %v871 = vunpack.c.h.b16 %v113
  %v872 = vunpack.c.l.b16 %v114
  %v873 = vunpack.c.h.b16 %v114
  %v874 = vunpack.c.l.b16 %v115
  %v875 = vunpack.c.h.b16 %v115
  %v876 = vunpack.c.l.b16 %v116
  %v877 = vunpack.c.h.b16 %v116
  %v878 = vunpack.c.l.b16 %v117
  %v879 = vunpack.c.h.b16 %v117
  %v880 = vunpack.c.l.b16 %v118
  %v881 = vunpack.c.h.b16 %v118
  %v882 = vunpack.c.l.b16 %v119
  %v883 = vunpack.c.h.b16 %v119
  %v884 = vunpack.c.l.b16 %v120
  %v885 = vunpack.c.h.b16 %v120
  %v886 = vunpack.c.l.b16 %v121
  %v887 = vunpack.c.h.b16 %v121
  %v888 = vunpack.c.l.b16 %v122
  %v889 = vunpack.c.h.b16 %v122
  %v890 = vunpack.c.l.b16 %v123
  %v891 = vunpack.c.h.b16 %v123
  %v892 = vunpack.c.l.b16 %v124
  %v893 = vunpack.c.h.b16 %v124
  %v894 = vunpack.c.l.b16 %v125
  %v895 = vunpack.c.h.b16 %v125
  %v896 = vunpack.c.l.b16 %v126
  %v897 = vunpack.c.h.b16 %v126
  %v898 = vunpack.c.l.b16 %v127
  %v899 = vunpack.c.h.b16 %v127
  %v900 = vunpack.c.l.b16 %v128
  %v901 = vunpack.c.h.b16 %v128
  %v902 = vunpack.c.l.b16 %v129
  %v903 = vunpack.c.h.b16 %v129
  %v904 = vunpack.c.l.b16 %v130
  %v905 = vunpack.c.h.b16 %v130
  %v906 = vunpack.c.l.b16 %v131
  %v907 = vunpack.c.h.b16 %v131
  %v908 = vunpack.c.l.b16 %v132
  %v909 = vunpack.c.h.b16 %v132
  %v910 = vunpack.c.l.b16 %v133
  %v911 = vunpack.c.h.b16 %v133
  %v912 = vunpack.c.l.b16 %v134
  %v913 = vunpack.c.h.b16 %v134
  %v914 = vunpack.c.l.b16 %v135
  %v915 = vunpack.c.h.b16 %v135
  %v916 = vunpack.c.l.b16 %v136
  %v917 = vunpack.c.h.b16 %v136
  %v918 = vunpack.c.l.b16 %v137
  %v919 = vunpack.c.h.b16 %v137
  %v920 = vunpack.c.l.b16 %v138
  %v921 = vunpack.c.h.b16 %v138
  %v922 = vunpack.c.l.b16 %v139
  %v923 = vunpack.c.h.b16 %v139
  %v924 = vunpack.c.l.b16 %v140
  %v925 = vunpack.c.h.b16 %v140
  %v926 = vunpack.c.l.b16 %v141
  %v927 = vunpack.c.h.b16 %v141
  %v928 = vunpack.c.l.b16 %v142
  %v929 = vunpack.c.h.b16 %v142
  %v930 = vunpack.c.l.b16 %v143
  %v931 = vunpack.c.h.b16 %v143
  %v932 = vunpack.c.l.b16 %v144
  %v933 = vunpack.c.h.b16 %v144
  %v934 = vunpack.c.l.b16 %v145
  %v935 = vunpack.c.h.b16 %v145
  %v936 = vunpack.c.l.b16 %v146
  %v937 = vunpack.c.h.b16 %v146
  %v938 = vunpack.c.l.b16 %v147
  %v939 = vunpack.c.h.b16 %v147
  %v940 = vunpack.c.l.b16 %v148
  %v941 = vunpack.c.h.b16 %v148
  %v942 = vunpack.c.l.b16 %v149
  %v943 = vunpack.c.h.b16 %v149
  %v944 = vunpack.c.l.b16 %v150
  %v945 = vunpack.c.h.b16 %v150
  %v946 = vunpack.c.l.b16 %v151
  %v947 = vunpack.c.h.b16 %v151
  %v948 = vunpack.c.l.b16 %v152
  %v949 = vunpack.c.h.b16 %v152
  %v950 = vunpack.c.l.b16 %v153
  %v951 = vunpack.c.h.b16 %v153
  %v952 = vunpack.c.l.b16 %v154
  %v953 = vunpack.c.h.b16 %v154
  %v954 = vunpack.c.l.b16 %v155
  %v955 = vunpack.c.h.b16 %v155
  %v956 = vpack.c.b16 %v832, %v828
  %v957 = vpack.c.b16 %v833, %v829
  %v958 = vpack.c.b16 %v834, %v830
  %v959 = vpack.c.b16 %v835, %v831
  %v960 = vpack.c.b16 %v840, %v836
  %v961 = vpack.c.b16 %v841, %v837
  %v962 = vpack.c.b16 %v842, %v838
  %v963 = vpack.c.b16 %v843, %v839
  %v964 = vpack.c.b16 %v848, %v844
  %v965 = vpack.c.b16 %v849, %v845
  %v966 = vpack.c.b16 %v850, %v846
  %v967 = vpack.c.b16 %v851, %v847
  %v968 = vpack.c.b16 %v856, %v852
  %v969 = vpack.c.b16 %v857, %v853
  %v970 = vpack.c.b16 %v858, %v854
  %v971 = vpack.c.b16 %v859, %v855
  %v972 = vpack.c.b16 %v864, %v860
  %v973 = vpack.c.b16 %v865, %v861
  %v974 = vpack.c.b16 %v866, %v862
  %v975 = vpack.c.b16 %v867, %v863
  %v976 = vpack.c.b16 %v872, %v868
  %v977 = vpack.c.b16 %v873, %v869
  %v978 = vpack.c.b16 %v874, %v870
  %v979 = vpack.c.b16 %v875, %v871
  %v980 = vpack.c.b16 %v880, %v876
  %v981 = vpack.c.b16 %v881, %v877
  %v982 = vpack.c.b16 %v882, %v878
  %v983 = vpack.c.b16 %v883, %v879
  %v984 = vpack.c.b16 %v888, %v884
  %v985 = vpack.c.b16 %v889, %v885
  %v986 = vpack.c.b16 %v890, %v886
  %v987 = vpack.c.b16 %v891, %v887
  %v988 = vpack.c.b16 %v896, %v892
  %v989 = vpack.c.b16 %v897, %v893
  %v990 = vpack.c.b16 %v898, %v894
  %v991 = vpack.c.b16 %v899, %v895
  %v992 = vpack.c.b16 %v904, %v900
  %v993 = vpack.c.b16 %v905, %v901
  %v994 = vpack.c.b16 %v906, %v902
  %v995 = vpack.c.b16 %v907, %v903
  %v996 = vpack.c.b16 %v912, %v908
  %v997 = vpack.c.b16 %v913, %v909
  %v998 = vpack.c.b16 %v914, %v910
  %v999 = vpack.c.b16 %v915, %v911
  %v1000 = vpack.c.b16 %v920, %v916
  %v1001 = vpack.c.b16 %v921, %v917
  %v1002 = vpack.c.b16 %v922, %v918
  %v1003 = vpack.c.b16 %v923, %v919
  %v1004 = vpack.c.b16 %v928, %v924
  %v1005 = vpack.c.b16 %v929, %v925
  %v1006 = vpack.c.b16 %v930, %v926
  %v1007 = vpack.c.b16 %v931, %v927
  %v1008 = vpack.c.b16 %v936, %v932
  %v1009 = vpack.c.b16 %v937, %v933
  %v1010 = vpack.c.b16 %v938, %v934
  %v1011 = vpack.c.b16 %v939, %v935
  %v1012 = vpack.c.b16 %v944, %v940
  %v1013 = vpack.c.b16 %v945, %v941
  %v1014 = vpack.c.b16 %v946, %v942
  %v1015 = vpack.c.b16 %v947, %v943
  %v1016 = vpack.c.b16 %v952, %v948
  %v1017 = vpack.c.b16 %v953, %v949
  %v1018 = vpack.c.b16 %v954, %v950
  %v1019 = vpack.c.b16 %v955, %v951
  %1084 = vmatpush.bf16.msra.mxu0 %v984
  %1085 = vmatpush.bf16.msra.mxu0 %v980
  %1086 = vmatpush.bf16.msra.mxu0 %v976
  %1087 = vmatpush.bf16.msra.mxu0 %v972
  %1088 = vmatpush.bf16.msra.mxu0 %v968
  %1089 = vmatpush.bf16.msra.mxu0 %v964
  %1090 = vmatpush.bf16.msra.mxu0 %v960
  %1091 = vmatpush.bf16.msra.mxu0 %v956
  %1092 = vmatmul.bf16.gmra.mxu0 %v86
  %v1093 = vpop.f32.mrf.mxu0
  %v1094 = vadd.f32 %v606, %v1093
  %v1095 = vpop.f32.mrf.mxu0
  %v1096 = vadd.f32 %v608, %v1095
  %1097 = vmatmul.bf16.gmra.mxu0 %v88
  %v1098 = vpop.f32.mrf.mxu0
  %v1099 = vadd.f32 %v611, %v1098
  %v1100 = vpop.f32.mrf.mxu0
  %v1101 = vadd.f32 %v613, %v1100
  %1102 = vmatmul.bf16.gmra.mxu0 %v90
  %v1103 = vpop.f32.mrf.mxu0
  %v1104 = vadd.f32 %v616, %v1103
  %v1105 = vpop.f32.mrf.mxu0
  %v1106 = vadd.f32 %v618, %v1105
  %1107 = vdwg.mxu0
  %1108 = vmatpush.bf16.msra.mxu0 %v1016
  %1109 = vmatpush.bf16.msra.mxu0 %v1012
  %1110 = vmatpush.bf16.msra.mxu0 %v1008
  %1111 = vmatpush.bf16.msra.mxu0 %v1004
  %1112 = vmatpush.bf16.msra.mxu0 %v1000
  %1113 = vmatpush.bf16.msra.mxu0 %v996
  %1114 = vmatpush.bf16.msra.mxu0 %v992
  %1115 = vmatpush.bf16.msra.mxu0 %v988
  %1116 = vmatmul.bf16.gmra.mxu0 %v87
  %v1117 = vpop.f32.mrf.mxu0
  %v1118 = vadd.f32 %v1094, %v1117
  %v1119 = vpop.f32.mrf.mxu0
  %v1120 = vadd.f32 %v1096, %v1119
  %1121 = vmatmul.bf16.gmra.mxu0 %v89
  %v1122 = vpop.f32.mrf.mxu0
  %v1123 = vadd.f32 %v1099, %v1122
  %v1124 = vpop.f32.mrf.mxu0
  %v1125 = vadd.f32 %v1101, %v1124
  %1126 = vmatmul.bf16.gmra.mxu0 %v91
  %v1127 = vpop.f32.mrf.mxu0
  %v1128 = vadd.f32 %v1104, %v1127
  %v1129 = vpop.f32.mrf.mxu0
  %v1130 = vadd.f32 %v1106, %v1129
  %1131 = vdwg.mxu0
  %1132 = vmatpush.bf16.msra.mxu0 %v985
  %1133 = vmatpush.bf16.msra.mxu0 %v981
  %1134 = vmatpush.bf16.msra.mxu0 %v977
  %1135 = vmatpush.bf16.msra.mxu0 %v973
  %1136 = vmatpush.bf16.msra.mxu0 %v969
  %1137 = vmatpush.bf16.msra.mxu0 %v965
  %1138 = vmatpush.bf16.msra.mxu0 %v961
  %1139 = vmatpush.bf16.msra.mxu0 %v957
  %1140 = vmatmul.bf16.gmra.mxu0 %v86
  %v1141 = vpop.f32.mrf.mxu0
  %v1142 = vadd.f32 %v654, %v1141
  %v1143 = vpop.f32.mrf.mxu0
  %v1144 = vadd.f32 %v656, %v1143
  %1145 = vmatmul.bf16.gmra.mxu0 %v88
  %v1146 = vpop.f32.mrf.mxu0
  %v1147 = vadd.f32 %v659, %v1146
  %v1148 = vpop.f32.mrf.mxu0
  %v1149 = vadd.f32 %v661, %v1148
  %1150 = vmatmul.bf16.gmra.mxu0 %v90
  %v1151 = vpop.f32.mrf.mxu0
  %v1152 = vadd.f32 %v664, %v1151
  %v1153 = vpop.f32.mrf.mxu0
  %v1154 = vadd.f32 %v666, %v1153
  %1155 = vdwg.mxu0
  %1156 = vmatpush.bf16.msra.mxu0 %v1017
  %1157 = vmatpush.bf16.msra.mxu0 %v1013
  %1158 = vmatpush.bf16.msra.mxu0 %v1009
  %1159 = vmatpush.bf16.msra.mxu0 %v1005
  %1160 = vmatpush.bf16.msra.mxu0 %v1001
  %1161 = vmatpush.bf16.msra.mxu0 %v997
  %1162 = vmatpush.bf16.msra.mxu0 %v993
  %1163 = vmatpush.bf16.msra.mxu0 %v989
  %1164 = vmatmul.bf16.gmra.mxu0 %v87
  %v1165 = vpop.f32.mrf.mxu0
  %v1166 = vadd.f32 %v1142, %v1165
  %v1167 = vpop.f32.mrf.mxu0
  %v1168 = vadd.f32 %v1144, %v1167
  %1169 = vmatmul.bf16.gmra.mxu0 %v89
  %v1170 = vpop.f32.mrf.mxu0
  %v1171 = vadd.f32 %v1147, %v1170
  %v1172 = vpop.f32.mrf.mxu0
  %v1173 = vadd.f32 %v1149, %v1172
  %1174 = vmatmul.bf16.gmra.mxu0 %v91
  %v1175 = vpop.f32.mrf.mxu0
  %v1176 = vadd.f32 %v1152, %v1175
  %v1177 = vpop.f32.mrf.mxu0
  %v1178 = vadd.f32 %v1154, %v1177
  %1179 = vdwg.mxu0
  %1180 = vmatpush.bf16.msra.mxu0 %v986
  %1181 = vmatpush.bf16.msra.mxu0 %v982
  %1182 = vmatpush.bf16.msra.mxu0 %v978
  %1183 = vmatpush.bf16.msra.mxu0 %v974
  %1184 = vmatpush.bf16.msra.mxu0 %v970
  %1185 = vmatpush.bf16.msra.mxu0 %v966
  %1186 = vmatpush.bf16.msra.mxu0 %v962
  %1187 = vmatpush.bf16.msra.mxu0 %v958
  %1188 = vmatmul.bf16.gmra.mxu0 %v86
  %v1189 = vpop.f32.mrf.mxu0
  %v1190 = vadd.f32 %v702, %v1189
  %v1191 = vpop.f32.mrf.mxu0
  %v1192 = vadd.f32 %v704, %v1191
  %1193 = vmatmul.bf16.gmra.mxu0 %v88
  %v1194 = vpop.f32.mrf.mxu0
  %v1195 = vadd.f32 %v707, %v1194
  %v1196 = vpop.f32.mrf.mxu0
  %v1197 = vadd.f32 %v709, %v1196
  %1198 = vmatmul.bf16.gmra.mxu0 %v90
  %v1199 = vpop.f32.mrf.mxu0
  %v1200 = vadd.f32 %v712, %v1199
  %v1201 = vpop.f32.mrf.mxu0
  %v1202 = vadd.f32 %v714, %v1201
  %1203 = vdwg.mxu0
  %1204 = vmatpush.bf16.msra.mxu0 %v1018
  %1205 = vmatpush.bf16.msra.mxu0 %v1014
  %1206 = vmatpush.bf16.msra.mxu0 %v1010
  %1207 = vmatpush.bf16.msra.mxu0 %v1006
  %1208 = vmatpush.bf16.msra.mxu0 %v1002
  %1209 = vmatpush.bf16.msra.mxu0 %v998
  %1210 = vmatpush.bf16.msra.mxu0 %v994
  %1211 = vmatpush.bf16.msra.mxu0 %v990
  %1212 = vmatmul.bf16.gmra.mxu0 %v87
  %v1213 = vpop.f32.mrf.mxu0
  %v1214 = vadd.f32 %v1190, %v1213
  %v1215 = vpop.f32.mrf.mxu0
  %v1216 = vadd.f32 %v1192, %v1215
  %1217 = vmatmul.bf16.gmra.mxu0 %v89
  %v1218 = vpop.f32.mrf.mxu0
  %v1219 = vadd.f32 %v1195, %v1218
  %v1220 = vpop.f32.mrf.mxu0
  %v1221 = vadd.f32 %v1197, %v1220
  %1222 = vmatmul.bf16.gmra.mxu0 %v91
  %v1223 = vpop.f32.mrf.mxu0
  %v1224 = vadd.f32 %v1200, %v1223
  %v1225 = vpop.f32.mrf.mxu0
  %v1226 = vadd.f32 %v1202, %v1225
  %1227 = vdwg.mxu0
  %1228 = vmatpush.bf16.msra.mxu0 %v987
  %1229 = vmatpush.bf16.msra.mxu0 %v983
  %1230 = vmatpush.bf16.msra.mxu0 %v979
  %1231 = vmatpush.bf16.msra.mxu0 %v975
  %1232 = vmatpush.bf16.msra.mxu0 %v971
  %1233 = vmatpush.bf16.msra.mxu0 %v967
  %1234 = vmatpush.bf16.msra.mxu0 %v963
  %1235 = vmatpush.bf16.msra.mxu0 %v959
  %1236 = vmatmul.bf16.gmra.mxu0 %v86
  %v1237 = vpop.f32.mrf.mxu0
  %v1238 = vadd.f32 %v750, %v1237
  %v1239 = vpop.f32.mrf.mxu0
  %v1240 = vadd.f32 %v752, %v1239
  %1241 = vmatmul.bf16.gmra.mxu0 %v88
  %v1242 = vpop.f32.mrf.mxu0
  %v1243 = vadd.f32 %v755, %v1242
  %v1244 = vpop.f32.mrf.mxu0
  %v1245 = vadd.f32 %v757, %v1244
  %1246 = vmatmul.bf16.gmra.mxu0 %v90
  %v1247 = vpop.f32.mrf.mxu0
  %v1248 = vadd.f32 %v760, %v1247
  %v1249 = vpop.f32.mrf.mxu0
  %v1250 = vadd.f32 %v762, %v1249
  %1251 = vdwg.mxu0
  %1252 = vmatpush.bf16.msra.mxu0 %v1019
  %1253 = vmatpush.bf16.msra.mxu0 %v1015
  %1254 = vmatpush.bf16.msra.mxu0 %v1011
  %1255 = vmatpush.bf16.msra.mxu0 %v1007
  %1256 = vmatpush.bf16.msra.mxu0 %v1003
  %1257 = vmatpush.bf16.msra.mxu0 %v999
  %1258 = vmatpush.bf16.msra.mxu0 %v995
  %1259 = vmatpush.bf16.msra.mxu0 %v991
  %1260 = vmatmul.bf16.gmra.mxu0 %v87
  %v1261 = vpop.f32.mrf.mxu0
  %v1262 = vadd.f32 %v1238, %v1261
  %v1263 = vpop.f32.mrf.mxu0
  %v1264 = vadd.f32 %v1240, %v1263
  %1265 = vmatmul.bf16.gmra.mxu0 %v89
  %v1266 = vpop.f32.mrf.mxu0
  %v1267 = vadd.f32 %v1243, %v1266
  %v1268 = vpop.f32.mrf.mxu0
  %v1269 = vadd.f32 %v1245, %v1268
  %1270 = vmatmul.bf16.gmra.mxu0 %v91
  %v1271 = vpop.f32.mrf.mxu0
  %v1272 = vadd.f32 %v1248, %v1271
  %v1273 = vpop.f32.mrf.mxu0
  %v1274 = vadd.f32 %v1250, %v1273
  %1275 = vdwg.mxu0
  %s1276 = scalar_lea.vmem %s2, 1024
  %v1277 = vld [vmem:[%s1276] sm:$0xff]
  %v1278 = vld [vmem:[%s1276 + $0x8] sm:$0xff]
  %v1279 = vld [vmem:[%s1276 + $0x10] sm:$0xff]
  %v1280 = vld [vmem:[%s1276 + $0x18] sm:$0xff]
  %v1281 = vld [vmem:[%s1276 + $0x20] sm:$0xff]
  %v1282 = vld [vmem:[%s1276 + $0x28] sm:$0xff]
  %v1283 = vld [vmem:[%s1276 + $0x30] sm:$0xff]
  %v1284 = vld [vmem:[%s1276 + $0x38] sm:$0xff]
  %v1285 = vld [vmem:[%s1276 + $0x40] sm:$0xff]
  %v1286 = vld [vmem:[%s1276 + $0x48] sm:$0xff]
  %v1287 = vld [vmem:[%s1276 + $0x50] sm:$0xff]
  %v1288 = vld [vmem:[%s1276 + $0x58] sm:$0xff]
  %v1289 = vld [vmem:[%s1276 + $0x60] sm:$0xff]
  %v1290 = vld [vmem:[%s1276 + $0x68] sm:$0xff]
  %v1291 = vld [vmem:[%s1276 + $0x70] sm:$0xff]
  %v1292 = vld [vmem:[%s1276 + $0x78] sm:$0xff]
  %v1293 = vld [vmem:[%s1276 + $0x80] sm:$0xff]
  %v1294 = vld [vmem:[%s1276 + $0x88] sm:$0xff]
  %v1295 = vld [vmem:[%s1276 + $0x90] sm:$0xff]
  %v1296 = vld [vmem:[%s1276 + $0x98] sm:$0xff]
  %v1297 = vld [vmem:[%s1276 + $0xa0] sm:$0xff]
  %v1298 = vld [vmem:[%s1276 + $0xa8] sm:$0xff]
  %v1299 = vld [vmem:[%s1276 + $0xb0] sm:$0xff]
  %v1300 = vld [vmem:[%s1276 + $0xb8] sm:$0xff]
  %v1301 = vld [vmem:[%s1276 + $0xc0] sm:$0xff]
  %v1302 = vld [vmem:[%s1276 + $0xc8] sm:$0xff]
  %v1303 = vld [vmem:[%s1276 + $0xd0] sm:$0xff]
  %v1304 = vld [vmem:[%s1276 + $0xd8] sm:$0xff]
  %v1305 = vld [vmem:[%s1276 + $0xe0] sm:$0xff]
  %v1306 = vld [vmem:[%s1276 + $0xe8] sm:$0xff]
  %v1307 = vld [vmem:[%s1276 + $0xf0] sm:$0xff]
  %v1308 = vld [vmem:[%s1276 + $0xf8] sm:$0xff]
  %v1309 = vld [vmem:[%s1276 + $0x100] sm:$0xff]
  %v1310 = vld [vmem:[%s1276 + $0x108] sm:$0xff]
  %v1311 = vld [vmem:[%s1276 + $0x110] sm:$0xff]
  %v1312 = vld [vmem:[%s1276 + $0x118] sm:$0xff]
  %v1313 = vld [vmem:[%s1276 + $0x120] sm:$0xff]
  %v1314 = vld [vmem:[%s1276 + $0x128] sm:$0xff]
  %v1315 = vld [vmem:[%s1276 + $0x130] sm:$0xff]
  %v1316 = vld [vmem:[%s1276 + $0x138] sm:$0xff]
  %v1317 = vld [vmem:[%s1276 + $0x140] sm:$0xff]
  %v1318 = vld [vmem:[%s1276 + $0x148] sm:$0xff]
  %v1319 = vld [vmem:[%s1276 + $0x150] sm:$0xff]
  %v1320 = vld [vmem:[%s1276 + $0x158] sm:$0xff]
  %v1321 = vld [vmem:[%s1276 + $0x160] sm:$0xff]
  %v1322 = vld [vmem:[%s1276 + $0x168] sm:$0xff]
  %v1323 = vld [vmem:[%s1276 + $0x170] sm:$0xff]
  %v1324 = vld [vmem:[%s1276 + $0x178] sm:$0xff]
  %v1325 = vld [vmem:[%s1276 + $0x180] sm:$0xff]
  %v1326 = vld [vmem:[%s1276 + $0x188] sm:$0xff]
  %v1327 = vld [vmem:[%s1276 + $0x190] sm:$0xff]
  %v1328 = vld [vmem:[%s1276 + $0x198] sm:$0xff]
  %v1329 = vld [vmem:[%s1276 + $0x1a0] sm:$0xff]
  %v1330 = vld [vmem:[%s1276 + $0x1a8] sm:$0xff]
  %v1331 = vld [vmem:[%s1276 + $0x1b0] sm:$0xff]
  %v1332 = vld [vmem:[%s1276 + $0x1b8] sm:$0xff]
  %v1333 = vld [vmem:[%s1276 + $0x1c0] sm:$0xff]
  %v1334 = vld [vmem:[%s1276 + $0x1c8] sm:$0xff]
  %v1335 = vld [vmem:[%s1276 + $0x1d0] sm:$0xff]
  %v1336 = vld [vmem:[%s1276 + $0x1d8] sm:$0xff]
  %v1337 = vld [vmem:[%s1276 + $0x1e0] sm:$0xff]
  %v1338 = vld [vmem:[%s1276 + $0x1e8] sm:$0xff]
  %v1339 = vld [vmem:[%s1276 + $0x1f0] sm:$0xff]
  %v1340 = vld [vmem:[%s1276 + $0x1f8] sm:$0xff]
  %v1347 = vunpack.c.l.b16 %v41
  %v1348 = vunpack.c.h.b16 %v41
  %v1349 = vunpack.c.l.b16 %v42
  %v1350 = vunpack.c.h.b16 %v42
  %v1351 = vunpack.c.l.b16 %v43
  %v1352 = vunpack.c.h.b16 %v43
  %v1353 = vunpack.c.l.b16 %v44
  %v1354 = vunpack.c.h.b16 %v44
  %v1355 = vunpack.c.l.b16 %v45
  %v1356 = vunpack.c.h.b16 %v45
  %v1357 = vunpack.c.l.b16 %v46
  %v1358 = vunpack.c.h.b16 %v46
  %v1359 = vpack.c.b16 %v1349, %v1347
  %v1360 = vpack.c.b16 %v1350, %v1348
  %v1361 = vpack.c.b16 %v1353, %v1351
  %v1362 = vpack.c.b16 %v1354, %v1352
  %v1363 = vpack.c.b16 %v1357, %v1355
  %v1364 = vpack.c.b16 %v1358, %v1356
  %v1435 = vunpack.c.l.b16 %v1277
  %v1436 = vunpack.c.h.b16 %v1277
  %v1437 = vunpack.c.l.b16 %v1278
  %v1438 = vunpack.c.h.b16 %v1278
  %v1439 = vunpack.c.l.b16 %v1279
  %v1440 = vunpack.c.h.b16 %v1279
  %v1441 = vunpack.c.l.b16 %v1280
  %v1442 = vunpack.c.h.b16 %v1280
  %v1443 = vunpack.c.l.b16 %v1281
  %v1444 = vunpack.c.h.b16 %v1281
  %v1445 = vunpack.c.l.b16 %v1282
  %v1446 = vunpack.c.h.b16 %v1282
  %v1447 = vunpack.c.l.b16 %v1283
  %v1448 = vunpack.c.h.b16 %v1283
  %v1449 = vunpack.c.l.b16 %v1284
  %v1450 = vunpack.c.h.b16 %v1284
  %v1451 = vunpack.c.l.b16 %v1285
  %v1452 = vunpack.c.h.b16 %v1285
  %v1453 = vunpack.c.l.b16 %v1286
  %v1454 = vunpack.c.h.b16 %v1286
  %v1455 = vunpack.c.l.b16 %v1287
  %v1456 = vunpack.c.h.b16 %v1287
  %v1457 = vunpack.c.l.b16 %v1288
  %v1458 = vunpack.c.h.b16 %v1288
  %v1459 = vunpack.c.l.b16 %v1289
  %v1460 = vunpack.c.h.b16 %v1289
  %v1461 = vunpack.c.l.b16 %v1290
  %v1462 = vunpack.c.h.b16 %v1290
  %v1463 = vunpack.c.l.b16 %v1291
  %v1464 = vunpack.c.h.b16 %v1291
  %v1465 = vunpack.c.l.b16 %v1292
  %v1466 = vunpack.c.h.b16 %v1292
  %v1467 = vunpack.c.l.b16 %v1293
  %v1468 = vunpack.c.h.b16 %v1293
  %v1469 = vunpack.c.l.b16 %v1294
  %v1470 = vunpack.c.h.b16 %v1294
  %v1471 = vunpack.c.l.b16 %v1295
  %v1472 = vunpack.c.h.b16 %v1295
  %v1473 = vunpack.c.l.b16 %v1296
  %v1474 = vunpack.c.h.b16 %v1296
  %v1475 = vunpack.c.l.b16 %v1297
  %v1476 = vunpack.c.h.b16 %v1297
  %v1477 = vunpack.c.l.b16 %v1298
  %v1478 = vunpack.c.h.b16 %v1298
  %v1479 = vunpack.c.l.b16 %v1299
  %v1480 = vunpack.c.h.b16 %v1299
  %v1481 = vunpack.c.l.b16 %v1300
  %v1482 = vunpack.c.h.b16 %v1300
  %v1483 = vunpack.c.l.b16 %v1301
  %v1484 = vunpack.c.h.b16 %v1301
  %v1485 = vunpack.c.l.b16 %v1302
  %v1486 = vunpack.c.h.b16 %v1302
  %v1487 = vunpack.c.l.b16 %v1303
  %v1488 = vunpack.c.h.b16 %v1303
  %v1489 = vunpack.c.l.b16 %v1304
  %v1490 = vunpack.c.h.b16 %v1304
  %v1491 = vunpack.c.l.b16 %v1305
  %v1492 = vunpack.c.h.b16 %v1305
  %v1493 = vunpack.c.l.b16 %v1306
  %v1494 = vunpack.c.h.b16 %v1306
  %v1495 = vunpack.c.l.b16 %v1307
  %v1496 = vunpack.c.h.b16 %v1307
  %v1497 = vunpack.c.l.b16 %v1308
  %v1498 = vunpack.c.h.b16 %v1308
  %v1499 = vunpack.c.l.b16 %v1309
  %v1500 = vunpack.c.h.b16 %v1309
  %v1501 = vunpack.c.l.b16 %v1310
  %v1502 = vunpack.c.h.b16 %v1310
  %v1503 = vunpack.c.l.b16 %v1311
  %v1504 = vunpack.c.h.b16 %v1311
  %v1505 = vunpack.c.l.b16 %v1312
  %v1506 = vunpack.c.h.b16 %v1312
  %v1507 = vunpack.c.l.b16 %v1313
  %v1508 = vunpack.c.h.b16 %v1313
  %v1509 = vunpack.c.l.b16 %v1314
  %v1510 = vunpack.c.h.b16 %v1314
  %v1511 = vunpack.c.l.b16 %v1315
  %v1512 = vunpack.c.h.b16 %v1315
  %v1513 = vunpack.c.l.b16 %v1316
  %v1514 = vunpack.c.h.b16 %v1316
  %v1515 = vunpack.c.l.b16 %v1317
  %v1516 = vunpack.c.h.b16 %v1317
  %v1517 = vunpack.c.l.b16 %v1318
  %v1518 = vunpack.c.h.b16 %v1318
  %v1519 = vunpack.c.l.b16 %v1319
  %v1520 = vunpack.c.h.b16 %v1319
  %v1521 = vunpack.c.l.b16 %v1320
  %v1522 = vunpack.c.h.b16 %v1320
  %v1523 = vunpack.c.l.b16 %v1321
  %v1524 = vunpack.c.h.b16 %v1321
  %v1525 = vunpack.c.l.b16 %v1322
  %v1526 = vunpack.c.h.b16 %v1322
  %v1527 = vunpack.c.l.b16 %v1323
  %v1528 = vunpack.c.h.b16 %v1323
  %v1529 = vunpack.c.l.b16 %v1324
  %v1530 = vunpack.c.h.b16 %v1324
  %v1531 = vunpack.c.l.b16 %v1325
  %v1532 = vunpack.c.h.b16 %v1325
  %v1533 = vunpack.c.l.b16 %v1326
  %v1534 = vunpack.c.h.b16 %v1326
  %v1535 = vunpack.c.l.b16 %v1327
  %v1536 = vunpack.c.h.b16 %v1327
  %v1537 = vunpack.c.l.b16 %v1328
  %v1538 = vunpack.c.h.b16 %v1328
  %v1539 = vunpack.c.l.b16 %v1329
  %v1540 = vunpack.c.h.b16 %v1329
  %v1541 = vunpack.c.l.b16 %v1330
  %v1542 = vunpack.c.h.b16 %v1330
  %v1543 = vunpack.c.l.b16 %v1331
  %v1544 = vunpack.c.h.b16 %v1331
  %v1545 = vunpack.c.l.b16 %v1332
  %v1546 = vunpack.c.h.b16 %v1332
  %v1547 = vunpack.c.l.b16 %v1333
  %v1548 = vunpack.c.h.b16 %v1333
  %v1549 = vunpack.c.l.b16 %v1334
  %v1550 = vunpack.c.h.b16 %v1334
  %v1551 = vunpack.c.l.b16 %v1335
  %v1552 = vunpack.c.h.b16 %v1335
  %v1553 = vunpack.c.l.b16 %v1336
  %v1554 = vunpack.c.h.b16 %v1336
  %v1555 = vunpack.c.l.b16 %v1337
  %v1556 = vunpack.c.h.b16 %v1337
  %v1557 = vunpack.c.l.b16 %v1338
  %v1558 = vunpack.c.h.b16 %v1338
  %v1559 = vunpack.c.l.b16 %v1339
  %v1560 = vunpack.c.h.b16 %v1339
  %v1561 = vunpack.c.l.b16 %v1340
  %v1562 = vunpack.c.h.b16 %v1340
  %v1563 = vpack.c.b16 %v1439, %v1435
  %v1564 = vpack.c.b16 %v1440, %v1436
  %v1565 = vpack.c.b16 %v1441, %v1437
  %v1566 = vpack.c.b16 %v1442, %v1438
  %v1567 = vpack.c.b16 %v1447, %v1443
  %v1568 = vpack.c.b16 %v1448, %v1444
  %v1569 = vpack.c.b16 %v1449, %v1445
  %v1570 = vpack.c.b16 %v1450, %v1446
  %v1571 = vpack.c.b16 %v1455, %v1451
  %v1572 = vpack.c.b16 %v1456, %v1452
  %v1573 = vpack.c.b16 %v1457, %v1453
  %v1574 = vpack.c.b16 %v1458, %v1454
  %v1575 = vpack.c.b16 %v1463, %v1459
  %v1576 = vpack.c.b16 %v1464, %v1460
  %v1577 = vpack.c.b16 %v1465, %v1461
  %v1578 = vpack.c.b16 %v1466, %v1462
  %v1579 = vpack.c.b16 %v1471, %v1467
  %v1580 = vpack.c.b16 %v1472, %v1468
  %v1581 = vpack.c.b16 %v1473, %v1469
  %v1582 = vpack.c.b16 %v1474, %v1470
  %v1583 = vpack.c.b16 %v1479, %v1475
  %v1584 = vpack.c.b16 %v1480, %v1476
  %v1585 = vpack.c.b16 %v1481, %v1477
  %v1586 = vpack.c.b16 %v1482, %v1478
  %v1587 = vpack.c.b16 %v1487, %v1483
  %v1588 = vpack.c.b16 %v1488, %v1484
  %v1589 = vpack.c.b16 %v1489, %v1485
  %v1590 = vpack.c.b16 %v1490, %v1486
  %v1591 = vpack.c.b16 %v1495, %v1491
  %v1592 = vpack.c.b16 %v1496, %v1492
  %v1593 = vpack.c.b16 %v1497, %v1493
  %v1594 = vpack.c.b16 %v1498, %v1494
  %v1595 = vpack.c.b16 %v1503, %v1499
  %v1596 = vpack.c.b16 %v1504, %v1500
  %v1597 = vpack.c.b16 %v1505, %v1501
  %v1598 = vpack.c.b16 %v1506, %v1502
  %v1599 = vpack.c.b16 %v1511, %v1507
  %v1600 = vpack.c.b16 %v1512, %v1508
  %v1601 = vpack.c.b16 %v1513, %v1509
  %v1602 = vpack.c.b16 %v1514, %v1510
  %v1603 = vpack.c.b16 %v1519, %v1515
  %v1604 = vpack.c.b16 %v1520, %v1516
  %v1605 = vpack.c.b16 %v1521, %v1517
  %v1606 = vpack.c.b16 %v1522, %v1518
  %v1607 = vpack.c.b16 %v1527, %v1523
  %v1608 = vpack.c.b16 %v1528, %v1524
  %v1609 = vpack.c.b16 %v1529, %v1525
  %v1610 = vpack.c.b16 %v1530, %v1526
  %v1611 = vpack.c.b16 %v1535, %v1531
  %v1612 = vpack.c.b16 %v1536, %v1532
  %v1613 = vpack.c.b16 %v1537, %v1533
  %v1614 = vpack.c.b16 %v1538, %v1534
  %v1615 = vpack.c.b16 %v1543, %v1539
  %v1616 = vpack.c.b16 %v1544, %v1540
  %v1617 = vpack.c.b16 %v1545, %v1541
  %v1618 = vpack.c.b16 %v1546, %v1542
  %v1619 = vpack.c.b16 %v1551, %v1547
  %v1620 = vpack.c.b16 %v1552, %v1548
  %v1621 = vpack.c.b16 %v1553, %v1549
  %v1622 = vpack.c.b16 %v1554, %v1550
  %v1623 = vpack.c.b16 %v1559, %v1555
  %v1624 = vpack.c.b16 %v1560, %v1556
  %v1625 = vpack.c.b16 %v1561, %v1557
  %v1626 = vpack.c.b16 %v1562, %v1558
  %1691 = vmatpush.bf16.msra.mxu0 %v1591
  %1692 = vmatpush.bf16.msra.mxu0 %v1587
  %1693 = vmatpush.bf16.msra.mxu0 %v1583
  %1694 = vmatpush.bf16.msra.mxu0 %v1579
  %1695 = vmatpush.bf16.msra.mxu0 %v1575
  %1696 = vmatpush.bf16.msra.mxu0 %v1571
  %1697 = vmatpush.bf16.msra.mxu0 %v1567
  %1698 = vmatpush.bf16.msra.mxu0 %v1563
  %1699 = vmatmul.bf16.gmra.mxu0 %v1359
  %v1700 = vpop.f32.mrf.mxu0
  %v1701 = vadd.f32 0.0, %v1700
  %v1702 = vpop.f32.mrf.mxu0
  %v1703 = vadd.f32 0.0, %v1702
  %1704 = vmatmul.bf16.gmra.mxu0 %v1361
  %v1705 = vpop.f32.mrf.mxu0
  %v1706 = vadd.f32 0.0, %v1705
  %v1707 = vpop.f32.mrf.mxu0
  %v1708 = vadd.f32 0.0, %v1707
  %1709 = vmatmul.bf16.gmra.mxu0 %v1363
  %v1710 = vpop.f32.mrf.mxu0
  %v1711 = vadd.f32 0.0, %v1710
  %v1712 = vpop.f32.mrf.mxu0
  %v1713 = vadd.f32 0.0, %v1712
  %1714 = vdwg.mxu0
  %1715 = vmatpush.bf16.msra.mxu0 %v1623
  %1716 = vmatpush.bf16.msra.mxu0 %v1619
  %1717 = vmatpush.bf16.msra.mxu0 %v1615
  %1718 = vmatpush.bf16.msra.mxu0 %v1611
  %1719 = vmatpush.bf16.msra.mxu0 %v1607
  %1720 = vmatpush.bf16.msra.mxu0 %v1603
  %1721 = vmatpush.bf16.msra.mxu0 %v1599
  %1722 = vmatpush.bf16.msra.mxu0 %v1595
  %1723 = vmatmul.bf16.gmra.mxu0 %v1360
  %v1724 = vpop.f32.mrf.mxu0
  %v1725 = vadd.f32 %v1701, %v1724
  %v1726 = vpop.f32.mrf.mxu0
  %v1727 = vadd.f32 %v1703, %v1726
  %1728 = vmatmul.bf16.gmra.mxu0 %v1362
  %v1729 = vpop.f32.mrf.mxu0
  %v1730 = vadd.f32 %v1706, %v1729
  %v1731 = vpop.f32.mrf.mxu0
  %v1732 = vadd.f32 %v1708, %v1731
  %1733 = vmatmul.bf16.gmra.mxu0 %v1364
  %v1734 = vpop.f32.mrf.mxu0
  %v1735 = vadd.f32 %v1711, %v1734
  %v1736 = vpop.f32.mrf.mxu0
  %v1737 = vadd.f32 %v1713, %v1736
  %1738 = vdwg.mxu0
  %1739 = vmatpush.bf16.msra.mxu0 %v1592
  %1740 = vmatpush.bf16.msra.mxu0 %v1588
  %1741 = vmatpush.bf16.msra.mxu0 %v1584
  %1742 = vmatpush.bf16.msra.mxu0 %v1580
  %1743 = vmatpush.bf16.msra.mxu0 %v1576
  %1744 = vmatpush.bf16.msra.mxu0 %v1572
  %1745 = vmatpush.bf16.msra.mxu0 %v1568
  %1746 = vmatpush.bf16.msra.mxu0 %v1564
  %1747 = vmatmul.bf16.gmra.mxu0 %v1359
  %v1748 = vpop.f32.mrf.mxu0
  %v1749 = vadd.f32 0.0, %v1748
  %v1750 = vpop.f32.mrf.mxu0
  %v1751 = vadd.f32 0.0, %v1750
  %1752 = vmatmul.bf16.gmra.mxu0 %v1361
  %v1753 = vpop.f32.mrf.mxu0
  %v1754 = vadd.f32 0.0, %v1753
  %v1755 = vpop.f32.mrf.mxu0
  %v1756 = vadd.f32 0.0, %v1755
  %1757 = vmatmul.bf16.gmra.mxu0 %v1363
  %v1758 = vpop.f32.mrf.mxu0
  %v1759 = vadd.f32 0.0, %v1758
  %v1760 = vpop.f32.mrf.mxu0
  %v1761 = vadd.f32 0.0, %v1760
  %1762 = vdwg.mxu0
  %1763 = vmatpush.bf16.msra.mxu0 %v1624
  %1764 = vmatpush.bf16.msra.mxu0 %v1620
  %1765 = vmatpush.bf16.msra.mxu0 %v1616
  %1766 = vmatpush.bf16.msra.mxu0 %v1612
  %1767 = vmatpush.bf16.msra.mxu0 %v1608
  %1768 = vmatpush.bf16.msra.mxu0 %v1604
  %1769 = vmatpush.bf16.msra.mxu0 %v1600
  %1770 = vmatpush.bf16.msra.mxu0 %v1596
  %1771 = vmatmul.bf16.gmra.mxu0 %v1360
  %v1772 = vpop.f32.mrf.mxu0
  %v1773 = vadd.f32 %v1749, %v1772
  %v1774 = vpop.f32.mrf.mxu0
  %v1775 = vadd.f32 %v1751, %v1774
  %1776 = vmatmul.bf16.gmra.mxu0 %v1362
  %v1777 = vpop.f32.mrf.mxu0
  %v1778 = vadd.f32 %v1754, %v1777
  %v1779 = vpop.f32.mrf.mxu0
  %v1780 = vadd.f32 %v1756, %v1779
  %1781 = vmatmul.bf16.gmra.mxu0 %v1364
  %v1782 = vpop.f32.mrf.mxu0
  %v1783 = vadd.f32 %v1759, %v1782
  %v1784 = vpop.f32.mrf.mxu0
  %v1785 = vadd.f32 %v1761, %v1784
  %1786 = vdwg.mxu0
  %1787 = vmatpush.bf16.msra.mxu0 %v1593
  %1788 = vmatpush.bf16.msra.mxu0 %v1589
  %1789 = vmatpush.bf16.msra.mxu0 %v1585
  %1790 = vmatpush.bf16.msra.mxu0 %v1581
  %1791 = vmatpush.bf16.msra.mxu0 %v1577
  %1792 = vmatpush.bf16.msra.mxu0 %v1573
  %1793 = vmatpush.bf16.msra.mxu0 %v1569
  %1794 = vmatpush.bf16.msra.mxu0 %v1565
  %1795 = vmatmul.bf16.gmra.mxu0 %v1359
  %v1796 = vpop.f32.mrf.mxu0
  %v1797 = vadd.f32 0.0, %v1796
  %v1798 = vpop.f32.mrf.mxu0
  %v1799 = vadd.f32 0.0, %v1798
  %1800 = vmatmul.bf16.gmra.mxu0 %v1361
  %v1801 = vpop.f32.mrf.mxu0
  %v1802 = vadd.f32 0.0, %v1801
  %v1803 = vpop.f32.mrf.mxu0
  %v1804 = vadd.f32 0.0, %v1803
  %1805 = vmatmul.bf16.gmra.mxu0 %v1363
  %v1806 = vpop.f32.mrf.mxu0
  %v1807 = vadd.f32 0.0, %v1806
  %v1808 = vpop.f32.mrf.mxu0
  %v1809 = vadd.f32 0.0, %v1808
  %1810 = vdwg.mxu0
  %1811 = vmatpush.bf16.msra.mxu0 %v1625
  %1812 = vmatpush.bf16.msra.mxu0 %v1621
  %1813 = vmatpush.bf16.msra.mxu0 %v1617
  %1814 = vmatpush.bf16.msra.mxu0 %v1613
  %1815 = vmatpush.bf16.msra.mxu0 %v1609
  %1816 = vmatpush.bf16.msra.mxu0 %v1605
  %1817 = vmatpush.bf16.msra.mxu0 %v1601
  %1818 = vmatpush.bf16.msra.mxu0 %v1597
  %1819 = vmatmul.bf16.gmra.mxu0 %v1360
  %v1820 = vpop.f32.mrf.mxu0
  %v1821 = vadd.f32 %v1797, %v1820
  %v1822 = vpop.f32.mrf.mxu0
  %v1823 = vadd.f32 %v1799, %v1822
  %1824 = vmatmul.bf16.gmra.mxu0 %v1362
  %v1825 = vpop.f32.mrf.mxu0
  %v1826 = vadd.f32 %v1802, %v1825
  %v1827 = vpop.f32.mrf.mxu0
  %v1828 = vadd.f32 %v1804, %v1827
  %1829 = vmatmul.bf16.gmra.mxu0 %v1364
  %v1830 = vpop.f32.mrf.mxu0
  %v1831 = vadd.f32 %v1807, %v1830
  %v1832 = vpop.f32.mrf.mxu0
  %v1833 = vadd.f32 %v1809, %v1832
  %1834 = vdwg.mxu0
  %1835 = vmatpush.bf16.msra.mxu0 %v1594
  %1836 = vmatpush.bf16.msra.mxu0 %v1590
  %1837 = vmatpush.bf16.msra.mxu0 %v1586
  %1838 = vmatpush.bf16.msra.mxu0 %v1582
  %1839 = vmatpush.bf16.msra.mxu0 %v1578
  %1840 = vmatpush.bf16.msra.mxu0 %v1574
  %1841 = vmatpush.bf16.msra.mxu0 %v1570
  %1842 = vmatpush.bf16.msra.mxu0 %v1566
  %1843 = vmatmul.bf16.gmra.mxu0 %v1359
  %v1844 = vpop.f32.mrf.mxu0
  %v1845 = vadd.f32 0.0, %v1844
  %v1846 = vpop.f32.mrf.mxu0
  %v1847 = vadd.f32 0.0, %v1846
  %1848 = vmatmul.bf16.gmra.mxu0 %v1361
  %v1849 = vpop.f32.mrf.mxu0
  %v1850 = vadd.f32 0.0, %v1849
  %v1851 = vpop.f32.mrf.mxu0
  %v1852 = vadd.f32 0.0, %v1851
  %1853 = vmatmul.bf16.gmra.mxu0 %v1363
  %v1854 = vpop.f32.mrf.mxu0
  %v1855 = vadd.f32 0.0, %v1854
  %v1856 = vpop.f32.mrf.mxu0
  %v1857 = vadd.f32 0.0, %v1856
  %1858 = vdwg.mxu0
  %1859 = vmatpush.bf16.msra.mxu0 %v1626
  %1860 = vmatpush.bf16.msra.mxu0 %v1622
  %1861 = vmatpush.bf16.msra.mxu0 %v1618
  %1862 = vmatpush.bf16.msra.mxu0 %v1614
  %1863 = vmatpush.bf16.msra.mxu0 %v1610
  %1864 = vmatpush.bf16.msra.mxu0 %v1606
  %1865 = vmatpush.bf16.msra.mxu0 %v1602
  %1866 = vmatpush.bf16.msra.mxu0 %v1598
  %1867 = vmatmul.bf16.gmra.mxu0 %v1360
  %v1868 = vpop.f32.mrf.mxu0
  %v1869 = vadd.f32 %v1845, %v1868
  %v1870 = vpop.f32.mrf.mxu0
  %v1871 = vadd.f32 %v1847, %v1870
  %1872 = vmatmul.bf16.gmra.mxu0 %v1362
  %v1873 = vpop.f32.mrf.mxu0
  %v1874 = vadd.f32 %v1850, %v1873
  %v1875 = vpop.f32.mrf.mxu0
  %v1876 = vadd.f32 %v1852, %v1875
  %1877 = vmatmul.bf16.gmra.mxu0 %v1364
  %v1878 = vpop.f32.mrf.mxu0
  %v1879 = vadd.f32 %v1855, %v1878
  %v1880 = vpop.f32.mrf.mxu0
  %v1881 = vadd.f32 %v1857, %v1880
  %1882 = vdwg.mxu0
  %v1883 = vadd.f32 %v1118, %v1725
  %v1884 = vadd.f32 %v1166, %v1773
  %v1885 = vadd.f32 %v1214, %v1821
  %v1886 = vadd.f32 %v1262, %v1869
  %v1887 = vadd.f32 %v1120, %v1727
  %v1888 = vadd.f32 %v1168, %v1775
  %v1889 = vadd.f32 %v1216, %v1823
  %v1890 = vadd.f32 %v1264, %v1871
  %v1891 = vadd.f32 %v1123, %v1730
  %v1892 = vadd.f32 %v1171, %v1778
  %v1893 = vadd.f32 %v1219, %v1826
  %v1894 = vadd.f32 %v1267, %v1874
  %v1895 = vadd.f32 %v1125, %v1732
  %v1896 = vadd.f32 %v1173, %v1780
  %v1897 = vadd.f32 %v1221, %v1828
  %v1898 = vadd.f32 %v1269, %v1876
  %v1899 = vadd.f32 %v1128, %v1735
  %v1900 = vadd.f32 %v1176, %v1783
  %v1901 = vadd.f32 %v1224, %v1831
  %v1902 = vadd.f32 %v1272, %v1879
  %v1903 = vadd.f32 %v1130, %v1737
  %v1904 = vadd.f32 %v1178, %v1785
  %v1905 = vadd.f32 %v1226, %v1833
  %v1906 = vadd.f32 %v1274, %v1881
  %v1907 = vrot.slane %v47, 1
  %v1908 = vrot.slane %v48, 1
  %v1909 = vrot.slane %v49, 1
  %v1910 = vrot.slane %v50, 1
  %v1911 = vrot.slane %v51, 1
  %v1912 = vrot.slane %v52, 1
  %v1913 = vrot.slane %v53, 1
  %v1914 = vrot.slane %v54, 1
  %v1915 = vrot.slane %v55, 1
  %v1916 = vrot.slane %v56, 1
  %v1917 = vrot.slane %v57, 1
  %v1918 = vrot.slane %v58, 1
  %vm1919 = vcmp.lt.s32.totalorder %v72, 7
  %v1920 = vsel %vm1919, %v1915, %v1917
  %v1921 = vsel %vm1919, %v1916, %v1918
  %v1922 = vsel %vm1919, %v1913, %v1915
  %v1923 = vsel %vm1919, %v1914, %v1916
  %v1924 = vsel %vm1919, %v1911, %v1913
  %v1925 = vsel %vm1919, %v1912, %v1914
  %v1926 = vsel %vm1919, %v1909, %v1911
  %v1927 = vsel %vm1919, %v1910, %v1912
  %v1928 = vsel %vm1919, %v1907, %v1909
  %v1929 = vsel %vm1919, %v1908, %v1910
  %v1930 = vsel %vm1919, %v1917, %v1907
  %v1931 = vsel %vm1919, %v1918, %v1908
  %v1932 = vpack.c.bf16 %v1926, %v1928
  %v1933 = vpack.c.bf16 %v1927, %v1929
  %v1934 = vpack.c.bf16 %v1922, %v1924
  %v1935 = vpack.c.bf16 %v1923, %v1925
  %v1936 = vpack.c.bf16 %v1930, %v1920
  %v1937 = vpack.c.bf16 %v1931, %v1921
  %s1938 = scalar_lea.vmem %s2, 1536
  %v1939 = vld [vmem:[%s1938] sm:$0xff]
  %v1940 = vld [vmem:[%s1938 + $0x8] sm:$0xff]
  %v1941 = vld [vmem:[%s1938 + $0x10] sm:$0xff]
  %v1942 = vld [vmem:[%s1938 + $0x18] sm:$0xff]
  %v1943 = vld [vmem:[%s1938 + $0x20] sm:$0xff]
  %v1944 = vld [vmem:[%s1938 + $0x28] sm:$0xff]
  %v1945 = vld [vmem:[%s1938 + $0x30] sm:$0xff]
  %v1946 = vld [vmem:[%s1938 + $0x38] sm:$0xff]
  %v1947 = vld [vmem:[%s1938 + $0x40] sm:$0xff]
  %v1948 = vld [vmem:[%s1938 + $0x48] sm:$0xff]
  %v1949 = vld [vmem:[%s1938 + $0x50] sm:$0xff]
  %v1950 = vld [vmem:[%s1938 + $0x58] sm:$0xff]
  %v1951 = vld [vmem:[%s1938 + $0x60] sm:$0xff]
  %v1952 = vld [vmem:[%s1938 + $0x68] sm:$0xff]
  %v1953 = vld [vmem:[%s1938 + $0x70] sm:$0xff]
  %v1954 = vld [vmem:[%s1938 + $0x78] sm:$0xff]
  %v1955 = vld [vmem:[%s1938 + $0x80] sm:$0xff]
  %v1956 = vld [vmem:[%s1938 + $0x88] sm:$0xff]
  %v1957 = vld [vmem:[%s1938 + $0x90] sm:$0xff]
  %v1958 = vld [vmem:[%s1938 + $0x98] sm:$0xff]
  %v1959 = vld [vmem:[%s1938 + $0xa0] sm:$0xff]
  %v1960 = vld [vmem:[%s1938 + $0xa8] sm:$0xff]
  %v1961 = vld [vmem:[%s1938 + $0xb0] sm:$0xff]
  %v1962 = vld [vmem:[%s1938 + $0xb8] sm:$0xff]
  %v1963 = vld [vmem:[%s1938 + $0xc0] sm:$0xff]
  %v1964 = vld [vmem:[%s1938 + $0xc8] sm:$0xff]
  %v1965 = vld [vmem:[%s1938 + $0xd0] sm:$0xff]
  %v1966 = vld [vmem:[%s1938 + $0xd8] sm:$0xff]
  %v1967 = vld [vmem:[%s1938 + $0xe0] sm:$0xff]
  %v1968 = vld [vmem:[%s1938 + $0xe8] sm:$0xff]
  %v1969 = vld [vmem:[%s1938 + $0xf0] sm:$0xff]
  %v1970 = vld [vmem:[%s1938 + $0xf8] sm:$0xff]
  %v1971 = vld [vmem:[%s1938 + $0x100] sm:$0xff]
  %v1972 = vld [vmem:[%s1938 + $0x108] sm:$0xff]
  %v1973 = vld [vmem:[%s1938 + $0x110] sm:$0xff]
  %v1974 = vld [vmem:[%s1938 + $0x118] sm:$0xff]
  %v1975 = vld [vmem:[%s1938 + $0x120] sm:$0xff]
  %v1976 = vld [vmem:[%s1938 + $0x128] sm:$0xff]
  %v1977 = vld [vmem:[%s1938 + $0x130] sm:$0xff]
  %v1978 = vld [vmem:[%s1938 + $0x138] sm:$0xff]
  %v1979 = vld [vmem:[%s1938 + $0x140] sm:$0xff]
  %v1980 = vld [vmem:[%s1938 + $0x148] sm:$0xff]
  %v1981 = vld [vmem:[%s1938 + $0x150] sm:$0xff]
  %v1982 = vld [vmem:[%s1938 + $0x158] sm:$0xff]
  %v1983 = vld [vmem:[%s1938 + $0x160] sm:$0xff]
  %v1984 = vld [vmem:[%s1938 + $0x168] sm:$0xff]
  %v1985 = vld [vmem:[%s1938 + $0x170] sm:$0xff]
  %v1986 = vld [vmem:[%s1938 + $0x178] sm:$0xff]
  %v1987 = vld [vmem:[%s1938 + $0x180] sm:$0xff]
  %v1988 = vld [vmem:[%s1938 + $0x188] sm:$0xff]
  %v1989 = vld [vmem:[%s1938 + $0x190] sm:$0xff]
  %v1990 = vld [vmem:[%s1938 + $0x198] sm:$0xff]
  %v1991 = vld [vmem:[%s1938 + $0x1a0] sm:$0xff]
  %v1992 = vld [vmem:[%s1938 + $0x1a8] sm:$0xff]
  %v1993 = vld [vmem:[%s1938 + $0x1b0] sm:$0xff]
  %v1994 = vld [vmem:[%s1938 + $0x1b8] sm:$0xff]
  %v1995 = vld [vmem:[%s1938 + $0x1c0] sm:$0xff]
  %v1996 = vld [vmem:[%s1938 + $0x1c8] sm:$0xff]
  %v1997 = vld [vmem:[%s1938 + $0x1d0] sm:$0xff]
  %v1998 = vld [vmem:[%s1938 + $0x1d8] sm:$0xff]
  %v1999 = vld [vmem:[%s1938 + $0x1e0] sm:$0xff]
  %v2000 = vld [vmem:[%s1938 + $0x1e8] sm:$0xff]
  %v2001 = vld [vmem:[%s1938 + $0x1f0] sm:$0xff]
  %v2002 = vld [vmem:[%s1938 + $0x1f8] sm:$0xff]
  %v2067 = vunpack.c.l.b16 %v1939
  %v2068 = vunpack.c.h.b16 %v1939
  %v2069 = vunpack.c.l.b16 %v1940
  %v2070 = vunpack.c.h.b16 %v1940
  %v2071 = vunpack.c.l.b16 %v1941
  %v2072 = vunpack.c.h.b16 %v1941
  %v2073 = vunpack.c.l.b16 %v1942
  %v2074 = vunpack.c.h.b16 %v1942
  %v2075 = vunpack.c.l.b16 %v1943
  %v2076 = vunpack.c.h.b16 %v1943
  %v2077 = vunpack.c.l.b16 %v1944
  %v2078 = vunpack.c.h.b16 %v1944
  %v2079 = vunpack.c.l.b16 %v1945
  %v2080 = vunpack.c.h.b16 %v1945
  %v2081 = vunpack.c.l.b16 %v1946
  %v2082 = vunpack.c.h.b16 %v1946
  %v2083 = vunpack.c.l.b16 %v1947
  %v2084 = vunpack.c.h.b16 %v1947
  %v2085 = vunpack.c.l.b16 %v1948
  %v2086 = vunpack.c.h.b16 %v1948
  %v2087 = vunpack.c.l.b16 %v1949
  %v2088 = vunpack.c.h.b16 %v1949
  %v2089 = vunpack.c.l.b16 %v1950
  %v2090 = vunpack.c.h.b16 %v1950
  %v2091 = vunpack.c.l.b16 %v1951
  %v2092 = vunpack.c.h.b16 %v1951
  %v2093 = vunpack.c.l.b16 %v1952
  %v2094 = vunpack.c.h.b16 %v1952
  %v2095 = vunpack.c.l.b16 %v1953
  %v2096 = vunpack.c.h.b16 %v1953
  %v2097 = vunpack.c.l.b16 %v1954
  %v2098 = vunpack.c.h.b16 %v1954
  %v2099 = vunpack.c.l.b16 %v1955
  %v2100 = vunpack.c.h.b16 %v1955
  %v2101 = vunpack.c.l.b16 %v1956
  %v2102 = vunpack.c.h.b16 %v1956
  %v2103 = vunpack.c.l.b16 %v1957
  %v2104 = vunpack.c.h.b16 %v1957
  %v2105 = vunpack.c.l.b16 %v1958
  %v2106 = vunpack.c.h.b16 %v1958
  %v2107 = vunpack.c.l.b16 %v1959
  %v2108 = vunpack.c.h.b16 %v1959
  %v2109 = vunpack.c.l.b16 %v1960
  %v2110 = vunpack.c.h.b16 %v1960
  %v2111 = vunpack.c.l.b16 %v1961
  %v2112 = vunpack.c.h.b16 %v1961
  %v2113 = vunpack.c.l.b16 %v1962
  %v2114 = vunpack.c.h.b16 %v1962
  %v2115 = vunpack.c.l.b16 %v1963
  %v2116 = vunpack.c.h.b16 %v1963
  %v2117 = vunpack.c.l.b16 %v1964
  %v2118 = vunpack.c.h.b16 %v1964
  %v2119 = vunpack.c.l.b16 %v1965
  %v2120 = vunpack.c.h.b16 %v1965
  %v2121 = vunpack.c.l.b16 %v1966
  %v2122 = vunpack.c.h.b16 %v1966
  %v2123 = vunpack.c.l.b16 %v1967
  %v2124 = vunpack.c.h.b16 %v1967
  %v2125 = vunpack.c.l.b16 %v1968
  %v2126 = vunpack.c.h.b16 %v1968
  %v2127 = vunpack.c.l.b16 %v1969
  %v2128 = vunpack.c.h.b16 %v1969
  %v2129 = vunpack.c.l.b16 %v1970
  %v2130 = vunpack.c.h.b16 %v1970
  %v2131 = vunpack.c.l.b16 %v1971
  %v2132 = vunpack.c.h.b16 %v1971
  %v2133 = vunpack.c.l.b16 %v1972
  %v2134 = vunpack.c.h.b16 %v1972
  %v2135 = vunpack.c.l.b16 %v1973
  %v2136 = vunpack.c.h.b16 %v1973
  %v2137 = vunpack.c.l.b16 %v1974
  %v2138 = vunpack.c.h.b16 %v1974
  %v2139 = vunpack.c.l.b16 %v1975
  %v2140 = vunpack.c.h.b16 %v1975
  %v2141 = vunpack.c.l.b16 %v1976
  %v2142 = vunpack.c.h.b16 %v1976
  %v2143 = vunpack.c.l.b16 %v1977
  %v2144 = vunpack.c.h.b16 %v1977
  %v2145 = vunpack.c.l.b16 %v1978
  %v2146 = vunpack.c.h.b16 %v1978
  %v2147 = vunpack.c.l.b16 %v1979
  %v2148 = vunpack.c.h.b16 %v1979
  %v2149 = vunpack.c.l.b16 %v1980
  %v2150 = vunpack.c.h.b16 %v1980
  %v2151 = vunpack.c.l.b16 %v1981
  %v2152 = vunpack.c.h.b16 %v1981
  %v2153 = vunpack.c.l.b16 %v1982
  %v2154 = vunpack.c.h.b16 %v1982
  %v2155 = vunpack.c.l.b16 %v1983
  %v2156 = vunpack.c.h.b16 %v1983
  %v2157 = vunpack.c.l.b16 %v1984
  %v2158 = vunpack.c.h.b16 %v1984
  %v2159 = vunpack.c.l.b16 %v1985
  %v2160 = vunpack.c.h.b16 %v1985
  %v2161 = vunpack.c.l.b16 %v1986
  %v2162 = vunpack.c.h.b16 %v1986
  %v2163 = vunpack.c.l.b16 %v1987
  %v2164 = vunpack.c.h.b16 %v1987
  %v2165 = vunpack.c.l.b16 %v1988
  %v2166 = vunpack.c.h.b16 %v1988
  %v2167 = vunpack.c.l.b16 %v1989
  %v2168 = vunpack.c.h.b16 %v1989
  %v2169 = vunpack.c.l.b16 %v1990
  %v2170 = vunpack.c.h.b16 %v1990
  %v2171 = vunpack.c.l.b16 %v1991
  %v2172 = vunpack.c.h.b16 %v1991
  %v2173 = vunpack.c.l.b16 %v1992
  %v2174 = vunpack.c.h.b16 %v1992
  %v2175 = vunpack.c.l.b16 %v1993
  %v2176 = vunpack.c.h.b16 %v1993
  %v2177 = vunpack.c.l.b16 %v1994
  %v2178 = vunpack.c.h.b16 %v1994
  %v2179 = vunpack.c.l.b16 %v1995
  %v2180 = vunpack.c.h.b16 %v1995
  %v2181 = vunpack.c.l.b16 %v1996
  %v2182 = vunpack.c.h.b16 %v1996
  %v2183 = vunpack.c.l.b16 %v1997
  %v2184 = vunpack.c.h.b16 %v1997
  %v2185 = vunpack.c.l.b16 %v1998
  %v2186 = vunpack.c.h.b16 %v1998
  %v2187 = vunpack.c.l.b16 %v1999
  %v2188 = vunpack.c.h.b16 %v1999
  %v2189 = vunpack.c.l.b16 %v2000
  %v2190 = vunpack.c.h.b16 %v2000
  %v2191 = vunpack.c.l.b16 %v2001
  %v2192 = vunpack.c.h.b16 %v2001
  %v2193 = vunpack.c.l.b16 %v2002
  %v2194 = vunpack.c.h.b16 %v2002
  %v2195 = vpack.c.b16 %v2071, %v2067
  %v2196 = vpack.c.b16 %v2072, %v2068
  %v2197 = vpack.c.b16 %v2073, %v2069
  %v2198 = vpack.c.b16 %v2074, %v2070
  %v2199 = vpack.c.b16 %v2079, %v2075
  %v2200 = vpack.c.b16 %v2080, %v2076
  %v2201 = vpack.c.b16 %v2081, %v2077
  %v2202 = vpack.c.b16 %v2082, %v2078
  %v2203 = vpack.c.b16 %v2087, %v2083
  %v2204 = vpack.c.b16 %v2088, %v2084
  %v2205 = vpack.c.b16 %v2089, %v2085
  %v2206 = vpack.c.b16 %v2090, %v2086
  %v2207 = vpack.c.b16 %v2095, %v2091
  %v2208 = vpack.c.b16 %v2096, %v2092
  %v2209 = vpack.c.b16 %v2097, %v2093
  %v2210 = vpack.c.b16 %v2098, %v2094
  %v2211 = vpack.c.b16 %v2103, %v2099
  %v2212 = vpack.c.b16 %v2104, %v2100
  %v2213 = vpack.c.b16 %v2105, %v2101
  %v2214 = vpack.c.b16 %v2106, %v2102
  %v2215 = vpack.c.b16 %v2111, %v2107
  %v2216 = vpack.c.b16 %v2112, %v2108
  %v2217 = vpack.c.b16 %v2113, %v2109
  %v2218 = vpack.c.b16 %v2114, %v2110
  %v2219 = vpack.c.b16 %v2119, %v2115
  %v2220 = vpack.c.b16 %v2120, %v2116
  %v2221 = vpack.c.b16 %v2121, %v2117
  %v2222 = vpack.c.b16 %v2122, %v2118
  %v2223 = vpack.c.b16 %v2127, %v2123
  %v2224 = vpack.c.b16 %v2128, %v2124
  %v2225 = vpack.c.b16 %v2129, %v2125
  %v2226 = vpack.c.b16 %v2130, %v2126
  %v2227 = vpack.c.b16 %v2135, %v2131
  %v2228 = vpack.c.b16 %v2136, %v2132
  %v2229 = vpack.c.b16 %v2137, %v2133
  %v2230 = vpack.c.b16 %v2138, %v2134
  %v2231 = vpack.c.b16 %v2143, %v2139
  %v2232 = vpack.c.b16 %v2144, %v2140
  %v2233 = vpack.c.b16 %v2145, %v2141
  %v2234 = vpack.c.b16 %v2146, %v2142
  %v2235 = vpack.c.b16 %v2151, %v2147
  %v2236 = vpack.c.b16 %v2152, %v2148
  %v2237 = vpack.c.b16 %v2153, %v2149
  %v2238 = vpack.c.b16 %v2154, %v2150
  %v2239 = vpack.c.b16 %v2159, %v2155
  %v2240 = vpack.c.b16 %v2160, %v2156
  %v2241 = vpack.c.b16 %v2161, %v2157
  %v2242 = vpack.c.b16 %v2162, %v2158
  %v2243 = vpack.c.b16 %v2167, %v2163
  %v2244 = vpack.c.b16 %v2168, %v2164
  %v2245 = vpack.c.b16 %v2169, %v2165
  %v2246 = vpack.c.b16 %v2170, %v2166
  %v2247 = vpack.c.b16 %v2175, %v2171
  %v2248 = vpack.c.b16 %v2176, %v2172
  %v2249 = vpack.c.b16 %v2177, %v2173
  %v2250 = vpack.c.b16 %v2178, %v2174
  %v2251 = vpack.c.b16 %v2183, %v2179
  %v2252 = vpack.c.b16 %v2184, %v2180
  %v2253 = vpack.c.b16 %v2185, %v2181
  %v2254 = vpack.c.b16 %v2186, %v2182
  %v2255 = vpack.c.b16 %v2191, %v2187
  %v2256 = vpack.c.b16 %v2192, %v2188
  %v2257 = vpack.c.b16 %v2193, %v2189
  %v2258 = vpack.c.b16 %v2194, %v2190
  %2323 = vmatpush.bf16.msra.mxu0 %v2223
  %2324 = vmatpush.bf16.msra.mxu0 %v2219
  %2325 = vmatpush.bf16.msra.mxu0 %v2215
  %2326 = vmatpush.bf16.msra.mxu0 %v2211
  %2327 = vmatpush.bf16.msra.mxu0 %v2207
  %2328 = vmatpush.bf16.msra.mxu0 %v2203
  %2329 = vmatpush.bf16.msra.mxu0 %v2199
  %2330 = vmatpush.bf16.msra.mxu0 %v2195
  %2331 = vmatmul.bf16.gmra.mxu0 %v1932
  %v2332 = vpop.f32.mrf.mxu0
  %v2333 = vadd.f32 0.0, %v2332
  %v2334 = vpop.f32.mrf.mxu0
  %v2335 = vadd.f32 0.0, %v2334
  %2336 = vmatmul.bf16.gmra.mxu0 %v1934
  %v2337 = vpop.f32.mrf.mxu0
  %v2338 = vadd.f32 0.0, %v2337
  %v2339 = vpop.f32.mrf.mxu0
  %v2340 = vadd.f32 0.0, %v2339
  %2341 = vmatmul.bf16.gmra.mxu0 %v1936
  %v2342 = vpop.f32.mrf.mxu0
  %v2343 = vadd.f32 0.0, %v2342
  %v2344 = vpop.f32.mrf.mxu0
  %v2345 = vadd.f32 0.0, %v2344
  %2346 = vdwg.mxu0
  %2347 = vmatpush.bf16.msra.mxu0 %v2255
  %2348 = vmatpush.bf16.msra.mxu0 %v2251
  %2349 = vmatpush.bf16.msra.mxu0 %v2247
  %2350 = vmatpush.bf16.msra.mxu0 %v2243
  %2351 = vmatpush.bf16.msra.mxu0 %v2239
  %2352 = vmatpush.bf16.msra.mxu0 %v2235
  %2353 = vmatpush.bf16.msra.mxu0 %v2231
  %2354 = vmatpush.bf16.msra.mxu0 %v2227
  %2355 = vmatmul.bf16.gmra.mxu0 %v1933
  %v2356 = vpop.f32.mrf.mxu0
  %v2357 = vadd.f32 %v2333, %v2356
  %v2358 = vpop.f32.mrf.mxu0
  %v2359 = vadd.f32 %v2335, %v2358
  %2360 = vmatmul.bf16.gmra.mxu0 %v1935
  %v2361 = vpop.f32.mrf.mxu0
  %v2362 = vadd.f32 %v2338, %v2361
  %v2363 = vpop.f32.mrf.mxu0
  %v2364 = vadd.f32 %v2340, %v2363
  %2365 = vmatmul.bf16.gmra.mxu0 %v1937
  %v2366 = vpop.f32.mrf.mxu0
  %v2367 = vadd.f32 %v2343, %v2366
  %v2368 = vpop.f32.mrf.mxu0
  %v2369 = vadd.f32 %v2345, %v2368
  %2370 = vdwg.mxu0
  %2371 = vmatpush.bf16.msra.mxu0 %v2224
  %2372 = vmatpush.bf16.msra.mxu0 %v2220
  %2373 = vmatpush.bf16.msra.mxu0 %v2216
  %2374 = vmatpush.bf16.msra.mxu0 %v2212
  %2375 = vmatpush.bf16.msra.mxu0 %v2208
  %2376 = vmatpush.bf16.msra.mxu0 %v2204
  %2377 = vmatpush.bf16.msra.mxu0 %v2200
  %2378 = vmatpush.bf16.msra.mxu0 %v2196
  %2379 = vmatmul.bf16.gmra.mxu0 %v1932
  %v2380 = vpop.f32.mrf.mxu0
  %v2381 = vadd.f32 0.0, %v2380
  %v2382 = vpop.f32.mrf.mxu0
  %v2383 = vadd.f32 0.0, %v2382
  %2384 = vmatmul.bf16.gmra.mxu0 %v1934
  %v2385 = vpop.f32.mrf.mxu0
  %v2386 = vadd.f32 0.0, %v2385
  %v2387 = vpop.f32.mrf.mxu0
  %v2388 = vadd.f32 0.0, %v2387
  %2389 = vmatmul.bf16.gmra.mxu0 %v1936
  %v2390 = vpop.f32.mrf.mxu0
  %v2391 = vadd.f32 0.0, %v2390
  %v2392 = vpop.f32.mrf.mxu0
  %v2393 = vadd.f32 0.0, %v2392
  %2394 = vdwg.mxu0
  %2395 = vmatpush.bf16.msra.mxu0 %v2256
  %2396 = vmatpush.bf16.msra.mxu0 %v2252
  %2397 = vmatpush.bf16.msra.mxu0 %v2248
  %2398 = vmatpush.bf16.msra.mxu0 %v2244
  %2399 = vmatpush.bf16.msra.mxu0 %v2240
  %2400 = vmatpush.bf16.msra.mxu0 %v2236
  %2401 = vmatpush.bf16.msra.mxu0 %v2232
  %2402 = vmatpush.bf16.msra.mxu0 %v2228
  %2403 = vmatmul.bf16.gmra.mxu0 %v1933
  %v2404 = vpop.f32.mrf.mxu0
  %v2405 = vadd.f32 %v2381, %v2404
  %v2406 = vpop.f32.mrf.mxu0
  %v2407 = vadd.f32 %v2383, %v2406
  %2408 = vmatmul.bf16.gmra.mxu0 %v1935
  %v2409 = vpop.f32.mrf.mxu0
  %v2410 = vadd.f32 %v2386, %v2409
  %v2411 = vpop.f32.mrf.mxu0
  %v2412 = vadd.f32 %v2388, %v2411
  %2413 = vmatmul.bf16.gmra.mxu0 %v1937
  %v2414 = vpop.f32.mrf.mxu0
  %v2415 = vadd.f32 %v2391, %v2414
  %v2416 = vpop.f32.mrf.mxu0
  %v2417 = vadd.f32 %v2393, %v2416
  %2418 = vdwg.mxu0
  %2419 = vmatpush.bf16.msra.mxu0 %v2225
  %2420 = vmatpush.bf16.msra.mxu0 %v2221
  %2421 = vmatpush.bf16.msra.mxu0 %v2217
  %2422 = vmatpush.bf16.msra.mxu0 %v2213
  %2423 = vmatpush.bf16.msra.mxu0 %v2209
  %2424 = vmatpush.bf16.msra.mxu0 %v2205
  %2425 = vmatpush.bf16.msra.mxu0 %v2201
  %2426 = vmatpush.bf16.msra.mxu0 %v2197
  %2427 = vmatmul.bf16.gmra.mxu0 %v1932
  %v2428 = vpop.f32.mrf.mxu0
  %v2429 = vadd.f32 0.0, %v2428
  %v2430 = vpop.f32.mrf.mxu0
  %v2431 = vadd.f32 0.0, %v2430
  %2432 = vmatmul.bf16.gmra.mxu0 %v1934
  %v2433 = vpop.f32.mrf.mxu0
  %v2434 = vadd.f32 0.0, %v2433
  %v2435 = vpop.f32.mrf.mxu0
  %v2436 = vadd.f32 0.0, %v2435
  %2437 = vmatmul.bf16.gmra.mxu0 %v1936
  %v2438 = vpop.f32.mrf.mxu0
  %v2439 = vadd.f32 0.0, %v2438
  %v2440 = vpop.f32.mrf.mxu0
  %v2441 = vadd.f32 0.0, %v2440
  %2442 = vdwg.mxu0
  %2443 = vmatpush.bf16.msra.mxu0 %v2257
  %2444 = vmatpush.bf16.msra.mxu0 %v2253
  %2445 = vmatpush.bf16.msra.mxu0 %v2249
  %2446 = vmatpush.bf16.msra.mxu0 %v2245
  %2447 = vmatpush.bf16.msra.mxu0 %v2241
  %2448 = vmatpush.bf16.msra.mxu0 %v2237
  %2449 = vmatpush.bf16.msra.mxu0 %v2233
  %2450 = vmatpush.bf16.msra.mxu0 %v2229
  %2451 = vmatmul.bf16.gmra.mxu0 %v1933
  %v2452 = vpop.f32.mrf.mxu0
  %v2453 = vadd.f32 %v2429, %v2452
  %v2454 = vpop.f32.mrf.mxu0
  %v2455 = vadd.f32 %v2431, %v2454
  %2456 = vmatmul.bf16.gmra.mxu0 %v1935
  %v2457 = vpop.f32.mrf.mxu0
  %v2458 = vadd.f32 %v2434, %v2457
  %v2459 = vpop.f32.mrf.mxu0
  %v2460 = vadd.f32 %v2436, %v2459
  %2461 = vmatmul.bf16.gmra.mxu0 %v1937
  %v2462 = vpop.f32.mrf.mxu0
  %v2463 = vadd.f32 %v2439, %v2462
  %v2464 = vpop.f32.mrf.mxu0
  %v2465 = vadd.f32 %v2441, %v2464
  %2466 = vdwg.mxu0
  %2467 = vmatpush.bf16.msra.mxu0 %v2226
  %2468 = vmatpush.bf16.msra.mxu0 %v2222
  %2469 = vmatpush.bf16.msra.mxu0 %v2218
  %2470 = vmatpush.bf16.msra.mxu0 %v2214
  %2471 = vmatpush.bf16.msra.mxu0 %v2210
  %2472 = vmatpush.bf16.msra.mxu0 %v2206
  %2473 = vmatpush.bf16.msra.mxu0 %v2202
  %2474 = vmatpush.bf16.msra.mxu0 %v2198
  %2475 = vmatmul.bf16.gmra.mxu0 %v1932
  %v2476 = vpop.f32.mrf.mxu0
  %v2477 = vadd.f32 0.0, %v2476
  %v2478 = vpop.f32.mrf.mxu0
  %v2479 = vadd.f32 0.0, %v2478
  %2480 = vmatmul.bf16.gmra.mxu0 %v1934
  %v2481 = vpop.f32.mrf.mxu0
  %v2482 = vadd.f32 0.0, %v2481
  %v2483 = vpop.f32.mrf.mxu0
  %v2484 = vadd.f32 0.0, %v2483
  %2485 = vmatmul.bf16.gmra.mxu0 %v1936
  %v2486 = vpop.f32.mrf.mxu0
  %v2487 = vadd.f32 0.0, %v2486
  %v2488 = vpop.f32.mrf.mxu0
  %v2489 = vadd.f32 0.0, %v2488
  %2490 = vdwg.mxu0
  %2491 = vmatpush.bf16.msra.mxu0 %v2258
  %2492 = vmatpush.bf16.msra.mxu0 %v2254
  %2493 = vmatpush.bf16.msra.mxu0 %v2250
  %2494 = vmatpush.bf16.msra.mxu0 %v2246
  %2495 = vmatpush.bf16.msra.mxu0 %v2242
  %2496 = vmatpush.bf16.msra.mxu0 %v2238
  %2497 = vmatpush.bf16.msra.mxu0 %v2234
  %2498 = vmatpush.bf16.msra.mxu0 %v2230
  %2499 = vmatmul.bf16.gmra.mxu0 %v1933
  %v2500 = vpop.f32.mrf.mxu0
  %v2501 = vadd.f32 %v2477, %v2500
  %v2502 = vpop.f32.mrf.mxu0
  %v2503 = vadd.f32 %v2479, %v2502
  %2504 = vmatmul.bf16.gmra.mxu0 %v1935
  %v2505 = vpop.f32.mrf.mxu0
  %v2506 = vadd.f32 %v2482, %v2505
  %v2507 = vpop.f32.mrf.mxu0
  %v2508 = vadd.f32 %v2484, %v2507
  %2509 = vmatmul.bf16.gmra.mxu0 %v1937
  %v2510 = vpop.f32.mrf.mxu0
  %v2511 = vadd.f32 %v2487, %v2510
  %v2512 = vpop.f32.mrf.mxu0
  %v2513 = vadd.f32 %v2489, %v2512
  %2514 = vdwg.mxu0
  %v2515 = vadd.f32 %v1883, %v2357
  %v2516 = vadd.f32 %v1884, %v2405
  %v2517 = vadd.f32 %v1885, %v2453
  %v2518 = vadd.f32 %v1886, %v2501
  %v2519 = vadd.f32 %v1887, %v2359
  %v2520 = vadd.f32 %v1888, %v2407
  %v2521 = vadd.f32 %v1889, %v2455
  %v2522 = vadd.f32 %v1890, %v2503
  %v2523 = vadd.f32 %v1891, %v2362
  %v2524 = vadd.f32 %v1892, %v2410
  %v2525 = vadd.f32 %v1893, %v2458
  %v2526 = vadd.f32 %v1894, %v2506
  %v2527 = vadd.f32 %v1895, %v2364
  %v2528 = vadd.f32 %v1896, %v2412
  %v2529 = vadd.f32 %v1897, %v2460
  %v2530 = vadd.f32 %v1898, %v2508
  %v2531 = vadd.f32 %v1899, %v2367
  %v2532 = vadd.f32 %v1900, %v2415
  %v2533 = vadd.f32 %v1901, %v2463
  %v2534 = vadd.f32 %v1902, %v2511
  %v2535 = vadd.f32 %v1903, %v2369
  %v2536 = vadd.f32 %v1904, %v2417
  %v2537 = vadd.f32 %v1905, %v2465
  %v2538 = vadd.f32 %v1906, %v2513
  %v2539 = vrot.slane %v47, 2
  %v2540 = vrot.slane %v48, 2
  %v2541 = vrot.slane %v49, 2
  %v2542 = vrot.slane %v50, 2
  %v2543 = vrot.slane %v51, 2
  %v2544 = vrot.slane %v52, 2
  %v2545 = vrot.slane %v53, 2
  %v2546 = vrot.slane %v54, 2
  %v2547 = vrot.slane %v55, 2
  %v2548 = vrot.slane %v56, 2
  %v2549 = vrot.slane %v57, 2
  %v2550 = vrot.slane %v58, 2
  %vm2551 = vcmp.lt.s32.totalorder %v72, 6
  %v2552 = vsel %vm2551, %v2547, %v2549
  %v2553 = vsel %vm2551, %v2548, %v2550
  %v2554 = vsel %vm2551, %v2545, %v2547
  %v2555 = vsel %vm2551, %v2546, %v2548
  %v2556 = vsel %vm2551, %v2543, %v2545
  %v2557 = vsel %vm2551, %v2544, %v2546
  %v2558 = vsel %vm2551, %v2541, %v2543
  %v2559 = vsel %vm2551, %v2542, %v2544
  %v2560 = vsel %vm2551, %v2539, %v2541
  %v2561 = vsel %vm2551, %v2540, %v2542
  %v2562 = vsel %vm2551, %v2549, %v2539
  %v2563 = vsel %vm2551, %v2550, %v2540
  %v2564 = vpack.c.bf16 %v2558, %v2560
  %v2565 = vpack.c.bf16 %v2559, %v2561
  %v2566 = vpack.c.bf16 %v2554, %v2556
  %v2567 = vpack.c.bf16 %v2555, %v2557
  %v2568 = vpack.c.bf16 %v2562, %v2552
  %v2569 = vpack.c.bf16 %v2563, %v2553
  %s2570 = scalar_lea.vmem %s2, 2048
  %v2571 = vld [vmem:[%s2570] sm:$0xff]
  %v2572 = vld [vmem:[%s2570 + $0x8] sm:$0xff]
  %v2573 = vld [vmem:[%s2570 + $0x10] sm:$0xff]
  %v2574 = vld [vmem:[%s2570 + $0x18] sm:$0xff]
  %v2575 = vld [vmem:[%s2570 + $0x20] sm:$0xff]
  %v2576 = vld [vmem:[%s2570 + $0x28] sm:$0xff]
  %v2577 = vld [vmem:[%s2570 + $0x30] sm:$0xff]
  %v2578 = vld [vmem:[%s2570 + $0x38] sm:$0xff]
  %v2579 = vld [vmem:[%s2570 + $0x40] sm:$0xff]
  %v2580 = vld [vmem:[%s2570 + $0x48] sm:$0xff]
  %v2581 = vld [vmem:[%s2570 + $0x50] sm:$0xff]
  %v2582 = vld [vmem:[%s2570 + $0x58] sm:$0xff]
  %v2583 = vld [vmem:[%s2570 + $0x60] sm:$0xff]
  %v2584 = vld [vmem:[%s2570 + $0x68] sm:$0xff]
  %v2585 = vld [vmem:[%s2570 + $0x70] sm:$0xff]
  %v2586 = vld [vmem:[%s2570 + $0x78] sm:$0xff]
  %v2587 = vld [vmem:[%s2570 + $0x80] sm:$0xff]
  %v2588 = vld [vmem:[%s2570 + $0x88] sm:$0xff]
  %v2589 = vld [vmem:[%s2570 + $0x90] sm:$0xff]
  %v2590 = vld [vmem:[%s2570 + $0x98] sm:$0xff]
  %v2591 = vld [vmem:[%s2570 + $0xa0] sm:$0xff]
  %v2592 = vld [vmem:[%s2570 + $0xa8] sm:$0xff]
  %v2593 = vld [vmem:[%s2570 + $0xb0] sm:$0xff]
  %v2594 = vld [vmem:[%s2570 + $0xb8] sm:$0xff]
  %v2595 = vld [vmem:[%s2570 + $0xc0] sm:$0xff]
  %v2596 = vld [vmem:[%s2570 + $0xc8] sm:$0xff]
  %v2597 = vld [vmem:[%s2570 + $0xd0] sm:$0xff]
  %v2598 = vld [vmem:[%s2570 + $0xd8] sm:$0xff]
  %v2599 = vld [vmem:[%s2570 + $0xe0] sm:$0xff]
  %v2600 = vld [vmem:[%s2570 + $0xe8] sm:$0xff]
  %v2601 = vld [vmem:[%s2570 + $0xf0] sm:$0xff]
  %v2602 = vld [vmem:[%s2570 + $0xf8] sm:$0xff]
  %v2603 = vld [vmem:[%s2570 + $0x100] sm:$0xff]
  %v2604 = vld [vmem:[%s2570 + $0x108] sm:$0xff]
  %v2605 = vld [vmem:[%s2570 + $0x110] sm:$0xff]
  %v2606 = vld [vmem:[%s2570 + $0x118] sm:$0xff]
  %v2607 = vld [vmem:[%s2570 + $0x120] sm:$0xff]
  %v2608 = vld [vmem:[%s2570 + $0x128] sm:$0xff]
  %v2609 = vld [vmem:[%s2570 + $0x130] sm:$0xff]
  %v2610 = vld [vmem:[%s2570 + $0x138] sm:$0xff]
  %v2611 = vld [vmem:[%s2570 + $0x140] sm:$0xff]
  %v2612 = vld [vmem:[%s2570 + $0x148] sm:$0xff]
  %v2613 = vld [vmem:[%s2570 + $0x150] sm:$0xff]
  %v2614 = vld [vmem:[%s2570 + $0x158] sm:$0xff]
  %v2615 = vld [vmem:[%s2570 + $0x160] sm:$0xff]
  %v2616 = vld [vmem:[%s2570 + $0x168] sm:$0xff]
  %v2617 = vld [vmem:[%s2570 + $0x170] sm:$0xff]
  %v2618 = vld [vmem:[%s2570 + $0x178] sm:$0xff]
  %v2619 = vld [vmem:[%s2570 + $0x180] sm:$0xff]
  %v2620 = vld [vmem:[%s2570 + $0x188] sm:$0xff]
  %v2621 = vld [vmem:[%s2570 + $0x190] sm:$0xff]
  %v2622 = vld [vmem:[%s2570 + $0x198] sm:$0xff]
  %v2623 = vld [vmem:[%s2570 + $0x1a0] sm:$0xff]
  %v2624 = vld [vmem:[%s2570 + $0x1a8] sm:$0xff]
  %v2625 = vld [vmem:[%s2570 + $0x1b0] sm:$0xff]
  %v2626 = vld [vmem:[%s2570 + $0x1b8] sm:$0xff]
  %v2627 = vld [vmem:[%s2570 + $0x1c0] sm:$0xff]
  %v2628 = vld [vmem:[%s2570 + $0x1c8] sm:$0xff]
  %v2629 = vld [vmem:[%s2570 + $0x1d0] sm:$0xff]
  %v2630 = vld [vmem:[%s2570 + $0x1d8] sm:$0xff]
  %v2631 = vld [vmem:[%s2570 + $0x1e0] sm:$0xff]
  %v2632 = vld [vmem:[%s2570 + $0x1e8] sm:$0xff]
  %v2633 = vld [vmem:[%s2570 + $0x1f0] sm:$0xff]
  %v2634 = vld [vmem:[%s2570 + $0x1f8] sm:$0xff]
  %v2699 = vunpack.c.l.b16 %v2571
  %v2700 = vunpack.c.h.b16 %v2571
  %v2701 = vunpack.c.l.b16 %v2572
  %v2702 = vunpack.c.h.b16 %v2572
  %v2703 = vunpack.c.l.b16 %v2573
  %v2704 = vunpack.c.h.b16 %v2573
  %v2705 = vunpack.c.l.b16 %v2574
  %v2706 = vunpack.c.h.b16 %v2574
  %v2707 = vunpack.c.l.b16 %v2575
  %v2708 = vunpack.c.h.b16 %v2575
  %v2709 = vunpack.c.l.b16 %v2576
  %v2710 = vunpack.c.h.b16 %v2576
  %v2711 = vunpack.c.l.b16 %v2577
  %v2712 = vunpack.c.h.b16 %v2577
  %v2713 = vunpack.c.l.b16 %v2578
  %v2714 = vunpack.c.h.b16 %v2578
  %v2715 = vunpack.c.l.b16 %v2579
  %v2716 = vunpack.c.h.b16 %v2579
  %v2717 = vunpack.c.l.b16 %v2580
  %v2718 = vunpack.c.h.b16 %v2580
  %v2719 = vunpack.c.l.b16 %v2581
  %v2720 = vunpack.c.h.b16 %v2581
  %v2721 = vunpack.c.l.b16 %v2582
  %v2722 = vunpack.c.h.b16 %v2582
  %v2723 = vunpack.c.l.b16 %v2583
  %v2724 = vunpack.c.h.b16 %v2583
  %v2725 = vunpack.c.l.b16 %v2584
  %v2726 = vunpack.c.h.b16 %v2584
  %v2727 = vunpack.c.l.b16 %v2585
  %v2728 = vunpack.c.h.b16 %v2585
  %v2729 = vunpack.c.l.b16 %v2586
  %v2730 = vunpack.c.h.b16 %v2586
  %v2731 = vunpack.c.l.b16 %v2587
  %v2732 = vunpack.c.h.b16 %v2587
  %v2733 = vunpack.c.l.b16 %v2588
  %v2734 = vunpack.c.h.b16 %v2588
  %v2735 = vunpack.c.l.b16 %v2589
  %v2736 = vunpack.c.h.b16 %v2589
  %v2737 = vunpack.c.l.b16 %v2590
  %v2738 = vunpack.c.h.b16 %v2590
  %v2739 = vunpack.c.l.b16 %v2591
  %v2740 = vunpack.c.h.b16 %v2591
  %v2741 = vunpack.c.l.b16 %v2592
  %v2742 = vunpack.c.h.b16 %v2592
  %v2743 = vunpack.c.l.b16 %v2593
  %v2744 = vunpack.c.h.b16 %v2593
  %v2745 = vunpack.c.l.b16 %v2594
  %v2746 = vunpack.c.h.b16 %v2594
  %v2747 = vunpack.c.l.b16 %v2595
  %v2748 = vunpack.c.h.b16 %v2595
  %v2749 = vunpack.c.l.b16 %v2596
  %v2750 = vunpack.c.h.b16 %v2596
  %v2751 = vunpack.c.l.b16 %v2597
  %v2752 = vunpack.c.h.b16 %v2597
  %v2753 = vunpack.c.l.b16 %v2598
  %v2754 = vunpack.c.h.b16 %v2598
  %v2755 = vunpack.c.l.b16 %v2599
  %v2756 = vunpack.c.h.b16 %v2599
  %v2757 = vunpack.c.l.b16 %v2600
  %v2758 = vunpack.c.h.b16 %v2600
  %v2759 = vunpack.c.l.b16 %v2601
  %v2760 = vunpack.c.h.b16 %v2601
  %v2761 = vunpack.c.l.b16 %v2602
  %v2762 = vunpack.c.h.b16 %v2602
  %v2763 = vunpack.c.l.b16 %v2603
  %v2764 = vunpack.c.h.b16 %v2603
  %v2765 = vunpack.c.l.b16 %v2604
  %v2766 = vunpack.c.h.b16 %v2604
  %v2767 = vunpack.c.l.b16 %v2605
  %v2768 = vunpack.c.h.b16 %v2605
  %v2769 = vunpack.c.l.b16 %v2606
  %v2770 = vunpack.c.h.b16 %v2606
  %v2771 = vunpack.c.l.b16 %v2607
  %v2772 = vunpack.c.h.b16 %v2607
  %v2773 = vunpack.c.l.b16 %v2608
  %v2774 = vunpack.c.h.b16 %v2608
  %v2775 = vunpack.c.l.b16 %v2609
  %v2776 = vunpack.c.h.b16 %v2609
  %v2777 = vunpack.c.l.b16 %v2610
  %v2778 = vunpack.c.h.b16 %v2610
  %v2779 = vunpack.c.l.b16 %v2611
  %v2780 = vunpack.c.h.b16 %v2611
  %v2781 = vunpack.c.l.b16 %v2612
  %v2782 = vunpack.c.h.b16 %v2612
  %v2783 = vunpack.c.l.b16 %v2613
  %v2784 = vunpack.c.h.b16 %v2613
  %v2785 = vunpack.c.l.b16 %v2614
  %v2786 = vunpack.c.h.b16 %v2614
  %v2787 = vunpack.c.l.b16 %v2615
  %v2788 = vunpack.c.h.b16 %v2615
  %v2789 = vunpack.c.l.b16 %v2616
  %v2790 = vunpack.c.h.b16 %v2616
  %v2791 = vunpack.c.l.b16 %v2617
  %v2792 = vunpack.c.h.b16 %v2617
  %v2793 = vunpack.c.l.b16 %v2618
  %v2794 = vunpack.c.h.b16 %v2618
  %v2795 = vunpack.c.l.b16 %v2619
  %v2796 = vunpack.c.h.b16 %v2619
  %v2797 = vunpack.c.l.b16 %v2620
  %v2798 = vunpack.c.h.b16 %v2620
  %v2799 = vunpack.c.l.b16 %v2621
  %v2800 = vunpack.c.h.b16 %v2621
  %v2801 = vunpack.c.l.b16 %v2622
  %v2802 = vunpack.c.h.b16 %v2622
  %v2803 = vunpack.c.l.b16 %v2623
  %v2804 = vunpack.c.h.b16 %v2623
  %v2805 = vunpack.c.l.b16 %v2624
  %v2806 = vunpack.c.h.b16 %v2624
  %v2807 = vunpack.c.l.b16 %v2625
  %v2808 = vunpack.c.h.b16 %v2625
  %v2809 = vunpack.c.l.b16 %v2626
  %v2810 = vunpack.c.h.b16 %v2626
  %v2811 = vunpack.c.l.b16 %v2627
  %v2812 = vunpack.c.h.b16 %v2627
  %v2813 = vunpack.c.l.b16 %v2628
  %v2814 = vunpack.c.h.b16 %v2628
  %v2815 = vunpack.c.l.b16 %v2629
  %v2816 = vunpack.c.h.b16 %v2629
  %v2817 = vunpack.c.l.b16 %v2630
  %v2818 = vunpack.c.h.b16 %v2630
  %v2819 = vunpack.c.l.b16 %v2631
  %v2820 = vunpack.c.h.b16 %v2631
  %v2821 = vunpack.c.l.b16 %v2632
  %v2822 = vunpack.c.h.b16 %v2632
  %v2823 = vunpack.c.l.b16 %v2633
  %v2824 = vunpack.c.h.b16 %v2633
  %v2825 = vunpack.c.l.b16 %v2634
  %v2826 = vunpack.c.h.b16 %v2634
  %v2827 = vpack.c.b16 %v2703, %v2699
  %v2828 = vpack.c.b16 %v2704, %v2700
  %v2829 = vpack.c.b16 %v2705, %v2701
  %v2830 = vpack.c.b16 %v2706, %v2702
  %v2831 = vpack.c.b16 %v2711, %v2707
  %v2832 = vpack.c.b16 %v2712, %v2708
  %v2833 = vpack.c.b16 %v2713, %v2709
  %v2834 = vpack.c.b16 %v2714, %v2710
  %v2835 = vpack.c.b16 %v2719, %v2715
  %v2836 = vpack.c.b16 %v2720, %v2716
  %v2837 = vpack.c.b16 %v2721, %v2717
  %v2838 = vpack.c.b16 %v2722, %v2718
  %v2839 = vpack.c.b16 %v2727, %v2723
  %v2840 = vpack.c.b16 %v2728, %v2724
  %v2841 = vpack.c.b16 %v2729, %v2725
  %v2842 = vpack.c.b16 %v2730, %v2726
  %v2843 = vpack.c.b16 %v2735, %v2731
  %v2844 = vpack.c.b16 %v2736, %v2732
  %v2845 = vpack.c.b16 %v2737, %v2733
  %v2846 = vpack.c.b16 %v2738, %v2734
  %v2847 = vpack.c.b16 %v2743, %v2739
  %v2848 = vpack.c.b16 %v2744, %v2740
  %v2849 = vpack.c.b16 %v2745, %v2741
  %v2850 = vpack.c.b16 %v2746, %v2742
  %v2851 = vpack.c.b16 %v2751, %v2747
  %v2852 = vpack.c.b16 %v2752, %v2748
  %v2853 = vpack.c.b16 %v2753, %v2749
  %v2854 = vpack.c.b16 %v2754, %v2750
  %v2855 = vpack.c.b16 %v2759, %v2755
  %v2856 = vpack.c.b16 %v2760, %v2756
  %v2857 = vpack.c.b16 %v2761, %v2757
  %v2858 = vpack.c.b16 %v2762, %v2758
  %v2859 = vpack.c.b16 %v2767, %v2763
  %v2860 = vpack.c.b16 %v2768, %v2764
  %v2861 = vpack.c.b16 %v2769, %v2765
  %v2862 = vpack.c.b16 %v2770, %v2766
  %v2863 = vpack.c.b16 %v2775, %v2771
  %v2864 = vpack.c.b16 %v2776, %v2772
  %v2865 = vpack.c.b16 %v2777, %v2773
  %v2866 = vpack.c.b16 %v2778, %v2774
  %v2867 = vpack.c.b16 %v2783, %v2779
  %v2868 = vpack.c.b16 %v2784, %v2780
  %v2869 = vpack.c.b16 %v2785, %v2781
  %v2870 = vpack.c.b16 %v2786, %v2782
  %v2871 = vpack.c.b16 %v2791, %v2787
  %v2872 = vpack.c.b16 %v2792, %v2788
  %v2873 = vpack.c.b16 %v2793, %v2789
  %v2874 = vpack.c.b16 %v2794, %v2790
  %v2875 = vpack.c.b16 %v2799, %v2795
  %v2876 = vpack.c.b16 %v2800, %v2796
  %v2877 = vpack.c.b16 %v2801, %v2797
  %v2878 = vpack.c.b16 %v2802, %v2798
  %v2879 = vpack.c.b16 %v2807, %v2803
  %v2880 = vpack.c.b16 %v2808, %v2804
  %v2881 = vpack.c.b16 %v2809, %v2805
  %v2882 = vpack.c.b16 %v2810, %v2806
  %v2883 = vpack.c.b16 %v2815, %v2811
  %v2884 = vpack.c.b16 %v2816, %v2812
  %v2885 = vpack.c.b16 %v2817, %v2813
  %v2886 = vpack.c.b16 %v2818, %v2814
  %v2887 = vpack.c.b16 %v2823, %v2819
  %v2888 = vpack.c.b16 %v2824, %v2820
  %v2889 = vpack.c.b16 %v2825, %v2821
  %v2890 = vpack.c.b16 %v2826, %v2822
  %2955 = vmatpush.bf16.msra.mxu0 %v2855
  %2956 = vmatpush.bf16.msra.mxu0 %v2851
  %2957 = vmatpush.bf16.msra.mxu0 %v2847
  %2958 = vmatpush.bf16.msra.mxu0 %v2843
  %2959 = vmatpush.bf16.msra.mxu0 %v2839
  %2960 = vmatpush.bf16.msra.mxu0 %v2835
  %2961 = vmatpush.bf16.msra.mxu0 %v2831
  %2962 = vmatpush.bf16.msra.mxu0 %v2827
  %2963 = vmatmul.bf16.gmra.mxu0 %v2564
  %v2964 = vpop.f32.mrf.mxu0
  %v2965 = vadd.f32 0.0, %v2964
  %v2966 = vpop.f32.mrf.mxu0
  %v2967 = vadd.f32 0.0, %v2966
  %2968 = vmatmul.bf16.gmra.mxu0 %v2566
  %v2969 = vpop.f32.mrf.mxu0
  %v2970 = vadd.f32 0.0, %v2969
  %v2971 = vpop.f32.mrf.mxu0
  %v2972 = vadd.f32 0.0, %v2971
  %2973 = vmatmul.bf16.gmra.mxu0 %v2568
  %v2974 = vpop.f32.mrf.mxu0
  %v2975 = vadd.f32 0.0, %v2974
  %v2976 = vpop.f32.mrf.mxu0
  %v2977 = vadd.f32 0.0, %v2976
  %2978 = vdwg.mxu0
  %2979 = vmatpush.bf16.msra.mxu0 %v2887
  %2980 = vmatpush.bf16.msra.mxu0 %v2883
  %2981 = vmatpush.bf16.msra.mxu0 %v2879
  %2982 = vmatpush.bf16.msra.mxu0 %v2875
  %2983 = vmatpush.bf16.msra.mxu0 %v2871
  %2984 = vmatpush.bf16.msra.mxu0 %v2867
  %2985 = vmatpush.bf16.msra.mxu0 %v2863
  %2986 = vmatpush.bf16.msra.mxu0 %v2859
  %2987 = vmatmul.bf16.gmra.mxu0 %v2565
  %v2988 = vpop.f32.mrf.mxu0
  %v2989 = vadd.f32 %v2965, %v2988
  %v2990 = vpop.f32.mrf.mxu0
  %v2991 = vadd.f32 %v2967, %v2990
  %2992 = vmatmul.bf16.gmra.mxu0 %v2567
  %v2993 = vpop.f32.mrf.mxu0
  %v2994 = vadd.f32 %v2970, %v2993
  %v2995 = vpop.f32.mrf.mxu0
  %v2996 = vadd.f32 %v2972, %v2995
  %2997 = vmatmul.bf16.gmra.mxu0 %v2569
  %v2998 = vpop.f32.mrf.mxu0
  %v2999 = vadd.f32 %v2975, %v2998
  %v3000 = vpop.f32.mrf.mxu0
  %v3001 = vadd.f32 %v2977, %v3000
  %3002 = vdwg.mxu0
  %3003 = vmatpush.bf16.msra.mxu0 %v2856
  %3004 = vmatpush.bf16.msra.mxu0 %v2852
  %3005 = vmatpush.bf16.msra.mxu0 %v2848
  %3006 = vmatpush.bf16.msra.mxu0 %v2844
  %3007 = vmatpush.bf16.msra.mxu0 %v2840
  %3008 = vmatpush.bf16.msra.mxu0 %v2836
  %3009 = vmatpush.bf16.msra.mxu0 %v2832
  %3010 = vmatpush.bf16.msra.mxu0 %v2828
  %3011 = vmatmul.bf16.gmra.mxu0 %v2564
  %v3012 = vpop.f32.mrf.mxu0
  %v3013 = vadd.f32 0.0, %v3012
  %v3014 = vpop.f32.mrf.mxu0
  %v3015 = vadd.f32 0.0, %v3014
  %3016 = vmatmul.bf16.gmra.mxu0 %v2566
  %v3017 = vpop.f32.mrf.mxu0
  %v3018 = vadd.f32 0.0, %v3017
  %v3019 = vpop.f32.mrf.mxu0
  %v3020 = vadd.f32 0.0, %v3019
  %3021 = vmatmul.bf16.gmra.mxu0 %v2568
  %v3022 = vpop.f32.mrf.mxu0
  %v3023 = vadd.f32 0.0, %v3022
  %v3024 = vpop.f32.mrf.mxu0
  %v3025 = vadd.f32 0.0, %v3024
  %3026 = vdwg.mxu0
  %3027 = vmatpush.bf16.msra.mxu0 %v2888
  %3028 = vmatpush.bf16.msra.mxu0 %v2884
  %3029 = vmatpush.bf16.msra.mxu0 %v2880
  %3030 = vmatpush.bf16.msra.mxu0 %v2876
  %3031 = vmatpush.bf16.msra.mxu0 %v2872
  %3032 = vmatpush.bf16.msra.mxu0 %v2868
  %3033 = vmatpush.bf16.msra.mxu0 %v2864
  %3034 = vmatpush.bf16.msra.mxu0 %v2860
  %3035 = vmatmul.bf16.gmra.mxu0 %v2565
  %v3036 = vpop.f32.mrf.mxu0
  %v3037 = vadd.f32 %v3013, %v3036
  %v3038 = vpop.f32.mrf.mxu0
  %v3039 = vadd.f32 %v3015, %v3038
  %3040 = vmatmul.bf16.gmra.mxu0 %v2567
  %v3041 = vpop.f32.mrf.mxu0
  %v3042 = vadd.f32 %v3018, %v3041
  %v3043 = vpop.f32.mrf.mxu0
  %v3044 = vadd.f32 %v3020, %v3043
  %3045 = vmatmul.bf16.gmra.mxu0 %v2569
  %v3046 = vpop.f32.mrf.mxu0
  %v3047 = vadd.f32 %v3023, %v3046
  %v3048 = vpop.f32.mrf.mxu0
  %v3049 = vadd.f32 %v3025, %v3048
  %3050 = vdwg.mxu0
  %3051 = vmatpush.bf16.msra.mxu0 %v2857
  %3052 = vmatpush.bf16.msra.mxu0 %v2853
  %3053 = vmatpush.bf16.msra.mxu0 %v2849
  %3054 = vmatpush.bf16.msra.mxu0 %v2845
  %3055 = vmatpush.bf16.msra.mxu0 %v2841
  %3056 = vmatpush.bf16.msra.mxu0 %v2837
  %3057 = vmatpush.bf16.msra.mxu0 %v2833
  %3058 = vmatpush.bf16.msra.mxu0 %v2829
  %3059 = vmatmul.bf16.gmra.mxu0 %v2564
  %v3060 = vpop.f32.mrf.mxu0
  %v3061 = vadd.f32 0.0, %v3060
  %v3062 = vpop.f32.mrf.mxu0
  %v3063 = vadd.f32 0.0, %v3062
  %3064 = vmatmul.bf16.gmra.mxu0 %v2566
  %v3065 = vpop.f32.mrf.mxu0
  %v3066 = vadd.f32 0.0, %v3065
  %v3067 = vpop.f32.mrf.mxu0
  %v3068 = vadd.f32 0.0, %v3067
  %3069 = vmatmul.bf16.gmra.mxu0 %v2568
  %v3070 = vpop.f32.mrf.mxu0
  %v3071 = vadd.f32 0.0, %v3070
  %v3072 = vpop.f32.mrf.mxu0
  %v3073 = vadd.f32 0.0, %v3072
  %3074 = vdwg.mxu0
  %3075 = vmatpush.bf16.msra.mxu0 %v2889
  %3076 = vmatpush.bf16.msra.mxu0 %v2885
  %3077 = vmatpush.bf16.msra.mxu0 %v2881
  %3078 = vmatpush.bf16.msra.mxu0 %v2877
  %3079 = vmatpush.bf16.msra.mxu0 %v2873
  %3080 = vmatpush.bf16.msra.mxu0 %v2869
  %3081 = vmatpush.bf16.msra.mxu0 %v2865
  %3082 = vmatpush.bf16.msra.mxu0 %v2861
  %3083 = vmatmul.bf16.gmra.mxu0 %v2565
  %v3084 = vpop.f32.mrf.mxu0
  %v3085 = vadd.f32 %v3061, %v3084
  %v3086 = vpop.f32.mrf.mxu0
  %v3087 = vadd.f32 %v3063, %v3086
  %3088 = vmatmul.bf16.gmra.mxu0 %v2567
  %v3089 = vpop.f32.mrf.mxu0
  %v3090 = vadd.f32 %v3066, %v3089
  %v3091 = vpop.f32.mrf.mxu0
  %v3092 = vadd.f32 %v3068, %v3091
  %3093 = vmatmul.bf16.gmra.mxu0 %v2569
  %v3094 = vpop.f32.mrf.mxu0
  %v3095 = vadd.f32 %v3071, %v3094
  %v3096 = vpop.f32.mrf.mxu0
  %v3097 = vadd.f32 %v3073, %v3096
  %3098 = vdwg.mxu0
  %3099 = vmatpush.bf16.msra.mxu0 %v2858
  %3100 = vmatpush.bf16.msra.mxu0 %v2854
  %3101 = vmatpush.bf16.msra.mxu0 %v2850
  %3102 = vmatpush.bf16.msra.mxu0 %v2846
  %3103 = vmatpush.bf16.msra.mxu0 %v2842
  %3104 = vmatpush.bf16.msra.mxu0 %v2838
  %3105 = vmatpush.bf16.msra.mxu0 %v2834
  %3106 = vmatpush.bf16.msra.mxu0 %v2830
  %3107 = vmatmul.bf16.gmra.mxu0 %v2564
  %v3108 = vpop.f32.mrf.mxu0
  %v3109 = vadd.f32 0.0, %v3108
  %v3110 = vpop.f32.mrf.mxu0
  %v3111 = vadd.f32 0.0, %v3110
  %3112 = vmatmul.bf16.gmra.mxu0 %v2566
  %v3113 = vpop.f32.mrf.mxu0
  %v3114 = vadd.f32 0.0, %v3113
  %v3115 = vpop.f32.mrf.mxu0
  %v3116 = vadd.f32 0.0, %v3115
  %3117 = vmatmul.bf16.gmra.mxu0 %v2568
  %v3118 = vpop.f32.mrf.mxu0
  %v3119 = vadd.f32 0.0, %v3118
  %v3120 = vpop.f32.mrf.mxu0
  %v3121 = vadd.f32 0.0, %v3120
  %3122 = vdwg.mxu0
  %3123 = vmatpush.bf16.msra.mxu0 %v2890
  %3124 = vmatpush.bf16.msra.mxu0 %v2886
  %3125 = vmatpush.bf16.msra.mxu0 %v2882
  %3126 = vmatpush.bf16.msra.mxu0 %v2878
  %3127 = vmatpush.bf16.msra.mxu0 %v2874
  %3128 = vmatpush.bf16.msra.mxu0 %v2870
  %3129 = vmatpush.bf16.msra.mxu0 %v2866
  %3130 = vmatpush.bf16.msra.mxu0 %v2862
  %3131 = vmatmul.bf16.gmra.mxu0 %v2565
  %v3132 = vpop.f32.mrf.mxu0
  %v3133 = vadd.f32 %v3109, %v3132
  %v3134 = vpop.f32.mrf.mxu0
  %v3135 = vadd.f32 %v3111, %v3134
  %3136 = vmatmul.bf16.gmra.mxu0 %v2567
  %v3137 = vpop.f32.mrf.mxu0
  %v3138 = vadd.f32 %v3114, %v3137
  %v3139 = vpop.f32.mrf.mxu0
  %v3140 = vadd.f32 %v3116, %v3139
  %3141 = vmatmul.bf16.gmra.mxu0 %v2569
  %v3142 = vpop.f32.mrf.mxu0
  %v3143 = vadd.f32 %v3119, %v3142
  %v3144 = vpop.f32.mrf.mxu0
  %v3145 = vadd.f32 %v3121, %v3144
  %3146 = vdwg.mxu0
  %v3147 = vadd.f32 %v2515, %v2989
  %v3148 = vadd.f32 %v2516, %v3037
  %v3149 = vadd.f32 %v2517, %v3085
  %v3150 = vadd.f32 %v2518, %v3133
  %v3151 = vadd.f32 %v2519, %v2991
  %v3152 = vadd.f32 %v2520, %v3039
  %v3153 = vadd.f32 %v2521, %v3087
  %v3154 = vadd.f32 %v2522, %v3135
  %v3155 = vadd.f32 %v2523, %v2994
  %v3156 = vadd.f32 %v2524, %v3042
  %v3157 = vadd.f32 %v2525, %v3090
  %v3158 = vadd.f32 %v2526, %v3138
  %v3159 = vadd.f32 %v2527, %v2996
  %v3160 = vadd.f32 %v2528, %v3044
  %v3161 = vadd.f32 %v2529, %v3092
  %v3162 = vadd.f32 %v2530, %v3140
  %v3163 = vadd.f32 %v2531, %v2999
  %v3164 = vadd.f32 %v2532, %v3047
  %v3165 = vadd.f32 %v2533, %v3095
  %v3166 = vadd.f32 %v2534, %v3143
  %v3167 = vadd.f32 %v2535, %v3001
  %v3168 = vadd.f32 %v2536, %v3049
  %v3169 = vadd.f32 %v2537, %v3097
  %v3170 = vadd.f32 %v2538, %v3145
  %v3171 = vld [vmem:[%s3] sm:$0xf]
  %v3173 = vperm.slane %v3171, 0
  %v3174 = vperm.slane %v3171, 1
  %v3175 = vperm.slane %v3171, 2
  %v3176 = vperm.slane %v3171, 3
  %v3181 = vadd.f32 %v3147, %v3173
  %v3182 = vadd.f32 %v3148, %v3174
  %v3183 = vadd.f32 %v3149, %v3175
  %v3184 = vadd.f32 %v3150, %v3176
  %v3185 = vadd.f32 %v3151, %v3173
  %v3186 = vadd.f32 %v3152, %v3174
  %v3187 = vadd.f32 %v3153, %v3175
  %v3188 = vadd.f32 %v3154, %v3176
  %v3189 = vadd.f32 %v3155, %v3173
  %v3190 = vadd.f32 %v3156, %v3174
  %v3191 = vadd.f32 %v3157, %v3175
  %v3192 = vadd.f32 %v3158, %v3176
  %v3193 = vadd.f32 %v3159, %v3173
  %v3194 = vadd.f32 %v3160, %v3174
  %v3195 = vadd.f32 %v3161, %v3175
  %v3196 = vadd.f32 %v3162, %v3176
  %v3197 = vadd.f32 %v3163, %v3173
  %v3198 = vadd.f32 %v3164, %v3174
  %v3199 = vadd.f32 %v3165, %v3175
  %v3200 = vadd.f32 %v3166, %v3176
  %v3201 = vadd.f32 %v3167, %v3173
  %v3202 = vadd.f32 %v3168, %v3174
  %v3203 = vadd.f32 %v3169, %v3175
  %v3204 = vadd.f32 %v3170, %v3176
  %v3205 = vmax.f32 %v3181, 0.0
  %v3206 = vmax.f32 %v3182, 0.0
  %v3207 = vmax.f32 %v3183, 0.0
  %v3208 = vmax.f32 %v3184, 0.0
  %v3209 = vmax.f32 %v3185, 0.0
  %v3210 = vmax.f32 %v3186, 0.0
  %v3211 = vmax.f32 %v3187, 0.0
  %v3212 = vmax.f32 %v3188, 0.0
  %v3213 = vmax.f32 %v3189, 0.0
  %v3214 = vmax.f32 %v3190, 0.0
  %v3215 = vmax.f32 %v3191, 0.0
  %v3216 = vmax.f32 %v3192, 0.0
  %v3217 = vmax.f32 %v3193, 0.0
  %v3218 = vmax.f32 %v3194, 0.0
  %v3219 = vmax.f32 %v3195, 0.0
  %v3220 = vmax.f32 %v3196, 0.0
  %v3221 = vmax.f32 %v3197, 0.0
  %v3222 = vmax.f32 %v3198, 0.0
  %v3223 = vmax.f32 %v3199, 0.0
  %v3224 = vmax.f32 %v3200, 0.0
  %v3225 = vmax.f32 %v3201, 0.0
  %v3226 = vmax.f32 %v3202, 0.0
  %v3227 = vmax.f32 %v3203, 0.0
  %v3228 = vmax.f32 %v3204, 0.0
  %3230 = vset.pattern.permute.xlu0 0
  %3231 = vperm.xlu0 %3230, %v35
  %v3232 = vpop.permute.xlu0 %3231
  %3235 = vset.pattern.permute.xlu0 0
  %3236 = vperm.xlu0 %3235, %v36
  %v3237 = vpop.permute.xlu0 %3236
  %3240 = vset.pattern.permute.xlu0 0
  %3241 = vperm.xlu0 %3240, %v37
  %v3242 = vpop.permute.xlu0 %3241
  %3245 = vset.pattern.permute.xlu0 0
  %3246 = vperm.xlu0 %3245, %v38
  %v3247 = vpop.permute.xlu0 %3246
  %3250 = vset.pattern.permute.xlu0 0
  %3251 = vperm.xlu0 %3250, %v39
  %v3252 = vpop.permute.xlu0 %3251
  %3255 = vset.pattern.permute.xlu0 0
  %3256 = vperm.xlu0 %3255, %v40
  %v3257 = vpop.permute.xlu0 %3256
  %v3259 = vmul.f32 %v3205, %v3232
  %v3260 = vmul.f32 %v3206, %v3232
  %v3261 = vmul.f32 %v3207, %v3232
  %v3262 = vmul.f32 %v3208, %v3232
  %v3263 = vmul.f32 %v3209, %v3237
  %v3264 = vmul.f32 %v3210, %v3237
  %v3265 = vmul.f32 %v3211, %v3237
  %v3266 = vmul.f32 %v3212, %v3237
  %v3267 = vmul.f32 %v3213, %v3242
  %v3268 = vmul.f32 %v3214, %v3242
  %v3269 = vmul.f32 %v3215, %v3242
  %v3270 = vmul.f32 %v3216, %v3242
  %v3271 = vmul.f32 %v3217, %v3247
  %v3272 = vmul.f32 %v3218, %v3247
  %v3273 = vmul.f32 %v3219, %v3247
  %v3274 = vmul.f32 %v3220, %v3247
  %v3275 = vmul.f32 %v3221, %v3252
  %v3276 = vmul.f32 %v3222, %v3252
  %v3277 = vmul.f32 %v3223, %v3252
  %v3278 = vmul.f32 %v3224, %v3252
  %v3279 = vmul.f32 %v3225, %v3257
  %v3280 = vmul.f32 %v3226, %v3257
  %v3281 = vmul.f32 %v3227, %v3257
  %v3282 = vmul.f32 %v3228, %v3257
  %v3283 = vrot.slane %v3259, 6
  %v3284 = vrot.slane %v3260, 6
  %v3285 = vrot.slane %v3261, 6
  %v3286 = vrot.slane %v3262, 6
  %v3287 = vrot.slane %v3263, 6
  %v3288 = vrot.slane %v3264, 6
  %v3289 = vrot.slane %v3265, 6
  %v3290 = vrot.slane %v3266, 6
  %v3291 = vrot.slane %v3267, 6
  %v3292 = vrot.slane %v3268, 6
  %v3293 = vrot.slane %v3269, 6
  %v3294 = vrot.slane %v3270, 6
  %v3295 = vrot.slane %v3271, 6
  %v3296 = vrot.slane %v3272, 6
  %v3297 = vrot.slane %v3273, 6
  %v3298 = vrot.slane %v3274, 6
  %v3299 = vrot.slane %v3275, 6
  %v3300 = vrot.slane %v3276, 6
  %v3301 = vrot.slane %v3277, 6
  %v3302 = vrot.slane %v3278, 6
  %v3303 = vrot.slane %v3279, 6
  %v3304 = vrot.slane %v3280, 6
  %v3305 = vrot.slane %v3281, 6
  %v3306 = vrot.slane %v3282, 6
  %v3307 = vsel %vm73, %v3299, %v3303
  %v3308 = vsel %vm73, %v3300, %v3304
  %v3309 = vsel %vm73, %v3301, %v3305
  %v3310 = vsel %vm73, %v3302, %v3306
  %v3311 = vsel %vm73, %v3295, %v3299
  %v3312 = vsel %vm73, %v3296, %v3300
  %v3313 = vsel %vm73, %v3297, %v3301
  %v3314 = vsel %vm73, %v3298, %v3302
  %v3315 = vsel %vm73, %v3291, %v3295
  %v3316 = vsel %vm73, %v3292, %v3296
  %v3317 = vsel %vm73, %v3293, %v3297
  %v3318 = vsel %vm73, %v3294, %v3298
  %v3319 = vsel %vm73, %v3287, %v3291
  %v3320 = vsel %vm73, %v3288, %v3292
  %v3321 = vsel %vm73, %v3289, %v3293
  %v3322 = vsel %vm73, %v3290, %v3294
  %v3323 = vsel %vm73, %v3283, %v3287
  %v3324 = vsel %vm73, %v3284, %v3288
  %v3325 = vsel %vm73, %v3285, %v3289
  %v3326 = vsel %vm73, %v3286, %v3290
  %v3327 = vsel %vm73, %v3303, %v3283
  %v3328 = vsel %vm73, %v3304, %v3284
  %v3329 = vsel %vm73, %v3305, %v3285
  %v3330 = vsel %vm73, %v3306, %v3286
  %v3331 = vpack.c.bf16 %v3323, %v3327
  %v3332 = vpack.c.bf16 %v3324, %v3328
  %v3333 = vpack.c.bf16 %v3325, %v3329
  %v3334 = vpack.c.bf16 %v3326, %v3330
  %v3335 = vpack.c.bf16 %v3315, %v3319
  %v3336 = vpack.c.bf16 %v3316, %v3320
  %v3337 = vpack.c.bf16 %v3317, %v3321
  %v3338 = vpack.c.bf16 %v3318, %v3322
  %v3339 = vpack.c.bf16 %v3307, %v3311
  %v3340 = vpack.c.bf16 %v3308, %v3312
  %v3341 = vpack.c.bf16 %v3309, %v3313
  %v3342 = vpack.c.bf16 %v3310, %v3314
  %v3343 = vld [vmem:[%s4] sm:$0xff]
  %v3344 = vld [vmem:[%s4 + $0x8] sm:$0xff]
  %v3345 = vld [vmem:[%s4 + $0x10] sm:$0xff]
  %v3346 = vld [vmem:[%s4 + $0x18] sm:$0xff]
  %v3347 = vld [vmem:[%s4 + $0x20] sm:$0xff]
  %v3348 = vld [vmem:[%s4 + $0x28] sm:$0xff]
  %v3349 = vld [vmem:[%s4 + $0x30] sm:$0xff]
  %v3350 = vld [vmem:[%s4 + $0x38] sm:$0xff]
  %v3351 = vld [vmem:[%s4 + $0x40] sm:$0xff]
  %v3352 = vld [vmem:[%s4 + $0x48] sm:$0xff]
  %v3353 = vld [vmem:[%s4 + $0x50] sm:$0xff]
  %v3354 = vld [vmem:[%s4 + $0x58] sm:$0xff]
  %v3355 = vld [vmem:[%s4 + $0x60] sm:$0xff]
  %v3356 = vld [vmem:[%s4 + $0x68] sm:$0xff]
  %v3357 = vld [vmem:[%s4 + $0x70] sm:$0xff]
  %v3358 = vld [vmem:[%s4 + $0x78] sm:$0xff]
  %v3359 = vld [vmem:[%s4 + $0x80] sm:$0xff]
  %v3360 = vld [vmem:[%s4 + $0x88] sm:$0xff]
  %v3361 = vld [vmem:[%s4 + $0x90] sm:$0xff]
  %v3362 = vld [vmem:[%s4 + $0x98] sm:$0xff]
  %v3363 = vld [vmem:[%s4 + $0xa0] sm:$0xff]
  %v3364 = vld [vmem:[%s4 + $0xa8] sm:$0xff]
  %v3365 = vld [vmem:[%s4 + $0xb0] sm:$0xff]
  %v3366 = vld [vmem:[%s4 + $0xb8] sm:$0xff]
  %v3367 = vld [vmem:[%s4 + $0xc0] sm:$0xff]
  %v3368 = vld [vmem:[%s4 + $0xc8] sm:$0xff]
  %v3369 = vld [vmem:[%s4 + $0xd0] sm:$0xff]
  %v3370 = vld [vmem:[%s4 + $0xd8] sm:$0xff]
  %v3371 = vld [vmem:[%s4 + $0xe0] sm:$0xff]
  %v3372 = vld [vmem:[%s4 + $0xe8] sm:$0xff]
  %v3373 = vld [vmem:[%s4 + $0xf0] sm:$0xff]
  %v3374 = vld [vmem:[%s4 + $0xf8] sm:$0xff]
  %v3375 = vld [vmem:[%s4 + $0x100] sm:$0xff]
  %v3376 = vld [vmem:[%s4 + $0x108] sm:$0xff]
  %v3377 = vld [vmem:[%s4 + $0x110] sm:$0xff]
  %v3378 = vld [vmem:[%s4 + $0x118] sm:$0xff]
  %v3379 = vld [vmem:[%s4 + $0x120] sm:$0xff]
  %v3380 = vld [vmem:[%s4 + $0x128] sm:$0xff]
  %v3381 = vld [vmem:[%s4 + $0x130] sm:$0xff]
  %v3382 = vld [vmem:[%s4 + $0x138] sm:$0xff]
  %v3383 = vld [vmem:[%s4 + $0x140] sm:$0xff]
  %v3384 = vld [vmem:[%s4 + $0x148] sm:$0xff]
  %v3385 = vld [vmem:[%s4 + $0x150] sm:$0xff]
  %v3386 = vld [vmem:[%s4 + $0x158] sm:$0xff]
  %v3387 = vld [vmem:[%s4 + $0x160] sm:$0xff]
  %v3388 = vld [vmem:[%s4 + $0x168] sm:$0xff]
  %v3389 = vld [vmem:[%s4 + $0x170] sm:$0xff]
  %v3390 = vld [vmem:[%s4 + $0x178] sm:$0xff]
  %v3391 = vld [vmem:[%s4 + $0x180] sm:$0xff]
  %v3392 = vld [vmem:[%s4 + $0x188] sm:$0xff]
  %v3393 = vld [vmem:[%s4 + $0x190] sm:$0xff]
  %v3394 = vld [vmem:[%s4 + $0x198] sm:$0xff]
  %v3395 = vld [vmem:[%s4 + $0x1a0] sm:$0xff]
  %v3396 = vld [vmem:[%s4 + $0x1a8] sm:$0xff]
  %v3397 = vld [vmem:[%s4 + $0x1b0] sm:$0xff]
  %v3398 = vld [vmem:[%s4 + $0x1b8] sm:$0xff]
  %v3399 = vld [vmem:[%s4 + $0x1c0] sm:$0xff]
  %v3400 = vld [vmem:[%s4 + $0x1c8] sm:$0xff]
  %v3401 = vld [vmem:[%s4 + $0x1d0] sm:$0xff]
  %v3402 = vld [vmem:[%s4 + $0x1d8] sm:$0xff]
  %v3403 = vld [vmem:[%s4 + $0x1e0] sm:$0xff]
  %v3404 = vld [vmem:[%s4 + $0x1e8] sm:$0xff]
  %v3405 = vld [vmem:[%s4 + $0x1f0] sm:$0xff]
  %v3406 = vld [vmem:[%s4 + $0x1f8] sm:$0xff]
  %v3407 = vrot.slane %v3259, 7
  %v3408 = vrot.slane %v3260, 7
  %v3409 = vrot.slane %v3261, 7
  %v3410 = vrot.slane %v3262, 7
  %v3411 = vrot.slane %v3263, 7
  %v3412 = vrot.slane %v3264, 7
  %v3413 = vrot.slane %v3265, 7
  %v3414 = vrot.slane %v3266, 7
  %v3415 = vrot.slane %v3267, 7
  %v3416 = vrot.slane %v3268, 7
  %v3417 = vrot.slane %v3269, 7
  %v3418 = vrot.slane %v3270, 7
  %v3419 = vrot.slane %v3271, 7
  %v3420 = vrot.slane %v3272, 7
  %v3421 = vrot.slane %v3273, 7
  %v3422 = vrot.slane %v3274, 7
  %v3423 = vrot.slane %v3275, 7
  %v3424 = vrot.slane %v3276, 7
  %v3425 = vrot.slane %v3277, 7
  %v3426 = vrot.slane %v3278, 7
  %v3427 = vrot.slane %v3279, 7
  %v3428 = vrot.slane %v3280, 7
  %v3429 = vrot.slane %v3281, 7
  %v3430 = vrot.slane %v3282, 7
  %v3431 = vsel %vm168, %v3423, %v3427
  %v3432 = vsel %vm168, %v3424, %v3428
  %v3433 = vsel %vm168, %v3425, %v3429
  %v3434 = vsel %vm168, %v3426, %v3430
  %v3435 = vsel %vm168, %v3419, %v3423
  %v3436 = vsel %vm168, %v3420, %v3424
  %v3437 = vsel %vm168, %v3421, %v3425
  %v3438 = vsel %vm168, %v3422, %v3426
  %v3439 = vsel %vm168, %v3415, %v3419
  %v3440 = vsel %vm168, %v3416, %v3420
  %v3441 = vsel %vm168, %v3417, %v3421
  %v3442 = vsel %vm168, %v3418, %v3422
  %v3443 = vsel %vm168, %v3411, %v3415
  %v3444 = vsel %vm168, %v3412, %v3416
  %v3445 = vsel %vm168, %v3413, %v3417
  %v3446 = vsel %vm168, %v3414, %v3418
  %v3447 = vsel %vm168, %v3407, %v3411
  %v3448 = vsel %vm168, %v3408, %v3412
  %v3449 = vsel %vm168, %v3409, %v3413
  %v3450 = vsel %vm168, %v3410, %v3414
  %v3451 = vsel %vm168, %v3427, %v3407
  %v3452 = vsel %vm168, %v3428, %v3408
  %v3453 = vsel %vm168, %v3429, %v3409
  %v3454 = vsel %vm168, %v3430, %v3410
  %v3455 = vpack.c.bf16 %v3447, %v3451
  %v3456 = vpack.c.bf16 %v3448, %v3452
  %v3457 = vpack.c.bf16 %v3449, %v3453
  %v3458 = vpack.c.bf16 %v3450, %v3454
  %v3459 = vpack.c.bf16 %v3439, %v3443
  %v3460 = vpack.c.bf16 %v3440, %v3444
  %v3461 = vpack.c.bf16 %v3441, %v3445
  %v3462 = vpack.c.bf16 %v3442, %v3446
  %v3463 = vpack.c.bf16 %v3431, %v3435
  %v3464 = vpack.c.bf16 %v3432, %v3436
  %v3465 = vpack.c.bf16 %v3433, %v3437
  %v3466 = vpack.c.bf16 %v3434, %v3438
  %s3467 = scalar_lea.vmem %s4, 512
  %v3468 = vld [vmem:[%s3467] sm:$0xff]
  %v3469 = vld [vmem:[%s3467 + $0x8] sm:$0xff]
  %v3470 = vld [vmem:[%s3467 + $0x10] sm:$0xff]
  %v3471 = vld [vmem:[%s3467 + $0x18] sm:$0xff]
  %v3472 = vld [vmem:[%s3467 + $0x20] sm:$0xff]
  %v3473 = vld [vmem:[%s3467 + $0x28] sm:$0xff]
  %v3474 = vld [vmem:[%s3467 + $0x30] sm:$0xff]
  %v3475 = vld [vmem:[%s3467 + $0x38] sm:$0xff]
  %v3476 = vld [vmem:[%s3467 + $0x40] sm:$0xff]
  %v3477 = vld [vmem:[%s3467 + $0x48] sm:$0xff]
  %v3478 = vld [vmem:[%s3467 + $0x50] sm:$0xff]
  %v3479 = vld [vmem:[%s3467 + $0x58] sm:$0xff]
  %v3480 = vld [vmem:[%s3467 + $0x60] sm:$0xff]
  %v3481 = vld [vmem:[%s3467 + $0x68] sm:$0xff]
  %v3482 = vld [vmem:[%s3467 + $0x70] sm:$0xff]
  %v3483 = vld [vmem:[%s3467 + $0x78] sm:$0xff]
  %v3484 = vld [vmem:[%s3467 + $0x80] sm:$0xff]
  %v3485 = vld [vmem:[%s3467 + $0x88] sm:$0xff]
  %v3486 = vld [vmem:[%s3467 + $0x90] sm:$0xff]
  %v3487 = vld [vmem:[%s3467 + $0x98] sm:$0xff]
  %v3488 = vld [vmem:[%s3467 + $0xa0] sm:$0xff]
  %v3489 = vld [vmem:[%s3467 + $0xa8] sm:$0xff]
  %v3490 = vld [vmem:[%s3467 + $0xb0] sm:$0xff]
  %v3491 = vld [vmem:[%s3467 + $0xb8] sm:$0xff]
  %v3492 = vld [vmem:[%s3467 + $0xc0] sm:$0xff]
  %v3493 = vld [vmem:[%s3467 + $0xc8] sm:$0xff]
  %v3494 = vld [vmem:[%s3467 + $0xd0] sm:$0xff]
  %v3495 = vld [vmem:[%s3467 + $0xd8] sm:$0xff]
  %v3496 = vld [vmem:[%s3467 + $0xe0] sm:$0xff]
  %v3497 = vld [vmem:[%s3467 + $0xe8] sm:$0xff]
  %v3498 = vld [vmem:[%s3467 + $0xf0] sm:$0xff]
  %v3499 = vld [vmem:[%s3467 + $0xf8] sm:$0xff]
  %v3500 = vld [vmem:[%s3467 + $0x100] sm:$0xff]
  %v3501 = vld [vmem:[%s3467 + $0x108] sm:$0xff]
  %v3502 = vld [vmem:[%s3467 + $0x110] sm:$0xff]
  %v3503 = vld [vmem:[%s3467 + $0x118] sm:$0xff]
  %v3504 = vld [vmem:[%s3467 + $0x120] sm:$0xff]
  %v3505 = vld [vmem:[%s3467 + $0x128] sm:$0xff]
  %v3506 = vld [vmem:[%s3467 + $0x130] sm:$0xff]
  %v3507 = vld [vmem:[%s3467 + $0x138] sm:$0xff]
  %v3508 = vld [vmem:[%s3467 + $0x140] sm:$0xff]
  %v3509 = vld [vmem:[%s3467 + $0x148] sm:$0xff]
  %v3510 = vld [vmem:[%s3467 + $0x150] sm:$0xff]
  %v3511 = vld [vmem:[%s3467 + $0x158] sm:$0xff]
  %v3512 = vld [vmem:[%s3467 + $0x160] sm:$0xff]
  %v3513 = vld [vmem:[%s3467 + $0x168] sm:$0xff]
  %v3514 = vld [vmem:[%s3467 + $0x170] sm:$0xff]
  %v3515 = vld [vmem:[%s3467 + $0x178] sm:$0xff]
  %v3516 = vld [vmem:[%s3467 + $0x180] sm:$0xff]
  %v3517 = vld [vmem:[%s3467 + $0x188] sm:$0xff]
  %v3518 = vld [vmem:[%s3467 + $0x190] sm:$0xff]
  %v3519 = vld [vmem:[%s3467 + $0x198] sm:$0xff]
  %v3520 = vld [vmem:[%s3467 + $0x1a0] sm:$0xff]
  %v3521 = vld [vmem:[%s3467 + $0x1a8] sm:$0xff]
  %v3522 = vld [vmem:[%s3467 + $0x1b0] sm:$0xff]
  %v3523 = vld [vmem:[%s3467 + $0x1b8] sm:$0xff]
  %v3524 = vld [vmem:[%s3467 + $0x1c0] sm:$0xff]
  %v3525 = vld [vmem:[%s3467 + $0x1c8] sm:$0xff]
  %v3526 = vld [vmem:[%s3467 + $0x1d0] sm:$0xff]
  %v3527 = vld [vmem:[%s3467 + $0x1d8] sm:$0xff]
  %v3528 = vld [vmem:[%s3467 + $0x1e0] sm:$0xff]
  %v3529 = vld [vmem:[%s3467 + $0x1e8] sm:$0xff]
  %v3530 = vld [vmem:[%s3467 + $0x1f0] sm:$0xff]
  %v3531 = vld [vmem:[%s3467 + $0x1f8] sm:$0xff]
  %v3596 = vunpack.c.l.b16 %v3468
  %v3597 = vunpack.c.h.b16 %v3468
  %v3598 = vunpack.c.l.b16 %v3469
  %v3599 = vunpack.c.h.b16 %v3469
  %v3600 = vunpack.c.l.b16 %v3470
  %v3601 = vunpack.c.h.b16 %v3470
  %v3602 = vunpack.c.l.b16 %v3471
  %v3603 = vunpack.c.h.b16 %v3471
  %v3604 = vunpack.c.l.b16 %v3472
  %v3605 = vunpack.c.h.b16 %v3472
  %v3606 = vunpack.c.l.b16 %v3473
  %v3607 = vunpack.c.h.b16 %v3473
  %v3608 = vunpack.c.l.b16 %v3474
  %v3609 = vunpack.c.h.b16 %v3474
  %v3610 = vunpack.c.l.b16 %v3475
  %v3611 = vunpack.c.h.b16 %v3475
  %v3612 = vunpack.c.l.b16 %v3476
  %v3613 = vunpack.c.h.b16 %v3476
  %v3614 = vunpack.c.l.b16 %v3477
  %v3615 = vunpack.c.h.b16 %v3477
  %v3616 = vunpack.c.l.b16 %v3478
  %v3617 = vunpack.c.h.b16 %v3478
  %v3618 = vunpack.c.l.b16 %v3479
  %v3619 = vunpack.c.h.b16 %v3479
  %v3620 = vunpack.c.l.b16 %v3480
  %v3621 = vunpack.c.h.b16 %v3480
  %v3622 = vunpack.c.l.b16 %v3481
  %v3623 = vunpack.c.h.b16 %v3481
  %v3624 = vunpack.c.l.b16 %v3482
  %v3625 = vunpack.c.h.b16 %v3482
  %v3626 = vunpack.c.l.b16 %v3483
  %v3627 = vunpack.c.h.b16 %v3483
  %v3628 = vunpack.c.l.b16 %v3484
  %v3629 = vunpack.c.h.b16 %v3484
  %v3630 = vunpack.c.l.b16 %v3485
  %v3631 = vunpack.c.h.b16 %v3485
  %v3632 = vunpack.c.l.b16 %v3486
  %v3633 = vunpack.c.h.b16 %v3486
  %v3634 = vunpack.c.l.b16 %v3487
  %v3635 = vunpack.c.h.b16 %v3487
  %v3636 = vunpack.c.l.b16 %v3488
  %v3637 = vunpack.c.h.b16 %v3488
  %v3638 = vunpack.c.l.b16 %v3489
  %v3639 = vunpack.c.h.b16 %v3489
  %v3640 = vunpack.c.l.b16 %v3490
  %v3641 = vunpack.c.h.b16 %v3490
  %v3642 = vunpack.c.l.b16 %v3491
  %v3643 = vunpack.c.h.b16 %v3491
  %v3644 = vunpack.c.l.b16 %v3492
  %v3645 = vunpack.c.h.b16 %v3492
  %v3646 = vunpack.c.l.b16 %v3493
  %v3647 = vunpack.c.h.b16 %v3493
  %v3648 = vunpack.c.l.b16 %v3494
  %v3649 = vunpack.c.h.b16 %v3494
  %v3650 = vunpack.c.l.b16 %v3495
  %v3651 = vunpack.c.h.b16 %v3495
  %v3652 = vunpack.c.l.b16 %v3496
  %v3653 = vunpack.c.h.b16 %v3496
  %v3654 = vunpack.c.l.b16 %v3497
  %v3655 = vunpack.c.h.b16 %v3497
  %v3656 = vunpack.c.l.b16 %v3498
  %v3657 = vunpack.c.h.b16 %v3498
  %v3658 = vunpack.c.l.b16 %v3499
  %v3659 = vunpack.c.h.b16 %v3499
  %v3660 = vunpack.c.l.b16 %v3500
  %v3661 = vunpack.c.h.b16 %v3500
  %v3662 = vunpack.c.l.b16 %v3501
  %v3663 = vunpack.c.h.b16 %v3501
  %v3664 = vunpack.c.l.b16 %v3502
  %v3665 = vunpack.c.h.b16 %v3502
  %v3666 = vunpack.c.l.b16 %v3503
  %v3667 = vunpack.c.h.b16 %v3503
  %v3668 = vunpack.c.l.b16 %v3504
  %v3669 = vunpack.c.h.b16 %v3504
  %v3670 = vunpack.c.l.b16 %v3505
  %v3671 = vunpack.c.h.b16 %v3505
  %v3672 = vunpack.c.l.b16 %v3506
  %v3673 = vunpack.c.h.b16 %v3506
  %v3674 = vunpack.c.l.b16 %v3507
  %v3675 = vunpack.c.h.b16 %v3507
  %v3676 = vunpack.c.l.b16 %v3508
  %v3677 = vunpack.c.h.b16 %v3508
  %v3678 = vunpack.c.l.b16 %v3509
  %v3679 = vunpack.c.h.b16 %v3509
  %v3680 = vunpack.c.l.b16 %v3510
  %v3681 = vunpack.c.h.b16 %v3510
  %v3682 = vunpack.c.l.b16 %v3511
  %v3683 = vunpack.c.h.b16 %v3511
  %v3684 = vunpack.c.l.b16 %v3512
  %v3685 = vunpack.c.h.b16 %v3512
  %v3686 = vunpack.c.l.b16 %v3513
  %v3687 = vunpack.c.h.b16 %v3513
  %v3688 = vunpack.c.l.b16 %v3514
  %v3689 = vunpack.c.h.b16 %v3514
  %v3690 = vunpack.c.l.b16 %v3515
  %v3691 = vunpack.c.h.b16 %v3515
  %v3692 = vunpack.c.l.b16 %v3516
  %v3693 = vunpack.c.h.b16 %v3516
  %v3694 = vunpack.c.l.b16 %v3517
  %v3695 = vunpack.c.h.b16 %v3517
  %v3696 = vunpack.c.l.b16 %v3518
  %v3697 = vunpack.c.h.b16 %v3518
  %v3698 = vunpack.c.l.b16 %v3519
  %v3699 = vunpack.c.h.b16 %v3519
  %v3700 = vunpack.c.l.b16 %v3520
  %v3701 = vunpack.c.h.b16 %v3520
  %v3702 = vunpack.c.l.b16 %v3521
  %v3703 = vunpack.c.h.b16 %v3521
  %v3704 = vunpack.c.l.b16 %v3522
  %v3705 = vunpack.c.h.b16 %v3522
  %v3706 = vunpack.c.l.b16 %v3523
  %v3707 = vunpack.c.h.b16 %v3523
  %v3708 = vunpack.c.l.b16 %v3524
  %v3709 = vunpack.c.h.b16 %v3524
  %v3710 = vunpack.c.l.b16 %v3525
  %v3711 = vunpack.c.h.b16 %v3525
  %v3712 = vunpack.c.l.b16 %v3526
  %v3713 = vunpack.c.h.b16 %v3526
  %v3714 = vunpack.c.l.b16 %v3527
  %v3715 = vunpack.c.h.b16 %v3527
  %v3716 = vunpack.c.l.b16 %v3528
  %v3717 = vunpack.c.h.b16 %v3528
  %v3718 = vunpack.c.l.b16 %v3529
  %v3719 = vunpack.c.h.b16 %v3529
  %v3720 = vunpack.c.l.b16 %v3530
  %v3721 = vunpack.c.h.b16 %v3530
  %v3722 = vunpack.c.l.b16 %v3531
  %v3723 = vunpack.c.h.b16 %v3531
  %v3724 = vpack.c.b16 %v3598, %v3596
  %v3725 = vpack.c.b16 %v3599, %v3597
  %v3726 = vpack.c.b16 %v3602, %v3600
  %v3727 = vpack.c.b16 %v3603, %v3601
  %v3728 = vpack.c.b16 %v3606, %v3604
  %v3729 = vpack.c.b16 %v3607, %v3605
  %v3730 = vpack.c.b16 %v3610, %v3608
  %v3731 = vpack.c.b16 %v3611, %v3609
  %v3732 = vpack.c.b16 %v3614, %v3612
  %v3733 = vpack.c.b16 %v3615, %v3613
  %v3734 = vpack.c.b16 %v3618, %v3616
  %v3735 = vpack.c.b16 %v3619, %v3617
  %v3736 = vpack.c.b16 %v3622, %v3620
  %v3737 = vpack.c.b16 %v3623, %v3621
  %v3738 = vpack.c.b16 %v3626, %v3624
  %v3739 = vpack.c.b16 %v3627, %v3625
  %v3740 = vpack.c.b16 %v3630, %v3628
  %v3741 = vpack.c.b16 %v3631, %v3629
  %v3742 = vpack.c.b16 %v3634, %v3632
  %v3743 = vpack.c.b16 %v3635, %v3633
  %v3744 = vpack.c.b16 %v3638, %v3636
  %v3745 = vpack.c.b16 %v3639, %v3637
  %v3746 = vpack.c.b16 %v3642, %v3640
  %v3747 = vpack.c.b16 %v3643, %v3641
  %v3748 = vpack.c.b16 %v3646, %v3644
  %v3749 = vpack.c.b16 %v3647, %v3645
  %v3750 = vpack.c.b16 %v3650, %v3648
  %v3751 = vpack.c.b16 %v3651, %v3649
  %v3752 = vpack.c.b16 %v3654, %v3652
  %v3753 = vpack.c.b16 %v3655, %v3653
  %v3754 = vpack.c.b16 %v3658, %v3656
  %v3755 = vpack.c.b16 %v3659, %v3657
  %v3756 = vpack.c.b16 %v3662, %v3660
  %v3757 = vpack.c.b16 %v3663, %v3661
  %v3758 = vpack.c.b16 %v3666, %v3664
  %v3759 = vpack.c.b16 %v3667, %v3665
  %v3760 = vpack.c.b16 %v3670, %v3668
  %v3761 = vpack.c.b16 %v3671, %v3669
  %v3762 = vpack.c.b16 %v3674, %v3672
  %v3763 = vpack.c.b16 %v3675, %v3673
  %v3764 = vpack.c.b16 %v3678, %v3676
  %v3765 = vpack.c.b16 %v3679, %v3677
  %v3766 = vpack.c.b16 %v3682, %v3680
  %v3767 = vpack.c.b16 %v3683, %v3681
  %v3768 = vpack.c.b16 %v3686, %v3684
  %v3769 = vpack.c.b16 %v3687, %v3685
  %v3770 = vpack.c.b16 %v3690, %v3688
  %v3771 = vpack.c.b16 %v3691, %v3689
  %v3772 = vpack.c.b16 %v3694, %v3692
  %v3773 = vpack.c.b16 %v3695, %v3693
  %v3774 = vpack.c.b16 %v3698, %v3696
  %v3775 = vpack.c.b16 %v3699, %v3697
  %v3776 = vpack.c.b16 %v3702, %v3700
  %v3777 = vpack.c.b16 %v3703, %v3701
  %v3778 = vpack.c.b16 %v3706, %v3704
  %v3779 = vpack.c.b16 %v3707, %v3705
  %v3780 = vpack.c.b16 %v3710, %v3708
  %v3781 = vpack.c.b16 %v3711, %v3709
  %v3782 = vpack.c.b16 %v3714, %v3712
  %v3783 = vpack.c.b16 %v3715, %v3713
  %v3784 = vpack.c.b16 %v3718, %v3716
  %v3785 = vpack.c.b16 %v3719, %v3717
  %v3786 = vpack.c.b16 %v3722, %v3720
  %v3787 = vpack.c.b16 %v3723, %v3721
  %3852 = vmatpush.bf16.msra.mxu0 %v3738
  %3853 = vmatpush.bf16.msra.mxu0 %v3736
  %3854 = vmatpush.bf16.msra.mxu0 %v3734
  %3855 = vmatpush.bf16.msra.mxu0 %v3732
  %3856 = vmatpush.bf16.msra.mxu0 %v3730
  %3857 = vmatpush.bf16.msra.mxu0 %v3728
  %3858 = vmatpush.bf16.msra.mxu0 %v3726
  %3859 = vmatpush.bf16.msra.mxu0 %v3724
  %3860 = vmatmul.bf16.gmra.mxu0 %v3455
  %v3861 = vpop.f32.mrf.mxu0
  %v3862 = vadd.f32 0.0, %v3861
  %v3863 = vpop.f32.mrf.mxu0
  %v3864 = vadd.f32 0.0, %v3863
  %3865 = vmatmul.bf16.gmra.mxu0 %v3459
  %v3866 = vpop.f32.mrf.mxu0
  %v3867 = vadd.f32 0.0, %v3866
  %v3868 = vpop.f32.mrf.mxu0
  %v3869 = vadd.f32 0.0, %v3868
  %3870 = vmatmul.bf16.gmra.mxu0 %v3463
  %v3871 = vpop.f32.mrf.mxu0
  %v3872 = vadd.f32 0.0, %v3871
  %v3873 = vpop.f32.mrf.mxu0
  %v3874 = vadd.f32 0.0, %v3873
  %3875 = vdwg.mxu0
  %3876 = vmatpush.bf16.msra.mxu0 %v3754
  %3877 = vmatpush.bf16.msra.mxu0 %v3752
  %3878 = vmatpush.bf16.msra.mxu0 %v3750
  %3879 = vmatpush.bf16.msra.mxu0 %v3748
  %3880 = vmatpush.bf16.msra.mxu0 %v3746
  %3881 = vmatpush.bf16.msra.mxu0 %v3744
  %3882 = vmatpush.bf16.msra.mxu0 %v3742
  %3883 = vmatpush.bf16.msra.mxu0 %v3740
  %3884 = vmatmul.bf16.gmra.mxu0 %v3456
  %v3885 = vpop.f32.mrf.mxu0
  %v3886 = vadd.f32 %v3862, %v3885
  %v3887 = vpop.f32.mrf.mxu0
  %v3888 = vadd.f32 %v3864, %v3887
  %3889 = vmatmul.bf16.gmra.mxu0 %v3460
  %v3890 = vpop.f32.mrf.mxu0
  %v3891 = vadd.f32 %v3867, %v3890
  %v3892 = vpop.f32.mrf.mxu0
  %v3893 = vadd.f32 %v3869, %v3892
  %3894 = vmatmul.bf16.gmra.mxu0 %v3464
  %v3895 = vpop.f32.mrf.mxu0
  %v3896 = vadd.f32 %v3872, %v3895
  %v3897 = vpop.f32.mrf.mxu0
  %v3898 = vadd.f32 %v3874, %v3897
  %3899 = vdwg.mxu0
  %3900 = vmatpush.bf16.msra.mxu0 %v3770
  %3901 = vmatpush.bf16.msra.mxu0 %v3768
  %3902 = vmatpush.bf16.msra.mxu0 %v3766
  %3903 = vmatpush.bf16.msra.mxu0 %v3764
  %3904 = vmatpush.bf16.msra.mxu0 %v3762
  %3905 = vmatpush.bf16.msra.mxu0 %v3760
  %3906 = vmatpush.bf16.msra.mxu0 %v3758
  %3907 = vmatpush.bf16.msra.mxu0 %v3756
  %3908 = vmatmul.bf16.gmra.mxu0 %v3457
  %v3909 = vpop.f32.mrf.mxu0
  %v3910 = vadd.f32 %v3886, %v3909
  %v3911 = vpop.f32.mrf.mxu0
  %v3912 = vadd.f32 %v3888, %v3911
  %3913 = vmatmul.bf16.gmra.mxu0 %v3461
  %v3914 = vpop.f32.mrf.mxu0
  %v3915 = vadd.f32 %v3891, %v3914
  %v3916 = vpop.f32.mrf.mxu0
  %v3917 = vadd.f32 %v3893, %v3916
  %3918 = vmatmul.bf16.gmra.mxu0 %v3465
  %v3919 = vpop.f32.mrf.mxu0
  %v3920 = vadd.f32 %v3896, %v3919
  %v3921 = vpop.f32.mrf.mxu0
  %v3922 = vadd.f32 %v3898, %v3921
  %3923 = vdwg.mxu0
  %3924 = vmatpush.bf16.msra.mxu0 %v3786
  %3925 = vmatpush.bf16.msra.mxu0 %v3784
  %3926 = vmatpush.bf16.msra.mxu0 %v3782
  %3927 = vmatpush.bf16.msra.mxu0 %v3780
  %3928 = vmatpush.bf16.msra.mxu0 %v3778
  %3929 = vmatpush.bf16.msra.mxu0 %v3776
  %3930 = vmatpush.bf16.msra.mxu0 %v3774
  %3931 = vmatpush.bf16.msra.mxu0 %v3772
  %3932 = vmatmul.bf16.gmra.mxu0 %v3458
  %v3933 = vpop.f32.mrf.mxu0
  %v3934 = vadd.f32 %v3910, %v3933
  %v3935 = vpop.f32.mrf.mxu0
  %v3936 = vadd.f32 %v3912, %v3935
  %3937 = vmatmul.bf16.gmra.mxu0 %v3462
  %v3938 = vpop.f32.mrf.mxu0
  %v3939 = vadd.f32 %v3915, %v3938
  %v3940 = vpop.f32.mrf.mxu0
  %v3941 = vadd.f32 %v3917, %v3940
  %3942 = vmatmul.bf16.gmra.mxu0 %v3466
  %v3943 = vpop.f32.mrf.mxu0
  %v3944 = vadd.f32 %v3920, %v3943
  %v3945 = vpop.f32.mrf.mxu0
  %v3946 = vadd.f32 %v3922, %v3945
  %3947 = vdwg.mxu0
  %3948 = vmatpush.bf16.msra.mxu0 %v3739
  %3949 = vmatpush.bf16.msra.mxu0 %v3737
  %3950 = vmatpush.bf16.msra.mxu0 %v3735
  %3951 = vmatpush.bf16.msra.mxu0 %v3733
  %3952 = vmatpush.bf16.msra.mxu0 %v3731
  %3953 = vmatpush.bf16.msra.mxu0 %v3729
  %3954 = vmatpush.bf16.msra.mxu0 %v3727
  %3955 = vmatpush.bf16.msra.mxu0 %v3725
  %3956 = vmatmul.bf16.gmra.mxu0 %v3455
  %v3957 = vpop.f32.mrf.mxu0
  %v3958 = vadd.f32 0.0, %v3957
  %v3959 = vpop.f32.mrf.mxu0
  %v3960 = vadd.f32 0.0, %v3959
  %3961 = vmatmul.bf16.gmra.mxu0 %v3459
  %v3962 = vpop.f32.mrf.mxu0
  %v3963 = vadd.f32 0.0, %v3962
  %v3964 = vpop.f32.mrf.mxu0
  %v3965 = vadd.f32 0.0, %v3964
  %3966 = vmatmul.bf16.gmra.mxu0 %v3463
  %v3967 = vpop.f32.mrf.mxu0
  %v3968 = vadd.f32 0.0, %v3967
  %v3969 = vpop.f32.mrf.mxu0
  %v3970 = vadd.f32 0.0, %v3969
  %3971 = vdwg.mxu0
  %3972 = vmatpush.bf16.msra.mxu0 %v3755
  %3973 = vmatpush.bf16.msra.mxu0 %v3753
  %3974 = vmatpush.bf16.msra.mxu0 %v3751
  %3975 = vmatpush.bf16.msra.mxu0 %v3749
  %3976 = vmatpush.bf16.msra.mxu0 %v3747
  %3977 = vmatpush.bf16.msra.mxu0 %v3745
  %3978 = vmatpush.bf16.msra.mxu0 %v3743
  %3979 = vmatpush.bf16.msra.mxu0 %v3741
  %3980 = vmatmul.bf16.gmra.mxu0 %v3456
  %v3981 = vpop.f32.mrf.mxu0
  %v3982 = vadd.f32 %v3958, %v3981
  %v3983 = vpop.f32.mrf.mxu0
  %v3984 = vadd.f32 %v3960, %v3983
  %3985 = vmatmul.bf16.gmra.mxu0 %v3460
  %v3986 = vpop.f32.mrf.mxu0
  %v3987 = vadd.f32 %v3963, %v3986
  %v3988 = vpop.f32.mrf.mxu0
  %v3989 = vadd.f32 %v3965, %v3988
  %3990 = vmatmul.bf16.gmra.mxu0 %v3464
  %v3991 = vpop.f32.mrf.mxu0
  %v3992 = vadd.f32 %v3968, %v3991
  %v3993 = vpop.f32.mrf.mxu0
  %v3994 = vadd.f32 %v3970, %v3993
  %3995 = vdwg.mxu0
  %3996 = vmatpush.bf16.msra.mxu0 %v3771
  %3997 = vmatpush.bf16.msra.mxu0 %v3769
  %3998 = vmatpush.bf16.msra.mxu0 %v3767
  %3999 = vmatpush.bf16.msra.mxu0 %v3765
  %4000 = vmatpush.bf16.msra.mxu0 %v3763
  %4001 = vmatpush.bf16.msra.mxu0 %v3761
  %4002 = vmatpush.bf16.msra.mxu0 %v3759
  %4003 = vmatpush.bf16.msra.mxu0 %v3757
  %4004 = vmatmul.bf16.gmra.mxu0 %v3457
  %v4005 = vpop.f32.mrf.mxu0
  %v4006 = vadd.f32 %v3982, %v4005
  %v4007 = vpop.f32.mrf.mxu0
  %v4008 = vadd.f32 %v3984, %v4007
  %4009 = vmatmul.bf16.gmra.mxu0 %v3461
  %v4010 = vpop.f32.mrf.mxu0
  %v4011 = vadd.f32 %v3987, %v4010
  %v4012 = vpop.f32.mrf.mxu0
  %v4013 = vadd.f32 %v3989, %v4012
  %4014 = vmatmul.bf16.gmra.mxu0 %v3465
  %v4015 = vpop.f32.mrf.mxu0
  %v4016 = vadd.f32 %v3992, %v4015
  %v4017 = vpop.f32.mrf.mxu0
  %v4018 = vadd.f32 %v3994, %v4017
  %4019 = vdwg.mxu0
  %4020 = vmatpush.bf16.msra.mxu0 %v3787
  %4021 = vmatpush.bf16.msra.mxu0 %v3785
  %4022 = vmatpush.bf16.msra.mxu0 %v3783
  %4023 = vmatpush.bf16.msra.mxu0 %v3781
  %4024 = vmatpush.bf16.msra.mxu0 %v3779
  %4025 = vmatpush.bf16.msra.mxu0 %v3777
  %4026 = vmatpush.bf16.msra.mxu0 %v3775
  %4027 = vmatpush.bf16.msra.mxu0 %v3773
  %4028 = vmatmul.bf16.gmra.mxu0 %v3458
  %v4029 = vpop.f32.mrf.mxu0
  %v4030 = vadd.f32 %v4006, %v4029
  %v4031 = vpop.f32.mrf.mxu0
  %v4032 = vadd.f32 %v4008, %v4031
  %4033 = vmatmul.bf16.gmra.mxu0 %v3462
  %v4034 = vpop.f32.mrf.mxu0
  %v4035 = vadd.f32 %v4011, %v4034
  %v4036 = vpop.f32.mrf.mxu0
  %v4037 = vadd.f32 %v4013, %v4036
  %4038 = vmatmul.bf16.gmra.mxu0 %v3466
  %v4039 = vpop.f32.mrf.mxu0
  %v4040 = vadd.f32 %v4016, %v4039
  %v4041 = vpop.f32.mrf.mxu0
  %v4042 = vadd.f32 %v4018, %v4041
  %4043 = vdwg.mxu0
  %v4108 = vunpack.c.l.b16 %v3343
  %v4109 = vunpack.c.h.b16 %v3343
  %v4110 = vunpack.c.l.b16 %v3344
  %v4111 = vunpack.c.h.b16 %v3344
  %v4112 = vunpack.c.l.b16 %v3345
  %v4113 = vunpack.c.h.b16 %v3345
  %v4114 = vunpack.c.l.b16 %v3346
  %v4115 = vunpack.c.h.b16 %v3346
  %v4116 = vunpack.c.l.b16 %v3347
  %v4117 = vunpack.c.h.b16 %v3347
  %v4118 = vunpack.c.l.b16 %v3348
  %v4119 = vunpack.c.h.b16 %v3348
  %v4120 = vunpack.c.l.b16 %v3349
  %v4121 = vunpack.c.h.b16 %v3349
  %v4122 = vunpack.c.l.b16 %v3350
  %v4123 = vunpack.c.h.b16 %v3350
  %v4124 = vunpack.c.l.b16 %v3351
  %v4125 = vunpack.c.h.b16 %v3351
  %v4126 = vunpack.c.l.b16 %v3352
  %v4127 = vunpack.c.h.b16 %v3352
  %v4128 = vunpack.c.l.b16 %v3353
  %v4129 = vunpack.c.h.b16 %v3353
  %v4130 = vunpack.c.l.b16 %v3354
  %v4131 = vunpack.c.h.b16 %v3354
  %v4132 = vunpack.c.l.b16 %v3355
  %v4133 = vunpack.c.h.b16 %v3355
  %v4134 = vunpack.c.l.b16 %v3356
  %v4135 = vunpack.c.h.b16 %v3356
  %v4136 = vunpack.c.l.b16 %v3357
  %v4137 = vunpack.c.h.b16 %v3357
  %v4138 = vunpack.c.l.b16 %v3358
  %v4139 = vunpack.c.h.b16 %v3358
  %v4140 = vunpack.c.l.b16 %v3359
  %v4141 = vunpack.c.h.b16 %v3359
  %v4142 = vunpack.c.l.b16 %v3360
  %v4143 = vunpack.c.h.b16 %v3360
  %v4144 = vunpack.c.l.b16 %v3361
  %v4145 = vunpack.c.h.b16 %v3361
  %v4146 = vunpack.c.l.b16 %v3362
  %v4147 = vunpack.c.h.b16 %v3362
  %v4148 = vunpack.c.l.b16 %v3363
  %v4149 = vunpack.c.h.b16 %v3363
  %v4150 = vunpack.c.l.b16 %v3364
  %v4151 = vunpack.c.h.b16 %v3364
  %v4152 = vunpack.c.l.b16 %v3365
  %v4153 = vunpack.c.h.b16 %v3365
  %v4154 = vunpack.c.l.b16 %v3366
  %v4155 = vunpack.c.h.b16 %v3366
  %v4156 = vunpack.c.l.b16 %v3367
  %v4157 = vunpack.c.h.b16 %v3367
  %v4158 = vunpack.c.l.b16 %v3368
  %v4159 = vunpack.c.h.b16 %v3368
  %v4160 = vunpack.c.l.b16 %v3369
  %v4161 = vunpack.c.h.b16 %v3369
  %v4162 = vunpack.c.l.b16 %v3370
  %v4163 = vunpack.c.h.b16 %v3370
  %v4164 = vunpack.c.l.b16 %v3371
  %v4165 = vunpack.c.h.b16 %v3371
  %v4166 = vunpack.c.l.b16 %v3372
  %v4167 = vunpack.c.h.b16 %v3372
  %v4168 = vunpack.c.l.b16 %v3373
  %v4169 = vunpack.c.h.b16 %v3373
  %v4170 = vunpack.c.l.b16 %v3374
  %v4171 = vunpack.c.h.b16 %v3374
  %v4172 = vunpack.c.l.b16 %v3375
  %v4173 = vunpack.c.h.b16 %v3375
  %v4174 = vunpack.c.l.b16 %v3376
  %v4175 = vunpack.c.h.b16 %v3376
  %v4176 = vunpack.c.l.b16 %v3377
  %v4177 = vunpack.c.h.b16 %v3377
  %v4178 = vunpack.c.l.b16 %v3378
  %v4179 = vunpack.c.h.b16 %v3378
  %v4180 = vunpack.c.l.b16 %v3379
  %v4181 = vunpack.c.h.b16 %v3379
  %v4182 = vunpack.c.l.b16 %v3380
  %v4183 = vunpack.c.h.b16 %v3380
  %v4184 = vunpack.c.l.b16 %v3381
  %v4185 = vunpack.c.h.b16 %v3381
  %v4186 = vunpack.c.l.b16 %v3382
  %v4187 = vunpack.c.h.b16 %v3382
  %v4188 = vunpack.c.l.b16 %v3383
  %v4189 = vunpack.c.h.b16 %v3383
  %v4190 = vunpack.c.l.b16 %v3384
  %v4191 = vunpack.c.h.b16 %v3384
  %v4192 = vunpack.c.l.b16 %v3385
  %v4193 = vunpack.c.h.b16 %v3385
  %v4194 = vunpack.c.l.b16 %v3386
  %v4195 = vunpack.c.h.b16 %v3386
  %v4196 = vunpack.c.l.b16 %v3387
  %v4197 = vunpack.c.h.b16 %v3387
  %v4198 = vunpack.c.l.b16 %v3388
  %v4199 = vunpack.c.h.b16 %v3388
  %v4200 = vunpack.c.l.b16 %v3389
  %v4201 = vunpack.c.h.b16 %v3389
  %v4202 = vunpack.c.l.b16 %v3390
  %v4203 = vunpack.c.h.b16 %v3390
  %v4204 = vunpack.c.l.b16 %v3391
  %v4205 = vunpack.c.h.b16 %v3391
  %v4206 = vunpack.c.l.b16 %v3392
  %v4207 = vunpack.c.h.b16 %v3392
  %v4208 = vunpack.c.l.b16 %v3393
  %v4209 = vunpack.c.h.b16 %v3393
  %v4210 = vunpack.c.l.b16 %v3394
  %v4211 = vunpack.c.h.b16 %v3394
  %v4212 = vunpack.c.l.b16 %v3395
  %v4213 = vunpack.c.h.b16 %v3395
  %v4214 = vunpack.c.l.b16 %v3396
  %v4215 = vunpack.c.h.b16 %v3396
  %v4216 = vunpack.c.l.b16 %v3397
  %v4217 = vunpack.c.h.b16 %v3397
  %v4218 = vunpack.c.l.b16 %v3398
  %v4219 = vunpack.c.h.b16 %v3398
  %v4220 = vunpack.c.l.b16 %v3399
  %v4221 = vunpack.c.h.b16 %v3399
  %v4222 = vunpack.c.l.b16 %v3400
  %v4223 = vunpack.c.h.b16 %v3400
  %v4224 = vunpack.c.l.b16 %v3401
  %v4225 = vunpack.c.h.b16 %v3401
  %v4226 = vunpack.c.l.b16 %v3402
  %v4227 = vunpack.c.h.b16 %v3402
  %v4228 = vunpack.c.l.b16 %v3403
  %v4229 = vunpack.c.h.b16 %v3403
  %v4230 = vunpack.c.l.b16 %v3404
  %v4231 = vunpack.c.h.b16 %v3404
  %v4232 = vunpack.c.l.b16 %v3405
  %v4233 = vunpack.c.h.b16 %v3405
  %v4234 = vunpack.c.l.b16 %v3406
  %v4235 = vunpack.c.h.b16 %v3406
  %v4236 = vpack.c.b16 %v4110, %v4108
  %v4237 = vpack.c.b16 %v4111, %v4109
  %v4238 = vpack.c.b16 %v4114, %v4112
  %v4239 = vpack.c.b16 %v4115, %v4113
  %v4240 = vpack.c.b16 %v4118, %v4116
  %v4241 = vpack.c.b16 %v4119, %v4117
  %v4242 = vpack.c.b16 %v4122, %v4120
  %v4243 = vpack.c.b16 %v4123, %v4121
  %v4244 = vpack.c.b16 %v4126, %v4124
  %v4245 = vpack.c.b16 %v4127, %v4125
  %v4246 = vpack.c.b16 %v4130, %v4128
  %v4247 = vpack.c.b16 %v4131, %v4129
  %v4248 = vpack.c.b16 %v4134, %v4132
  %v4249 = vpack.c.b16 %v4135, %v4133
  %v4250 = vpack.c.b16 %v4138, %v4136
  %v4251 = vpack.c.b16 %v4139, %v4137
  %v4252 = vpack.c.b16 %v4142, %v4140
  %v4253 = vpack.c.b16 %v4143, %v4141
  %v4254 = vpack.c.b16 %v4146, %v4144
  %v4255 = vpack.c.b16 %v4147, %v4145
  %v4256 = vpack.c.b16 %v4150, %v4148
  %v4257 = vpack.c.b16 %v4151, %v4149
  %v4258 = vpack.c.b16 %v4154, %v4152
  %v4259 = vpack.c.b16 %v4155, %v4153
  %v4260 = vpack.c.b16 %v4158, %v4156
  %v4261 = vpack.c.b16 %v4159, %v4157
  %v4262 = vpack.c.b16 %v4162, %v4160
  %v4263 = vpack.c.b16 %v4163, %v4161
  %v4264 = vpack.c.b16 %v4166, %v4164
  %v4265 = vpack.c.b16 %v4167, %v4165
  %v4266 = vpack.c.b16 %v4170, %v4168
  %v4267 = vpack.c.b16 %v4171, %v4169
  %v4268 = vpack.c.b16 %v4174, %v4172
  %v4269 = vpack.c.b16 %v4175, %v4173
  %v4270 = vpack.c.b16 %v4178, %v4176
  %v4271 = vpack.c.b16 %v4179, %v4177
  %v4272 = vpack.c.b16 %v4182, %v4180
  %v4273 = vpack.c.b16 %v4183, %v4181
  %v4274 = vpack.c.b16 %v4186, %v4184
  %v4275 = vpack.c.b16 %v4187, %v4185
  %v4276 = vpack.c.b16 %v4190, %v4188
  %v4277 = vpack.c.b16 %v4191, %v4189
  %v4278 = vpack.c.b16 %v4194, %v4192
  %v4279 = vpack.c.b16 %v4195, %v4193
  %v4280 = vpack.c.b16 %v4198, %v4196
  %v4281 = vpack.c.b16 %v4199, %v4197
  %v4282 = vpack.c.b16 %v4202, %v4200
  %v4283 = vpack.c.b16 %v4203, %v4201
  %v4284 = vpack.c.b16 %v4206, %v4204
  %v4285 = vpack.c.b16 %v4207, %v4205
  %v4286 = vpack.c.b16 %v4210, %v4208
  %v4287 = vpack.c.b16 %v4211, %v4209
  %v4288 = vpack.c.b16 %v4214, %v4212
  %v4289 = vpack.c.b16 %v4215, %v4213
  %v4290 = vpack.c.b16 %v4218, %v4216
  %v4291 = vpack.c.b16 %v4219, %v4217
  %v4292 = vpack.c.b16 %v4222, %v4220
  %v4293 = vpack.c.b16 %v4223, %v4221
  %v4294 = vpack.c.b16 %v4226, %v4224
  %v4295 = vpack.c.b16 %v4227, %v4225
  %v4296 = vpack.c.b16 %v4230, %v4228
  %v4297 = vpack.c.b16 %v4231, %v4229
  %v4298 = vpack.c.b16 %v4234, %v4232
  %v4299 = vpack.c.b16 %v4235, %v4233
  %4364 = vmatpush.bf16.msra.mxu0 %v4250
  %4365 = vmatpush.bf16.msra.mxu0 %v4248
  %4366 = vmatpush.bf16.msra.mxu0 %v4246
  %4367 = vmatpush.bf16.msra.mxu0 %v4244
  %4368 = vmatpush.bf16.msra.mxu0 %v4242
  %4369 = vmatpush.bf16.msra.mxu0 %v4240
  %4370 = vmatpush.bf16.msra.mxu0 %v4238
  %4371 = vmatpush.bf16.msra.mxu0 %v4236
  %4372 = vmatmul.bf16.gmra.mxu0 %v3331
  %v4373 = vpop.f32.mrf.mxu0
  %v4374 = vadd.f32 %v3934, %v4373
  %v4375 = vpop.f32.mrf.mxu0
  %v4376 = vadd.f32 %v3936, %v4375
  %4377 = vmatmul.bf16.gmra.mxu0 %v3335
  %v4378 = vpop.f32.mrf.mxu0
  %v4379 = vadd.f32 %v3939, %v4378
  %v4380 = vpop.f32.mrf.mxu0
  %v4381 = vadd.f32 %v3941, %v4380
  %4382 = vmatmul.bf16.gmra.mxu0 %v3339
  %v4383 = vpop.f32.mrf.mxu0
  %v4384 = vadd.f32 %v3944, %v4383
  %v4385 = vpop.f32.mrf.mxu0
  %v4386 = vadd.f32 %v3946, %v4385
  %4387 = vdwg.mxu0
  %4388 = vmatpush.bf16.msra.mxu0 %v4266
  %4389 = vmatpush.bf16.msra.mxu0 %v4264
  %4390 = vmatpush.bf16.msra.mxu0 %v4262
  %4391 = vmatpush.bf16.msra.mxu0 %v4260
  %4392 = vmatpush.bf16.msra.mxu0 %v4258
  %4393 = vmatpush.bf16.msra.mxu0 %v4256
  %4394 = vmatpush.bf16.msra.mxu0 %v4254
  %4395 = vmatpush.bf16.msra.mxu0 %v4252
  %4396 = vmatmul.bf16.gmra.mxu0 %v3332
  %v4397 = vpop.f32.mrf.mxu0
  %v4398 = vadd.f32 %v4374, %v4397
  %v4399 = vpop.f32.mrf.mxu0
  %v4400 = vadd.f32 %v4376, %v4399
  %4401 = vmatmul.bf16.gmra.mxu0 %v3336
  %v4402 = vpop.f32.mrf.mxu0
  %v4403 = vadd.f32 %v4379, %v4402
  %v4404 = vpop.f32.mrf.mxu0
  %v4405 = vadd.f32 %v4381, %v4404
  %4406 = vmatmul.bf16.gmra.mxu0 %v3340
  %v4407 = vpop.f32.mrf.mxu0
  %v4408 = vadd.f32 %v4384, %v4407
  %v4409 = vpop.f32.mrf.mxu0
  %v4410 = vadd.f32 %v4386, %v4409
  %4411 = vdwg.mxu0
  %4412 = vmatpush.bf16.msra.mxu0 %v4282
  %4413 = vmatpush.bf16.msra.mxu0 %v4280
  %4414 = vmatpush.bf16.msra.mxu0 %v4278
  %4415 = vmatpush.bf16.msra.mxu0 %v4276
  %4416 = vmatpush.bf16.msra.mxu0 %v4274
  %4417 = vmatpush.bf16.msra.mxu0 %v4272
  %4418 = vmatpush.bf16.msra.mxu0 %v4270
  %4419 = vmatpush.bf16.msra.mxu0 %v4268
  %4420 = vmatmul.bf16.gmra.mxu0 %v3333
  %v4421 = vpop.f32.mrf.mxu0
  %v4422 = vadd.f32 %v4398, %v4421
  %v4423 = vpop.f32.mrf.mxu0
  %v4424 = vadd.f32 %v4400, %v4423
  %4425 = vmatmul.bf16.gmra.mxu0 %v3337
  %v4426 = vpop.f32.mrf.mxu0
  %v4427 = vadd.f32 %v4403, %v4426
  %v4428 = vpop.f32.mrf.mxu0
  %v4429 = vadd.f32 %v4405, %v4428
  %4430 = vmatmul.bf16.gmra.mxu0 %v3341
  %v4431 = vpop.f32.mrf.mxu0
  %v4432 = vadd.f32 %v4408, %v4431
  %v4433 = vpop.f32.mrf.mxu0
  %v4434 = vadd.f32 %v4410, %v4433
  %4435 = vdwg.mxu0
  %4436 = vmatpush.bf16.msra.mxu0 %v4298
  %4437 = vmatpush.bf16.msra.mxu0 %v4296
  %4438 = vmatpush.bf16.msra.mxu0 %v4294
  %4439 = vmatpush.bf16.msra.mxu0 %v4292
  %4440 = vmatpush.bf16.msra.mxu0 %v4290
  %4441 = vmatpush.bf16.msra.mxu0 %v4288
  %4442 = vmatpush.bf16.msra.mxu0 %v4286
  %4443 = vmatpush.bf16.msra.mxu0 %v4284
  %4444 = vmatmul.bf16.gmra.mxu0 %v3334
  %v4445 = vpop.f32.mrf.mxu0
  %v4446 = vadd.f32 %v4422, %v4445
  %v4447 = vpop.f32.mrf.mxu0
  %v4448 = vadd.f32 %v4424, %v4447
  %4449 = vmatmul.bf16.gmra.mxu0 %v3338
  %v4450 = vpop.f32.mrf.mxu0
  %v4451 = vadd.f32 %v4427, %v4450
  %v4452 = vpop.f32.mrf.mxu0
  %v4453 = vadd.f32 %v4429, %v4452
  %4454 = vmatmul.bf16.gmra.mxu0 %v3342
  %v4455 = vpop.f32.mrf.mxu0
  %v4456 = vadd.f32 %v4432, %v4455
  %v4457 = vpop.f32.mrf.mxu0
  %v4458 = vadd.f32 %v4434, %v4457
  %4459 = vdwg.mxu0
  %4460 = vmatpush.bf16.msra.mxu0 %v4251
  %4461 = vmatpush.bf16.msra.mxu0 %v4249
  %4462 = vmatpush.bf16.msra.mxu0 %v4247
  %4463 = vmatpush.bf16.msra.mxu0 %v4245
  %4464 = vmatpush.bf16.msra.mxu0 %v4243
  %4465 = vmatpush.bf16.msra.mxu0 %v4241
  %4466 = vmatpush.bf16.msra.mxu0 %v4239
  %4467 = vmatpush.bf16.msra.mxu0 %v4237
  %4468 = vmatmul.bf16.gmra.mxu0 %v3331
  %v4469 = vpop.f32.mrf.mxu0
  %v4470 = vadd.f32 %v4030, %v4469
  %v4471 = vpop.f32.mrf.mxu0
  %v4472 = vadd.f32 %v4032, %v4471
  %4473 = vmatmul.bf16.gmra.mxu0 %v3335
  %v4474 = vpop.f32.mrf.mxu0
  %v4475 = vadd.f32 %v4035, %v4474
  %v4476 = vpop.f32.mrf.mxu0
  %v4477 = vadd.f32 %v4037, %v4476
  %4478 = vmatmul.bf16.gmra.mxu0 %v3339
  %v4479 = vpop.f32.mrf.mxu0
  %v4480 = vadd.f32 %v4040, %v4479
  %v4481 = vpop.f32.mrf.mxu0
  %v4482 = vadd.f32 %v4042, %v4481
  %4483 = vdwg.mxu0
  %4484 = vmatpush.bf16.msra.mxu0 %v4267
  %4485 = vmatpush.bf16.msra.mxu0 %v4265
  %4486 = vmatpush.bf16.msra.mxu0 %v4263
  %4487 = vmatpush.bf16.msra.mxu0 %v4261
  %4488 = vmatpush.bf16.msra.mxu0 %v4259
  %4489 = vmatpush.bf16.msra.mxu0 %v4257
  %4490 = vmatpush.bf16.msra.mxu0 %v4255
  %4491 = vmatpush.bf16.msra.mxu0 %v4253
  %4492 = vmatmul.bf16.gmra.mxu0 %v3332
  %v4493 = vpop.f32.mrf.mxu0
  %v4494 = vadd.f32 %v4470, %v4493
  %v4495 = vpop.f32.mrf.mxu0
  %v4496 = vadd.f32 %v4472, %v4495
  %4497 = vmatmul.bf16.gmra.mxu0 %v3336
  %v4498 = vpop.f32.mrf.mxu0
  %v4499 = vadd.f32 %v4475, %v4498
  %v4500 = vpop.f32.mrf.mxu0
  %v4501 = vadd.f32 %v4477, %v4500
  %4502 = vmatmul.bf16.gmra.mxu0 %v3340
  %v4503 = vpop.f32.mrf.mxu0
  %v4504 = vadd.f32 %v4480, %v4503
  %v4505 = vpop.f32.mrf.mxu0
  %v4506 = vadd.f32 %v4482, %v4505
  %4507 = vdwg.mxu0
  %4508 = vmatpush.bf16.msra.mxu0 %v4283
  %4509 = vmatpush.bf16.msra.mxu0 %v4281
  %4510 = vmatpush.bf16.msra.mxu0 %v4279
  %4511 = vmatpush.bf16.msra.mxu0 %v4277
  %4512 = vmatpush.bf16.msra.mxu0 %v4275
  %4513 = vmatpush.bf16.msra.mxu0 %v4273
  %4514 = vmatpush.bf16.msra.mxu0 %v4271
  %4515 = vmatpush.bf16.msra.mxu0 %v4269
  %4516 = vmatmul.bf16.gmra.mxu0 %v3333
  %v4517 = vpop.f32.mrf.mxu0
  %v4518 = vadd.f32 %v4494, %v4517
  %v4519 = vpop.f32.mrf.mxu0
  %v4520 = vadd.f32 %v4496, %v4519
  %4521 = vmatmul.bf16.gmra.mxu0 %v3337
  %v4522 = vpop.f32.mrf.mxu0
  %v4523 = vadd.f32 %v4499, %v4522
  %v4524 = vpop.f32.mrf.mxu0
  %v4525 = vadd.f32 %v4501, %v4524
  %4526 = vmatmul.bf16.gmra.mxu0 %v3341
  %v4527 = vpop.f32.mrf.mxu0
  %v4528 = vadd.f32 %v4504, %v4527
  %v4529 = vpop.f32.mrf.mxu0
  %v4530 = vadd.f32 %v4506, %v4529
  %4531 = vdwg.mxu0
  %4532 = vmatpush.bf16.msra.mxu0 %v4299
  %4533 = vmatpush.bf16.msra.mxu0 %v4297
  %4534 = vmatpush.bf16.msra.mxu0 %v4295
  %4535 = vmatpush.bf16.msra.mxu0 %v4293
  %4536 = vmatpush.bf16.msra.mxu0 %v4291
  %4537 = vmatpush.bf16.msra.mxu0 %v4289
  %4538 = vmatpush.bf16.msra.mxu0 %v4287
  %4539 = vmatpush.bf16.msra.mxu0 %v4285
  %4540 = vmatmul.bf16.gmra.mxu0 %v3334
  %v4541 = vpop.f32.mrf.mxu0
  %v4542 = vadd.f32 %v4518, %v4541
  %v4543 = vpop.f32.mrf.mxu0
  %v4544 = vadd.f32 %v4520, %v4543
  %4545 = vmatmul.bf16.gmra.mxu0 %v3338
  %v4546 = vpop.f32.mrf.mxu0
  %v4547 = vadd.f32 %v4523, %v4546
  %v4548 = vpop.f32.mrf.mxu0
  %v4549 = vadd.f32 %v4525, %v4548
  %4550 = vmatmul.bf16.gmra.mxu0 %v3342
  %v4551 = vpop.f32.mrf.mxu0
  %v4552 = vadd.f32 %v4528, %v4551
  %v4553 = vpop.f32.mrf.mxu0
  %v4554 = vadd.f32 %v4530, %v4553
  %4555 = vdwg.mxu0
  %v4556 = vpack.c.bf16 %v3263, %v3259
  %v4557 = vpack.c.bf16 %v3264, %v3260
  %v4558 = vpack.c.bf16 %v3265, %v3261
  %v4559 = vpack.c.bf16 %v3266, %v3262
  %v4560 = vpack.c.bf16 %v3271, %v3267
  %v4561 = vpack.c.bf16 %v3272, %v3268
  %v4562 = vpack.c.bf16 %v3273, %v3269
  %v4563 = vpack.c.bf16 %v3274, %v3270
  %v4564 = vpack.c.bf16 %v3279, %v3275
  %v4565 = vpack.c.bf16 %v3280, %v3276
  %v4566 = vpack.c.bf16 %v3281, %v3277
  %v4567 = vpack.c.bf16 %v3282, %v3278
  %s4568 = scalar_lea.vmem %s4, 1024
  %v4569 = vld [vmem:[%s4568] sm:$0xff]
  %v4570 = vld [vmem:[%s4568 + $0x8] sm:$0xff]
  %v4571 = vld [vmem:[%s4568 + $0x10] sm:$0xff]
  %v4572 = vld [vmem:[%s4568 + $0x18] sm:$0xff]
  %v4573 = vld [vmem:[%s4568 + $0x20] sm:$0xff]
  %v4574 = vld [vmem:[%s4568 + $0x28] sm:$0xff]
  %v4575 = vld [vmem:[%s4568 + $0x30] sm:$0xff]
  %v4576 = vld [vmem:[%s4568 + $0x38] sm:$0xff]
  %v4577 = vld [vmem:[%s4568 + $0x40] sm:$0xff]
  %v4578 = vld [vmem:[%s4568 + $0x48] sm:$0xff]
  %v4579 = vld [vmem:[%s4568 + $0x50] sm:$0xff]
  %v4580 = vld [vmem:[%s4568 + $0x58] sm:$0xff]
  %v4581 = vld [vmem:[%s4568 + $0x60] sm:$0xff]
  %v4582 = vld [vmem:[%s4568 + $0x68] sm:$0xff]
  %v4583 = vld [vmem:[%s4568 + $0x70] sm:$0xff]
  %v4584 = vld [vmem:[%s4568 + $0x78] sm:$0xff]
  %v4585 = vld [vmem:[%s4568 + $0x80] sm:$0xff]
  %v4586 = vld [vmem:[%s4568 + $0x88] sm:$0xff]
  %v4587 = vld [vmem:[%s4568 + $0x90] sm:$0xff]
  %v4588 = vld [vmem:[%s4568 + $0x98] sm:$0xff]
  %v4589 = vld [vmem:[%s4568 + $0xa0] sm:$0xff]
  %v4590 = vld [vmem:[%s4568 + $0xa8] sm:$0xff]
  %v4591 = vld [vmem:[%s4568 + $0xb0] sm:$0xff]
  %v4592 = vld [vmem:[%s4568 + $0xb8] sm:$0xff]
  %v4593 = vld [vmem:[%s4568 + $0xc0] sm:$0xff]
  %v4594 = vld [vmem:[%s4568 + $0xc8] sm:$0xff]
  %v4595 = vld [vmem:[%s4568 + $0xd0] sm:$0xff]
  %v4596 = vld [vmem:[%s4568 + $0xd8] sm:$0xff]
  %v4597 = vld [vmem:[%s4568 + $0xe0] sm:$0xff]
  %v4598 = vld [vmem:[%s4568 + $0xe8] sm:$0xff]
  %v4599 = vld [vmem:[%s4568 + $0xf0] sm:$0xff]
  %v4600 = vld [vmem:[%s4568 + $0xf8] sm:$0xff]
  %v4601 = vld [vmem:[%s4568 + $0x100] sm:$0xff]
  %v4602 = vld [vmem:[%s4568 + $0x108] sm:$0xff]
  %v4603 = vld [vmem:[%s4568 + $0x110] sm:$0xff]
  %v4604 = vld [vmem:[%s4568 + $0x118] sm:$0xff]
  %v4605 = vld [vmem:[%s4568 + $0x120] sm:$0xff]
  %v4606 = vld [vmem:[%s4568 + $0x128] sm:$0xff]
  %v4607 = vld [vmem:[%s4568 + $0x130] sm:$0xff]
  %v4608 = vld [vmem:[%s4568 + $0x138] sm:$0xff]
  %v4609 = vld [vmem:[%s4568 + $0x140] sm:$0xff]
  %v4610 = vld [vmem:[%s4568 + $0x148] sm:$0xff]
  %v4611 = vld [vmem:[%s4568 + $0x150] sm:$0xff]
  %v4612 = vld [vmem:[%s4568 + $0x158] sm:$0xff]
  %v4613 = vld [vmem:[%s4568 + $0x160] sm:$0xff]
  %v4614 = vld [vmem:[%s4568 + $0x168] sm:$0xff]
  %v4615 = vld [vmem:[%s4568 + $0x170] sm:$0xff]
  %v4616 = vld [vmem:[%s4568 + $0x178] sm:$0xff]
  %v4617 = vld [vmem:[%s4568 + $0x180] sm:$0xff]
  %v4618 = vld [vmem:[%s4568 + $0x188] sm:$0xff]
  %v4619 = vld [vmem:[%s4568 + $0x190] sm:$0xff]
  %v4620 = vld [vmem:[%s4568 + $0x198] sm:$0xff]
  %v4621 = vld [vmem:[%s4568 + $0x1a0] sm:$0xff]
  %v4622 = vld [vmem:[%s4568 + $0x1a8] sm:$0xff]
  %v4623 = vld [vmem:[%s4568 + $0x1b0] sm:$0xff]
  %v4624 = vld [vmem:[%s4568 + $0x1b8] sm:$0xff]
  %v4625 = vld [vmem:[%s4568 + $0x1c0] sm:$0xff]
  %v4626 = vld [vmem:[%s4568 + $0x1c8] sm:$0xff]
  %v4627 = vld [vmem:[%s4568 + $0x1d0] sm:$0xff]
  %v4628 = vld [vmem:[%s4568 + $0x1d8] sm:$0xff]
  %v4629 = vld [vmem:[%s4568 + $0x1e0] sm:$0xff]
  %v4630 = vld [vmem:[%s4568 + $0x1e8] sm:$0xff]
  %v4631 = vld [vmem:[%s4568 + $0x1f0] sm:$0xff]
  %v4632 = vld [vmem:[%s4568 + $0x1f8] sm:$0xff]
  %v4697 = vunpack.c.l.b16 %v4569
  %v4698 = vunpack.c.h.b16 %v4569
  %v4699 = vunpack.c.l.b16 %v4570
  %v4700 = vunpack.c.h.b16 %v4570
  %v4701 = vunpack.c.l.b16 %v4571
  %v4702 = vunpack.c.h.b16 %v4571
  %v4703 = vunpack.c.l.b16 %v4572
  %v4704 = vunpack.c.h.b16 %v4572
  %v4705 = vunpack.c.l.b16 %v4573
  %v4706 = vunpack.c.h.b16 %v4573
  %v4707 = vunpack.c.l.b16 %v4574
  %v4708 = vunpack.c.h.b16 %v4574
  %v4709 = vunpack.c.l.b16 %v4575
  %v4710 = vunpack.c.h.b16 %v4575
  %v4711 = vunpack.c.l.b16 %v4576
  %v4712 = vunpack.c.h.b16 %v4576
  %v4713 = vunpack.c.l.b16 %v4577
  %v4714 = vunpack.c.h.b16 %v4577
  %v4715 = vunpack.c.l.b16 %v4578
  %v4716 = vunpack.c.h.b16 %v4578
  %v4717 = vunpack.c.l.b16 %v4579
  %v4718 = vunpack.c.h.b16 %v4579
  %v4719 = vunpack.c.l.b16 %v4580
  %v4720 = vunpack.c.h.b16 %v4580
  %v4721 = vunpack.c.l.b16 %v4581
  %v4722 = vunpack.c.h.b16 %v4581
  %v4723 = vunpack.c.l.b16 %v4582
  %v4724 = vunpack.c.h.b16 %v4582
  %v4725 = vunpack.c.l.b16 %v4583
  %v4726 = vunpack.c.h.b16 %v4583
  %v4727 = vunpack.c.l.b16 %v4584
  %v4728 = vunpack.c.h.b16 %v4584
  %v4729 = vunpack.c.l.b16 %v4585
  %v4730 = vunpack.c.h.b16 %v4585
  %v4731 = vunpack.c.l.b16 %v4586
  %v4732 = vunpack.c.h.b16 %v4586
  %v4733 = vunpack.c.l.b16 %v4587
  %v4734 = vunpack.c.h.b16 %v4587
  %v4735 = vunpack.c.l.b16 %v4588
  %v4736 = vunpack.c.h.b16 %v4588
  %v4737 = vunpack.c.l.b16 %v4589
  %v4738 = vunpack.c.h.b16 %v4589
  %v4739 = vunpack.c.l.b16 %v4590
  %v4740 = vunpack.c.h.b16 %v4590
  %v4741 = vunpack.c.l.b16 %v4591
  %v4742 = vunpack.c.h.b16 %v4591
  %v4743 = vunpack.c.l.b16 %v4592
  %v4744 = vunpack.c.h.b16 %v4592
  %v4745 = vunpack.c.l.b16 %v4593
  %v4746 = vunpack.c.h.b16 %v4593
  %v4747 = vunpack.c.l.b16 %v4594
  %v4748 = vunpack.c.h.b16 %v4594
  %v4749 = vunpack.c.l.b16 %v4595
  %v4750 = vunpack.c.h.b16 %v4595
  %v4751 = vunpack.c.l.b16 %v4596
  %v4752 = vunpack.c.h.b16 %v4596
  %v4753 = vunpack.c.l.b16 %v4597
  %v4754 = vunpack.c.h.b16 %v4597
  %v4755 = vunpack.c.l.b16 %v4598
  %v4756 = vunpack.c.h.b16 %v4598
  %v4757 = vunpack.c.l.b16 %v4599
  %v4758 = vunpack.c.h.b16 %v4599
  %v4759 = vunpack.c.l.b16 %v4600
  %v4760 = vunpack.c.h.b16 %v4600
  %v4761 = vunpack.c.l.b16 %v4601
  %v4762 = vunpack.c.h.b16 %v4601
  %v4763 = vunpack.c.l.b16 %v4602
  %v4764 = vunpack.c.h.b16 %v4602
  %v4765 = vunpack.c.l.b16 %v4603
  %v4766 = vunpack.c.h.b16 %v4603
  %v4767 = vunpack.c.l.b16 %v4604
  %v4768 = vunpack.c.h.b16 %v4604
  %v4769 = vunpack.c.l.b16 %v4605
  %v4770 = vunpack.c.h.b16 %v4605
  %v4771 = vunpack.c.l.b16 %v4606
  %v4772 = vunpack.c.h.b16 %v4606
  %v4773 = vunpack.c.l.b16 %v4607
  %v4774 = vunpack.c.h.b16 %v4607
  %v4775 = vunpack.c.l.b16 %v4608
  %v4776 = vunpack.c.h.b16 %v4608
  %v4777 = vunpack.c.l.b16 %v4609
  %v4778 = vunpack.c.h.b16 %v4609
  %v4779 = vunpack.c.l.b16 %v4610
  %v4780 = vunpack.c.h.b16 %v4610
  %v4781 = vunpack.c.l.b16 %v4611
  %v4782 = vunpack.c.h.b16 %v4611
  %v4783 = vunpack.c.l.b16 %v4612
  %v4784 = vunpack.c.h.b16 %v4612
  %v4785 = vunpack.c.l.b16 %v4613
  %v4786 = vunpack.c.h.b16 %v4613
  %v4787 = vunpack.c.l.b16 %v4614
  %v4788 = vunpack.c.h.b16 %v4614
  %v4789 = vunpack.c.l.b16 %v4615
  %v4790 = vunpack.c.h.b16 %v4615
  %v4791 = vunpack.c.l.b16 %v4616
  %v4792 = vunpack.c.h.b16 %v4616
  %v4793 = vunpack.c.l.b16 %v4617
  %v4794 = vunpack.c.h.b16 %v4617
  %v4795 = vunpack.c.l.b16 %v4618
  %v4796 = vunpack.c.h.b16 %v4618
  %v4797 = vunpack.c.l.b16 %v4619
  %v4798 = vunpack.c.h.b16 %v4619
  %v4799 = vunpack.c.l.b16 %v4620
  %v4800 = vunpack.c.h.b16 %v4620
  %v4801 = vunpack.c.l.b16 %v4621
  %v4802 = vunpack.c.h.b16 %v4621
  %v4803 = vunpack.c.l.b16 %v4622
  %v4804 = vunpack.c.h.b16 %v4622
  %v4805 = vunpack.c.l.b16 %v4623
  %v4806 = vunpack.c.h.b16 %v4623
  %v4807 = vunpack.c.l.b16 %v4624
  %v4808 = vunpack.c.h.b16 %v4624
  %v4809 = vunpack.c.l.b16 %v4625
  %v4810 = vunpack.c.h.b16 %v4625
  %v4811 = vunpack.c.l.b16 %v4626
  %v4812 = vunpack.c.h.b16 %v4626
  %v4813 = vunpack.c.l.b16 %v4627
  %v4814 = vunpack.c.h.b16 %v4627
  %v4815 = vunpack.c.l.b16 %v4628
  %v4816 = vunpack.c.h.b16 %v4628
  %v4817 = vunpack.c.l.b16 %v4629
  %v4818 = vunpack.c.h.b16 %v4629
  %v4819 = vunpack.c.l.b16 %v4630
  %v4820 = vunpack.c.h.b16 %v4630
  %v4821 = vunpack.c.l.b16 %v4631
  %v4822 = vunpack.c.h.b16 %v4631
  %v4823 = vunpack.c.l.b16 %v4632
  %v4824 = vunpack.c.h.b16 %v4632
  %v4825 = vpack.c.b16 %v4699, %v4697
  %v4826 = vpack.c.b16 %v4700, %v4698
  %v4827 = vpack.c.b16 %v4703, %v4701
  %v4828 = vpack.c.b16 %v4704, %v4702
  %v4829 = vpack.c.b16 %v4707, %v4705
  %v4830 = vpack.c.b16 %v4708, %v4706
  %v4831 = vpack.c.b16 %v4711, %v4709
  %v4832 = vpack.c.b16 %v4712, %v4710
  %v4833 = vpack.c.b16 %v4715, %v4713
  %v4834 = vpack.c.b16 %v4716, %v4714
  %v4835 = vpack.c.b16 %v4719, %v4717
  %v4836 = vpack.c.b16 %v4720, %v4718
  %v4837 = vpack.c.b16 %v4723, %v4721
  %v4838 = vpack.c.b16 %v4724, %v4722
  %v4839 = vpack.c.b16 %v4727, %v4725
  %v4840 = vpack.c.b16 %v4728, %v4726
  %v4841 = vpack.c.b16 %v4731, %v4729
  %v4842 = vpack.c.b16 %v4732, %v4730
  %v4843 = vpack.c.b16 %v4735, %v4733
  %v4844 = vpack.c.b16 %v4736, %v4734
  %v4845 = vpack.c.b16 %v4739, %v4737
  %v4846 = vpack.c.b16 %v4740, %v4738
  %v4847 = vpack.c.b16 %v4743, %v4741
  %v4848 = vpack.c.b16 %v4744, %v4742
  %v4849 = vpack.c.b16 %v4747, %v4745
  %v4850 = vpack.c.b16 %v4748, %v4746
  %v4851 = vpack.c.b16 %v4751, %v4749
  %v4852 = vpack.c.b16 %v4752, %v4750
  %v4853 = vpack.c.b16 %v4755, %v4753
  %v4854 = vpack.c.b16 %v4756, %v4754
  %v4855 = vpack.c.b16 %v4759, %v4757
  %v4856 = vpack.c.b16 %v4760, %v4758
  %v4857 = vpack.c.b16 %v4763, %v4761
  %v4858 = vpack.c.b16 %v4764, %v4762
  %v4859 = vpack.c.b16 %v4767, %v4765
  %v4860 = vpack.c.b16 %v4768, %v4766
  %v4861 = vpack.c.b16 %v4771, %v4769
  %v4862 = vpack.c.b16 %v4772, %v4770
  %v4863 = vpack.c.b16 %v4775, %v4773
  %v4864 = vpack.c.b16 %v4776, %v4774
  %v4865 = vpack.c.b16 %v4779, %v4777
  %v4866 = vpack.c.b16 %v4780, %v4778
  %v4867 = vpack.c.b16 %v4783, %v4781
  %v4868 = vpack.c.b16 %v4784, %v4782
  %v4869 = vpack.c.b16 %v4787, %v4785
  %v4870 = vpack.c.b16 %v4788, %v4786
  %v4871 = vpack.c.b16 %v4791, %v4789
  %v4872 = vpack.c.b16 %v4792, %v4790
  %v4873 = vpack.c.b16 %v4795, %v4793
  %v4874 = vpack.c.b16 %v4796, %v4794
  %v4875 = vpack.c.b16 %v4799, %v4797
  %v4876 = vpack.c.b16 %v4800, %v4798
  %v4877 = vpack.c.b16 %v4803, %v4801
  %v4878 = vpack.c.b16 %v4804, %v4802
  %v4879 = vpack.c.b16 %v4807, %v4805
  %v4880 = vpack.c.b16 %v4808, %v4806
  %v4881 = vpack.c.b16 %v4811, %v4809
  %v4882 = vpack.c.b16 %v4812, %v4810
  %v4883 = vpack.c.b16 %v4815, %v4813
  %v4884 = vpack.c.b16 %v4816, %v4814
  %v4885 = vpack.c.b16 %v4819, %v4817
  %v4886 = vpack.c.b16 %v4820, %v4818
  %v4887 = vpack.c.b16 %v4823, %v4821
  %v4888 = vpack.c.b16 %v4824, %v4822
  %4953 = vmatpush.bf16.msra.mxu0 %v4839
  %4954 = vmatpush.bf16.msra.mxu0 %v4837
  %4955 = vmatpush.bf16.msra.mxu0 %v4835
  %4956 = vmatpush.bf16.msra.mxu0 %v4833
  %4957 = vmatpush.bf16.msra.mxu0 %v4831
  %4958 = vmatpush.bf16.msra.mxu0 %v4829
  %4959 = vmatpush.bf16.msra.mxu0 %v4827
  %4960 = vmatpush.bf16.msra.mxu0 %v4825
  %4961 = vmatmul.bf16.gmra.mxu0 %v4556
  %v4962 = vpop.f32.mrf.mxu0
  %v4963 = vadd.f32 0.0, %v4962
  %v4964 = vpop.f32.mrf.mxu0
  %v4965 = vadd.f32 0.0, %v4964
  %4966 = vmatmul.bf16.gmra.mxu0 %v4560
  %v4967 = vpop.f32.mrf.mxu0
  %v4968 = vadd.f32 0.0, %v4967
  %v4969 = vpop.f32.mrf.mxu0
  %v4970 = vadd.f32 0.0, %v4969
  %4971 = vmatmul.bf16.gmra.mxu0 %v4564
  %v4972 = vpop.f32.mrf.mxu0
  %v4973 = vadd.f32 0.0, %v4972
  %v4974 = vpop.f32.mrf.mxu0
  %v4975 = vadd.f32 0.0, %v4974
  %4976 = vdwg.mxu0
  %4977 = vmatpush.bf16.msra.mxu0 %v4855
  %4978 = vmatpush.bf16.msra.mxu0 %v4853
  %4979 = vmatpush.bf16.msra.mxu0 %v4851
  %4980 = vmatpush.bf16.msra.mxu0 %v4849
  %4981 = vmatpush.bf16.msra.mxu0 %v4847
  %4982 = vmatpush.bf16.msra.mxu0 %v4845
  %4983 = vmatpush.bf16.msra.mxu0 %v4843
  %4984 = vmatpush.bf16.msra.mxu0 %v4841
  %4985 = vmatmul.bf16.gmra.mxu0 %v4557
  %v4986 = vpop.f32.mrf.mxu0
  %v4987 = vadd.f32 %v4963, %v4986
  %v4988 = vpop.f32.mrf.mxu0
  %v4989 = vadd.f32 %v4965, %v4988
  %4990 = vmatmul.bf16.gmra.mxu0 %v4561
  %v4991 = vpop.f32.mrf.mxu0
  %v4992 = vadd.f32 %v4968, %v4991
  %v4993 = vpop.f32.mrf.mxu0
  %v4994 = vadd.f32 %v4970, %v4993
  %4995 = vmatmul.bf16.gmra.mxu0 %v4565
  %v4996 = vpop.f32.mrf.mxu0
  %v4997 = vadd.f32 %v4973, %v4996
  %v4998 = vpop.f32.mrf.mxu0
  %v4999 = vadd.f32 %v4975, %v4998
  %5000 = vdwg.mxu0
  %5001 = vmatpush.bf16.msra.mxu0 %v4871
  %5002 = vmatpush.bf16.msra.mxu0 %v4869
  %5003 = vmatpush.bf16.msra.mxu0 %v4867
  %5004 = vmatpush.bf16.msra.mxu0 %v4865
  %5005 = vmatpush.bf16.msra.mxu0 %v4863
  %5006 = vmatpush.bf16.msra.mxu0 %v4861
  %5007 = vmatpush.bf16.msra.mxu0 %v4859
  %5008 = vmatpush.bf16.msra.mxu0 %v4857
  %5009 = vmatmul.bf16.gmra.mxu0 %v4558
  %v5010 = vpop.f32.mrf.mxu0
  %v5011 = vadd.f32 %v4987, %v5010
  %v5012 = vpop.f32.mrf.mxu0
  %v5013 = vadd.f32 %v4989, %v5012
  %5014 = vmatmul.bf16.gmra.mxu0 %v4562
  %v5015 = vpop.f32.mrf.mxu0
  %v5016 = vadd.f32 %v4992, %v5015
  %v5017 = vpop.f32.mrf.mxu0
  %v5018 = vadd.f32 %v4994, %v5017
  %5019 = vmatmul.bf16.gmra.mxu0 %v4566
  %v5020 = vpop.f32.mrf.mxu0
  %v5021 = vadd.f32 %v4997, %v5020
  %v5022 = vpop.f32.mrf.mxu0
  %v5023 = vadd.f32 %v4999, %v5022
  %5024 = vdwg.mxu0
  %5025 = vmatpush.bf16.msra.mxu0 %v4887
  %5026 = vmatpush.bf16.msra.mxu0 %v4885
  %5027 = vmatpush.bf16.msra.mxu0 %v4883
  %5028 = vmatpush.bf16.msra.mxu0 %v4881
  %5029 = vmatpush.bf16.msra.mxu0 %v4879
  %5030 = vmatpush.bf16.msra.mxu0 %v4877
  %5031 = vmatpush.bf16.msra.mxu0 %v4875
  %5032 = vmatpush.bf16.msra.mxu0 %v4873
  %5033 = vmatmul.bf16.gmra.mxu0 %v4559
  %v5034 = vpop.f32.mrf.mxu0
  %v5035 = vadd.f32 %v5011, %v5034
  %v5036 = vpop.f32.mrf.mxu0
  %v5037 = vadd.f32 %v5013, %v5036
  %5038 = vmatmul.bf16.gmra.mxu0 %v4563
  %v5039 = vpop.f32.mrf.mxu0
  %v5040 = vadd.f32 %v5016, %v5039
  %v5041 = vpop.f32.mrf.mxu0
  %v5042 = vadd.f32 %v5018, %v5041
  %5043 = vmatmul.bf16.gmra.mxu0 %v4567
  %v5044 = vpop.f32.mrf.mxu0
  %v5045 = vadd.f32 %v5021, %v5044
  %v5046 = vpop.f32.mrf.mxu0
  %v5047 = vadd.f32 %v5023, %v5046
  %5048 = vdwg.mxu0
  %5049 = vmatpush.bf16.msra.mxu0 %v4840
  %5050 = vmatpush.bf16.msra.mxu0 %v4838
  %5051 = vmatpush.bf16.msra.mxu0 %v4836
  %5052 = vmatpush.bf16.msra.mxu0 %v4834
  %5053 = vmatpush.bf16.msra.mxu0 %v4832
  %5054 = vmatpush.bf16.msra.mxu0 %v4830
  %5055 = vmatpush.bf16.msra.mxu0 %v4828
  %5056 = vmatpush.bf16.msra.mxu0 %v4826
  %5057 = vmatmul.bf16.gmra.mxu0 %v4556
  %v5058 = vpop.f32.mrf.mxu0
  %v5059 = vadd.f32 0.0, %v5058
  %v5060 = vpop.f32.mrf.mxu0
  %v5061 = vadd.f32 0.0, %v5060
  %5062 = vmatmul.bf16.gmra.mxu0 %v4560
  %v5063 = vpop.f32.mrf.mxu0
  %v5064 = vadd.f32 0.0, %v5063
  %v5065 = vpop.f32.mrf.mxu0
  %v5066 = vadd.f32 0.0, %v5065
  %5067 = vmatmul.bf16.gmra.mxu0 %v4564
  %v5068 = vpop.f32.mrf.mxu0
  %v5069 = vadd.f32 0.0, %v5068
  %v5070 = vpop.f32.mrf.mxu0
  %v5071 = vadd.f32 0.0, %v5070
  %5072 = vdwg.mxu0
  %5073 = vmatpush.bf16.msra.mxu0 %v4856
  %5074 = vmatpush.bf16.msra.mxu0 %v4854
  %5075 = vmatpush.bf16.msra.mxu0 %v4852
  %5076 = vmatpush.bf16.msra.mxu0 %v4850
  %5077 = vmatpush.bf16.msra.mxu0 %v4848
  %5078 = vmatpush.bf16.msra.mxu0 %v4846
  %5079 = vmatpush.bf16.msra.mxu0 %v4844
  %5080 = vmatpush.bf16.msra.mxu0 %v4842
  %5081 = vmatmul.bf16.gmra.mxu0 %v4557
  %v5082 = vpop.f32.mrf.mxu0
  %v5083 = vadd.f32 %v5059, %v5082
  %v5084 = vpop.f32.mrf.mxu0
  %v5085 = vadd.f32 %v5061, %v5084
  %5086 = vmatmul.bf16.gmra.mxu0 %v4561
  %v5087 = vpop.f32.mrf.mxu0
  %v5088 = vadd.f32 %v5064, %v5087
  %v5089 = vpop.f32.mrf.mxu0
  %v5090 = vadd.f32 %v5066, %v5089
  %5091 = vmatmul.bf16.gmra.mxu0 %v4565
  %v5092 = vpop.f32.mrf.mxu0
  %v5093 = vadd.f32 %v5069, %v5092
  %v5094 = vpop.f32.mrf.mxu0
  %v5095 = vadd.f32 %v5071, %v5094
  %5096 = vdwg.mxu0
  %5097 = vmatpush.bf16.msra.mxu0 %v4872
  %5098 = vmatpush.bf16.msra.mxu0 %v4870
  %5099 = vmatpush.bf16.msra.mxu0 %v4868
  %5100 = vmatpush.bf16.msra.mxu0 %v4866
  %5101 = vmatpush.bf16.msra.mxu0 %v4864
  %5102 = vmatpush.bf16.msra.mxu0 %v4862
  %5103 = vmatpush.bf16.msra.mxu0 %v4860
  %5104 = vmatpush.bf16.msra.mxu0 %v4858
  %5105 = vmatmul.bf16.gmra.mxu0 %v4558
  %v5106 = vpop.f32.mrf.mxu0
  %v5107 = vadd.f32 %v5083, %v5106
  %v5108 = vpop.f32.mrf.mxu0
  %v5109 = vadd.f32 %v5085, %v5108
  %5110 = vmatmul.bf16.gmra.mxu0 %v4562
  %v5111 = vpop.f32.mrf.mxu0
  %v5112 = vadd.f32 %v5088, %v5111
  %v5113 = vpop.f32.mrf.mxu0
  %v5114 = vadd.f32 %v5090, %v5113
  %5115 = vmatmul.bf16.gmra.mxu0 %v4566
  %v5116 = vpop.f32.mrf.mxu0
  %v5117 = vadd.f32 %v5093, %v5116
  %v5118 = vpop.f32.mrf.mxu0
  %v5119 = vadd.f32 %v5095, %v5118
  %5120 = vdwg.mxu0
  %5121 = vmatpush.bf16.msra.mxu0 %v4888
  %5122 = vmatpush.bf16.msra.mxu0 %v4886
  %5123 = vmatpush.bf16.msra.mxu0 %v4884
  %5124 = vmatpush.bf16.msra.mxu0 %v4882
  %5125 = vmatpush.bf16.msra.mxu0 %v4880
  %5126 = vmatpush.bf16.msra.mxu0 %v4878
  %5127 = vmatpush.bf16.msra.mxu0 %v4876
  %5128 = vmatpush.bf16.msra.mxu0 %v4874
  %5129 = vmatmul.bf16.gmra.mxu0 %v4559
  %v5130 = vpop.f32.mrf.mxu0
  %v5131 = vadd.f32 %v5107, %v5130
  %v5132 = vpop.f32.mrf.mxu0
  %v5133 = vadd.f32 %v5109, %v5132
  %5134 = vmatmul.bf16.gmra.mxu0 %v4563
  %v5135 = vpop.f32.mrf.mxu0
  %v5136 = vadd.f32 %v5112, %v5135
  %v5137 = vpop.f32.mrf.mxu0
  %v5138 = vadd.f32 %v5114, %v5137
  %5139 = vmatmul.bf16.gmra.mxu0 %v4567
  %v5140 = vpop.f32.mrf.mxu0
  %v5141 = vadd.f32 %v5117, %v5140
  %v5142 = vpop.f32.mrf.mxu0
  %v5143 = vadd.f32 %v5119, %v5142
  %5144 = vdwg.mxu0
  %v5145 = vadd.f32 %v4446, %v5035
  %v5146 = vadd.f32 %v4542, %v5131
  %v5147 = vadd.f32 %v4448, %v5037
  %v5148 = vadd.f32 %v4544, %v5133
  %v5149 = vadd.f32 %v4451, %v5040
  %v5150 = vadd.f32 %v4547, %v5136
  %v5151 = vadd.f32 %v4453, %v5042
  %v5152 = vadd.f32 %v4549, %v5138
  %v5153 = vadd.f32 %v4456, %v5045
  %v5154 = vadd.f32 %v4552, %v5141
  %v5155 = vadd.f32 %v4458, %v5047
  %v5156 = vadd.f32 %v4554, %v5143
  %v5157 = vrot.slane %v3259, 1
  %v5158 = vrot.slane %v3260, 1
  %v5159 = vrot.slane %v3261, 1
  %v5160 = vrot.slane %v3262, 1
  %v5161 = vrot.slane %v3263, 1
  %v5162 = vrot.slane %v3264, 1
  %v5163 = vrot.slane %v3265, 1
  %v5164 = vrot.slane %v3266, 1
  %v5165 = vrot.slane %v3267, 1
  %v5166 = vrot.slane %v3268, 1
  %v5167 = vrot.slane %v3269, 1
  %v5168 = vrot.slane %v3270, 1
  %v5169 = vrot.slane %v3271, 1
  %v5170 = vrot.slane %v3272, 1
  %v5171 = vrot.slane %v3273, 1
  %v5172 = vrot.slane %v3274, 1
  %v5173 = vrot.slane %v3275, 1
  %v5174 = vrot.slane %v3276, 1
  %v5175 = vrot.slane %v3277, 1
  %v5176 = vrot.slane %v3278, 1
  %v5177 = vrot.slane %v3279, 1
  %v5178 = vrot.slane %v3280, 1
  %v5179 = vrot.slane %v3281, 1
  %v5180 = vrot.slane %v3282, 1
  %v5181 = vsel %vm1919, %v5173, %v5177
  %v5182 = vsel %vm1919, %v5174, %v5178
  %v5183 = vsel %vm1919, %v5175, %v5179
  %v5184 = vsel %vm1919, %v5176, %v5180
  %v5185 = vsel %vm1919, %v5169, %v5173
  %v5186 = vsel %vm1919, %v5170, %v5174
  %v5187 = vsel %vm1919, %v5171, %v5175
  %v5188 = vsel %vm1919, %v5172, %v5176
  %v5189 = vsel %vm1919, %v5165, %v5169
  %v5190 = vsel %vm1919, %v5166, %v5170
  %v5191 = vsel %vm1919, %v5167, %v5171
  %v5192 = vsel %vm1919, %v5168, %v5172
  %v5193 = vsel %vm1919, %v5161, %v5165
  %v5194 = vsel %vm1919, %v5162, %v5166
  %v5195 = vsel %vm1919, %v5163, %v5167
  %v5196 = vsel %vm1919, %v5164, %v5168
  %v5197 = vsel %vm1919, %v5157, %v5161
  %v5198 = vsel %vm1919, %v5158, %v5162
  %v5199 = vsel %vm1919, %v5159, %v5163
  %v5200 = vsel %vm1919, %v5160, %v5164
  %v5201 = vsel %vm1919, %v5177, %v5157
  %v5202 = vsel %vm1919, %v5178, %v5158
  %v5203 = vsel %vm1919, %v5179, %v5159
  %v5204 = vsel %vm1919, %v5180, %v5160
  %v5205 = vpack.c.bf16 %v5193, %v5197
  %v5206 = vpack.c.bf16 %v5194, %v5198
  %v5207 = vpack.c.bf16 %v5195, %v5199
  %v5208 = vpack.c.bf16 %v5196, %v5200
  %v5209 = vpack.c.bf16 %v5185, %v5189
  %v5210 = vpack.c.bf16 %v5186, %v5190
  %v5211 = vpack.c.bf16 %v5187, %v5191
  %v5212 = vpack.c.bf16 %v5188, %v5192
  %v5213 = vpack.c.bf16 %v5201, %v5181
  %v5214 = vpack.c.bf16 %v5202, %v5182
  %v5215 = vpack.c.bf16 %v5203, %v5183
  %v5216 = vpack.c.bf16 %v5204, %v5184
  %s5217 = scalar_lea.vmem %s4, 1536
  %v5218 = vld [vmem:[%s5217] sm:$0xff]
  %v5219 = vld [vmem:[%s5217 + $0x8] sm:$0xff]
  %v5220 = vld [vmem:[%s5217 + $0x10] sm:$0xff]
  %v5221 = vld [vmem:[%s5217 + $0x18] sm:$0xff]
  %v5222 = vld [vmem:[%s5217 + $0x20] sm:$0xff]
  %v5223 = vld [vmem:[%s5217 + $0x28] sm:$0xff]
  %v5224 = vld [vmem:[%s5217 + $0x30] sm:$0xff]
  %v5225 = vld [vmem:[%s5217 + $0x38] sm:$0xff]
  %v5226 = vld [vmem:[%s5217 + $0x40] sm:$0xff]
  %v5227 = vld [vmem:[%s5217 + $0x48] sm:$0xff]
  %v5228 = vld [vmem:[%s5217 + $0x50] sm:$0xff]
  %v5229 = vld [vmem:[%s5217 + $0x58] sm:$0xff]
  %v5230 = vld [vmem:[%s5217 + $0x60] sm:$0xff]
  %v5231 = vld [vmem:[%s5217 + $0x68] sm:$0xff]
  %v5232 = vld [vmem:[%s5217 + $0x70] sm:$0xff]
  %v5233 = vld [vmem:[%s5217 + $0x78] sm:$0xff]
  %v5234 = vld [vmem:[%s5217 + $0x80] sm:$0xff]
  %v5235 = vld [vmem:[%s5217 + $0x88] sm:$0xff]
  %v5236 = vld [vmem:[%s5217 + $0x90] sm:$0xff]
  %v5237 = vld [vmem:[%s5217 + $0x98] sm:$0xff]
  %v5238 = vld [vmem:[%s5217 + $0xa0] sm:$0xff]
  %v5239 = vld [vmem:[%s5217 + $0xa8] sm:$0xff]
  %v5240 = vld [vmem:[%s5217 + $0xb0] sm:$0xff]
  %v5241 = vld [vmem:[%s5217 + $0xb8] sm:$0xff]
  %v5242 = vld [vmem:[%s5217 + $0xc0] sm:$0xff]
  %v5243 = vld [vmem:[%s5217 + $0xc8] sm:$0xff]
  %v5244 = vld [vmem:[%s5217 + $0xd0] sm:$0xff]
  %v5245 = vld [vmem:[%s5217 + $0xd8] sm:$0xff]
  %v5246 = vld [vmem:[%s5217 + $0xe0] sm:$0xff]
  %v5247 = vld [vmem:[%s5217 + $0xe8] sm:$0xff]
  %v5248 = vld [vmem:[%s5217 + $0xf0] sm:$0xff]
  %v5249 = vld [vmem:[%s5217 + $0xf8] sm:$0xff]
  %v5250 = vld [vmem:[%s5217 + $0x100] sm:$0xff]
  %v5251 = vld [vmem:[%s5217 + $0x108] sm:$0xff]
  %v5252 = vld [vmem:[%s5217 + $0x110] sm:$0xff]
  %v5253 = vld [vmem:[%s5217 + $0x118] sm:$0xff]
  %v5254 = vld [vmem:[%s5217 + $0x120] sm:$0xff]
  %v5255 = vld [vmem:[%s5217 + $0x128] sm:$0xff]
  %v5256 = vld [vmem:[%s5217 + $0x130] sm:$0xff]
  %v5257 = vld [vmem:[%s5217 + $0x138] sm:$0xff]
  %v5258 = vld [vmem:[%s5217 + $0x140] sm:$0xff]
  %v5259 = vld [vmem:[%s5217 + $0x148] sm:$0xff]
  %v5260 = vld [vmem:[%s5217 + $0x150] sm:$0xff]
  %v5261 = vld [vmem:[%s5217 + $0x158] sm:$0xff]
  %v5262 = vld [vmem:[%s5217 + $0x160] sm:$0xff]
  %v5263 = vld [vmem:[%s5217 + $0x168] sm:$0xff]
  %v5264 = vld [vmem:[%s5217 + $0x170] sm:$0xff]
  %v5265 = vld [vmem:[%s5217 + $0x178] sm:$0xff]
  %v5266 = vld [vmem:[%s5217 + $0x180] sm:$0xff]
  %v5267 = vld [vmem:[%s5217 + $0x188] sm:$0xff]
  %v5268 = vld [vmem:[%s5217 + $0x190] sm:$0xff]
  %v5269 = vld [vmem:[%s5217 + $0x198] sm:$0xff]
  %v5270 = vld [vmem:[%s5217 + $0x1a0] sm:$0xff]
  %v5271 = vld [vmem:[%s5217 + $0x1a8] sm:$0xff]
  %v5272 = vld [vmem:[%s5217 + $0x1b0] sm:$0xff]
  %v5273 = vld [vmem:[%s5217 + $0x1b8] sm:$0xff]
  %v5274 = vld [vmem:[%s5217 + $0x1c0] sm:$0xff]
  %v5275 = vld [vmem:[%s5217 + $0x1c8] sm:$0xff]
  %v5276 = vld [vmem:[%s5217 + $0x1d0] sm:$0xff]
  %v5277 = vld [vmem:[%s5217 + $0x1d8] sm:$0xff]
  %v5278 = vld [vmem:[%s5217 + $0x1e0] sm:$0xff]
  %v5279 = vld [vmem:[%s5217 + $0x1e8] sm:$0xff]
  %v5280 = vld [vmem:[%s5217 + $0x1f0] sm:$0xff]
  %v5281 = vld [vmem:[%s5217 + $0x1f8] sm:$0xff]
  %v5346 = vunpack.c.l.b16 %v5218
  %v5347 = vunpack.c.h.b16 %v5218
  %v5348 = vunpack.c.l.b16 %v5219
  %v5349 = vunpack.c.h.b16 %v5219
  %v5350 = vunpack.c.l.b16 %v5220
  %v5351 = vunpack.c.h.b16 %v5220
  %v5352 = vunpack.c.l.b16 %v5221
  %v5353 = vunpack.c.h.b16 %v5221
  %v5354 = vunpack.c.l.b16 %v5222
  %v5355 = vunpack.c.h.b16 %v5222
  %v5356 = vunpack.c.l.b16 %v5223
  %v5357 = vunpack.c.h.b16 %v5223
  %v5358 = vunpack.c.l.b16 %v5224
  %v5359 = vunpack.c.h.b16 %v5224
  %v5360 = vunpack.c.l.b16 %v5225
  %v5361 = vunpack.c.h.b16 %v5225
  %v5362 = vunpack.c.l.b16 %v5226
  %v5363 = vunpack.c.h.b16 %v5226
  %v5364 = vunpack.c.l.b16 %v5227
  %v5365 = vunpack.c.h.b16 %v5227
  %v5366 = vunpack.c.l.b16 %v5228
  %v5367 = vunpack.c.h.b16 %v5228
  %v5368 = vunpack.c.l.b16 %v5229
  %v5369 = vunpack.c.h.b16 %v5229
  %v5370 = vunpack.c.l.b16 %v5230
  %v5371 = vunpack.c.h.b16 %v5230
  %v5372 = vunpack.c.l.b16 %v5231
  %v5373 = vunpack.c.h.b16 %v5231
  %v5374 = vunpack.c.l.b16 %v5232
  %v5375 = vunpack.c.h.b16 %v5232
  %v5376 = vunpack.c.l.b16 %v5233
  %v5377 = vunpack.c.h.b16 %v5233
  %v5378 = vunpack.c.l.b16 %v5234
  %v5379 = vunpack.c.h.b16 %v5234
  %v5380 = vunpack.c.l.b16 %v5235
  %v5381 = vunpack.c.h.b16 %v5235
  %v5382 = vunpack.c.l.b16 %v5236
  %v5383 = vunpack.c.h.b16 %v5236
  %v5384 = vunpack.c.l.b16 %v5237
  %v5385 = vunpack.c.h.b16 %v5237
  %v5386 = vunpack.c.l.b16 %v5238
  %v5387 = vunpack.c.h.b16 %v5238
  %v5388 = vunpack.c.l.b16 %v5239
  %v5389 = vunpack.c.h.b16 %v5239
  %v5390 = vunpack.c.l.b16 %v5240
  %v5391 = vunpack.c.h.b16 %v5240
  %v5392 = vunpack.c.l.b16 %v5241
  %v5393 = vunpack.c.h.b16 %v5241
  %v5394 = vunpack.c.l.b16 %v5242
  %v5395 = vunpack.c.h.b16 %v5242
  %v5396 = vunpack.c.l.b16 %v5243
  %v5397 = vunpack.c.h.b16 %v5243
  %v5398 = vunpack.c.l.b16 %v5244
  %v5399 = vunpack.c.h.b16 %v5244
  %v5400 = vunpack.c.l.b16 %v5245
  %v5401 = vunpack.c.h.b16 %v5245
  %v5402 = vunpack.c.l.b16 %v5246
  %v5403 = vunpack.c.h.b16 %v5246
  %v5404 = vunpack.c.l.b16 %v5247
  %v5405 = vunpack.c.h.b16 %v5247
  %v5406 = vunpack.c.l.b16 %v5248
  %v5407 = vunpack.c.h.b16 %v5248
  %v5408 = vunpack.c.l.b16 %v5249
  %v5409 = vunpack.c.h.b16 %v5249
  %v5410 = vunpack.c.l.b16 %v5250
  %v5411 = vunpack.c.h.b16 %v5250
  %v5412 = vunpack.c.l.b16 %v5251
  %v5413 = vunpack.c.h.b16 %v5251
  %v5414 = vunpack.c.l.b16 %v5252
  %v5415 = vunpack.c.h.b16 %v5252
  %v5416 = vunpack.c.l.b16 %v5253
  %v5417 = vunpack.c.h.b16 %v5253
  %v5418 = vunpack.c.l.b16 %v5254
  %v5419 = vunpack.c.h.b16 %v5254
  %v5420 = vunpack.c.l.b16 %v5255
  %v5421 = vunpack.c.h.b16 %v5255
  %v5422 = vunpack.c.l.b16 %v5256
  %v5423 = vunpack.c.h.b16 %v5256
  %v5424 = vunpack.c.l.b16 %v5257
  %v5425 = vunpack.c.h.b16 %v5257
  %v5426 = vunpack.c.l.b16 %v5258
  %v5427 = vunpack.c.h.b16 %v5258
  %v5428 = vunpack.c.l.b16 %v5259
  %v5429 = vunpack.c.h.b16 %v5259
  %v5430 = vunpack.c.l.b16 %v5260
  %v5431 = vunpack.c.h.b16 %v5260
  %v5432 = vunpack.c.l.b16 %v5261
  %v5433 = vunpack.c.h.b16 %v5261
  %v5434 = vunpack.c.l.b16 %v5262
  %v5435 = vunpack.c.h.b16 %v5262
  %v5436 = vunpack.c.l.b16 %v5263
  %v5437 = vunpack.c.h.b16 %v5263
  %v5438 = vunpack.c.l.b16 %v5264
  %v5439 = vunpack.c.h.b16 %v5264
  %v5440 = vunpack.c.l.b16 %v5265
  %v5441 = vunpack.c.h.b16 %v5265
  %v5442 = vunpack.c.l.b16 %v5266
  %v5443 = vunpack.c.h.b16 %v5266
  %v5444 = vunpack.c.l.b16 %v5267
  %v5445 = vunpack.c.h.b16 %v5267
  %v5446 = vunpack.c.l.b16 %v5268
  %v5447 = vunpack.c.h.b16 %v5268
  %v5448 = vunpack.c.l.b16 %v5269
  %v5449 = vunpack.c.h.b16 %v5269
  %v5450 = vunpack.c.l.b16 %v5270
  %v5451 = vunpack.c.h.b16 %v5270
  %v5452 = vunpack.c.l.b16 %v5271
  %v5453 = vunpack.c.h.b16 %v5271
  %v5454 = vunpack.c.l.b16 %v5272
  %v5455 = vunpack.c.h.b16 %v5272
  %v5456 = vunpack.c.l.b16 %v5273
  %v5457 = vunpack.c.h.b16 %v5273
  %v5458 = vunpack.c.l.b16 %v5274
  %v5459 = vunpack.c.h.b16 %v5274
  %v5460 = vunpack.c.l.b16 %v5275
  %v5461 = vunpack.c.h.b16 %v5275
  %v5462 = vunpack.c.l.b16 %v5276
  %v5463 = vunpack.c.h.b16 %v5276
  %v5464 = vunpack.c.l.b16 %v5277
  %v5465 = vunpack.c.h.b16 %v5277
  %v5466 = vunpack.c.l.b16 %v5278
  %v5467 = vunpack.c.h.b16 %v5278
  %v5468 = vunpack.c.l.b16 %v5279
  %v5469 = vunpack.c.h.b16 %v5279
  %v5470 = vunpack.c.l.b16 %v5280
  %v5471 = vunpack.c.h.b16 %v5280
  %v5472 = vunpack.c.l.b16 %v5281
  %v5473 = vunpack.c.h.b16 %v5281
  %v5474 = vpack.c.b16 %v5348, %v5346
  %v5475 = vpack.c.b16 %v5349, %v5347
  %v5476 = vpack.c.b16 %v5352, %v5350
  %v5477 = vpack.c.b16 %v5353, %v5351
  %v5478 = vpack.c.b16 %v5356, %v5354
  %v5479 = vpack.c.b16 %v5357, %v5355
  %v5480 = vpack.c.b16 %v5360, %v5358
  %v5481 = vpack.c.b16 %v5361, %v5359
  %v5482 = vpack.c.b16 %v5364, %v5362
  %v5483 = vpack.c.b16 %v5365, %v5363
  %v5484 = vpack.c.b16 %v5368, %v5366
  %v5485 = vpack.c.b16 %v5369, %v5367
  %v5486 = vpack.c.b16 %v5372, %v5370
  %v5487 = vpack.c.b16 %v5373, %v5371
  %v5488 = vpack.c.b16 %v5376, %v5374
  %v5489 = vpack.c.b16 %v5377, %v5375
  %v5490 = vpack.c.b16 %v5380, %v5378
  %v5491 = vpack.c.b16 %v5381, %v5379
  %v5492 = vpack.c.b16 %v5384, %v5382
  %v5493 = vpack.c.b16 %v5385, %v5383
  %v5494 = vpack.c.b16 %v5388, %v5386
  %v5495 = vpack.c.b16 %v5389, %v5387
  %v5496 = vpack.c.b16 %v5392, %v5390
  %v5497 = vpack.c.b16 %v5393, %v5391
  %v5498 = vpack.c.b16 %v5396, %v5394
  %v5499 = vpack.c.b16 %v5397, %v5395
  %v5500 = vpack.c.b16 %v5400, %v5398
  %v5501 = vpack.c.b16 %v5401, %v5399
  %v5502 = vpack.c.b16 %v5404, %v5402
  %v5503 = vpack.c.b16 %v5405, %v5403
  %v5504 = vpack.c.b16 %v5408, %v5406
  %v5505 = vpack.c.b16 %v5409, %v5407
  %v5506 = vpack.c.b16 %v5412, %v5410
  %v5507 = vpack.c.b16 %v5413, %v5411
  %v5508 = vpack.c.b16 %v5416, %v5414
  %v5509 = vpack.c.b16 %v5417, %v5415
  %v5510 = vpack.c.b16 %v5420, %v5418
  %v5511 = vpack.c.b16 %v5421, %v5419
  %v5512 = vpack.c.b16 %v5424, %v5422
  %v5513 = vpack.c.b16 %v5425, %v5423
  %v5514 = vpack.c.b16 %v5428, %v5426
  %v5515 = vpack.c.b16 %v5429, %v5427
  %v5516 = vpack.c.b16 %v5432, %v5430
  %v5517 = vpack.c.b16 %v5433, %v5431
  %v5518 = vpack.c.b16 %v5436, %v5434
  %v5519 = vpack.c.b16 %v5437, %v5435
  %v5520 = vpack.c.b16 %v5440, %v5438
  %v5521 = vpack.c.b16 %v5441, %v5439
  %v5522 = vpack.c.b16 %v5444, %v5442
  %v5523 = vpack.c.b16 %v5445, %v5443
  %v5524 = vpack.c.b16 %v5448, %v5446
  %v5525 = vpack.c.b16 %v5449, %v5447
  %v5526 = vpack.c.b16 %v5452, %v5450
  %v5527 = vpack.c.b16 %v5453, %v5451
  %v5528 = vpack.c.b16 %v5456, %v5454
  %v5529 = vpack.c.b16 %v5457, %v5455
  %v5530 = vpack.c.b16 %v5460, %v5458
  %v5531 = vpack.c.b16 %v5461, %v5459
  %v5532 = vpack.c.b16 %v5464, %v5462
  %v5533 = vpack.c.b16 %v5465, %v5463
  %v5534 = vpack.c.b16 %v5468, %v5466
  %v5535 = vpack.c.b16 %v5469, %v5467
  %v5536 = vpack.c.b16 %v5472, %v5470
  %v5537 = vpack.c.b16 %v5473, %v5471
  %5602 = vmatpush.bf16.msra.mxu0 %v5488
  %5603 = vmatpush.bf16.msra.mxu0 %v5486
  %5604 = vmatpush.bf16.msra.mxu0 %v5484
  %5605 = vmatpush.bf16.msra.mxu0 %v5482
  %5606 = vmatpush.bf16.msra.mxu0 %v5480
  %5607 = vmatpush.bf16.msra.mxu0 %v5478
  %5608 = vmatpush.bf16.msra.mxu0 %v5476
  %5609 = vmatpush.bf16.msra.mxu0 %v5474
  %5610 = vmatmul.bf16.gmra.mxu0 %v5205
  %v5611 = vpop.f32.mrf.mxu0
  %v5612 = vadd.f32 0.0, %v5611
  %v5613 = vpop.f32.mrf.mxu0
  %v5614 = vadd.f32 0.0, %v5613
  %5615 = vmatmul.bf16.gmra.mxu0 %v5209
  %v5616 = vpop.f32.mrf.mxu0
  %v5617 = vadd.f32 0.0, %v5616
  %v5618 = vpop.f32.mrf.mxu0
  %v5619 = vadd.f32 0.0, %v5618
  %5620 = vmatmul.bf16.gmra.mxu0 %v5213
  %v5621 = vpop.f32.mrf.mxu0
  %v5622 = vadd.f32 0.0, %v5621
  %v5623 = vpop.f32.mrf.mxu0
  %v5624 = vadd.f32 0.0, %v5623
  %5625 = vdwg.mxu0
  %5626 = vmatpush.bf16.msra.mxu0 %v5504
  %5627 = vmatpush.bf16.msra.mxu0 %v5502
  %5628 = vmatpush.bf16.msra.mxu0 %v5500
  %5629 = vmatpush.bf16.msra.mxu0 %v5498
  %5630 = vmatpush.bf16.msra.mxu0 %v5496
  %5631 = vmatpush.bf16.msra.mxu0 %v5494
  %5632 = vmatpush.bf16.msra.mxu0 %v5492
  %5633 = vmatpush.bf16.msra.mxu0 %v5490
  %5634 = vmatmul.bf16.gmra.mxu0 %v5206
  %v5635 = vpop.f32.mrf.mxu0
  %v5636 = vadd.f32 %v5612, %v5635
  %v5637 = vpop.f32.mrf.mxu0
  %v5638 = vadd.f32 %v5614, %v5637
  %5639 = vmatmul.bf16.gmra.mxu0 %v5210
  %v5640 = vpop.f32.mrf.mxu0
  %v5641 = vadd.f32 %v5617, %v5640
  %v5642 = vpop.f32.mrf.mxu0
  %v5643 = vadd.f32 %v5619, %v5642
  %5644 = vmatmul.bf16.gmra.mxu0 %v5214
  %v5645 = vpop.f32.mrf.mxu0
  %v5646 = vadd.f32 %v5622, %v5645
  %v5647 = vpop.f32.mrf.mxu0
  %v5648 = vadd.f32 %v5624, %v5647
  %5649 = vdwg.mxu0
  %5650 = vmatpush.bf16.msra.mxu0 %v5520
  %5651 = vmatpush.bf16.msra.mxu0 %v5518
  %5652 = vmatpush.bf16.msra.mxu0 %v5516
  %5653 = vmatpush.bf16.msra.mxu0 %v5514
  %5654 = vmatpush.bf16.msra.mxu0 %v5512
  %5655 = vmatpush.bf16.msra.mxu0 %v5510
  %5656 = vmatpush.bf16.msra.mxu0 %v5508
  %5657 = vmatpush.bf16.msra.mxu0 %v5506
  %5658 = vmatmul.bf16.gmra.mxu0 %v5207
  %v5659 = vpop.f32.mrf.mxu0
  %v5660 = vadd.f32 %v5636, %v5659
  %v5661 = vpop.f32.mrf.mxu0
  %v5662 = vadd.f32 %v5638, %v5661
  %5663 = vmatmul.bf16.gmra.mxu0 %v5211
  %v5664 = vpop.f32.mrf.mxu0
  %v5665 = vadd.f32 %v5641, %v5664
  %v5666 = vpop.f32.mrf.mxu0
  %v5667 = vadd.f32 %v5643, %v5666
  %5668 = vmatmul.bf16.gmra.mxu0 %v5215
  %v5669 = vpop.f32.mrf.mxu0
  %v5670 = vadd.f32 %v5646, %v5669
  %v5671 = vpop.f32.mrf.mxu0
  %v5672 = vadd.f32 %v5648, %v5671
  %5673 = vdwg.mxu0
  %5674 = vmatpush.bf16.msra.mxu0 %v5536
  %5675 = vmatpush.bf16.msra.mxu0 %v5534
  %5676 = vmatpush.bf16.msra.mxu0 %v5532
  %5677 = vmatpush.bf16.msra.mxu0 %v5530
  %5678 = vmatpush.bf16.msra.mxu0 %v5528
  %5679 = vmatpush.bf16.msra.mxu0 %v5526
  %5680 = vmatpush.bf16.msra.mxu0 %v5524
  %5681 = vmatpush.bf16.msra.mxu0 %v5522
  %5682 = vmatmul.bf16.gmra.mxu0 %v5208
  %v5683 = vpop.f32.mrf.mxu0
  %v5684 = vadd.f32 %v5660, %v5683
  %v5685 = vpop.f32.mrf.mxu0
  %v5686 = vadd.f32 %v5662, %v5685
  %5687 = vmatmul.bf16.gmra.mxu0 %v5212
  %v5688 = vpop.f32.mrf.mxu0
  %v5689 = vadd.f32 %v5665, %v5688
  %v5690 = vpop.f32.mrf.mxu0
  %v5691 = vadd.f32 %v5667, %v5690
  %5692 = vmatmul.bf16.gmra.mxu0 %v5216
  %v5693 = vpop.f32.mrf.mxu0
  %v5694 = vadd.f32 %v5670, %v5693
  %v5695 = vpop.f32.mrf.mxu0
  %v5696 = vadd.f32 %v5672, %v5695
  %5697 = vdwg.mxu0
  %5698 = vmatpush.bf16.msra.mxu0 %v5489
  %5699 = vmatpush.bf16.msra.mxu0 %v5487
  %5700 = vmatpush.bf16.msra.mxu0 %v5485
  %5701 = vmatpush.bf16.msra.mxu0 %v5483
  %5702 = vmatpush.bf16.msra.mxu0 %v5481
  %5703 = vmatpush.bf16.msra.mxu0 %v5479
  %5704 = vmatpush.bf16.msra.mxu0 %v5477
  %5705 = vmatpush.bf16.msra.mxu0 %v5475
  %5706 = vmatmul.bf16.gmra.mxu0 %v5205
  %v5707 = vpop.f32.mrf.mxu0
  %v5708 = vadd.f32 0.0, %v5707
  %v5709 = vpop.f32.mrf.mxu0
  %v5710 = vadd.f32 0.0, %v5709
  %5711 = vmatmul.bf16.gmra.mxu0 %v5209
  %v5712 = vpop.f32.mrf.mxu0
  %v5713 = vadd.f32 0.0, %v5712
  %v5714 = vpop.f32.mrf.mxu0
  %v5715 = vadd.f32 0.0, %v5714
  %5716 = vmatmul.bf16.gmra.mxu0 %v5213
  %v5717 = vpop.f32.mrf.mxu0
  %v5718 = vadd.f32 0.0, %v5717
  %v5719 = vpop.f32.mrf.mxu0
  %v5720 = vadd.f32 0.0, %v5719
  %5721 = vdwg.mxu0
  %5722 = vmatpush.bf16.msra.mxu0 %v5505
  %5723 = vmatpush.bf16.msra.mxu0 %v5503
  %5724 = vmatpush.bf16.msra.mxu0 %v5501
  %5725 = vmatpush.bf16.msra.mxu0 %v5499
  %5726 = vmatpush.bf16.msra.mxu0 %v5497
  %5727 = vmatpush.bf16.msra.mxu0 %v5495
  %5728 = vmatpush.bf16.msra.mxu0 %v5493
  %5729 = vmatpush.bf16.msra.mxu0 %v5491
  %5730 = vmatmul.bf16.gmra.mxu0 %v5206
  %v5731 = vpop.f32.mrf.mxu0
  %v5732 = vadd.f32 %v5708, %v5731
  %v5733 = vpop.f32.mrf.mxu0
  %v5734 = vadd.f32 %v5710, %v5733
  %5735 = vmatmul.bf16.gmra.mxu0 %v5210
  %v5736 = vpop.f32.mrf.mxu0
  %v5737 = vadd.f32 %v5713, %v5736
  %v5738 = vpop.f32.mrf.mxu0
  %v5739 = vadd.f32 %v5715, %v5738
  %5740 = vmatmul.bf16.gmra.mxu0 %v5214
  %v5741 = vpop.f32.mrf.mxu0
  %v5742 = vadd.f32 %v5718, %v5741
  %v5743 = vpop.f32.mrf.mxu0
  %v5744 = vadd.f32 %v5720, %v5743
  %5745 = vdwg.mxu0
  %5746 = vmatpush.bf16.msra.mxu0 %v5521
  %5747 = vmatpush.bf16.msra.mxu0 %v5519
  %5748 = vmatpush.bf16.msra.mxu0 %v5517
  %5749 = vmatpush.bf16.msra.mxu0 %v5515
  %5750 = vmatpush.bf16.msra.mxu0 %v5513
  %5751 = vmatpush.bf16.msra.mxu0 %v5511
  %5752 = vmatpush.bf16.msra.mxu0 %v5509
  %5753 = vmatpush.bf16.msra.mxu0 %v5507
  %5754 = vmatmul.bf16.gmra.mxu0 %v5207
  %v5755 = vpop.f32.mrf.mxu0
  %v5756 = vadd.f32 %v5732, %v5755
  %v5757 = vpop.f32.mrf.mxu0
  %v5758 = vadd.f32 %v5734, %v5757
  %5759 = vmatmul.bf16.gmra.mxu0 %v5211
  %v5760 = vpop.f32.mrf.mxu0
  %v5761 = vadd.f32 %v5737, %v5760
  %v5762 = vpop.f32.mrf.mxu0
  %v5763 = vadd.f32 %v5739, %v5762
  %5764 = vmatmul.bf16.gmra.mxu0 %v5215
  %v5765 = vpop.f32.mrf.mxu0
  %v5766 = vadd.f32 %v5742, %v5765
  %v5767 = vpop.f32.mrf.mxu0
  %v5768 = vadd.f32 %v5744, %v5767
  %5769 = vdwg.mxu0
  %5770 = vmatpush.bf16.msra.mxu0 %v5537
  %5771 = vmatpush.bf16.msra.mxu0 %v5535
  %5772 = vmatpush.bf16.msra.mxu0 %v5533
  %5773 = vmatpush.bf16.msra.mxu0 %v5531
  %5774 = vmatpush.bf16.msra.mxu0 %v5529
  %5775 = vmatpush.bf16.msra.mxu0 %v5527
  %5776 = vmatpush.bf16.msra.mxu0 %v5525
  %5777 = vmatpush.bf16.msra.mxu0 %v5523
  %5778 = vmatmul.bf16.gmra.mxu0 %v5208
  %v5779 = vpop.f32.mrf.mxu0
  %v5780 = vadd.f32 %v5756, %v5779
  %v5781 = vpop.f32.mrf.mxu0
  %v5782 = vadd.f32 %v5758, %v5781
  %5783 = vmatmul.bf16.gmra.mxu0 %v5212
  %v5784 = vpop.f32.mrf.mxu0
  %v5785 = vadd.f32 %v5761, %v5784
  %v5786 = vpop.f32.mrf.mxu0
  %v5787 = vadd.f32 %v5763, %v5786
  %5788 = vmatmul.bf16.gmra.mxu0 %v5216
  %v5789 = vpop.f32.mrf.mxu0
  %v5790 = vadd.f32 %v5766, %v5789
  %v5791 = vpop.f32.mrf.mxu0
  %v5792 = vadd.f32 %v5768, %v5791
  %5793 = vdwg.mxu0
  %v5794 = vadd.f32 %v5145, %v5684
  %v5795 = vadd.f32 %v5146, %v5780
  %v5796 = vadd.f32 %v5147, %v5686
  %v5797 = vadd.f32 %v5148, %v5782
  %v5798 = vadd.f32 %v5149, %v5689
  %v5799 = vadd.f32 %v5150, %v5785
  %v5800 = vadd.f32 %v5151, %v5691
  %v5801 = vadd.f32 %v5152, %v5787
  %v5802 = vadd.f32 %v5153, %v5694
  %v5803 = vadd.f32 %v5154, %v5790
  %v5804 = vadd.f32 %v5155, %v5696
  %v5805 = vadd.f32 %v5156, %v5792
  %v5806 = vrot.slane %v3259, 2
  %v5807 = vrot.slane %v3260, 2
  %v5808 = vrot.slane %v3261, 2
  %v5809 = vrot.slane %v3262, 2
  %v5810 = vrot.slane %v3263, 2
  %v5811 = vrot.slane %v3264, 2
  %v5812 = vrot.slane %v3265, 2
  %v5813 = vrot.slane %v3266, 2
  %v5814 = vrot.slane %v3267, 2
  %v5815 = vrot.slane %v3268, 2
  %v5816 = vrot.slane %v3269, 2
  %v5817 = vrot.slane %v3270, 2
  %v5818 = vrot.slane %v3271, 2
  %v5819 = vrot.slane %v3272, 2
  %v5820 = vrot.slane %v3273, 2
  %v5821 = vrot.slane %v3274, 2
  %v5822 = vrot.slane %v3275, 2
  %v5823 = vrot.slane %v3276, 2
  %v5824 = vrot.slane %v3277, 2
  %v5825 = vrot.slane %v3278, 2
  %v5826 = vrot.slane %v3279, 2
  %v5827 = vrot.slane %v3280, 2
  %v5828 = vrot.slane %v3281, 2
  %v5829 = vrot.slane %v3282, 2
  %v5830 = vsel %vm2551, %v5822, %v5826
  %v5831 = vsel %vm2551, %v5823, %v5827
  %v5832 = vsel %vm2551, %v5824, %v5828
  %v5833 = vsel %vm2551, %v5825, %v5829
  %v5834 = vsel %vm2551, %v5818, %v5822
  %v5835 = vsel %vm2551, %v5819, %v5823
  %v5836 = vsel %vm2551, %v5820, %v5824
  %v5837 = vsel %vm2551, %v5821, %v5825
  %v5838 = vsel %vm2551, %v5814, %v5818
  %v5839 = vsel %vm2551, %v5815, %v5819
  %v5840 = vsel %vm2551, %v5816, %v5820
  %v5841 = vsel %vm2551, %v5817, %v5821
  %v5842 = vsel %vm2551, %v5810, %v5814
  %v5843 = vsel %vm2551, %v5811, %v5815
  %v5844 = vsel %vm2551, %v5812, %v5816
  %v5845 = vsel %vm2551, %v5813, %v5817
  %v5846 = vsel %vm2551, %v5806, %v5810
  %v5847 = vsel %vm2551, %v5807, %v5811
  %v5848 = vsel %vm2551, %v5808, %v5812
  %v5849 = vsel %vm2551, %v5809, %v5813
  %v5850 = vsel %vm2551, %v5826, %v5806
  %v5851 = vsel %vm2551, %v5827, %v5807
  %v5852 = vsel %vm2551, %v5828, %v5808
  %v5853 = vsel %vm2551, %v5829, %v5809
  %v5854 = vpack.c.bf16 %v5842, %v5846
  %v5855 = vpack.c.bf16 %v5843, %v5847
  %v5856 = vpack.c.bf16 %v5844, %v5848
  %v5857 = vpack.c.bf16 %v5845, %v5849
  %v5858 = vpack.c.bf16 %v5834, %v5838
  %v5859 = vpack.c.bf16 %v5835, %v5839
  %v5860 = vpack.c.bf16 %v5836, %v5840
  %v5861 = vpack.c.bf16 %v5837, %v5841
  %v5862 = vpack.c.bf16 %v5850, %v5830
  %v5863 = vpack.c.bf16 %v5851, %v5831
  %v5864 = vpack.c.bf16 %v5852, %v5832
  %v5865 = vpack.c.bf16 %v5853, %v5833
  %s5866 = scalar_lea.vmem %s4, 2048
  %v5867 = vld [vmem:[%s5866] sm:$0xff]
  %v5868 = vld [vmem:[%s5866 + $0x8] sm:$0xff]
  %v5869 = vld [vmem:[%s5866 + $0x10] sm:$0xff]
  %v5870 = vld [vmem:[%s5866 + $0x18] sm:$0xff]
  %v5871 = vld [vmem:[%s5866 + $0x20] sm:$0xff]
  %v5872 = vld [vmem:[%s5866 + $0x28] sm:$0xff]
  %v5873 = vld [vmem:[%s5866 + $0x30] sm:$0xff]
  %v5874 = vld [vmem:[%s5866 + $0x38] sm:$0xff]
  %v5875 = vld [vmem:[%s5866 + $0x40] sm:$0xff]
  %v5876 = vld [vmem:[%s5866 + $0x48] sm:$0xff]
  %v5877 = vld [vmem:[%s5866 + $0x50] sm:$0xff]
  %v5878 = vld [vmem:[%s5866 + $0x58] sm:$0xff]
  %v5879 = vld [vmem:[%s5866 + $0x60] sm:$0xff]
  %v5880 = vld [vmem:[%s5866 + $0x68] sm:$0xff]
  %v5881 = vld [vmem:[%s5866 + $0x70] sm:$0xff]
  %v5882 = vld [vmem:[%s5866 + $0x78] sm:$0xff]
  %v5883 = vld [vmem:[%s5866 + $0x80] sm:$0xff]
  %v5884 = vld [vmem:[%s5866 + $0x88] sm:$0xff]
  %v5885 = vld [vmem:[%s5866 + $0x90] sm:$0xff]
  %v5886 = vld [vmem:[%s5866 + $0x98] sm:$0xff]
  %v5887 = vld [vmem:[%s5866 + $0xa0] sm:$0xff]
  %v5888 = vld [vmem:[%s5866 + $0xa8] sm:$0xff]
  %v5889 = vld [vmem:[%s5866 + $0xb0] sm:$0xff]
  %v5890 = vld [vmem:[%s5866 + $0xb8] sm:$0xff]
  %v5891 = vld [vmem:[%s5866 + $0xc0] sm:$0xff]
  %v5892 = vld [vmem:[%s5866 + $0xc8] sm:$0xff]
  %v5893 = vld [vmem:[%s5866 + $0xd0] sm:$0xff]
  %v5894 = vld [vmem:[%s5866 + $0xd8] sm:$0xff]
  %v5895 = vld [vmem:[%s5866 + $0xe0] sm:$0xff]
  %v5896 = vld [vmem:[%s5866 + $0xe8] sm:$0xff]
  %v5897 = vld [vmem:[%s5866 + $0xf0] sm:$0xff]
  %v5898 = vld [vmem:[%s5866 + $0xf8] sm:$0xff]
  %v5899 = vld [vmem:[%s5866 + $0x100] sm:$0xff]
  %v5900 = vld [vmem:[%s5866 + $0x108] sm:$0xff]
  %v5901 = vld [vmem:[%s5866 + $0x110] sm:$0xff]
  %v5902 = vld [vmem:[%s5866 + $0x118] sm:$0xff]
  %v5903 = vld [vmem:[%s5866 + $0x120] sm:$0xff]
  %v5904 = vld [vmem:[%s5866 + $0x128] sm:$0xff]
  %v5905 = vld [vmem:[%s5866 + $0x130] sm:$0xff]
  %v5906 = vld [vmem:[%s5866 + $0x138] sm:$0xff]
  %v5907 = vld [vmem:[%s5866 + $0x140] sm:$0xff]
  %v5908 = vld [vmem:[%s5866 + $0x148] sm:$0xff]
  %v5909 = vld [vmem:[%s5866 + $0x150] sm:$0xff]
  %v5910 = vld [vmem:[%s5866 + $0x158] sm:$0xff]
  %v5911 = vld [vmem:[%s5866 + $0x160] sm:$0xff]
  %v5912 = vld [vmem:[%s5866 + $0x168] sm:$0xff]
  %v5913 = vld [vmem:[%s5866 + $0x170] sm:$0xff]
  %v5914 = vld [vmem:[%s5866 + $0x178] sm:$0xff]
  %v5915 = vld [vmem:[%s5866 + $0x180] sm:$0xff]
  %v5916 = vld [vmem:[%s5866 + $0x188] sm:$0xff]
  %v5917 = vld [vmem:[%s5866 + $0x190] sm:$0xff]
  %v5918 = vld [vmem:[%s5866 + $0x198] sm:$0xff]
  %v5919 = vld [vmem:[%s5866 + $0x1a0] sm:$0xff]
  %v5920 = vld [vmem:[%s5866 + $0x1a8] sm:$0xff]
  %v5921 = vld [vmem:[%s5866 + $0x1b0] sm:$0xff]
  %v5922 = vld [vmem:[%s5866 + $0x1b8] sm:$0xff]
  %v5923 = vld [vmem:[%s5866 + $0x1c0] sm:$0xff]
  %v5924 = vld [vmem:[%s5866 + $0x1c8] sm:$0xff]
  %v5925 = vld [vmem:[%s5866 + $0x1d0] sm:$0xff]
  %v5926 = vld [vmem:[%s5866 + $0x1d8] sm:$0xff]
  %v5927 = vld [vmem:[%s5866 + $0x1e0] sm:$0xff]
  %v5928 = vld [vmem:[%s5866 + $0x1e8] sm:$0xff]
  %v5929 = vld [vmem:[%s5866 + $0x1f0] sm:$0xff]
  %v5930 = vld [vmem:[%s5866 + $0x1f8] sm:$0xff]
  %v5995 = vunpack.c.l.b16 %v5867
  %v5996 = vunpack.c.h.b16 %v5867
  %v5997 = vunpack.c.l.b16 %v5868
  %v5998 = vunpack.c.h.b16 %v5868
  %v5999 = vunpack.c.l.b16 %v5869
  %v6000 = vunpack.c.h.b16 %v5869
  %v6001 = vunpack.c.l.b16 %v5870
  %v6002 = vunpack.c.h.b16 %v5870
  %v6003 = vunpack.c.l.b16 %v5871
  %v6004 = vunpack.c.h.b16 %v5871
  %v6005 = vunpack.c.l.b16 %v5872
  %v6006 = vunpack.c.h.b16 %v5872
  %v6007 = vunpack.c.l.b16 %v5873
  %v6008 = vunpack.c.h.b16 %v5873
  %v6009 = vunpack.c.l.b16 %v5874
  %v6010 = vunpack.c.h.b16 %v5874
  %v6011 = vunpack.c.l.b16 %v5875
  %v6012 = vunpack.c.h.b16 %v5875
  %v6013 = vunpack.c.l.b16 %v5876
  %v6014 = vunpack.c.h.b16 %v5876
  %v6015 = vunpack.c.l.b16 %v5877
  %v6016 = vunpack.c.h.b16 %v5877
  %v6017 = vunpack.c.l.b16 %v5878
  %v6018 = vunpack.c.h.b16 %v5878
  %v6019 = vunpack.c.l.b16 %v5879
  %v6020 = vunpack.c.h.b16 %v5879
  %v6021 = vunpack.c.l.b16 %v5880
  %v6022 = vunpack.c.h.b16 %v5880
  %v6023 = vunpack.c.l.b16 %v5881
  %v6024 = vunpack.c.h.b16 %v5881
  %v6025 = vunpack.c.l.b16 %v5882
  %v6026 = vunpack.c.h.b16 %v5882
  %v6027 = vunpack.c.l.b16 %v5883
  %v6028 = vunpack.c.h.b16 %v5883
  %v6029 = vunpack.c.l.b16 %v5884
  %v6030 = vunpack.c.h.b16 %v5884
  %v6031 = vunpack.c.l.b16 %v5885
  %v6032 = vunpack.c.h.b16 %v5885
  %v6033 = vunpack.c.l.b16 %v5886
  %v6034 = vunpack.c.h.b16 %v5886
  %v6035 = vunpack.c.l.b16 %v5887
  %v6036 = vunpack.c.h.b16 %v5887
  %v6037 = vunpack.c.l.b16 %v5888
  %v6038 = vunpack.c.h.b16 %v5888
  %v6039 = vunpack.c.l.b16 %v5889
  %v6040 = vunpack.c.h.b16 %v5889
  %v6041 = vunpack.c.l.b16 %v5890
  %v6042 = vunpack.c.h.b16 %v5890
  %v6043 = vunpack.c.l.b16 %v5891
  %v6044 = vunpack.c.h.b16 %v5891
  %v6045 = vunpack.c.l.b16 %v5892
  %v6046 = vunpack.c.h.b16 %v5892
  %v6047 = vunpack.c.l.b16 %v5893
  %v6048 = vunpack.c.h.b16 %v5893
  %v6049 = vunpack.c.l.b16 %v5894
  %v6050 = vunpack.c.h.b16 %v5894
  %v6051 = vunpack.c.l.b16 %v5895
  %v6052 = vunpack.c.h.b16 %v5895
  %v6053 = vunpack.c.l.b16 %v5896
  %v6054 = vunpack.c.h.b16 %v5896
  %v6055 = vunpack.c.l.b16 %v5897
  %v6056 = vunpack.c.h.b16 %v5897
  %v6057 = vunpack.c.l.b16 %v5898
  %v6058 = vunpack.c.h.b16 %v5898
  %v6059 = vunpack.c.l.b16 %v5899
  %v6060 = vunpack.c.h.b16 %v5899
  %v6061 = vunpack.c.l.b16 %v5900
  %v6062 = vunpack.c.h.b16 %v5900
  %v6063 = vunpack.c.l.b16 %v5901
  %v6064 = vunpack.c.h.b16 %v5901
  %v6065 = vunpack.c.l.b16 %v5902
  %v6066 = vunpack.c.h.b16 %v5902
  %v6067 = vunpack.c.l.b16 %v5903
  %v6068 = vunpack.c.h.b16 %v5903
  %v6069 = vunpack.c.l.b16 %v5904
  %v6070 = vunpack.c.h.b16 %v5904
  %v6071 = vunpack.c.l.b16 %v5905
  %v6072 = vunpack.c.h.b16 %v5905
  %v6073 = vunpack.c.l.b16 %v5906
  %v6074 = vunpack.c.h.b16 %v5906
  %v6075 = vunpack.c.l.b16 %v5907
  %v6076 = vunpack.c.h.b16 %v5907
  %v6077 = vunpack.c.l.b16 %v5908
  %v6078 = vunpack.c.h.b16 %v5908
  %v6079 = vunpack.c.l.b16 %v5909
  %v6080 = vunpack.c.h.b16 %v5909
  %v6081 = vunpack.c.l.b16 %v5910
  %v6082 = vunpack.c.h.b16 %v5910
  %v6083 = vunpack.c.l.b16 %v5911
  %v6084 = vunpack.c.h.b16 %v5911
  %v6085 = vunpack.c.l.b16 %v5912
  %v6086 = vunpack.c.h.b16 %v5912
  %v6087 = vunpack.c.l.b16 %v5913
  %v6088 = vunpack.c.h.b16 %v5913
  %v6089 = vunpack.c.l.b16 %v5914
  %v6090 = vunpack.c.h.b16 %v5914
  %v6091 = vunpack.c.l.b16 %v5915
  %v6092 = vunpack.c.h.b16 %v5915
  %v6093 = vunpack.c.l.b16 %v5916
  %v6094 = vunpack.c.h.b16 %v5916
  %v6095 = vunpack.c.l.b16 %v5917
  %v6096 = vunpack.c.h.b16 %v5917
  %v6097 = vunpack.c.l.b16 %v5918
  %v6098 = vunpack.c.h.b16 %v5918
  %v6099 = vunpack.c.l.b16 %v5919
  %v6100 = vunpack.c.h.b16 %v5919
  %v6101 = vunpack.c.l.b16 %v5920
  %v6102 = vunpack.c.h.b16 %v5920
  %v6103 = vunpack.c.l.b16 %v5921
  %v6104 = vunpack.c.h.b16 %v5921
  %v6105 = vunpack.c.l.b16 %v5922
  %v6106 = vunpack.c.h.b16 %v5922
  %v6107 = vunpack.c.l.b16 %v5923
  %v6108 = vunpack.c.h.b16 %v5923
  %v6109 = vunpack.c.l.b16 %v5924
  %v6110 = vunpack.c.h.b16 %v5924
  %v6111 = vunpack.c.l.b16 %v5925
  %v6112 = vunpack.c.h.b16 %v5925
  %v6113 = vunpack.c.l.b16 %v5926
  %v6114 = vunpack.c.h.b16 %v5926
  %v6115 = vunpack.c.l.b16 %v5927
  %v6116 = vunpack.c.h.b16 %v5927
  %v6117 = vunpack.c.l.b16 %v5928
  %v6118 = vunpack.c.h.b16 %v5928
  %v6119 = vunpack.c.l.b16 %v5929
  %v6120 = vunpack.c.h.b16 %v5929
  %v6121 = vunpack.c.l.b16 %v5930
  %v6122 = vunpack.c.h.b16 %v5930
  %v6123 = vpack.c.b16 %v5997, %v5995
  %v6124 = vpack.c.b16 %v5998, %v5996
  %v6125 = vpack.c.b16 %v6001, %v5999
  %v6126 = vpack.c.b16 %v6002, %v6000
  %v6127 = vpack.c.b16 %v6005, %v6003
  %v6128 = vpack.c.b16 %v6006, %v6004
  %v6129 = vpack.c.b16 %v6009, %v6007
  %v6130 = vpack.c.b16 %v6010, %v6008
  %v6131 = vpack.c.b16 %v6013, %v6011
  %v6132 = vpack.c.b16 %v6014, %v6012
  %v6133 = vpack.c.b16 %v6017, %v6015
  %v6134 = vpack.c.b16 %v6018, %v6016
  %v6135 = vpack.c.b16 %v6021, %v6019
  %v6136 = vpack.c.b16 %v6022, %v6020
  %v6137 = vpack.c.b16 %v6025, %v6023
  %v6138 = vpack.c.b16 %v6026, %v6024
  %v6139 = vpack.c.b16 %v6029, %v6027
  %v6140 = vpack.c.b16 %v6030, %v6028
  %v6141 = vpack.c.b16 %v6033, %v6031
  %v6142 = vpack.c.b16 %v6034, %v6032
  %v6143 = vpack.c.b16 %v6037, %v6035
  %v6144 = vpack.c.b16 %v6038, %v6036
  %v6145 = vpack.c.b16 %v6041, %v6039
  %v6146 = vpack.c.b16 %v6042, %v6040
  %v6147 = vpack.c.b16 %v6045, %v6043
  %v6148 = vpack.c.b16 %v6046, %v6044
  %v6149 = vpack.c.b16 %v6049, %v6047
  %v6150 = vpack.c.b16 %v6050, %v6048
  %v6151 = vpack.c.b16 %v6053, %v6051
  %v6152 = vpack.c.b16 %v6054, %v6052
  %v6153 = vpack.c.b16 %v6057, %v6055
  %v6154 = vpack.c.b16 %v6058, %v6056
  %v6155 = vpack.c.b16 %v6061, %v6059
  %v6156 = vpack.c.b16 %v6062, %v6060
  %v6157 = vpack.c.b16 %v6065, %v6063
  %v6158 = vpack.c.b16 %v6066, %v6064
  %v6159 = vpack.c.b16 %v6069, %v6067
  %v6160 = vpack.c.b16 %v6070, %v6068
  %v6161 = vpack.c.b16 %v6073, %v6071
  %v6162 = vpack.c.b16 %v6074, %v6072
  %v6163 = vpack.c.b16 %v6077, %v6075
  %v6164 = vpack.c.b16 %v6078, %v6076
  %v6165 = vpack.c.b16 %v6081, %v6079
  %v6166 = vpack.c.b16 %v6082, %v6080
  %v6167 = vpack.c.b16 %v6085, %v6083
  %v6168 = vpack.c.b16 %v6086, %v6084
  %v6169 = vpack.c.b16 %v6089, %v6087
  %v6170 = vpack.c.b16 %v6090, %v6088
  %v6171 = vpack.c.b16 %v6093, %v6091
  %v6172 = vpack.c.b16 %v6094, %v6092
  %v6173 = vpack.c.b16 %v6097, %v6095
  %v6174 = vpack.c.b16 %v6098, %v6096
  %v6175 = vpack.c.b16 %v6101, %v6099
  %v6176 = vpack.c.b16 %v6102, %v6100
  %v6177 = vpack.c.b16 %v6105, %v6103
  %v6178 = vpack.c.b16 %v6106, %v6104
  %v6179 = vpack.c.b16 %v6109, %v6107
  %v6180 = vpack.c.b16 %v6110, %v6108
  %v6181 = vpack.c.b16 %v6113, %v6111
  %v6182 = vpack.c.b16 %v6114, %v6112
  %v6183 = vpack.c.b16 %v6117, %v6115
  %v6184 = vpack.c.b16 %v6118, %v6116
  %v6185 = vpack.c.b16 %v6121, %v6119
  %v6186 = vpack.c.b16 %v6122, %v6120
  %6251 = vmatpush.bf16.msra.mxu0 %v6137
  %6252 = vmatpush.bf16.msra.mxu0 %v6135
  %6253 = vmatpush.bf16.msra.mxu0 %v6133
  %6254 = vmatpush.bf16.msra.mxu0 %v6131
  %6255 = vmatpush.bf16.msra.mxu0 %v6129
  %6256 = vmatpush.bf16.msra.mxu0 %v6127
  %6257 = vmatpush.bf16.msra.mxu0 %v6125
  %6258 = vmatpush.bf16.msra.mxu0 %v6123
  %6259 = vmatmul.bf16.gmra.mxu0 %v5854
  %v6260 = vpop.f32.mrf.mxu0
  %v6261 = vadd.f32 0.0, %v6260
  %v6262 = vpop.f32.mrf.mxu0
  %v6263 = vadd.f32 0.0, %v6262
  %6264 = vmatmul.bf16.gmra.mxu0 %v5858
  %v6265 = vpop.f32.mrf.mxu0
  %v6266 = vadd.f32 0.0, %v6265
  %v6267 = vpop.f32.mrf.mxu0
  %v6268 = vadd.f32 0.0, %v6267
  %6269 = vmatmul.bf16.gmra.mxu0 %v5862
  %v6270 = vpop.f32.mrf.mxu0
  %v6271 = vadd.f32 0.0, %v6270
  %v6272 = vpop.f32.mrf.mxu0
  %v6273 = vadd.f32 0.0, %v6272
  %6274 = vdwg.mxu0
  %6275 = vmatpush.bf16.msra.mxu0 %v6153
  %6276 = vmatpush.bf16.msra.mxu0 %v6151
  %6277 = vmatpush.bf16.msra.mxu0 %v6149
  %6278 = vmatpush.bf16.msra.mxu0 %v6147
  %6279 = vmatpush.bf16.msra.mxu0 %v6145
  %6280 = vmatpush.bf16.msra.mxu0 %v6143
  %6281 = vmatpush.bf16.msra.mxu0 %v6141
  %6282 = vmatpush.bf16.msra.mxu0 %v6139
  %6283 = vmatmul.bf16.gmra.mxu0 %v5855
  %v6284 = vpop.f32.mrf.mxu0
  %v6285 = vadd.f32 %v6261, %v6284
  %v6286 = vpop.f32.mrf.mxu0
  %v6287 = vadd.f32 %v6263, %v6286
  %6288 = vmatmul.bf16.gmra.mxu0 %v5859
  %v6289 = vpop.f32.mrf.mxu0
  %v6290 = vadd.f32 %v6266, %v6289
  %v6291 = vpop.f32.mrf.mxu0
  %v6292 = vadd.f32 %v6268, %v6291
  %6293 = vmatmul.bf16.gmra.mxu0 %v5863
  %v6294 = vpop.f32.mrf.mxu0
  %v6295 = vadd.f32 %v6271, %v6294
  %v6296 = vpop.f32.mrf.mxu0
  %v6297 = vadd.f32 %v6273, %v6296
  %6298 = vdwg.mxu0
  %6299 = vmatpush.bf16.msra.mxu0 %v6169
  %6300 = vmatpush.bf16.msra.mxu0 %v6167
  %6301 = vmatpush.bf16.msra.mxu0 %v6165
  %6302 = vmatpush.bf16.msra.mxu0 %v6163
  %6303 = vmatpush.bf16.msra.mxu0 %v6161
  %6304 = vmatpush.bf16.msra.mxu0 %v6159
  %6305 = vmatpush.bf16.msra.mxu0 %v6157
  %6306 = vmatpush.bf16.msra.mxu0 %v6155
  %6307 = vmatmul.bf16.gmra.mxu0 %v5856
  %v6308 = vpop.f32.mrf.mxu0
  %v6309 = vadd.f32 %v6285, %v6308
  %v6310 = vpop.f32.mrf.mxu0
  %v6311 = vadd.f32 %v6287, %v6310
  %6312 = vmatmul.bf16.gmra.mxu0 %v5860
  %v6313 = vpop.f32.mrf.mxu0
  %v6314 = vadd.f32 %v6290, %v6313
  %v6315 = vpop.f32.mrf.mxu0
  %v6316 = vadd.f32 %v6292, %v6315
  %6317 = vmatmul.bf16.gmra.mxu0 %v5864
  %v6318 = vpop.f32.mrf.mxu0
  %v6319 = vadd.f32 %v6295, %v6318
  %v6320 = vpop.f32.mrf.mxu0
  %v6321 = vadd.f32 %v6297, %v6320
  %6322 = vdwg.mxu0
  %6323 = vmatpush.bf16.msra.mxu0 %v6185
  %6324 = vmatpush.bf16.msra.mxu0 %v6183
  %6325 = vmatpush.bf16.msra.mxu0 %v6181
  %6326 = vmatpush.bf16.msra.mxu0 %v6179
  %6327 = vmatpush.bf16.msra.mxu0 %v6177
  %6328 = vmatpush.bf16.msra.mxu0 %v6175
  %6329 = vmatpush.bf16.msra.mxu0 %v6173
  %6330 = vmatpush.bf16.msra.mxu0 %v6171
  %6331 = vmatmul.bf16.gmra.mxu0 %v5857
  %v6332 = vpop.f32.mrf.mxu0
  %v6333 = vadd.f32 %v6309, %v6332
  %v6334 = vpop.f32.mrf.mxu0
  %v6335 = vadd.f32 %v6311, %v6334
  %6336 = vmatmul.bf16.gmra.mxu0 %v5861
  %v6337 = vpop.f32.mrf.mxu0
  %v6338 = vadd.f32 %v6314, %v6337
  %v6339 = vpop.f32.mrf.mxu0
  %v6340 = vadd.f32 %v6316, %v6339
  %6341 = vmatmul.bf16.gmra.mxu0 %v5865
  %v6342 = vpop.f32.mrf.mxu0
  %v6343 = vadd.f32 %v6319, %v6342
  %v6344 = vpop.f32.mrf.mxu0
  %v6345 = vadd.f32 %v6321, %v6344
  %6346 = vdwg.mxu0
  %6347 = vmatpush.bf16.msra.mxu0 %v6138
  %6348 = vmatpush.bf16.msra.mxu0 %v6136
  %6349 = vmatpush.bf16.msra.mxu0 %v6134
  %6350 = vmatpush.bf16.msra.mxu0 %v6132
  %6351 = vmatpush.bf16.msra.mxu0 %v6130
  %6352 = vmatpush.bf16.msra.mxu0 %v6128
  %6353 = vmatpush.bf16.msra.mxu0 %v6126
  %6354 = vmatpush.bf16.msra.mxu0 %v6124
  %6355 = vmatmul.bf16.gmra.mxu0 %v5854
  %v6356 = vpop.f32.mrf.mxu0
  %v6357 = vadd.f32 0.0, %v6356
  %v6358 = vpop.f32.mrf.mxu0
  %v6359 = vadd.f32 0.0, %v6358
  %6360 = vmatmul.bf16.gmra.mxu0 %v5858
  %v6361 = vpop.f32.mrf.mxu0
  %v6362 = vadd.f32 0.0, %v6361
  %v6363 = vpop.f32.mrf.mxu0
  %v6364 = vadd.f32 0.0, %v6363
  %6365 = vmatmul.bf16.gmra.mxu0 %v5862
  %v6366 = vpop.f32.mrf.mxu0
  %v6367 = vadd.f32 0.0, %v6366
  %v6368 = vpop.f32.mrf.mxu0
  %v6369 = vadd.f32 0.0, %v6368
  %6370 = vdwg.mxu0
  %6371 = vmatpush.bf16.msra.mxu0 %v6154
  %6372 = vmatpush.bf16.msra.mxu0 %v6152
  %6373 = vmatpush.bf16.msra.mxu0 %v6150
  %6374 = vmatpush.bf16.msra.mxu0 %v6148
  %6375 = vmatpush.bf16.msra.mxu0 %v6146
  %6376 = vmatpush.bf16.msra.mxu0 %v6144
  %6377 = vmatpush.bf16.msra.mxu0 %v6142
  %6378 = vmatpush.bf16.msra.mxu0 %v6140
  %6379 = vmatmul.bf16.gmra.mxu0 %v5855
  %v6380 = vpop.f32.mrf.mxu0
  %v6381 = vadd.f32 %v6357, %v6380
  %v6382 = vpop.f32.mrf.mxu0
  %v6383 = vadd.f32 %v6359, %v6382
  %6384 = vmatmul.bf16.gmra.mxu0 %v5859
  %v6385 = vpop.f32.mrf.mxu0
  %v6386 = vadd.f32 %v6362, %v6385
  %v6387 = vpop.f32.mrf.mxu0
  %v6388 = vadd.f32 %v6364, %v6387
  %6389 = vmatmul.bf16.gmra.mxu0 %v5863
  %v6390 = vpop.f32.mrf.mxu0
  %v6391 = vadd.f32 %v6367, %v6390
  %v6392 = vpop.f32.mrf.mxu0
  %v6393 = vadd.f32 %v6369, %v6392
  %6394 = vdwg.mxu0
  %6395 = vmatpush.bf16.msra.mxu0 %v6170
  %6396 = vmatpush.bf16.msra.mxu0 %v6168
  %6397 = vmatpush.bf16.msra.mxu0 %v6166
  %6398 = vmatpush.bf16.msra.mxu0 %v6164
  %6399 = vmatpush.bf16.msra.mxu0 %v6162
  %6400 = vmatpush.bf16.msra.mxu0 %v6160
  %6401 = vmatpush.bf16.msra.mxu0 %v6158
  %6402 = vmatpush.bf16.msra.mxu0 %v6156
  %6403 = vmatmul.bf16.gmra.mxu0 %v5856
  %v6404 = vpop.f32.mrf.mxu0
  %v6405 = vadd.f32 %v6381, %v6404
  %v6406 = vpop.f32.mrf.mxu0
  %v6407 = vadd.f32 %v6383, %v6406
  %6408 = vmatmul.bf16.gmra.mxu0 %v5860
  %v6409 = vpop.f32.mrf.mxu0
  %v6410 = vadd.f32 %v6386, %v6409
  %v6411 = vpop.f32.mrf.mxu0
  %v6412 = vadd.f32 %v6388, %v6411
  %6413 = vmatmul.bf16.gmra.mxu0 %v5864
  %v6414 = vpop.f32.mrf.mxu0
  %v6415 = vadd.f32 %v6391, %v6414
  %v6416 = vpop.f32.mrf.mxu0
  %v6417 = vadd.f32 %v6393, %v6416
  %6418 = vdwg.mxu0
  %6419 = vmatpush.bf16.msra.mxu0 %v6186
  %6420 = vmatpush.bf16.msra.mxu0 %v6184
  %6421 = vmatpush.bf16.msra.mxu0 %v6182
  %6422 = vmatpush.bf16.msra.mxu0 %v6180
  %6423 = vmatpush.bf16.msra.mxu0 %v6178
  %6424 = vmatpush.bf16.msra.mxu0 %v6176
  %6425 = vmatpush.bf16.msra.mxu0 %v6174
  %6426 = vmatpush.bf16.msra.mxu0 %v6172
  %6427 = vmatmul.bf16.gmra.mxu0 %v5857
  %v6428 = vpop.f32.mrf.mxu0
  %v6429 = vadd.f32 %v6405, %v6428
  %v6430 = vpop.f32.mrf.mxu0
  %v6431 = vadd.f32 %v6407, %v6430
  %6432 = vmatmul.bf16.gmra.mxu0 %v5861
  %v6433 = vpop.f32.mrf.mxu0
  %v6434 = vadd.f32 %v6410, %v6433
  %v6435 = vpop.f32.mrf.mxu0
  %v6436 = vadd.f32 %v6412, %v6435
  %6437 = vmatmul.bf16.gmra.mxu0 %v5865
  %v6438 = vpop.f32.mrf.mxu0
  %v6439 = vadd.f32 %v6415, %v6438
  %v6440 = vpop.f32.mrf.mxu0
  %v6441 = vadd.f32 %v6417, %v6440
  %6442 = vdwg.mxu0
  %v6443 = vadd.f32 %v5794, %v6333
  %v6444 = vadd.f32 %v5795, %v6429
  %v6445 = vadd.f32 %v5796, %v6335
  %v6446 = vadd.f32 %v5797, %v6431
  %v6447 = vadd.f32 %v5798, %v6338
  %v6448 = vadd.f32 %v5799, %v6434
  %v6449 = vadd.f32 %v5800, %v6340
  %v6450 = vadd.f32 %v5801, %v6436
  %v6451 = vadd.f32 %v5802, %v6343
  %v6452 = vadd.f32 %v5803, %v6439
  %v6453 = vadd.f32 %v5804, %v6345
  %v6454 = vadd.f32 %v5805, %v6441
  %v6455 = vld [vmem:[%s5] sm:$0x3]
  %v6457 = vperm.slane %v6455, 0
  %v6458 = vperm.slane %v6455, 1
  %v6461 = vadd.f32 %v6443, %v6457
  %v6462 = vadd.f32 %v6444, %v6458
  %v6463 = vadd.f32 %v6445, %v6457
  %v6464 = vadd.f32 %v6446, %v6458
  %v6465 = vadd.f32 %v6447, %v6457
  %v6466 = vadd.f32 %v6448, %v6458
  %v6467 = vadd.f32 %v6449, %v6457
  %v6468 = vadd.f32 %v6450, %v6458
  %v6469 = vadd.f32 %v6451, %v6457
  %v6470 = vadd.f32 %v6452, %v6458
  %v6471 = vadd.f32 %v6453, %v6457
  %v6472 = vadd.f32 %v6454, %v6458
  %v6473 = vmax.f32 %v6461, 0.0
  %v6474 = vmax.f32 %v6462, 0.0
  %v6475 = vmax.f32 %v6463, 0.0
  %v6476 = vmax.f32 %v6464, 0.0
  %v6477 = vmax.f32 %v6465, 0.0
  %v6478 = vmax.f32 %v6466, 0.0
  %v6479 = vmax.f32 %v6467, 0.0
  %v6480 = vmax.f32 %v6468, 0.0
  %v6481 = vmax.f32 %v6469, 0.0
  %v6482 = vmax.f32 %v6470, 0.0
  %v6483 = vmax.f32 %v6471, 0.0
  %v6484 = vmax.f32 %v6472, 0.0
  %v6485 = vmul.f32 %v6473, %v3232
  %v6486 = vmul.f32 %v6474, %v3232
  %v6487 = vmul.f32 %v6475, %v3237
  %v6488 = vmul.f32 %v6476, %v3237
  %v6489 = vmul.f32 %v6477, %v3242
  %v6490 = vmul.f32 %v6478, %v3242
  %v6491 = vmul.f32 %v6479, %v3247
  %v6492 = vmul.f32 %v6480, %v3247
  %v6493 = vmul.f32 %v6481, %v3252
  %v6494 = vmul.f32 %v6482, %v3252
  %v6495 = vmul.f32 %v6483, %v3257
  %v6496 = vmul.f32 %v6484, %v3257
  %v6497 = vrot.slane %v6485, 6
  %v6498 = vrot.slane %v6486, 6
  %v6499 = vrot.slane %v6487, 6
  %v6500 = vrot.slane %v6488, 6
  %v6501 = vrot.slane %v6489, 6
  %v6502 = vrot.slane %v6490, 6
  %v6503 = vrot.slane %v6491, 6
  %v6504 = vrot.slane %v6492, 6
  %v6505 = vrot.slane %v6493, 6
  %v6506 = vrot.slane %v6494, 6
  %v6507 = vrot.slane %v6495, 6
  %v6508 = vrot.slane %v6496, 6
  %v6509 = vsel %vm73, %v6505, %v6507
  %v6510 = vsel %vm73, %v6506, %v6508
  %v6511 = vsel %vm73, %v6503, %v6505
  %v6512 = vsel %vm73, %v6504, %v6506
  %v6513 = vsel %vm73, %v6501, %v6503
  %v6514 = vsel %vm73, %v6502, %v6504
  %v6515 = vsel %vm73, %v6499, %v6501
  %v6516 = vsel %vm73, %v6500, %v6502
  %v6517 = vsel %vm73, %v6497, %v6499
  %v6518 = vsel %vm73, %v6498, %v6500
  %v6519 = vsel %vm73, %v6507, %v6497
  %v6520 = vsel %vm73, %v6508, %v6498
  %v6521 = vpack.c.bf16 %v6517, %v6519
  %v6522 = vpack.c.bf16 %v6518, %v6520
  %v6523 = vpack.c.bf16 %v6513, %v6515
  %v6524 = vpack.c.bf16 %v6514, %v6516
  %v6525 = vpack.c.bf16 %v6509, %v6511
  %v6526 = vpack.c.bf16 %v6510, %v6512
  %v6527 = vld [vmem:[%s6] sm:$0xf]
  %v6528 = vld [vmem:[%s6 + $0x4] sm:$0xf]
  %v6529 = vld [vmem:[%s6 + $0x8] sm:$0xf]
  %v6530 = vld [vmem:[%s6 + $0xc] sm:$0xf]
  %v6531 = vld [vmem:[%s6 + $0x10] sm:$0xf]
  %v6532 = vld [vmem:[%s6 + $0x14] sm:$0xf]
  %v6533 = vld [vmem:[%s6 + $0x18] sm:$0xf]
  %v6534 = vld [vmem:[%s6 + $0x1c] sm:$0xf]
  %v6535 = vld [vmem:[%s6 + $0x20] sm:$0xf]
  %v6536 = vld [vmem:[%s6 + $0x24] sm:$0xf]
  %v6537 = vld [vmem:[%s6 + $0x28] sm:$0xf]
  %v6538 = vld [vmem:[%s6 + $0x2c] sm:$0xf]
  %v6539 = vld [vmem:[%s6 + $0x30] sm:$0xf]
  %v6540 = vld [vmem:[%s6 + $0x34] sm:$0xf]
  %v6541 = vld [vmem:[%s6 + $0x38] sm:$0xf]
  %v6542 = vld [vmem:[%s6 + $0x3c] sm:$0xf]
  %v6543 = vld [vmem:[%s6 + $0x40] sm:$0xf]
  %v6544 = vld [vmem:[%s6 + $0x44] sm:$0xf]
  %v6545 = vld [vmem:[%s6 + $0x48] sm:$0xf]
  %v6546 = vld [vmem:[%s6 + $0x4c] sm:$0xf]
  %v6547 = vld [vmem:[%s6 + $0x50] sm:$0xf]
  %v6548 = vld [vmem:[%s6 + $0x54] sm:$0xf]
  %v6549 = vld [vmem:[%s6 + $0x58] sm:$0xf]
  %v6550 = vld [vmem:[%s6 + $0x5c] sm:$0xf]
  %v6551 = vld [vmem:[%s6 + $0x60] sm:$0xf]
  %v6552 = vld [vmem:[%s6 + $0x64] sm:$0xf]
  %v6553 = vld [vmem:[%s6 + $0x68] sm:$0xf]
  %v6554 = vld [vmem:[%s6 + $0x6c] sm:$0xf]
  %v6555 = vld [vmem:[%s6 + $0x70] sm:$0xf]
  %v6556 = vld [vmem:[%s6 + $0x74] sm:$0xf]
  %v6557 = vld [vmem:[%s6 + $0x78] sm:$0xf]
  %v6558 = vld [vmem:[%s6 + $0x7c] sm:$0xf]
  %v6559 = vrot.slane %v6485, 7
  %v6560 = vrot.slane %v6486, 7
  %v6561 = vrot.slane %v6487, 7
  %v6562 = vrot.slane %v6488, 7
  %v6563 = vrot.slane %v6489, 7
  %v6564 = vrot.slane %v6490, 7
  %v6565 = vrot.slane %v6491, 7
  %v6566 = vrot.slane %v6492, 7
  %v6567 = vrot.slane %v6493, 7
  %v6568 = vrot.slane %v6494, 7
  %v6569 = vrot.slane %v6495, 7
  %v6570 = vrot.slane %v6496, 7
  %v6571 = vsel %vm168, %v6567, %v6569
  %v6572 = vsel %vm168, %v6568, %v6570
  %v6573 = vsel %vm168, %v6565, %v6567
  %v6574 = vsel %vm168, %v6566, %v6568
  %v6575 = vsel %vm168, %v6563, %v6565
  %v6576 = vsel %vm168, %v6564, %v6566
  %v6577 = vsel %vm168, %v6561, %v6563
  %v6578 = vsel %vm168, %v6562, %v6564
  %v6579 = vsel %vm168, %v6559, %v6561
  %v6580 = vsel %vm168, %v6560, %v6562
  %v6581 = vsel %vm168, %v6569, %v6559
  %v6582 = vsel %vm168, %v6570, %v6560
  %v6583 = vpack.c.bf16 %v6579, %v6581
  %v6584 = vpack.c.bf16 %v6580, %v6582
  %v6585 = vpack.c.bf16 %v6575, %v6577
  %v6586 = vpack.c.bf16 %v6576, %v6578
  %v6587 = vpack.c.bf16 %v6571, %v6573
  %v6588 = vpack.c.bf16 %v6572, %v6574
  %s6589 = scalar_lea.vmem %s6, 128
  %v6590 = vld [vmem:[%s6589] sm:$0xf]
  %v6591 = vld [vmem:[%s6589 + $0x4] sm:$0xf]
  %v6592 = vld [vmem:[%s6589 + $0x8] sm:$0xf]
  %v6593 = vld [vmem:[%s6589 + $0xc] sm:$0xf]
  %v6594 = vld [vmem:[%s6589 + $0x10] sm:$0xf]
  %v6595 = vld [vmem:[%s6589 + $0x14] sm:$0xf]
  %v6596 = vld [vmem:[%s6589 + $0x18] sm:$0xf]
  %v6597 = vld [vmem:[%s6589 + $0x1c] sm:$0xf]
  %v6598 = vld [vmem:[%s6589 + $0x20] sm:$0xf]
  %v6599 = vld [vmem:[%s6589 + $0x24] sm:$0xf]
  %v6600 = vld [vmem:[%s6589 + $0x28] sm:$0xf]
  %v6601 = vld [vmem:[%s6589 + $0x2c] sm:$0xf]
  %v6602 = vld [vmem:[%s6589 + $0x30] sm:$0xf]
  %v6603 = vld [vmem:[%s6589 + $0x34] sm:$0xf]
  %v6604 = vld [vmem:[%s6589 + $0x38] sm:$0xf]
  %v6605 = vld [vmem:[%s6589 + $0x3c] sm:$0xf]
  %v6606 = vld [vmem:[%s6589 + $0x40] sm:$0xf]
  %v6607 = vld [vmem:[%s6589 + $0x44] sm:$0xf]
  %v6608 = vld [vmem:[%s6589 + $0x48] sm:$0xf]
  %v6609 = vld [vmem:[%s6589 + $0x4c] sm:$0xf]
  %v6610 = vld [vmem:[%s6589 + $0x50] sm:$0xf]
  %v6611 = vld [vmem:[%s6589 + $0x54] sm:$0xf]
  %v6612 = vld [vmem:[%s6589 + $0x58] sm:$0xf]
  %v6613 = vld [vmem:[%s6589 + $0x5c] sm:$0xf]
  %v6614 = vld [vmem:[%s6589 + $0x60] sm:$0xf]
  %v6615 = vld [vmem:[%s6589 + $0x64] sm:$0xf]
  %v6616 = vld [vmem:[%s6589 + $0x68] sm:$0xf]
  %v6617 = vld [vmem:[%s6589 + $0x6c] sm:$0xf]
  %v6618 = vld [vmem:[%s6589 + $0x70] sm:$0xf]
  %v6619 = vld [vmem:[%s6589 + $0x74] sm:$0xf]
  %v6620 = vld [vmem:[%s6589 + $0x78] sm:$0xf]
  %v6621 = vld [vmem:[%s6589 + $0x7c] sm:$0xf]
  %v6654 = vunpack.c.l.b16 %v6590
  %v6655 = vunpack.c.l.b16 %v6591
  %v6656 = vunpack.c.l.b16 %v6592
  %v6657 = vunpack.c.l.b16 %v6593
  %v6658 = vunpack.c.l.b16 %v6594
  %v6659 = vunpack.c.l.b16 %v6595
  %v6660 = vunpack.c.l.b16 %v6596
  %v6661 = vunpack.c.l.b16 %v6597
  %v6662 = vunpack.c.l.b16 %v6598
  %v6663 = vunpack.c.l.b16 %v6599
  %v6664 = vunpack.c.l.b16 %v6600
  %v6665 = vunpack.c.l.b16 %v6601
  %v6666 = vunpack.c.l.b16 %v6602
  %v6667 = vunpack.c.l.b16 %v6603
  %v6668 = vunpack.c.l.b16 %v6604
  %v6669 = vunpack.c.l.b16 %v6605
  %v6670 = vunpack.c.l.b16 %v6606
  %v6671 = vunpack.c.l.b16 %v6607
  %v6672 = vunpack.c.l.b16 %v6608
  %v6673 = vunpack.c.l.b16 %v6609
  %v6674 = vunpack.c.l.b16 %v6610
  %v6675 = vunpack.c.l.b16 %v6611
  %v6676 = vunpack.c.l.b16 %v6612
  %v6677 = vunpack.c.l.b16 %v6613
  %v6678 = vunpack.c.l.b16 %v6614
  %v6679 = vunpack.c.l.b16 %v6615
  %v6680 = vunpack.c.l.b16 %v6616
  %v6681 = vunpack.c.l.b16 %v6617
  %v6682 = vunpack.c.l.b16 %v6618
  %v6683 = vunpack.c.l.b16 %v6619
  %v6684 = vunpack.c.l.b16 %v6620
  %v6685 = vunpack.c.l.b16 %v6621
  %v6686 = vpack.c.b16 %v6655, %v6654
  %v6687 = vpack.c.b16 %v6657, %v6656
  %v6688 = vpack.c.b16 %v6659, %v6658
  %v6689 = vpack.c.b16 %v6661, %v6660
  %v6690 = vpack.c.b16 %v6663, %v6662
  %v6691 = vpack.c.b16 %v6665, %v6664
  %v6692 = vpack.c.b16 %v6667, %v6666
  %v6693 = vpack.c.b16 %v6669, %v6668
  %v6694 = vpack.c.b16 %v6671, %v6670
  %v6695 = vpack.c.b16 %v6673, %v6672
  %v6696 = vpack.c.b16 %v6675, %v6674
  %v6697 = vpack.c.b16 %v6677, %v6676
  %v6698 = vpack.c.b16 %v6679, %v6678
  %v6699 = vpack.c.b16 %v6681, %v6680
  %v6700 = vpack.c.b16 %v6683, %v6682
  %v6701 = vpack.c.b16 %v6685, %v6684
  %6718 = vmatpush.bf16.msra.mxu0 %v6693
  %6719 = vmatpush.bf16.msra.mxu0 %v6692
  %6720 = vmatpush.bf16.msra.mxu0 %v6691
  %6721 = vmatpush.bf16.msra.mxu0 %v6690
  %6722 = vmatpush.bf16.msra.mxu0 %v6689
  %6723 = vmatpush.bf16.msra.mxu0 %v6688
  %6724 = vmatpush.bf16.msra.mxu0 %v6687
  %6725 = vmatpush.bf16.msra.mxu0 %v6686
  %6726 = vmatmul.bf16.gmra.mxu0 %v6583
  %v6727 = vpop.f32.mrf.mxu0
  %v6728 = vadd.f32 0.0, %v6727
  %v6729 = vpop.f32.mrf.mxu0
  %v6730 = vadd.f32 0.0, %v6729
  %6731 = vmatmul.bf16.gmra.mxu0 %v6585
  %v6732 = vpop.f32.mrf.mxu0
  %v6733 = vadd.f32 0.0, %v6732
  %v6734 = vpop.f32.mrf.mxu0
  %v6735 = vadd.f32 0.0, %v6734
  %6736 = vmatmul.bf16.gmra.mxu0 %v6587
  %v6737 = vpop.f32.mrf.mxu0
  %v6738 = vadd.f32 0.0, %v6737
  %v6739 = vpop.f32.mrf.mxu0
  %v6740 = vadd.f32 0.0, %v6739
  %6741 = vdwg.mxu0
  %6742 = vmatpush.bf16.msra.mxu0 %v6701
  %6743 = vmatpush.bf16.msra.mxu0 %v6700
  %6744 = vmatpush.bf16.msra.mxu0 %v6699
  %6745 = vmatpush.bf16.msra.mxu0 %v6698
  %6746 = vmatpush.bf16.msra.mxu0 %v6697
  %6747 = vmatpush.bf16.msra.mxu0 %v6696
  %6748 = vmatpush.bf16.msra.mxu0 %v6695
  %6749 = vmatpush.bf16.msra.mxu0 %v6694
  %6750 = vmatmul.bf16.gmra.mxu0 %v6584
  %v6751 = vpop.f32.mrf.mxu0
  %v6752 = vadd.f32 %v6728, %v6751
  %v6753 = vpop.f32.mrf.mxu0
  %v6754 = vadd.f32 %v6730, %v6753
  %6755 = vmatmul.bf16.gmra.mxu0 %v6586
  %v6756 = vpop.f32.mrf.mxu0
  %v6757 = vadd.f32 %v6733, %v6756
  %v6758 = vpop.f32.mrf.mxu0
  %v6759 = vadd.f32 %v6735, %v6758
  %6760 = vmatmul.bf16.gmra.mxu0 %v6588
  %v6761 = vpop.f32.mrf.mxu0
  %v6762 = vadd.f32 %v6738, %v6761
  %v6763 = vpop.f32.mrf.mxu0
  %v6764 = vadd.f32 %v6740, %v6763
  %6765 = vdwg.mxu0
  %v6798 = vunpack.c.l.b16 %v6527
  %v6799 = vunpack.c.l.b16 %v6528
  %v6800 = vunpack.c.l.b16 %v6529
  %v6801 = vunpack.c.l.b16 %v6530
  %v6802 = vunpack.c.l.b16 %v6531
  %v6803 = vunpack.c.l.b16 %v6532
  %v6804 = vunpack.c.l.b16 %v6533
  %v6805 = vunpack.c.l.b16 %v6534
  %v6806 = vunpack.c.l.b16 %v6535
  %v6807 = vunpack.c.l.b16 %v6536
  %v6808 = vunpack.c.l.b16 %v6537
  %v6809 = vunpack.c.l.b16 %v6538
  %v6810 = vunpack.c.l.b16 %v6539
  %v6811 = vunpack.c.l.b16 %v6540
  %v6812 = vunpack.c.l.b16 %v6541
  %v6813 = vunpack.c.l.b16 %v6542
  %v6814 = vunpack.c.l.b16 %v6543
  %v6815 = vunpack.c.l.b16 %v6544
  %v6816 = vunpack.c.l.b16 %v6545
  %v6817 = vunpack.c.l.b16 %v6546
  %v6818 = vunpack.c.l.b16 %v6547
  %v6819 = vunpack.c.l.b16 %v6548
  %v6820 = vunpack.c.l.b16 %v6549
  %v6821 = vunpack.c.l.b16 %v6550
  %v6822 = vunpack.c.l.b16 %v6551
  %v6823 = vunpack.c.l.b16 %v6552
  %v6824 = vunpack.c.l.b16 %v6553
  %v6825 = vunpack.c.l.b16 %v6554
  %v6826 = vunpack.c.l.b16 %v6555
  %v6827 = vunpack.c.l.b16 %v6556
  %v6828 = vunpack.c.l.b16 %v6557
  %v6829 = vunpack.c.l.b16 %v6558
  %v6830 = vpack.c.b16 %v6799, %v6798
  %v6831 = vpack.c.b16 %v6801, %v6800
  %v6832 = vpack.c.b16 %v6803, %v6802
  %v6833 = vpack.c.b16 %v6805, %v6804
  %v6834 = vpack.c.b16 %v6807, %v6806
  %v6835 = vpack.c.b16 %v6809, %v6808
  %v6836 = vpack.c.b16 %v6811, %v6810
  %v6837 = vpack.c.b16 %v6813, %v6812
  %v6838 = vpack.c.b16 %v6815, %v6814
  %v6839 = vpack.c.b16 %v6817, %v6816
  %v6840 = vpack.c.b16 %v6819, %v6818
  %v6841 = vpack.c.b16 %v6821, %v6820
  %v6842 = vpack.c.b16 %v6823, %v6822
  %v6843 = vpack.c.b16 %v6825, %v6824
  %v6844 = vpack.c.b16 %v6827, %v6826
  %v6845 = vpack.c.b16 %v6829, %v6828
  %6862 = vmatpush.bf16.msra.mxu0 %v6837
  %6863 = vmatpush.bf16.msra.mxu0 %v6836
  %6864 = vmatpush.bf16.msra.mxu0 %v6835
  %6865 = vmatpush.bf16.msra.mxu0 %v6834
  %6866 = vmatpush.bf16.msra.mxu0 %v6833
  %6867 = vmatpush.bf16.msra.mxu0 %v6832
  %6868 = vmatpush.bf16.msra.mxu0 %v6831
  %6869 = vmatpush.bf16.msra.mxu0 %v6830
  %6870 = vmatmul.bf16.gmra.mxu0 %v6521
  %v6871 = vpop.f32.mrf.mxu0
  %v6872 = vadd.f32 %v6752, %v6871
  %v6873 = vpop.f32.mrf.mxu0
  %v6874 = vadd.f32 %v6754, %v6873
  %6875 = vmatmul.bf16.gmra.mxu0 %v6523
  %v6876 = vpop.f32.mrf.mxu0
  %v6877 = vadd.f32 %v6757, %v6876
  %v6878 = vpop.f32.mrf.mxu0
  %v6879 = vadd.f32 %v6759, %v6878
  %6880 = vmatmul.bf16.gmra.mxu0 %v6525
  %v6881 = vpop.f32.mrf.mxu0
  %v6882 = vadd.f32 %v6762, %v6881
  %v6883 = vpop.f32.mrf.mxu0
  %v6884 = vadd.f32 %v6764, %v6883
  %6885 = vdwg.mxu0
  %6886 = vmatpush.bf16.msra.mxu0 %v6845
  %6887 = vmatpush.bf16.msra.mxu0 %v6844
  %6888 = vmatpush.bf16.msra.mxu0 %v6843
  %6889 = vmatpush.bf16.msra.mxu0 %v6842
  %6890 = vmatpush.bf16.msra.mxu0 %v6841
  %6891 = vmatpush.bf16.msra.mxu0 %v6840
  %6892 = vmatpush.bf16.msra.mxu0 %v6839
  %6893 = vmatpush.bf16.msra.mxu0 %v6838
  %6894 = vmatmul.bf16.gmra.mxu0 %v6522
  %v6895 = vpop.f32.mrf.mxu0
  %v6896 = vadd.f32 %v6872, %v6895
  %v6897 = vpop.f32.mrf.mxu0
  %v6898 = vadd.f32 %v6874, %v6897
  %6899 = vmatmul.bf16.gmra.mxu0 %v6524
  %v6900 = vpop.f32.mrf.mxu0
  %v6901 = vadd.f32 %v6877, %v6900
  %v6902 = vpop.f32.mrf.mxu0
  %v6903 = vadd.f32 %v6879, %v6902
  %6904 = vmatmul.bf16.gmra.mxu0 %v6526
  %v6905 = vpop.f32.mrf.mxu0
  %v6906 = vadd.f32 %v6882, %v6905
  %v6907 = vpop.f32.mrf.mxu0
  %v6908 = vadd.f32 %v6884, %v6907
  %6909 = vdwg.mxu0
  %v6910 = vpack.c.bf16 %v6487, %v6485
  %v6911 = vpack.c.bf16 %v6488, %v6486
  %v6912 = vpack.c.bf16 %v6491, %v6489
  %v6913 = vpack.c.bf16 %v6492, %v6490
  %v6914 = vpack.c.bf16 %v6495, %v6493
  %v6915 = vpack.c.bf16 %v6496, %v6494
  %s6916 = scalar_lea.vmem %s6, 256
  %v6917 = vld [vmem:[%s6916] sm:$0xf]
  %v6918 = vld [vmem:[%s6916 + $0x4] sm:$0xf]
  %v6919 = vld [vmem:[%s6916 + $0x8] sm:$0xf]
  %v6920 = vld [vmem:[%s6916 + $0xc] sm:$0xf]
  %v6921 = vld [vmem:[%s6916 + $0x10] sm:$0xf]
  %v6922 = vld [vmem:[%s6916 + $0x14] sm:$0xf]
  %v6923 = vld [vmem:[%s6916 + $0x18] sm:$0xf]
  %v6924 = vld [vmem:[%s6916 + $0x1c] sm:$0xf]
  %v6925 = vld [vmem:[%s6916 + $0x20] sm:$0xf]
  %v6926 = vld [vmem:[%s6916 + $0x24] sm:$0xf]
  %v6927 = vld [vmem:[%s6916 + $0x28] sm:$0xf]
  %v6928 = vld [vmem:[%s6916 + $0x2c] sm:$0xf]
  %v6929 = vld [vmem:[%s6916 + $0x30] sm:$0xf]
  %v6930 = vld [vmem:[%s6916 + $0x34] sm:$0xf]
  %v6931 = vld [vmem:[%s6916 + $0x38] sm:$0xf]
  %v6932 = vld [vmem:[%s6916 + $0x3c] sm:$0xf]
  %v6933 = vld [vmem:[%s6916 + $0x40] sm:$0xf]
  %v6934 = vld [vmem:[%s6916 + $0x44] sm:$0xf]
  %v6935 = vld [vmem:[%s6916 + $0x48] sm:$0xf]
  %v6936 = vld [vmem:[%s6916 + $0x4c] sm:$0xf]
  %v6937 = vld [vmem:[%s6916 + $0x50] sm:$0xf]
  %v6938 = vld [vmem:[%s6916 + $0x54] sm:$0xf]
  %v6939 = vld [vmem:[%s6916 + $0x58] sm:$0xf]
  %v6940 = vld [vmem:[%s6916 + $0x5c] sm:$0xf]
  %v6941 = vld [vmem:[%s6916 + $0x60] sm:$0xf]
  %v6942 = vld [vmem:[%s6916 + $0x64] sm:$0xf]
  %v6943 = vld [vmem:[%s6916 + $0x68] sm:$0xf]
  %v6944 = vld [vmem:[%s6916 + $0x6c] sm:$0xf]
  %v6945 = vld [vmem:[%s6916 + $0x70] sm:$0xf]
  %v6946 = vld [vmem:[%s6916 + $0x74] sm:$0xf]
  %v6947 = vld [vmem:[%s6916 + $0x78] sm:$0xf]
  %v6948 = vld [vmem:[%s6916 + $0x7c] sm:$0xf]
  %v6981 = vunpack.c.l.b16 %v6917
  %v6982 = vunpack.c.l.b16 %v6918
  %v6983 = vunpack.c.l.b16 %v6919
  %v6984 = vunpack.c.l.b16 %v6920
  %v6985 = vunpack.c.l.b16 %v6921
  %v6986 = vunpack.c.l.b16 %v6922
  %v6987 = vunpack.c.l.b16 %v6923
  %v6988 = vunpack.c.l.b16 %v6924
  %v6989 = vunpack.c.l.b16 %v6925
  %v6990 = vunpack.c.l.b16 %v6926
  %v6991 = vunpack.c.l.b16 %v6927
  %v6992 = vunpack.c.l.b16 %v6928
  %v6993 = vunpack.c.l.b16 %v6929
  %v6994 = vunpack.c.l.b16 %v6930
  %v6995 = vunpack.c.l.b16 %v6931
  %v6996 = vunpack.c.l.b16 %v6932
  %v6997 = vunpack.c.l.b16 %v6933
  %v6998 = vunpack.c.l.b16 %v6934
  %v6999 = vunpack.c.l.b16 %v6935
  %v7000 = vunpack.c.l.b16 %v6936
  %v7001 = vunpack.c.l.b16 %v6937
  %v7002 = vunpack.c.l.b16 %v6938
  %v7003 = vunpack.c.l.b16 %v6939
  %v7004 = vunpack.c.l.b16 %v6940
  %v7005 = vunpack.c.l.b16 %v6941
  %v7006 = vunpack.c.l.b16 %v6942
  %v7007 = vunpack.c.l.b16 %v6943
  %v7008 = vunpack.c.l.b16 %v6944
  %v7009 = vunpack.c.l.b16 %v6945
  %v7010 = vunpack.c.l.b16 %v6946
  %v7011 = vunpack.c.l.b16 %v6947
  %v7012 = vunpack.c.l.b16 %v6948
  %v7013 = vpack.c.b16 %v6982, %v6981
  %v7014 = vpack.c.b16 %v6984, %v6983
  %v7015 = vpack.c.b16 %v6986, %v6985
  %v7016 = vpack.c.b16 %v6988, %v6987
  %v7017 = vpack.c.b16 %v6990, %v6989
  %v7018 = vpack.c.b16 %v6992, %v6991
  %v7019 = vpack.c.b16 %v6994, %v6993
  %v7020 = vpack.c.b16 %v6996, %v6995
  %v7021 = vpack.c.b16 %v6998, %v6997
  %v7022 = vpack.c.b16 %v7000, %v6999
  %v7023 = vpack.c.b16 %v7002, %v7001
  %v7024 = vpack.c.b16 %v7004, %v7003
  %v7025 = vpack.c.b16 %v7006, %v7005
  %v7026 = vpack.c.b16 %v7008, %v7007
  %v7027 = vpack.c.b16 %v7010, %v7009
  %v7028 = vpack.c.b16 %v7012, %v7011
  %7045 = vmatpush.bf16.msra.mxu0 %v7020
  %7046 = vmatpush.bf16.msra.mxu0 %v7019
  %7047 = vmatpush.bf16.msra.mxu0 %v7018
  %7048 = vmatpush.bf16.msra.mxu0 %v7017
  %7049 = vmatpush.bf16.msra.mxu0 %v7016
  %7050 = vmatpush.bf16.msra.mxu0 %v7015
  %7051 = vmatpush.bf16.msra.mxu0 %v7014
  %7052 = vmatpush.bf16.msra.mxu0 %v7013
  %7053 = vmatmul.bf16.gmra.mxu0 %v6910
  %v7054 = vpop.f32.mrf.mxu0
  %v7055 = vadd.f32 0.0, %v7054
  %v7056 = vpop.f32.mrf.mxu0
  %v7057 = vadd.f32 0.0, %v7056
  %7058 = vmatmul.bf16.gmra.mxu0 %v6912
  %v7059 = vpop.f32.mrf.mxu0
  %v7060 = vadd.f32 0.0, %v7059
  %v7061 = vpop.f32.mrf.mxu0
  %v7062 = vadd.f32 0.0, %v7061
  %7063 = vmatmul.bf16.gmra.mxu0 %v6914
  %v7064 = vpop.f32.mrf.mxu0
  %v7065 = vadd.f32 0.0, %v7064
  %v7066 = vpop.f32.mrf.mxu0
  %v7067 = vadd.f32 0.0, %v7066
  %7068 = vdwg.mxu0
  %7069 = vmatpush.bf16.msra.mxu0 %v7028
  %7070 = vmatpush.bf16.msra.mxu0 %v7027
  %7071 = vmatpush.bf16.msra.mxu0 %v7026
  %7072 = vmatpush.bf16.msra.mxu0 %v7025
  %7073 = vmatpush.bf16.msra.mxu0 %v7024
  %7074 = vmatpush.bf16.msra.mxu0 %v7023
  %7075 = vmatpush.bf16.msra.mxu0 %v7022
  %7076 = vmatpush.bf16.msra.mxu0 %v7021
  %7077 = vmatmul.bf16.gmra.mxu0 %v6911
  %v7078 = vpop.f32.mrf.mxu0
  %v7079 = vadd.f32 %v7055, %v7078
  %v7080 = vpop.f32.mrf.mxu0
  %v7081 = vadd.f32 %v7057, %v7080
  %7082 = vmatmul.bf16.gmra.mxu0 %v6913
  %v7083 = vpop.f32.mrf.mxu0
  %v7084 = vadd.f32 %v7060, %v7083
  %v7085 = vpop.f32.mrf.mxu0
  %v7086 = vadd.f32 %v7062, %v7085
  %7087 = vmatmul.bf16.gmra.mxu0 %v6915
  %v7088 = vpop.f32.mrf.mxu0
  %v7089 = vadd.f32 %v7065, %v7088
  %v7090 = vpop.f32.mrf.mxu0
  %v7091 = vadd.f32 %v7067, %v7090
  %7092 = vdwg.mxu0
  %v7093 = vadd.f32 %v6896, %v7079
  %v7094 = vadd.f32 %v6898, %v7081
  %v7095 = vadd.f32 %v6901, %v7084
  %v7096 = vadd.f32 %v6903, %v7086
  %v7097 = vadd.f32 %v6906, %v7089
  %v7098 = vadd.f32 %v6908, %v7091
  %v7099 = vrot.slane %v6485, 1
  %v7100 = vrot.slane %v6486, 1
  %v7101 = vrot.slane %v6487, 1
  %v7102 = vrot.slane %v6488, 1
  %v7103 = vrot.slane %v6489, 1
  %v7104 = vrot.slane %v6490, 1
  %v7105 = vrot.slane %v6491, 1
  %v7106 = vrot.slane %v6492, 1
  %v7107 = vrot.slane %v6493, 1
  %v7108 = vrot.slane %v6494, 1
  %v7109 = vrot.slane %v6495, 1
  %v7110 = vrot.slane %v6496, 1
  %v7111 = vsel %vm1919, %v7107, %v7109
  %v7112 = vsel %vm1919, %v7108, %v7110
  %v7113 = vsel %vm1919, %v7105, %v7107
  %v7114 = vsel %vm1919, %v7106, %v7108
  %v7115 = vsel %vm1919, %v7103, %v7105
  %v7116 = vsel %vm1919, %v7104, %v7106
  %v7117 = vsel %vm1919, %v7101, %v7103
  %v7118 = vsel %vm1919, %v7102, %v7104
  %v7119 = vsel %vm1919, %v7099, %v7101
  %v7120 = vsel %vm1919, %v7100, %v7102
  %v7121 = vsel %vm1919, %v7109, %v7099
  %v7122 = vsel %vm1919, %v7110, %v7100
  %v7123 = vpack.c.bf16 %v7117, %v7119
  %v7124 = vpack.c.bf16 %v7118, %v7120
  %v7125 = vpack.c.bf16 %v7113, %v7115
  %v7126 = vpack.c.bf16 %v7114, %v7116
  %v7127 = vpack.c.bf16 %v7121, %v7111
  %v7128 = vpack.c.bf16 %v7122, %v7112
  %s7129 = scalar_lea.vmem %s6, 384
  %v7130 = vld [vmem:[%s7129] sm:$0xf]
  %v7131 = vld [vmem:[%s7129 + $0x4] sm:$0xf]
  %v7132 = vld [vmem:[%s7129 + $0x8] sm:$0xf]
  %v7133 = vld [vmem:[%s7129 + $0xc] sm:$0xf]
  %v7134 = vld [vmem:[%s7129 + $0x10] sm:$0xf]
  %v7135 = vld [vmem:[%s7129 + $0x14] sm:$0xf]
  %v7136 = vld [vmem:[%s7129 + $0x18] sm:$0xf]
  %v7137 = vld [vmem:[%s7129 + $0x1c] sm:$0xf]
  %v7138 = vld [vmem:[%s7129 + $0x20] sm:$0xf]
  %v7139 = vld [vmem:[%s7129 + $0x24] sm:$0xf]
  %v7140 = vld [vmem:[%s7129 + $0x28] sm:$0xf]
  %v7141 = vld [vmem:[%s7129 + $0x2c] sm:$0xf]
  %v7142 = vld [vmem:[%s7129 + $0x30] sm:$0xf]
  %v7143 = vld [vmem:[%s7129 + $0x34] sm:$0xf]
  %v7144 = vld [vmem:[%s7129 + $0x38] sm:$0xf]
  %v7145 = vld [vmem:[%s7129 + $0x3c] sm:$0xf]
  %v7146 = vld [vmem:[%s7129 + $0x40] sm:$0xf]
  %v7147 = vld [vmem:[%s7129 + $0x44] sm:$0xf]
  %v7148 = vld [vmem:[%s7129 + $0x48] sm:$0xf]
  %v7149 = vld [vmem:[%s7129 + $0x4c] sm:$0xf]
  %v7150 = vld [vmem:[%s7129 + $0x50] sm:$0xf]
  %v7151 = vld [vmem:[%s7129 + $0x54] sm:$0xf]
  %v7152 = vld [vmem:[%s7129 + $0x58] sm:$0xf]
  %v7153 = vld [vmem:[%s7129 + $0x5c] sm:$0xf]
  %v7154 = vld [vmem:[%s7129 + $0x60] sm:$0xf]
  %v7155 = vld [vmem:[%s7129 + $0x64] sm:$0xf]
  %v7156 = vld [vmem:[%s7129 + $0x68] sm:$0xf]
  %v7157 = vld [vmem:[%s7129 + $0x6c] sm:$0xf]
  %v7158 = vld [vmem:[%s7129 + $0x70] sm:$0xf]
  %v7159 = vld [vmem:[%s7129 + $0x74] sm:$0xf]
  %v7160 = vld [vmem:[%s7129 + $0x78] sm:$0xf]
  %v7161 = vld [vmem:[%s7129 + $0x7c] sm:$0xf]
  %v7194 = vunpack.c.l.b16 %v7130
  %v7195 = vunpack.c.l.b16 %v7131
  %v7196 = vunpack.c.l.b16 %v7132
  %v7197 = vunpack.c.l.b16 %v7133
  %v7198 = vunpack.c.l.b16 %v7134
  %v7199 = vunpack.c.l.b16 %v7135
  %v7200 = vunpack.c.l.b16 %v7136
  %v7201 = vunpack.c.l.b16 %v7137
  %v7202 = vunpack.c.l.b16 %v7138
  %v7203 = vunpack.c.l.b16 %v7139
  %v7204 = vunpack.c.l.b16 %v7140
  %v7205 = vunpack.c.l.b16 %v7141
  %v7206 = vunpack.c.l.b16 %v7142
  %v7207 = vunpack.c.l.b16 %v7143
  %v7208 = vunpack.c.l.b16 %v7144
  %v7209 = vunpack.c.l.b16 %v7145
  %v7210 = vunpack.c.l.b16 %v7146
  %v7211 = vunpack.c.l.b16 %v7147
  %v7212 = vunpack.c.l.b16 %v7148
  %v7213 = vunpack.c.l.b16 %v7149
  %v7214 = vunpack.c.l.b16 %v7150
  %v7215 = vunpack.c.l.b16 %v7151
  %v7216 = vunpack.c.l.b16 %v7152
  %v7217 = vunpack.c.l.b16 %v7153
  %v7218 = vunpack.c.l.b16 %v7154
  %v7219 = vunpack.c.l.b16 %v7155
  %v7220 = vunpack.c.l.b16 %v7156
  %v7221 = vunpack.c.l.b16 %v7157
  %v7222 = vunpack.c.l.b16 %v7158
  %v7223 = vunpack.c.l.b16 %v7159
  %v7224 = vunpack.c.l.b16 %v7160
  %v7225 = vunpack.c.l.b16 %v7161
  %v7226 = vpack.c.b16 %v7195, %v7194
  %v7227 = vpack.c.b16 %v7197, %v7196
  %v7228 = vpack.c.b16 %v7199, %v7198
  %v7229 = vpack.c.b16 %v7201, %v7200
  %v7230 = vpack.c.b16 %v7203, %v7202
  %v7231 = vpack.c.b16 %v7205, %v7204
  %v7232 = vpack.c.b16 %v7207, %v7206
  %v7233 = vpack.c.b16 %v7209, %v7208
  %v7234 = vpack.c.b16 %v7211, %v7210
  %v7235 = vpack.c.b16 %v7213, %v7212
  %v7236 = vpack.c.b16 %v7215, %v7214
  %v7237 = vpack.c.b16 %v7217, %v7216
  %v7238 = vpack.c.b16 %v7219, %v7218
  %v7239 = vpack.c.b16 %v7221, %v7220
  %v7240 = vpack.c.b16 %v7223, %v7222
  %v7241 = vpack.c.b16 %v7225, %v7224
  %7258 = vmatpush.bf16.msra.mxu0 %v7233
  %7259 = vmatpush.bf16.msra.mxu0 %v7232
  %7260 = vmatpush.bf16.msra.mxu0 %v7231
  %7261 = vmatpush.bf16.msra.mxu0 %v7230
  %7262 = vmatpush.bf16.msra.mxu0 %v7229
  %7263 = vmatpush.bf16.msra.mxu0 %v7228
  %7264 = vmatpush.bf16.msra.mxu0 %v7227
  %7265 = vmatpush.bf16.msra.mxu0 %v7226
  %7266 = vmatmul.bf16.gmra.mxu0 %v7123
  %v7267 = vpop.f32.mrf.mxu0
  %v7268 = vadd.f32 0.0, %v7267
  %v7269 = vpop.f32.mrf.mxu0
  %v7270 = vadd.f32 0.0, %v7269
  %7271 = vmatmul.bf16.gmra.mxu0 %v7125
  %v7272 = vpop.f32.mrf.mxu0
  %v7273 = vadd.f32 0.0, %v7272
  %v7274 = vpop.f32.mrf.mxu0
  %v7275 = vadd.f32 0.0, %v7274
  %7276 = vmatmul.bf16.gmra.mxu0 %v7127
  %v7277 = vpop.f32.mrf.mxu0
  %v7278 = vadd.f32 0.0, %v7277
  %v7279 = vpop.f32.mrf.mxu0
  %v7280 = vadd.f32 0.0, %v7279
  %7281 = vdwg.mxu0
  %7282 = vmatpush.bf16.msra.mxu0 %v7241
  %7283 = vmatpush.bf16.msra.mxu0 %v7240
  %7284 = vmatpush.bf16.msra.mxu0 %v7239
  %7285 = vmatpush.bf16.msra.mxu0 %v7238
  %7286 = vmatpush.bf16.msra.mxu0 %v7237
  %7287 = vmatpush.bf16.msra.mxu0 %v7236
  %7288 = vmatpush.bf16.msra.mxu0 %v7235
  %7289 = vmatpush.bf16.msra.mxu0 %v7234
  %7290 = vmatmul.bf16.gmra.mxu0 %v7124
  %v7291 = vpop.f32.mrf.mxu0
  %v7292 = vadd.f32 %v7268, %v7291
  %v7293 = vpop.f32.mrf.mxu0
  %v7294 = vadd.f32 %v7270, %v7293
  %7295 = vmatmul.bf16.gmra.mxu0 %v7126
  %v7296 = vpop.f32.mrf.mxu0
  %v7297 = vadd.f32 %v7273, %v7296
  %v7298 = vpop.f32.mrf.mxu0
  %v7299 = vadd.f32 %v7275, %v7298
  %7300 = vmatmul.bf16.gmra.mxu0 %v7128
  %v7301 = vpop.f32.mrf.mxu0
  %v7302 = vadd.f32 %v7278, %v7301
  %v7303 = vpop.f32.mrf.mxu0
  %v7304 = vadd.f32 %v7280, %v7303
  %7305 = vdwg.mxu0
  %v7306 = vadd.f32 %v7093, %v7292
  %v7307 = vadd.f32 %v7094, %v7294
  %v7308 = vadd.f32 %v7095, %v7297
  %v7309 = vadd.f32 %v7096, %v7299
  %v7310 = vadd.f32 %v7097, %v7302
  %v7311 = vadd.f32 %v7098, %v7304
  %v7312 = vrot.slane %v6485, 2
  %v7313 = vrot.slane %v6486, 2
  %v7314 = vrot.slane %v6487, 2
  %v7315 = vrot.slane %v6488, 2
  %v7316 = vrot.slane %v6489, 2
  %v7317 = vrot.slane %v6490, 2
  %v7318 = vrot.slane %v6491, 2
  %v7319 = vrot.slane %v6492, 2
  %v7320 = vrot.slane %v6493, 2
  %v7321 = vrot.slane %v6494, 2
  %v7322 = vrot.slane %v6495, 2
  %v7323 = vrot.slane %v6496, 2
  %v7324 = vsel %vm2551, %v7320, %v7322
  %v7325 = vsel %vm2551, %v7321, %v7323
  %v7326 = vsel %vm2551, %v7318, %v7320
  %v7327 = vsel %vm2551, %v7319, %v7321
  %v7328 = vsel %vm2551, %v7316, %v7318
  %v7329 = vsel %vm2551, %v7317, %v7319
  %v7330 = vsel %vm2551, %v7314, %v7316
  %v7331 = vsel %vm2551, %v7315, %v7317
  %v7332 = vsel %vm2551, %v7312, %v7314
  %v7333 = vsel %vm2551, %v7313, %v7315
  %v7334 = vsel %vm2551, %v7322, %v7312
  %v7335 = vsel %vm2551, %v7323, %v7313
  %v7336 = vpack.c.bf16 %v7330, %v7332
  %v7337 = vpack.c.bf16 %v7331, %v7333
  %v7338 = vpack.c.bf16 %v7326, %v7328
  %v7339 = vpack.c.bf16 %v7327, %v7329
  %v7340 = vpack.c.bf16 %v7334, %v7324
  %v7341 = vpack.c.bf16 %v7335, %v7325
  %s7342 = scalar_lea.vmem %s6, 512
  %v7343 = vld [vmem:[%s7342] sm:$0xf]
  %v7344 = vld [vmem:[%s7342 + $0x4] sm:$0xf]
  %v7345 = vld [vmem:[%s7342 + $0x8] sm:$0xf]
  %v7346 = vld [vmem:[%s7342 + $0xc] sm:$0xf]
  %v7347 = vld [vmem:[%s7342 + $0x10] sm:$0xf]
  %v7348 = vld [vmem:[%s7342 + $0x14] sm:$0xf]
  %v7349 = vld [vmem:[%s7342 + $0x18] sm:$0xf]
  %v7350 = vld [vmem:[%s7342 + $0x1c] sm:$0xf]
  %v7351 = vld [vmem:[%s7342 + $0x20] sm:$0xf]
  %v7352 = vld [vmem:[%s7342 + $0x24] sm:$0xf]
  %v7353 = vld [vmem:[%s7342 + $0x28] sm:$0xf]
  %v7354 = vld [vmem:[%s7342 + $0x2c] sm:$0xf]
  %v7355 = vld [vmem:[%s7342 + $0x30] sm:$0xf]
  %v7356 = vld [vmem:[%s7342 + $0x34] sm:$0xf]
  %v7357 = vld [vmem:[%s7342 + $0x38] sm:$0xf]
  %v7358 = vld [vmem:[%s7342 + $0x3c] sm:$0xf]
  %v7359 = vld [vmem:[%s7342 + $0x40] sm:$0xf]
  %v7360 = vld [vmem:[%s7342 + $0x44] sm:$0xf]
  %v7361 = vld [vmem:[%s7342 + $0x48] sm:$0xf]
  %v7362 = vld [vmem:[%s7342 + $0x4c] sm:$0xf]
  %v7363 = vld [vmem:[%s7342 + $0x50] sm:$0xf]
  %v7364 = vld [vmem:[%s7342 + $0x54] sm:$0xf]
  %v7365 = vld [vmem:[%s7342 + $0x58] sm:$0xf]
  %v7366 = vld [vmem:[%s7342 + $0x5c] sm:$0xf]
  %v7367 = vld [vmem:[%s7342 + $0x60] sm:$0xf]
  %v7368 = vld [vmem:[%s7342 + $0x64] sm:$0xf]
  %v7369 = vld [vmem:[%s7342 + $0x68] sm:$0xf]
  %v7370 = vld [vmem:[%s7342 + $0x6c] sm:$0xf]
  %v7371 = vld [vmem:[%s7342 + $0x70] sm:$0xf]
  %v7372 = vld [vmem:[%s7342 + $0x74] sm:$0xf]
  %v7373 = vld [vmem:[%s7342 + $0x78] sm:$0xf]
  %v7374 = vld [vmem:[%s7342 + $0x7c] sm:$0xf]
  %v7407 = vunpack.c.l.b16 %v7343
  %v7408 = vunpack.c.l.b16 %v7344
  %v7409 = vunpack.c.l.b16 %v7345
  %v7410 = vunpack.c.l.b16 %v7346
  %v7411 = vunpack.c.l.b16 %v7347
  %v7412 = vunpack.c.l.b16 %v7348
  %v7413 = vunpack.c.l.b16 %v7349
  %v7414 = vunpack.c.l.b16 %v7350
  %v7415 = vunpack.c.l.b16 %v7351
  %v7416 = vunpack.c.l.b16 %v7352
  %v7417 = vunpack.c.l.b16 %v7353
  %v7418 = vunpack.c.l.b16 %v7354
  %v7419 = vunpack.c.l.b16 %v7355
  %v7420 = vunpack.c.l.b16 %v7356
  %v7421 = vunpack.c.l.b16 %v7357
  %v7422 = vunpack.c.l.b16 %v7358
  %v7423 = vunpack.c.l.b16 %v7359
  %v7424 = vunpack.c.l.b16 %v7360
  %v7425 = vunpack.c.l.b16 %v7361
  %v7426 = vunpack.c.l.b16 %v7362
  %v7427 = vunpack.c.l.b16 %v7363
  %v7428 = vunpack.c.l.b16 %v7364
  %v7429 = vunpack.c.l.b16 %v7365
  %v7430 = vunpack.c.l.b16 %v7366
  %v7431 = vunpack.c.l.b16 %v7367
  %v7432 = vunpack.c.l.b16 %v7368
  %v7433 = vunpack.c.l.b16 %v7369
  %v7434 = vunpack.c.l.b16 %v7370
  %v7435 = vunpack.c.l.b16 %v7371
  %v7436 = vunpack.c.l.b16 %v7372
  %v7437 = vunpack.c.l.b16 %v7373
  %v7438 = vunpack.c.l.b16 %v7374
  %v7439 = vpack.c.b16 %v7408, %v7407
  %v7440 = vpack.c.b16 %v7410, %v7409
  %v7441 = vpack.c.b16 %v7412, %v7411
  %v7442 = vpack.c.b16 %v7414, %v7413
  %v7443 = vpack.c.b16 %v7416, %v7415
  %v7444 = vpack.c.b16 %v7418, %v7417
  %v7445 = vpack.c.b16 %v7420, %v7419
  %v7446 = vpack.c.b16 %v7422, %v7421
  %v7447 = vpack.c.b16 %v7424, %v7423
  %v7448 = vpack.c.b16 %v7426, %v7425
  %v7449 = vpack.c.b16 %v7428, %v7427
  %v7450 = vpack.c.b16 %v7430, %v7429
  %v7451 = vpack.c.b16 %v7432, %v7431
  %v7452 = vpack.c.b16 %v7434, %v7433
  %v7453 = vpack.c.b16 %v7436, %v7435
  %v7454 = vpack.c.b16 %v7438, %v7437
  %7471 = vmatpush.bf16.msra.mxu0 %v7446
  %7472 = vmatpush.bf16.msra.mxu0 %v7445
  %7473 = vmatpush.bf16.msra.mxu0 %v7444
  %7474 = vmatpush.bf16.msra.mxu0 %v7443
  %7475 = vmatpush.bf16.msra.mxu0 %v7442
  %7476 = vmatpush.bf16.msra.mxu0 %v7441
  %7477 = vmatpush.bf16.msra.mxu0 %v7440
  %7478 = vmatpush.bf16.msra.mxu0 %v7439
  %7479 = vmatmul.bf16.gmra.mxu0 %v7336
  %v7480 = vpop.f32.mrf.mxu0
  %v7481 = vadd.f32 0.0, %v7480
  %v7482 = vpop.f32.mrf.mxu0
  %v7483 = vadd.f32 0.0, %v7482
  %7484 = vmatmul.bf16.gmra.mxu0 %v7338
  %v7485 = vpop.f32.mrf.mxu0
  %v7486 = vadd.f32 0.0, %v7485
  %v7487 = vpop.f32.mrf.mxu0
  %v7488 = vadd.f32 0.0, %v7487
  %7489 = vmatmul.bf16.gmra.mxu0 %v7340
  %v7490 = vpop.f32.mrf.mxu0
  %v7491 = vadd.f32 0.0, %v7490
  %v7492 = vpop.f32.mrf.mxu0
  %v7493 = vadd.f32 0.0, %v7492
  %7494 = vdwg.mxu0
  %7495 = vmatpush.bf16.msra.mxu0 %v7454
  %7496 = vmatpush.bf16.msra.mxu0 %v7453
  %7497 = vmatpush.bf16.msra.mxu0 %v7452
  %7498 = vmatpush.bf16.msra.mxu0 %v7451
  %7499 = vmatpush.bf16.msra.mxu0 %v7450
  %7500 = vmatpush.bf16.msra.mxu0 %v7449
  %7501 = vmatpush.bf16.msra.mxu0 %v7448
  %7502 = vmatpush.bf16.msra.mxu0 %v7447
  %7503 = vmatmul.bf16.gmra.mxu0 %v7337
  %v7504 = vpop.f32.mrf.mxu0
  %v7505 = vadd.f32 %v7481, %v7504
  %v7506 = vpop.f32.mrf.mxu0
  %v7507 = vadd.f32 %v7483, %v7506
  %7508 = vmatmul.bf16.gmra.mxu0 %v7339
  %v7509 = vpop.f32.mrf.mxu0
  %v7510 = vadd.f32 %v7486, %v7509
  %v7511 = vpop.f32.mrf.mxu0
  %v7512 = vadd.f32 %v7488, %v7511
  %7513 = vmatmul.bf16.gmra.mxu0 %v7341
  %v7514 = vpop.f32.mrf.mxu0
  %v7515 = vadd.f32 %v7491, %v7514
  %v7516 = vpop.f32.mrf.mxu0
  %v7517 = vadd.f32 %v7493, %v7516
  %7518 = vdwg.mxu0
  %v7519 = vadd.f32 %v7306, %v7505
  %v7520 = vadd.f32 %v7307, %v7507
  %v7521 = vadd.f32 %v7308, %v7510
  %v7522 = vadd.f32 %v7309, %v7512
  %v7523 = vadd.f32 %v7310, %v7515
  %v7524 = vadd.f32 %v7311, %v7517
  %v7525 = vld [vmem:[%s7] sm:$0x1]
  %v7527 = vperm.slane %v7525, 0
  %v7529 = vadd.f32 %v7519, %v7527
  %v7530 = vadd.f32 %v7520, %v7527
  %v7531 = vadd.f32 %v7521, %v7527
  %v7532 = vadd.f32 %v7522, %v7527
  %v7533 = vadd.f32 %v7523, %v7527
  %v7534 = vadd.f32 %v7524, %v7527
  %v7535 = vmax.f32 %v7529, 0.0
  %v7536 = vmax.f32 %v7530, 0.0
  %v7537 = vmax.f32 %v7531, 0.0
  %v7538 = vmax.f32 %v7532, 0.0
  %v7539 = vmax.f32 %v7533, 0.0
  %v7540 = vmax.f32 %v7534, 0.0
  %v7541 = vmul.f32 %v7535, %v3232
  %v7542 = vmul.f32 %v7536, %v3237
  %v7543 = vmul.f32 %v7537, %v3242
  %v7544 = vmul.f32 %v7538, %v3247
  %v7545 = vmul.f32 %v7539, %v3252
  %v7546 = vmul.f32 %v7540, %v3257
  %v7547 = vpack.c.bf16 %v7542, %v7541
  %v7548 = vpack.c.bf16 %v7544, %v7543
  %v7549 = vpack.c.bf16 %v7546, %v7545
  %v7550 = vld [vmem:[%s8] sm:$0xff]
  %v7551 = vld [vmem:[%s8 + $0x8] sm:$0xff]
  %v7552 = vld [vmem:[%s8 + $0x10] sm:$0xff]
  %v7553 = vld [vmem:[%s8 + $0x18] sm:$0xff]
  %v7554 = vld [vmem:[%s8 + $0x20] sm:$0xff]
  %v7555 = vld [vmem:[%s8 + $0x28] sm:$0xff]
  %v7556 = vld [vmem:[%s8 + $0x30] sm:$0xff]
  %v7557 = vld [vmem:[%s8 + $0x38] sm:$0xff]
  %v7558 = vld [vmem:[%s8 + $0x40] sm:$0xff]
  %v7559 = vld [vmem:[%s8 + $0x48] sm:$0xff]
  %v7560 = vld [vmem:[%s8 + $0x50] sm:$0xff]
  %v7561 = vld [vmem:[%s8 + $0x58] sm:$0xff]
  %v7562 = vld [vmem:[%s8 + $0x60] sm:$0xff]
  %v7563 = vld [vmem:[%s8 + $0x68] sm:$0xff]
  %v7564 = vld [vmem:[%s8 + $0x70] sm:$0xff]
  %v7565 = vld [vmem:[%s8 + $0x78] sm:$0xff]
  %v7566 = vld [vmem:[%s8 + $0x80] sm:$0xff]
  %v7567 = vld [vmem:[%s8 + $0x88] sm:$0xff]
  %v7568 = vld [vmem:[%s8 + $0x90] sm:$0xff]
  %v7569 = vld [vmem:[%s8 + $0x98] sm:$0xff]
  %v7570 = vld [vmem:[%s8 + $0xa0] sm:$0xff]
  %v7571 = vld [vmem:[%s8 + $0xa8] sm:$0xff]
  %v7572 = vld [vmem:[%s8 + $0xb0] sm:$0xff]
  %v7573 = vld [vmem:[%s8 + $0xb8] sm:$0xff]
  %v7574 = vld [vmem:[%s8 + $0xc0] sm:$0xff]
  %v7575 = vld [vmem:[%s8 + $0xc8] sm:$0xff]
  %v7576 = vld [vmem:[%s8 + $0xd0] sm:$0xff]
  %v7577 = vld [vmem:[%s8 + $0xd8] sm:$0xff]
  %v7578 = vld [vmem:[%s8 + $0xe0] sm:$0xff]
  %v7579 = vld [vmem:[%s8 + $0xe8] sm:$0xff]
  %v7580 = vld [vmem:[%s8 + $0xf0] sm:$0xff]
  %v7581 = vld [vmem:[%s8 + $0xf8] sm:$0xff]
  %v7582 = vld [vmem:[%s9] sm:$0xf]
  %v7584 = vperm.slane %v7582, 0
  %v7585 = vperm.slane %v7582, 1
  %v7586 = vperm.slane %v7582, 2
  %v7587 = vperm.slane %v7582, 3
  %v7624 = vunpack.c.l.b16 %v7550
  %v7625 = vunpack.c.h.b16 %v7550
  %v7626 = vunpack.c.l.b16 %v7551
  %v7627 = vunpack.c.h.b16 %v7551
  %v7628 = vunpack.c.l.b16 %v7552
  %v7629 = vunpack.c.h.b16 %v7552
  %v7630 = vunpack.c.l.b16 %v7553
  %v7631 = vunpack.c.h.b16 %v7553
  %v7632 = vunpack.c.l.b16 %v7554
  %v7633 = vunpack.c.h.b16 %v7554
  %v7634 = vunpack.c.l.b16 %v7555
  %v7635 = vunpack.c.h.b16 %v7555
  %v7636 = vunpack.c.l.b16 %v7556
  %v7637 = vunpack.c.h.b16 %v7556
  %v7638 = vunpack.c.l.b16 %v7557
  %v7639 = vunpack.c.h.b16 %v7557
  %v7640 = vunpack.c.l.b16 %v7558
  %v7641 = vunpack.c.h.b16 %v7558
  %v7642 = vunpack.c.l.b16 %v7559
  %v7643 = vunpack.c.h.b16 %v7559
  %v7644 = vunpack.c.l.b16 %v7560
  %v7645 = vunpack.c.h.b16 %v7560
  %v7646 = vunpack.c.l.b16 %v7561
  %v7647 = vunpack.c.h.b16 %v7561
  %v7648 = vunpack.c.l.b16 %v7562
  %v7649 = vunpack.c.h.b16 %v7562
  %v7650 = vunpack.c.l.b16 %v7563
  %v7651 = vunpack.c.h.b16 %v7563
  %v7652 = vunpack.c.l.b16 %v7564
  %v7653 = vunpack.c.h.b16 %v7564
  %v7654 = vunpack.c.l.b16 %v7565
  %v7655 = vunpack.c.h.b16 %v7565
  %v7656 = vunpack.c.l.b16 %v7566
  %v7657 = vunpack.c.h.b16 %v7566
  %v7658 = vunpack.c.l.b16 %v7567
  %v7659 = vunpack.c.h.b16 %v7567
  %v7660 = vunpack.c.l.b16 %v7568
  %v7661 = vunpack.c.h.b16 %v7568
  %v7662 = vunpack.c.l.b16 %v7569
  %v7663 = vunpack.c.h.b16 %v7569
  %v7664 = vunpack.c.l.b16 %v7570
  %v7665 = vunpack.c.h.b16 %v7570
  %v7666 = vunpack.c.l.b16 %v7571
  %v7667 = vunpack.c.h.b16 %v7571
  %v7668 = vunpack.c.l.b16 %v7572
  %v7669 = vunpack.c.h.b16 %v7572
  %v7670 = vunpack.c.l.b16 %v7573
  %v7671 = vunpack.c.h.b16 %v7573
  %v7672 = vunpack.c.l.b16 %v7574
  %v7673 = vunpack.c.h.b16 %v7574
  %v7674 = vunpack.c.l.b16 %v7575
  %v7675 = vunpack.c.h.b16 %v7575
  %v7676 = vunpack.c.l.b16 %v7576
  %v7677 = vunpack.c.h.b16 %v7576
  %v7678 = vunpack.c.l.b16 %v7577
  %v7679 = vunpack.c.h.b16 %v7577
  %v7680 = vunpack.c.l.b16 %v7578
  %v7681 = vunpack.c.h.b16 %v7578
  %v7682 = vunpack.c.l.b16 %v7579
  %v7683 = vunpack.c.h.b16 %v7579
  %v7684 = vunpack.c.l.b16 %v7580
  %v7685 = vunpack.c.h.b16 %v7580
  %v7686 = vunpack.c.l.b16 %v7581
  %v7687 = vunpack.c.h.b16 %v7581
  %v7688 = vpack.c.b16 %v7628, %v7624
  %v7689 = vpack.c.b16 %v7629, %v7625
  %v7690 = vpack.c.b16 %v7630, %v7626
  %v7691 = vpack.c.b16 %v7631, %v7627
  %v7692 = vpack.c.b16 %v7636, %v7632
  %v7693 = vpack.c.b16 %v7637, %v7633
  %v7694 = vpack.c.b16 %v7638, %v7634
  %v7695 = vpack.c.b16 %v7639, %v7635
  %v7696 = vpack.c.b16 %v7644, %v7640
  %v7697 = vpack.c.b16 %v7645, %v7641
  %v7698 = vpack.c.b16 %v7646, %v7642
  %v7699 = vpack.c.b16 %v7647, %v7643
  %v7700 = vpack.c.b16 %v7652, %v7648
  %v7701 = vpack.c.b16 %v7653, %v7649
  %v7702 = vpack.c.b16 %v7654, %v7650
  %v7703 = vpack.c.b16 %v7655, %v7651
  %v7704 = vpack.c.b16 %v7660, %v7656
  %v7705 = vpack.c.b16 %v7661, %v7657
  %v7706 = vpack.c.b16 %v7662, %v7658
  %v7707 = vpack.c.b16 %v7663, %v7659
  %v7708 = vpack.c.b16 %v7668, %v7664
  %v7709 = vpack.c.b16 %v7669, %v7665
  %v7710 = vpack.c.b16 %v7670, %v7666
  %v7711 = vpack.c.b16 %v7671, %v7667
  %v7712 = vpack.c.b16 %v7676, %v7672
  %v7713 = vpack.c.b16 %v7677, %v7673
  %v7714 = vpack.c.b16 %v7678, %v7674
  %v7715 = vpack.c.b16 %v7679, %v7675
  %v7716 = vpack.c.b16 %v7684, %v7680
  %v7717 = vpack.c.b16 %v7685, %v7681
  %v7718 = vpack.c.b16 %v7686, %v7682
  %v7719 = vpack.c.b16 %v7687, %v7683
  %7752 = vmatpush.bf16.msra.mxu0 %v7716
  %7753 = vmatpush.bf16.msra.mxu0 %v7712
  %7754 = vmatpush.bf16.msra.mxu0 %v7708
  %7755 = vmatpush.bf16.msra.mxu0 %v7704
  %7756 = vmatpush.bf16.msra.mxu0 %v7700
  %7757 = vmatpush.bf16.msra.mxu0 %v7696
  %7758 = vmatpush.bf16.msra.mxu0 %v7692
  %7759 = vmatpush.bf16.msra.mxu0 %v7688
  %7760 = vmatmul.bf16.gmra.mxu0 %v7547
  %v7761 = vpop.f32.mrf.mxu0
  %v7762 = vadd.f32 %v7584, %v7761
  %v7763 = vpop.f32.mrf.mxu0
  %v7764 = vadd.f32 %v7584, %v7763
  %7765 = vmatmul.bf16.gmra.mxu0 %v7548
  %v7766 = vpop.f32.mrf.mxu0
  %v7767 = vadd.f32 %v7584, %v7766
  %v7768 = vpop.f32.mrf.mxu0
  %v7769 = vadd.f32 %v7584, %v7768
  %7770 = vmatmul.bf16.gmra.mxu0 %v7549
  %v7771 = vpop.f32.mrf.mxu0
  %v7772 = vadd.f32 %v7584, %v7771
  %v7773 = vpop.f32.mrf.mxu0
  %v7774 = vadd.f32 %v7584, %v7773
  %7775 = vdwg.mxu0
  %7776 = vmatpush.bf16.msra.mxu0 %v7717
  %7777 = vmatpush.bf16.msra.mxu0 %v7713
  %7778 = vmatpush.bf16.msra.mxu0 %v7709
  %7779 = vmatpush.bf16.msra.mxu0 %v7705
  %7780 = vmatpush.bf16.msra.mxu0 %v7701
  %7781 = vmatpush.bf16.msra.mxu0 %v7697
  %7782 = vmatpush.bf16.msra.mxu0 %v7693
  %7783 = vmatpush.bf16.msra.mxu0 %v7689
  %7784 = vmatmul.bf16.gmra.mxu0 %v7547
  %v7785 = vpop.f32.mrf.mxu0
  %v7786 = vadd.f32 %v7585, %v7785
  %v7787 = vpop.f32.mrf.mxu0
  %v7788 = vadd.f32 %v7585, %v7787
  %7789 = vmatmul.bf16.gmra.mxu0 %v7548
  %v7790 = vpop.f32.mrf.mxu0
  %v7791 = vadd.f32 %v7585, %v7790
  %v7792 = vpop.f32.mrf.mxu0
  %v7793 = vadd.f32 %v7585, %v7792
  %7794 = vmatmul.bf16.gmra.mxu0 %v7549
  %v7795 = vpop.f32.mrf.mxu0
  %v7796 = vadd.f32 %v7585, %v7795
  %v7797 = vpop.f32.mrf.mxu0
  %v7798 = vadd.f32 %v7585, %v7797
  %7799 = vdwg.mxu0
  %7800 = vmatpush.bf16.msra.mxu0 %v7718
  %7801 = vmatpush.bf16.msra.mxu0 %v7714
  %7802 = vmatpush.bf16.msra.mxu0 %v7710
  %7803 = vmatpush.bf16.msra.mxu0 %v7706
  %7804 = vmatpush.bf16.msra.mxu0 %v7702
  %7805 = vmatpush.bf16.msra.mxu0 %v7698
  %7806 = vmatpush.bf16.msra.mxu0 %v7694
  %7807 = vmatpush.bf16.msra.mxu0 %v7690
  %7808 = vmatmul.bf16.gmra.mxu0 %v7547
  %v7809 = vpop.f32.mrf.mxu0
  %v7810 = vadd.f32 %v7586, %v7809
  %v7811 = vpop.f32.mrf.mxu0
  %v7812 = vadd.f32 %v7586, %v7811
  %7813 = vmatmul.bf16.gmra.mxu0 %v7548
  %v7814 = vpop.f32.mrf.mxu0
  %v7815 = vadd.f32 %v7586, %v7814
  %v7816 = vpop.f32.mrf.mxu0
  %v7817 = vadd.f32 %v7586, %v7816
  %7818 = vmatmul.bf16.gmra.mxu0 %v7549
  %v7819 = vpop.f32.mrf.mxu0
  %v7820 = vadd.f32 %v7586, %v7819
  %v7821 = vpop.f32.mrf.mxu0
  %v7822 = vadd.f32 %v7586, %v7821
  %7823 = vdwg.mxu0
  %7824 = vmatpush.bf16.msra.mxu0 %v7719
  %7825 = vmatpush.bf16.msra.mxu0 %v7715
  %7826 = vmatpush.bf16.msra.mxu0 %v7711
  %7827 = vmatpush.bf16.msra.mxu0 %v7707
  %7828 = vmatpush.bf16.msra.mxu0 %v7703
  %7829 = vmatpush.bf16.msra.mxu0 %v7699
  %7830 = vmatpush.bf16.msra.mxu0 %v7695
  %7831 = vmatpush.bf16.msra.mxu0 %v7691
  %7832 = vmatmul.bf16.gmra.mxu0 %v7547
  %v7833 = vpop.f32.mrf.mxu0
  %v7834 = vadd.f32 %v7587, %v7833
  %v7835 = vpop.f32.mrf.mxu0
  %v7836 = vadd.f32 %v7587, %v7835
  %7837 = vmatmul.bf16.gmra.mxu0 %v7548
  %v7838 = vpop.f32.mrf.mxu0
  %v7839 = vadd.f32 %v7587, %v7838
  %v7840 = vpop.f32.mrf.mxu0
  %v7841 = vadd.f32 %v7587, %v7840
  %7842 = vmatmul.bf16.gmra.mxu0 %v7549
  %v7843 = vpop.f32.mrf.mxu0
  %v7844 = vadd.f32 %v7587, %v7843
  %v7845 = vpop.f32.mrf.mxu0
  %v7846 = vadd.f32 %v7587, %v7845
  %7847 = vdwg.mxu0
  %7848 = vst [vmem:[%s10] sm:$0xff] %v7762
  %7849 = vst [vmem:[%s10 + $0x8] sm:$0xff] %v7786
  %7850 = vst [vmem:[%s10 + $0x10] sm:$0xff] %v7810
  %7851 = vst [vmem:[%s10 + $0x18] sm:$0xff] %v7834
  %7852 = vst [vmem:[%s10 + $0x20] sm:$0xff] %v7764
  %7853 = vst [vmem:[%s10 + $0x28] sm:$0xff] %v7788
  %7854 = vst [vmem:[%s10 + $0x30] sm:$0xff] %v7812
  %7855 = vst [vmem:[%s10 + $0x38] sm:$0xff] %v7836
  %7856 = vst [vmem:[%s10 + $0x40] sm:$0xff] %v7767
  %7857 = vst [vmem:[%s10 + $0x48] sm:$0xff] %v7791
  %7858 = vst [vmem:[%s10 + $0x50] sm:$0xff] %v7815
  %7859 = vst [vmem:[%s10 + $0x58] sm:$0xff] %v7839
  %7860 = vst [vmem:[%s10 + $0x60] sm:$0xff] %v7769
  %7861 = vst [vmem:[%s10 + $0x68] sm:$0xff] %v7793
  %7862 = vst [vmem:[%s10 + $0x70] sm:$0xff] %v7817
  %7863 = vst [vmem:[%s10 + $0x78] sm:$0xff] %v7841
  %7864 = vst [vmem:[%s10 + $0x80] sm:$0xff] %v7772
  %7865 = vst [vmem:[%s10 + $0x88] sm:$0xff] %v7796
  %7866 = vst [vmem:[%s10 + $0x90] sm:$0xff] %v7820
  %7867 = vst [vmem:[%s10 + $0x98] sm:$0xff] %v7844
  %7868 = vst [vmem:[%s10 + $0xa0] sm:$0xff] %v7774
  %7869 = vst [vmem:[%s10 + $0xa8] sm:$0xff] %v7798
  %7870 = vst [vmem:[%s10 + $0xb0] sm:$0xff] %v7822
  %7871 = vst [vmem:[%s10 + $0xb8] sm:$0xff] %v7846
  // Predicated region
  $region42: #{network_forward.2} parent=0 // pred_check
    _
  $region43: #{network_forward.2} parent=0 // pred_check_branch
    %7873 = sbr.rel (0) target = $region45
  $region44: #{network_forward.2} parent=0 // pred_region
    _
  $region45: #{network_forward.2} parent=0 // pred_fallthru
    _
  // Predicated region
  $region46: #{network_forward.2} parent=0 // pred_check
    _
  $region47: #{network_forward.2} parent=0 // pred_check_branch
    %7875 = sbr.rel (0) target = $region49
  $region48: #{network_forward.2} parent=0 // pred_region
    _
  $region49: #{network_forward.2} parent=0 // pred_fallthru
    _

</llo_original>
